<compile_context>
chip_gen: v7x
topology: tpu7x:2x2x1
jax: 0.10.0
libtpu: 0.0.40
codegen_flags: <defaults>
</compile_context>

<pallas_src>
import jax
import jax.numpy as jnp
from jax.experimental import pallas as pl
from jax.experimental.pallas import tpu as pltpu


# ---------------------------------------------------------------------------
# Kernel 1: K-split partial GEMM for layer 1.  grid = (k_split, M tiles, K steps)
# ---------------------------------------------------------------------------
def _l1_partial_kernel(x_ref, w1_ref, o_ref, acc_ref):
    k = pl.program_id(2)

    @pl.when(k == 0)
    def _init():
        acc_ref[...] = jnp.zeros_like(acc_ref)

    # bf16 x bf16 MXU pass, f32 accumulate.
    acc_ref[...] += jnp.dot(x_ref[...], w1_ref[...],
                            preferred_element_type=jnp.float32)

    @pl.when(k == pl.num_programs(2) - 1)
    def _store():
        o_ref[0] = acc_ref[...]


# ---------------------------------------------------------------------------
# Kernel 2: epilogue — combine partials, +b1, PReLU, Linear2, PReLU, Linear3
# ---------------------------------------------------------------------------
def _head_kernel(part_ref, b1_ref, w2_ref, b2_ref, w3_ref, b3_ref, a_ref, o_ref):
    a = a_ref[0]                                          # shared PReLU slope (SMEM)
    h = jnp.sum(part_ref[...], axis=0) + b1_ref[...]      # (tm, H) f32
    h = jnp.where(h >= 0, h, a * h)                       # PReLU #1
    h = jnp.dot(h, w2_ref[...],
                preferred_element_type=jnp.float32) + b2_ref[...]
    h = jnp.where(h >= 0, h, a * h)                       # PReLU #2 (same slope)
    # Linear(H -> 1) as a lane reduction (avoids an N=1 matmul).
    o_ref[...] = jnp.sum(h * w3_ref[...], axis=1, keepdims=True) + b3_ref[0]


# ---------------------------------------------------------------------------
# Wrapper
# ---------------------------------------------------------------------------
def _pick_tile(n, cap, quantum):
    """Largest multiple of `quantum` that divides n and is <= cap (robust fallbacks)."""
    if n <= quantum or n % quantum:
        return n
    t = min(cap, n)
    t = max(quantum, t - t % quantum)
    while n % t:
        t -= quantum
    return t


def prepare_params(w1, b1, w2, b2, w3, b3, prelu_a):
    """One-time layout / dtype prep.  Call OUTSIDE the per-step jit: the (F, H) bf16
    copy of W1 must not be re-materialized (64 MiB read+write) on every forward."""
    H, F = w1.shape
    return dict(
        w1t=jnp.transpose(w1).astype(jnp.bfloat16),      # (F, H) bf16
        b1=b1.reshape(1, H).astype(jnp.float32),
        w2t=jnp.transpose(w2).astype(jnp.float32),       # (H, H)
        b2=b2.reshape(1, H).astype(jnp.float32),
        w3=w3.reshape(1, H).astype(jnp.float32),
        b3=b3.reshape(1).astype(jnp.float32),            # SMEM scalar
        a=prelu_a.reshape(1).astype(jnp.float32),        # SMEM scalar (shared PReLU)
    )


def feature_discriminator(x, params, *, tm_cap=256, tk_cap=8192, k_split=2,
                          w1_buffers=2):
    """JAX/Pallas equivalent of _FeatureDiscriminator.forward (default n_layers=2)."""
    w1t = params["w1t"]
    F, H = w1t.shape                       # F = input_nc*16*16, H = input_nc

    # forward() hard-codes view(-1, 256*16*16); with input_nc=256 that equals F.
    xf = x.reshape(-1, F).astype(jnp.bfloat16)
    B = xf.shape[0]

    # Pad rows to a multiple of 16 (bf16 sublane packing); sliced off at the end.
    M = ((B + 15) // 16) * 16
    if M != B:
        xf = jnp.pad(xf, ((0, M - B), (0, 0)))

    if F % (k_split * 128) != 0:
        k_split = 1
    Fs = F // k_split                      # K range owned by one split
    tm = _pick_tile(M, tm_cap, 16)
    tk = _pick_tile(Fs, tk_cap, 128)
    ks = Fs // tk                          # K steps per split
    m_tiles = M // tm

    x_map = lambda s, i, k: (i, s * ks + k)
    w1_map = lambda s, i, k: (s * ks + k, 0)
    if w1_buffers > 2:                     # optional deeper-DMA sweep (v6e/v7x)
        x_spec = pl.BlockSpec((tm, tk), x_map, pipeline_mode=pl.Buffered(w1_buffers))
        w1_spec = pl.BlockSpec((tk, H), w1_map, pipeline_mode=pl.Buffered(w1_buffers))
    else:
        x_spec = pl.BlockSpec((tm, tk), x_map)
        w1_spec = pl.BlockSpec((tk, H), w1_map)

    gemm_cost = pl.CostEstimate(
        flops=2 * M * F * H,
        bytes_accessed=M * F * 2 + m_tiles * F * H * 2 + k_split * M * H * 4,
        transcendentals=0)

    partials = pl.pallas_call(
        _l1_partial_kernel,
        out_shape=jax.ShapeDtypeStruct((k_split, M, H), jnp.float32),
        grid=(k_split, m_tiles, ks),
        in_specs=[x_spec, w1_spec],
        out_specs=pl.BlockSpec((1, tm, H), lambda s, i, k: (s, i, 0)),
        scratch_shapes=[pltpu.VMEM((tm, H), jnp.float32)],
        compiler_params=pltpu.CompilerParams(
            dimension_semantics=("parallel", "parallel", "arbitrary"),
            vmem_limit_bytes=32 * 1024 * 1024),
        cost_estimate=gemm_cost,
    )(xf, w1t)

    tm2 = _pick_tile(M, 256, 8)
    head_cost = pl.CostEstimate(
        flops=2 * M * H * H + 6 * M * H,
        bytes_accessed=k_split * M * H * 4 + H * H * 4 + 3 * H * 4 + M * 4,
        transcendentals=0)

    out = pl.pallas_call(
        _head_kernel,
        out_shape=jax.ShapeDtypeStruct((M, 1), jnp.float32),
        grid=(M // tm2,),
        in_specs=[
            pl.BlockSpec((k_split, tm2, H), lambda i: (0, i, 0)),   # partials
            pl.BlockSpec((1, H), lambda i: (0, 0)),                 # b1
            pl.BlockSpec((H, H), lambda i: (0, 0)),                 # W2^T
            pl.BlockSpec((1, H), lambda i: (0, 0)),                 # b2
            pl.BlockSpec((1, H), lambda i: (0, 0)),                 # W3 row
            pl.BlockSpec(memory_space=pltpu.MemorySpace.SMEM),      # b3 scalar
            pl.BlockSpec(memory_space=pltpu.MemorySpace.SMEM),      # PReLU slope
        ],
        out_specs=pl.BlockSpec((tm2, 1), lambda i: (i, 0)),
        compiler_params=pltpu.CompilerParams(dimension_semantics=("parallel",)),
        cost_estimate=head_cost,
    )(partials, params["b1"], params["w2t"], params["b2"], params["w3"],
      params["b3"], params["a"])

    # TODO(synk): only the default n_layers=2 configuration is fused; deeper configs
    # would repeat the (Linear(H,H) + PReLU) pair inside _head_kernel.
    return out[:B]


# ---------------------------------------------------------------------------
# Pure-JAX reference (PyTorch semantics, f32 weights)
# ---------------------------------------------------------------------------
def reference_forward(x, w1, b1, w2, b2, w3, b3, prelu_a):
    a = prelu_a.reshape(())
    h = x.reshape(-1, w1.shape[1]).astype(jnp.float32)
    h = h @ w1.T + b1
    h = jnp.where(h >= 0, h, a * h)
    h = h @ w2.T + b2
    h = jnp.where(h >= 0, h, a * h)
    return h @ w3.T + b3


# ---------------------------------------------------------------------------
if __name__ == "__main__":
    key = jax.random.PRNGKey(0)
    keys = jax.random.split(key, 8)

    # forward() hard-codes view(-1, 256*16*16) => input_nc = 256, spatial = 16x16.
    B, C, Hs, Ws = 2, 256, 16, 16
    F = C * Hs * Ws                        # 65536
    Hid = C                                # input_nc

    x = jax.random.normal(keys[0], (B, C, Hs, Ws), jnp.float32)
    # nn.Linear default init: U(-1/sqrt(fan_in), 1/sqrt(fan_in)).
    bnd1 = 1.0 / (F ** 0.5)
    bnd2 = 1.0 / (Hid ** 0.5)
    w1 = jax.random.uniform(keys[1], (Hid, F), jnp.float32, -bnd1, bnd1)
    b1 = jax.random.uniform(keys[2], (Hid,), jnp.float32, -bnd1, bnd1)
    w2 = jax.random.uniform(keys[3], (Hid, Hid), jnp.float32, -bnd2, bnd2)
    b2 = jax.random.uniform(keys[4], (Hid,), jnp.float32, -bnd2, bnd2)
    w3 = jax.random.uniform(keys[5], (1, Hid), jnp.float32, -bnd2, bnd2)
    b3 = jax.random.uniform(keys[6], (1,), jnp.float32, -bnd2, bnd2)
    prelu_a = jnp.full((1,), 0.25, jnp.float32)          # nn.PReLU() default init

    # One-time parameter prep (transpose + bf16 cast) OUTSIDE the per-call jit.
    params = prepare_params(w1, b1, w2, b2, w3, b3, prelu_a)
    params = jax.tree_util.tree_map(jax.block_until_ready, params)

    fwd = jax.jit(feature_discriminator)
    out = jax.block_until_ready(fwd(x, params))
    assert out.shape == (B, 1), out.shape

    ref = reference_forward(x, w1, b1, w2, b2, w3, b3, prelu_a)
    max_err = float(jnp.max(jnp.abs(out - ref)))
    assert jnp.allclose(out, ref, atol=2e-2, rtol=2e-2), f"max abs err {max_err}"

    print("KERNEL_OK")
</pallas_src>

<mosaic_0001>
module attributes {stable_mosaic.version = 11 : i64} {
  func.func @_l1_partial_kernel(%arg0: i32, %arg1: i32, %arg2: i32, %arg3: memref<16x8192xbf16, #tpu.memory_space<vmem>>, %arg4: memref<8192x256xbf16, #tpu.memory_space<vmem>>, %arg5: memref<1x16x256xf32, #tpu.memory_space<vmem>>, %arg6: memref<16x256xf32, #tpu.memory_space<vmem>>) attributes {dimension_semantics = [#tpu.dimension_semantics<parallel>, #tpu.dimension_semantics<parallel>, #tpu.dimension_semantics<arbitrary>], iteration_bounds = array<i64: 2, 1, 4>, scalar_prefetch = 0 : i64, scratch_operands = 1 : i64, tpu.core_type = #tpu.core_type<tc>, window_params = [{transform_indices = @transform_0, window_bounds = array<i64: 16, 8192>}, {transform_indices = @transform_1, window_bounds = array<i64: 8192, 256>}, {transform_indices = @transform_2, window_bounds = array<i64: 1, 16, 256>}]} {
    %c0_i32 = arith.constant 0 : i32
    %0 = arith.cmpi eq, %arg2, %c0_i32 : i32
    %1 = arith.extui %0 : i1 to i32
    %c0_i32_0 = arith.constant 0 : i32
    %2 = arith.cmpi ne, %1, %c0_i32_0 : i32
    scf.if %2 {
      %cst_9 = arith.constant 0.000000e+00 : f32
      %12 = vector.broadcast %cst_9 : f32 to vector<16x256xf32>
      %c0_10 = arith.constant 0 : index
      %c0_11 = arith.constant 0 : index
      %13 = vector.load %arg6[%c0_10, %c0_11] : memref<16x256xf32, #tpu.memory_space<vmem>>, vector<16x256xf32>
      tpu.vector_store %arg6[%c0_10, %c0_11], %12 {strides = array<i32>} : memref<16x256xf32, #tpu.memory_space<vmem>>, vector<16x256xf32>,
    } else {
    }
    %c0 = arith.constant 0 : index
    %c0_1 = arith.constant 0 : index
    %3 = vector.load %arg6[%c0, %c0_1] : memref<16x256xf32, #tpu.memory_space<vmem>>, vector<16x256xf32>
    %c0_2 = arith.constant 0 : index
    %c0_3 = arith.constant 0 : index
    %4 = vector.load %arg3[%c0_2, %c0_3] : memref<16x8192xbf16, #tpu.memory_space<vmem>>, vector<16x8192xbf16>
    %c0_4 = arith.constant 0 : index
    %c0_5 = arith.constant 0 : index
    %5 = vector.load %arg4[%c0_4, %c0_5] : memref<8192x256xbf16, #tpu.memory_space<vmem>>, vector<8192x256xbf16>
    %cst = arith.constant dense<0.000000e+00> : vector<16x256xf32>
    %6 = tpu.matmul %4, %5, %cst {dimension_numbers = #tpu.dot_dimension_numbers<[1], [0], [0], [1], [0, 0, 1, 1], [], []>} : vector<16x8192xbf16>, vector<8192x256xbf16>, vector<16x256xf32> -> vector<16x256xf32>
    %7 = arith.addf %3, %6 : vector<16x256xf32>
    %c0_6 = arith.constant 0 : index
    %c0_7 = arith.constant 0 : index
    %8 = vector.load %arg6[%c0_6, %c0_7] : memref<16x256xf32, #tpu.memory_space<vmem>>, vector<16x256xf32>
    tpu.vector_store %arg6[%c0_6, %c0_7], %7 {strides = array<i32>} : memref<16x256xf32, #tpu.memory_space<vmem>>, vector<16x256xf32>,
    %c3_i32 = arith.constant 3 : i32
    %9 = arith.cmpi eq, %arg2, %c3_i32 : i32
    %10 = arith.extui %9 : i1 to i32
    %c0_i32_8 = arith.constant 0 : i32
    %11 = arith.cmpi ne, %10, %c0_i32_8 : i32
    scf.if %11 {
      %c0_9 = arith.constant 0 : index
      %c0_10 = arith.constant 0 : index
      %12 = vector.load %arg6[%c0_9, %c0_10] : memref<16x256xf32, #tpu.memory_space<vmem>>, vector<16x256xf32>
      %c0_11 = arith.constant 0 : index
      %c0_12 = arith.constant 0 : index
      %c0_13 = arith.constant 0 : index
      %13 = vector.load %arg5[%c0_11, %c0_12, %c0_13] : memref<1x16x256xf32, #tpu.memory_space<vmem>>, vector<1x16x256xf32>
      %14 = vector.shape_cast %13 : vector<1x16x256xf32> to vector<16x256xf32>
      %15 = vector.shape_cast %12 : vector<16x256xf32> to vector<1x16x256xf32>
      tpu.vector_store %arg5[%c0_11, %c0_12, %c0_13], %15 {strides = array<i32>} : memref<1x16x256xf32, #tpu.memory_space<vmem>>, vector<1x16x256xf32>,
    } else {
    }
    return
  }
  func.func @transform_0(%arg0: i32, %arg1: i32, %arg2: i32) -> (i32, i32) {
    %c4_i32 = arith.constant 4 : i32
    %0 = arith.muli %arg0, %c4_i32 : i32
    %1 = arith.addi %0, %arg2 : i32
    %c0_i32 = arith.constant 0 : i32
    return %arg1, %1 : i32, i32
  }
  func.func @transform_1(%arg0: i32, %arg1: i32, %arg2: i32) -> (i32, i32) {
    %c4_i32 = arith.constant 4 : i32
    %0 = arith.muli %arg0, %c4_i32 : i32
    %1 = arith.addi %0, %arg2 : i32
    %c0_i32 = arith.constant 0 : i32
    %c0_i32_0 = arith.constant 0 : i32
    return %1, %c0_i32 : i32, i32
  }
  func.func @transform_2(%arg0: i32, %arg1: i32, %arg2: i32) -> (i32, i32, i32) {
    %c0_i32 = arith.constant 0 : i32
    %c0_i32_0 = arith.constant 0 : i32
    return %arg0, %arg1, %c0_i32 : i32, i32, i32
  }
}

module attributes {stable_mosaic.version = 11 : i64} {
  func.func @_head_kernel(%arg0: i32, %arg1: memref<2x16x256xf32, #tpu.memory_space<vmem>>, %arg2: memref<1x256xf32, #tpu.memory_space<vmem>>, %arg3: memref<256x256xf32, #tpu.memory_space<vmem>>, %arg4: memref<1x256xf32, #tpu.memory_space<vmem>>, %arg5: memref<1x256xf32, #tpu.memory_space<vmem>>, %arg6: memref<1xf32, #tpu.memory_space<smem>>, %arg7: memref<1xf32, #tpu.memory_space<smem>>, %arg8: memref<16x1xf32, #tpu.memory_space<vmem>>) attributes {dimension_semantics = [#tpu.dimension_semantics<parallel>], iteration_bounds = array<i64: 1>, scalar_prefetch = 0 : i64, scratch_operands = 0 : i64, tpu.core_type = #tpu.core_type<tc>, window_params = [{transform_indices = @transform_0, window_bounds = array<i64: 2, 16, 256>}, {pipeline_mode = #tpu.pipeline_mode<synchronous>, transform_indices = @transform_1, window_bounds = array<i64: 1, 256>}, {pipeline_mode = #tpu.pipeline_mode<synchronous>, transform_indices = @transform_2, window_bounds = array<i64: 256, 256>}, {pipeline_mode = #tpu.pipeline_mode<synchronous>, transform_indices = @transform_3, window_bounds = array<i64: 1, 256>}, {pipeline_mode = #tpu.pipeline_mode<synchronous>, transform_indices = @transform_4, window_bounds = array<i64: 1, 256>}, {transform_indices = @transform_5, window_bounds = array<i64: 1>}, {transform_indices = @transform_6, window_bounds = array<i64: 1>}, {transform_indices = @transform_7, window_bounds = array<i64: 16, 1>}]} {
    %c0 = arith.constant 0 : index
    %0 = memref.load %arg7[%c0] : memref<1xf32, #tpu.memory_space<smem>>
    %c0_0 = arith.constant 0 : index
    %c0_1 = arith.constant 0 : index
    %c0_2 = arith.constant 0 : index
    %1 = vector.load %arg1[%c0_0, %c0_1, %c0_2] : memref<2x16x256xf32, #tpu.memory_space<vmem>>, vector<2x16x256xf32>
    %cst = arith.constant dense<0.000000e+00> : vector<16x256xf32>
    %2 = vector.multi_reduction <add>, %1, %cst [0] : vector<2x16x256xf32> to vector<16x256xf32>
    %c0_3 = arith.constant 0 : index
    %c0_4 = arith.constant 0 : index
    %3 = vector.load %arg2[%c0_3, %c0_4] : memref<1x256xf32, #tpu.memory_space<vmem>>, vector<1x256xf32>
    %4 = vector.broadcast %3 : vector<1x256xf32> to vector<16x256xf32>
    %5 = arith.addf %2, %4 : vector<16x256xf32>
    %cst_5 = arith.constant 0.000000e+00 : f32
    %6 = vector.broadcast %cst_5 : f32 to vector<16x256xf32>
    %7 = arith.cmpf oge, %5, %6 : vector<16x256xf32>
    %8 = vector.broadcast %0 : f32 to vector<16x256xf32>
    %9 = arith.mulf %8, %5 : vector<16x256xf32>
    %10 = arith.select %7, %5, %9 : vector<16x256xi1>, vector<16x256xf32>
    %c0_6 = arith.constant 0 : index
    %c0_7 = arith.constant 0 : index
    %11 = vector.load %arg3[%c0_6, %c0_7] : memref<256x256xf32, #tpu.memory_space<vmem>>, vector<256x256xf32>
    %cst_8 = arith.constant dense<0.000000e+00> : vector<16x256xf32>
    %12 = tpu.matmul %10, %11, %cst_8 {dimension_numbers = #tpu.dot_dimension_numbers<[1], [0], [0], [1], [0, 0, 1, 1], [], []>} : vector<16x256xf32>, vector<256x256xf32>, vector<16x256xf32> -> vector<16x256xf32>
    %c0_9 = arith.constant 0 : index
    %c0_10 = arith.constant 0 : index
    %13 = vector.load %arg4[%c0_9, %c0_10] : memref<1x256xf32, #tpu.memory_space<vmem>>, vector<1x256xf32>
    %14 = vector.broadcast %13 : vector<1x256xf32> to vector<16x256xf32>
    %15 = arith.addf %12, %14 : vector<16x256xf32>
    %cst_11 = arith.constant 0.000000e+00 : f32
    %16 = vector.broadcast %cst_11 : f32 to vector<16x256xf32>
    %17 = arith.cmpf oge, %15, %16 : vector<16x256xf32>
    %18 = vector.broadcast %0 : f32 to vector<16x256xf32>
    %19 = arith.mulf %18, %15 : vector<16x256xf32>
    %20 = arith.select %17, %15, %19 : vector<16x256xi1>, vector<16x256xf32>
    %c0_12 = arith.constant 0 : index
    %c0_13 = arith.constant 0 : index
    %21 = vector.load %arg5[%c0_12, %c0_13] : memref<1x256xf32, #tpu.memory_space<vmem>>, vector<1x256xf32>
    %22 = vector.broadcast %21 : vector<1x256xf32> to vector<16x256xf32>
    %23 = arith.mulf %20, %22 : vector<16x256xf32>
    %cst_14 = arith.constant dense<0.000000e+00> : vector<16xf32>
    %24 = vector.multi_reduction <add>, %23, %cst_14 [1] : vector<16x256xf32> to vector<16xf32>
    %25 = vector.shape_cast %24 : vector<16xf32> to vector<16x1xf32>
    %c0_15 = arith.constant 0 : index
    %26 = memref.load %arg6[%c0_15] : memref<1xf32, #tpu.memory_space<smem>>
    %27 = vector.broadcast %26 : f32 to vector<16x1xf32>
    %28 = arith.addf %25, %27 : vector<16x1xf32>
    %c0_16 = arith.constant 0 : index
    %c0_17 = arith.constant 0 : index
    %29 = vector.load %arg8[%c0_16, %c0_17] : memref<16x1xf32, #tpu.memory_space<vmem>>, vector<16x1xf32>
    tpu.vector_store %arg8[%c0_16, %c0_17], %28 {strides = array<i32>} : memref<16x1xf32, #tpu.memory_space<vmem>>, vector<16x1xf32>,
    return
  }
  func.func @transform_0(%arg0: i32) -> (i32, i32, i32) {
    %c0_i32 = arith.constant 0 : i32
    %c0_i32_0 = arith.constant 0 : i32
    %c0_i32_1 = arith.constant 0 : i32
    return %c0_i32, %arg0, %c0_i32_0 : i32, i32, i32
  }
  func.func @transform_1(%arg0: i32) -> (i32, i32) {
    %c0_i32 = arith.constant 0 : i32
    %c0_i32_0 = arith.constant 0 : i32
    %c0_i32_1 = arith.constant 0 : i32
    return %c0_i32, %c0_i32_0 : i32, i32
  }
  func.func @transform_2(%arg0: i32) -> (i32, i32) {
    %c0_i32 = arith.constant 0 : i32
    %c0_i32_0 = arith.constant 0 : i32
    %c0_i32_1 = arith.constant 0 : i32
    return %c0_i32, %c0_i32_0 : i32, i32
  }
  func.func @transform_3(%arg0: i32) -> (i32, i32) {
    %c0_i32 = arith.constant 0 : i32
    %c0_i32_0 = arith.constant 0 : i32
    %c0_i32_1 = arith.constant 0 : i32
    return %c0_i32, %c0_i32_0 : i32, i32
  }
  func.func @transform_4(%arg0: i32) -> (i32, i32) {
    %c0_i32 = arith.constant 0 : i32
    %c0_i32_0 = arith.constant 0 : i32
    %c0_i32_1 = arith.constant 0 : i32
    return %c0_i32, %c0_i32_0 : i32, i32
  }
  func.func @transform_5(%arg0: i32) -> i32 {
    %c0_i32 = arith.constant 0 : i32
    %c0_i32_0 = arith.constant 0 : i32
    return %c0_i32 : i32
  }
  func.func @transform_6(%arg0: i32) -> i32 {
    %c0_i32 = arith.constant 0 : i32
    %c0_i32_0 = arith.constant 0 : i32
    return %c0_i32 : i32
  }
  func.func @transform_7(%arg0: i32) -> (i32, i32) {
    %c0_i32 = arith.constant 0 : i32
    %c0_i32_0 = arith.constant 0 : i32
    return %arg0, %c0_i32 : i32, i32
  }
}

</mosaic_0001>

<llo_original>
// kernel: feature_discriminator.3
$region0: #{feature_discriminator.3}
  #allocation0 [shape = 'u32[]', space=smem, size = 0x4, offset = 0x4, fixed_abs, tag = 'smem constant byte address 0x4 - core index']
  #allocation1 [shape = 'u32[144,128]{1,0:T(1,128)}', space=vmem, size = 0x12000, scoped, tag = 'internal scratch']
  #allocation2 [shape = 'f32[1]{0:T(128)S(6)}', space=smem, size = 0x200, scoped, tag = 'scoped memory for feature_discriminator.3']
  #allocation3 [shape = 'f32[1]{0:T(128)S(6)}', space=smem, size = 0x200, scoped, tag = 'scoped memory for feature_discriminator.3']
  %s0 = inlined_call_operand.vmem [shape: f32[2,16,256], index: 0, kind: input, shape index: {}]
  %s1 = inlined_call_operand.vmem [shape: f32[1,256], index: 1, kind: input, shape index: {}]
  %s2 = inlined_call_operand.vmem [shape: f32[256,256], index: 2, kind: input, shape index: {}]
  %s3 = inlined_call_operand.vmem [shape: f32[1,256], index: 3, kind: input, shape index: {}]
  %s4 = inlined_call_operand.vmem [shape: f32[1,256], index: 4, kind: input, shape index: {}]
  %s5 = inlined_call_operand.<no memory space> [shape: f32[1], index: 5, kind: input, shape index: {}]
  %s6 = inlined_call_operand.<no memory space> [shape: f32[1], index: 6, kind: input, shape index: {}]
  %s7 = inlined_call_operand.vmem [shape: f32[16,1], index: 7, kind: output, shape index: {}]
  %s8 = sld [smem:[#allocation0]]
  $region38: #{feature_discriminator.3} parent=0
    _
  %s10 = ssub.s32 1, %s8
  %s11 = scalar_select 0, %s10, %s8
  %12 = sst [smem:[#allocation2]] %s5
  %13 = sst [smem:[#allocation3]] %s6
  // Predicated region
  $region2: #{feature_discriminator.3} parent=0 // pred_check
    _
  $region3: #{feature_discriminator.3} parent=0 // pred_check_branch
    %15 = sbr.rel (0) target = $region5
  $region4: #{feature_discriminator.3} parent=0 // pred_region
    _
  $region5: #{feature_discriminator.3} parent=0 // pred_fallthru
    _
  // Predicated region
  $region6: #{feature_discriminator.3} parent=0 // pred_check
    _
  $region7: #{feature_discriminator.3} parent=0 // pred_check_branch
    %17 = sbr.rel (0) target = $region9
  $region8: #{feature_discriminator.3} parent=0 // pred_region
    _
  $region9: #{feature_discriminator.3} parent=0 // pred_fallthru
    _
  // Predicated region
  $region10: #{feature_discriminator.3} parent=0 // pred_check
    _
  $region11: #{feature_discriminator.3} parent=0 // pred_check_branch
    %19 = sbr.rel (0) target = $region13
  $region12: #{feature_discriminator.3} parent=0 // pred_region
    _
  $region13: #{feature_discriminator.3} parent=0 // pred_fallthru
    _
  // Predicated region
  $region14: #{feature_discriminator.3} parent=0 // pred_check
    _
  $region15: #{feature_discriminator.3} parent=0 // pred_check_branch
    %21 = sbr.rel (0) target = $region17
  $region16: #{feature_discriminator.3} parent=0 // pred_region
    _
  $region17: #{feature_discriminator.3} parent=0 // pred_fallthru
    _
  // Predicated region
  $region18: #{feature_discriminator.3} parent=0 // pred_check
    _
  $region19: #{feature_discriminator.3} parent=0 // pred_check_branch
    %23 = sbr.rel (0) target = $region21
  $region20: #{feature_discriminator.3} parent=0 // pred_region
    _
  $region21: #{feature_discriminator.3} parent=0 // pred_fallthru
    _
  // Predicated region
  $region22: #{feature_discriminator.3} parent=0 // pred_check
    _
  $region23: #{feature_discriminator.3} parent=0 // pred_check_branch
    %25 = sbr.rel (0) target = $region25
  $region24: #{feature_discriminator.3} parent=0 // pred_region
    _
  $region25: #{feature_discriminator.3} parent=0 // pred_fallthru
    _
  // Predicated region
  $region26: #{feature_discriminator.3} parent=0 // pred_check
    _
  $region27: #{feature_discriminator.3} parent=0 // pred_check_branch
    %27 = sbr.rel (0) target = $region29
  $region28: #{feature_discriminator.3} parent=0 // pred_region
    _
  $region29: #{feature_discriminator.3} parent=0 // pred_fallthru
    _
  %s28 = sld [smem:[#allocation3]]
  %v29 = vld [vmem:[%s0] sm:$0xff]
  %v30 = vld [vmem:[%s0 + $0x8] sm:$0xff]
  %v31 = vld [vmem:[%s0 + $0x10] sm:$0xff]
  %v32 = vld [vmem:[%s0 + $0x18] sm:$0xff]
  %v33 = vld [vmem:[%s0 + $0x20] sm:$0xff]
  %v34 = vld [vmem:[%s0 + $0x28] sm:$0xff]
  %v35 = vld [vmem:[%s0 + $0x30] sm:$0xff]
  %v36 = vld [vmem:[%s0 + $0x38] sm:$0xff]
  %v37 = vadd.f32 %v29, %v33
  %v38 = vadd.f32 %v30, %v34
  %v39 = vadd.f32 %v31, %v35
  %v40 = vadd.f32 %v32, %v36
  %v41 = vld [vmem:[%s1] sm:$0x3]
  %v43 = vlaneseq
  %v44 = vshrl.u32 %v43, 7
  %v45 = vsub.s32 0, %v44
  %v46 = vrot.slane %v41, %v45
  %v47 = vlaneseq
  %v48 = vshrl.u32 %v47, 7
  %v49 = vsub.s32 1, %v48
  %v50 = vrot.slane %v41, %v49
  %v53 = vadd.f32 %v37, %v46
  %v54 = vadd.f32 %v38, %v50
  %v55 = vadd.f32 %v39, %v46
  %v56 = vadd.f32 %v40, %v50
  %vm57 = vcmp.ge.f32.partialorder %v53, 0.0
  %vm58 = vcmp.ge.f32.partialorder %v54, 0.0
  %vm59 = vcmp.ge.f32.partialorder %v55, 0.0
  %vm60 = vcmp.ge.f32.partialorder %v56, 0.0
  %v61 = vstv %s28
  %v62 = vmul.f32 %v61, %v53
  %v63 = vmul.f32 %v61, %v54
  %v64 = vmul.f32 %v61, %v55
  %v65 = vmul.f32 %v61, %v56
  %v66 = vsel %vm57, %v53, %v62
  %v67 = vsel %vm58, %v54, %v63
  %v68 = vsel %vm59, %v55, %v64
  %v69 = vsel %vm60, %v56, %v65
  %v70 = vld [vmem:[%s2] sm:$0xff]
  %v71 = vld [vmem:[%s2 + $0x8] sm:$0xff]
  %v72 = vld [vmem:[%s2 + $0x10] sm:$0xff]
  %v73 = vld [vmem:[%s2 + $0x18] sm:$0xff]
  %v74 = vld [vmem:[%s2 + $0x20] sm:$0xff]
  %v75 = vld [vmem:[%s2 + $0x28] sm:$0xff]
  %v76 = vld [vmem:[%s2 + $0x30] sm:$0xff]
  %v77 = vld [vmem:[%s2 + $0x38] sm:$0xff]
  %v78 = vld [vmem:[%s2 + $0x40] sm:$0xff]
  %v79 = vld [vmem:[%s2 + $0x48] sm:$0xff]
  %v80 = vld [vmem:[%s2 + $0x50] sm:$0xff]
  %v81 = vld [vmem:[%s2 + $0x58] sm:$0xff]
  %v82 = vld [vmem:[%s2 + $0x60] sm:$0xff]
  %v83 = vld [vmem:[%s2 + $0x68] sm:$0xff]
  %v84 = vld [vmem:[%s2 + $0x70] sm:$0xff]
  %v85 = vld [vmem:[%s2 + $0x78] sm:$0xff]
  %v86 = vld [vmem:[%s2 + $0x80] sm:$0xff]
  %v87 = vld [vmem:[%s2 + $0x88] sm:$0xff]
  %v88 = vld [vmem:[%s2 + $0x90] sm:$0xff]
  %v89 = vld [vmem:[%s2 + $0x98] sm:$0xff]
  %v90 = vld [vmem:[%s2 + $0xa0] sm:$0xff]
  %v91 = vld [vmem:[%s2 + $0xa8] sm:$0xff]
  %v92 = vld [vmem:[%s2 + $0xb0] sm:$0xff]
  %v93 = vld [vmem:[%s2 + $0xb8] sm:$0xff]
  %v94 = vld [vmem:[%s2 + $0xc0] sm:$0xff]
  %v95 = vld [vmem:[%s2 + $0xc8] sm:$0xff]
  %v96 = vld [vmem:[%s2 + $0xd0] sm:$0xff]
  %v97 = vld [vmem:[%s2 + $0xd8] sm:$0xff]
  %v98 = vld [vmem:[%s2 + $0xe0] sm:$0xff]
  %v99 = vld [vmem:[%s2 + $0xe8] sm:$0xff]
  %v100 = vld [vmem:[%s2 + $0xf0] sm:$0xff]
  %v101 = vld [vmem:[%s2 + $0xf8] sm:$0xff]
  %v102 = vld [vmem:[%s2 + $0x100] sm:$0xff]
  %v103 = vld [vmem:[%s2 + $0x108] sm:$0xff]
  %v104 = vld [vmem:[%s2 + $0x110] sm:$0xff]
  %v105 = vld [vmem:[%s2 + $0x118] sm:$0xff]
  %v106 = vld [vmem:[%s2 + $0x120] sm:$0xff]
  %v107 = vld [vmem:[%s2 + $0x128] sm:$0xff]
  %v108 = vld [vmem:[%s2 + $0x130] sm:$0xff]
  %v109 = vld [vmem:[%s2 + $0x138] sm:$0xff]
  %v110 = vld [vmem:[%s2 + $0x140] sm:$0xff]
  %v111 = vld [vmem:[%s2 + $0x148] sm:$0xff]
  %v112 = vld [vmem:[%s2 + $0x150] sm:$0xff]
  %v113 = vld [vmem:[%s2 + $0x158] sm:$0xff]
  %v114 = vld [vmem:[%s2 + $0x160] sm:$0xff]
  %v115 = vld [vmem:[%s2 + $0x168] sm:$0xff]
  %v116 = vld [vmem:[%s2 + $0x170] sm:$0xff]
  %v117 = vld [vmem:[%s2 + $0x178] sm:$0xff]
  %v118 = vld [vmem:[%s2 + $0x180] sm:$0xff]
  %v119 = vld [vmem:[%s2 + $0x188] sm:$0xff]
  %v120 = vld [vmem:[%s2 + $0x190] sm:$0xff]
  %v121 = vld [vmem:[%s2 + $0x198] sm:$0xff]
  %v122 = vld [vmem:[%s2 + $0x1a0] sm:$0xff]
  %v123 = vld [vmem:[%s2 + $0x1a8] sm:$0xff]
  %v124 = vld [vmem:[%s2 + $0x1b0] sm:$0xff]
  %v125 = vld [vmem:[%s2 + $0x1b8] sm:$0xff]
  %v126 = vld [vmem:[%s2 + $0x1c0] sm:$0xff]
  %v127 = vld [vmem:[%s2 + $0x1c8] sm:$0xff]
  %v128 = vld [vmem:[%s2 + $0x1d0] sm:$0xff]
  %v129 = vld [vmem:[%s2 + $0x1d8] sm:$0xff]
  %v130 = vld [vmem:[%s2 + $0x1e0] sm:$0xff]
  %v131 = vld [vmem:[%s2 + $0x1e8] sm:$0xff]
  %v132 = vld [vmem:[%s2 + $0x1f0] sm:$0xff]
  %v133 = vld [vmem:[%s2 + $0x1f8] sm:$0xff]
  %v134 = vld [vmem:[%s3] sm:$0x3]
  %v136 = vlaneseq
  %v137 = vshrl.u32 %v136, 7
  %v138 = vsub.s32 0, %v137
  %v139 = vrot.slane %v134, %v138
  %v140 = vlaneseq
  %v141 = vshrl.u32 %v140, 7
  %v142 = vsub.s32 1, %v141
  %v143 = vrot.slane %v134, %v142
  %146 = vmatprep.subr.mxu0 %v71
  %147 = vmatpush1.msra.mxu0 %v70
  %148 = vmatprep.subr.mxu0 %v73
  %149 = vmatpush1.msra.mxu0 %v72
  %150 = vmatprep.subr.mxu0 %v75
  %151 = vmatpush1.msra.mxu0 %v74
  %152 = vmatprep.subr.mxu0 %v77
  %153 = vmatpush1.msra.mxu0 %v76
  %154 = vmatprep.subr.mxu0 %v79
  %155 = vmatpush1.msra.mxu0 %v78
  %156 = vmatprep.subr.mxu0 %v81
  %157 = vmatpush1.msra.mxu0 %v80
  %158 = vmatprep.subr.mxu0 %v83
  %159 = vmatpush1.msra.mxu0 %v82
  %160 = vmatprep.subr.mxu0 %v85
  %161 = vmatpush1.msra.mxu0 %v84
  %162 = vmatprep.subr.mxu0 %v87
  %163 = vmatpush1.msra.mxu0 %v86
  %164 = vmatprep.subr.mxu0 %v89
  %165 = vmatpush1.msra.mxu0 %v88
  %166 = vmatprep.subr.mxu0 %v91
  %167 = vmatpush1.msra.mxu0 %v90
  %168 = vmatprep.subr.mxu0 %v93
  %169 = vmatpush1.msra.mxu0 %v92
  %170 = vmatprep.subr.mxu0 %v95
  %171 = vmatpush1.msra.mxu0 %v94
  %172 = vmatprep.subr.mxu0 %v97
  %173 = vmatpush1.msra.mxu0 %v96
  %174 = vmatprep.subr.mxu0 %v99
  %175 = vmatpush1.msra.mxu0 %v98
  %176 = vmatprep.subr.mxu0 %v101
  %177 = vmatpush1.msra.mxu0 %v100
  %178 = vmatprep.subr.mxu0 %v103
  %179 = vmatpush1.msra.mxu0 %v102
  %180 = vmatprep.subr.mxu0 %v105
  %181 = vmatpush1.msra.mxu0 %v104
  %182 = vmatprep.subr.mxu0 %v107
  %183 = vmatpush1.msra.mxu0 %v106
  %184 = vmatprep.subr.mxu0 %v109
  %185 = vmatpush1.msra.mxu0 %v108
  %186 = vmatprep.subr.mxu0 %v111
  %187 = vmatpush1.msra.mxu0 %v110
  %188 = vmatprep.subr.mxu0 %v113
  %189 = vmatpush1.msra.mxu0 %v112
  %190 = vmatprep.subr.mxu0 %v115
  %191 = vmatpush1.msra.mxu0 %v114
  %192 = vmatprep.subr.mxu0 %v117
  %193 = vmatpush1.msra.mxu0 %v116
  %194 = vmatprep.subr.mxu0 %v119
  %195 = vmatpush1.msra.mxu0 %v118
  %196 = vmatprep.subr.mxu0 %v121
  %197 = vmatpush1.msra.mxu0 %v120
  %198 = vmatprep.subr.mxu0 %v123
  %199 = vmatpush1.msra.mxu0 %v122
  %200 = vmatprep.subr.mxu0 %v125
  %201 = vmatpush1.msra.mxu0 %v124
  %202 = vmatprep.subr.mxu0 %v127
  %203 = vmatpush1.msra.mxu0 %v126
  %204 = vmatprep.subr.mxu0 %v129
  %205 = vmatpush1.msra.mxu0 %v128
  %206 = vmatprep.subr.mxu0 %v131
  %207 = vmatpush1.msra.mxu0 %v130
  %208 = vmatprep.subr.mxu0 %v133
  %209 = vmatpush1.msra.mxu0 %v132
  %210 = vmatprep.mubr.f32.mxu0 %v67
  %211 = vmatmul.mubr.f32.gmra.mrb[0].mxu0 %v66
  %v212 = vpop.f32.mrb[0].mxu0
  %v213 = vadd.f32 %v139, %v212
  %v214 = vpop.f32.mrb[0].mxu0
  %v215 = vadd.f32 %v143, %v214
  %216 = vmatprep.mubr.f32.mxu0 %v69
  %217 = vmatmul.mubr.f32.gmra.mrb[0].mxu0 %v68
  %v218 = vpop.f32.mrb[0].mxu0
  %v219 = vadd.f32 %v139, %v218
  %v220 = vpop.f32.mrb[0].mxu0
  %v221 = vadd.f32 %v143, %v220
  %222 = vdwg.mxu0
  %vm223 = vcmp.ge.f32.partialorder %v213, 0.0
  %vm224 = vcmp.ge.f32.partialorder %v215, 0.0
  %vm225 = vcmp.ge.f32.partialorder %v219, 0.0
  %vm226 = vcmp.ge.f32.partialorder %v221, 0.0
  %v227 = vmul.f32 %v61, %v213
  %v228 = vmul.f32 %v61, %v215
  %v229 = vmul.f32 %v61, %v219
  %v230 = vmul.f32 %v61, %v221
  %v231 = vsel %vm223, %v213, %v227
  %v232 = vsel %vm224, %v215, %v228
  %v233 = vsel %vm225, %v219, %v229
  %v234 = vsel %vm226, %v221, %v230
  %v235 = vld [vmem:[%s4] sm:$0x3]
  %v237 = vlaneseq
  %v238 = vshrl.u32 %v237, 7
  %v239 = vsub.s32 0, %v238
  %v240 = vrot.slane %v235, %v239
  %v241 = vlaneseq
  %v242 = vshrl.u32 %v241, 7
  %v243 = vsub.s32 1, %v242
  %v244 = vrot.slane %v235, %v243
  %v247 = vmul.f32 %v231, %v240
  %v248 = vmul.f32 %v232, %v244
  %v249 = vmul.f32 %v233, %v240
  %v250 = vmul.f32 %v234, %v244
  %v251 = vadd.f32 %v247, %v248
  %252 = vadd.xlane.f32.xlu0 %v251
  %v253 = vpop.xlane.xlu0 %252
  %v254 = vadd.f32 %v249, %v250
  %255 = vadd.xlane.f32.xlu0 %v254
  %v256 = vpop.xlane.xlu0 %255
  %s257 = sld [smem:[#allocation2]]
  %v258 = vstv %s257
  %v259 = vadd.f32 %v253, %v258
  %v260 = vadd.f32 %v256, %v258
  %vm261 = vcmask 7168
  %262 = vst.msk [vmem:[%s7] sm:$0xff] %vm261, %v259
  %263 = vst.msk [vmem:[%s7 + $0x8] sm:$0xff] %vm261, %v260
  // Predicated region
  $region30: #{feature_discriminator.3} parent=0 // pred_check
    _
  $region31: #{feature_discriminator.3} parent=0 // pred_check_branch
    %265 = sbr.rel (0) target = $region33
  $region32: #{feature_discriminator.3} parent=0 // pred_region
    _
  $region33: #{feature_discriminator.3} parent=0 // pred_fallthru
    _
  // Predicated region
  $region34: #{feature_discriminator.3} parent=0 // pred_check
    _
  $region35: #{feature_discriminator.3} parent=0 // pred_check_branch
    %267 = sbr.rel (0) target = $region37
  $region36: #{feature_discriminator.3} parent=0 // pred_region
    _
  $region37: #{feature_discriminator.3} parent=0 // pred_fallthru
    _

// kernel: feature_discriminator.2
$region0: #{feature_discriminator.2}
  #allocation0 [shape = 'u32[]', space=smem, size = 0x4, offset = 0x4, fixed_abs, tag = 'smem constant byte address 0x4 - core index']
  #allocation1 [shape = 'u32[144,128]{1,0:T(1,128)}', space=vmem, size = 0x12000, scoped, tag = 'internal scratch']
  #allocation2 [shape = 'f32[16,256]{1,0:T(8,128)}', space=vmem, size = 0x4000, scoped, tag = 'scratch operand']
  %s0 = inlined_call_operand.vmem [shape: bf16[16,65536], index: 0, kind: input, shape index: {}]
  %s1 = inlined_call_operand.hbm [shape: bf16[65536,256], index: 1, kind: input, shape index: {}]
  %s2 = inlined_call_operand.vmem [shape: f32[2,16,256], index: 2, kind: output, shape index: {}]
  %s3 = sld [smem:[#allocation0]]
  $region76: #{feature_discriminator.2} parent=0
    _
  %s5 = ssub.s32 1, %s3
  %s6 = scalar_select 0, %s5, %s3
  $region1: #{feature_discriminator.2} parent=0
    #allocation3 [shape = 'u8[524288]{0}', space=vmem, size = 0x80000, scoped, tag = 'input window, operand 0']
    #allocation4 [shape = 'u8[8388608]{0}', space=vmem, size = 0x800000, scoped, tag = 'input window, operand 1']
    #allocation5 [shape = 's32[2]{0}', space=sflag, size = 0x8, scoped, tag = 'scoped memory for feature_discriminator.2']
    %7 = vsyncpa [#allocation5], 0
    %s8 = scalar_lea.sflag [#allocation5], 1
    %9 = vsyncpa %s8, 0
    loop: start=0, step=1, limit=10
    $region2: #{feature_discriminator.2} parent=1 // loop_pre_header
      _
    $region3: #{feature_discriminator.2} parent=1 // loop_header
      %s11 = sphi 0, %s15
      %p12 = scmp.ge.s32.totalorder %s11, 10
      %s18 = sphi 0, %s37
      %s19 = sphi 0, %s33
      %s20 = sphi 0, %s29
      %s21 = sphi 0, %s18
      %s22 = sphi 0, %s19
      %s23 = sphi 0, %s20
      %s24 = sphi 0, %s21
      %s25 = sphi 0, %s22
      %s26 = sphi 0, %s23
      %s46 = sphi 0, %s48
      %s49 = sphi 0, %s46
      %s50 = sphi 0, %s49
      %s66 = sphi 0, %s50
      %s76 = sphi 0, %s78
      %s79 = sphi 0, %s76
      %s80 = sphi 0, %s79
      %s96 = sphi 0, %s80
      %s104 = sphi 0, %s106
      %s107 = sphi 0, %s104
      %s108 = sphi 0, %s107
      %s124 = sphi 0, %s108
    $region4: #{feature_discriminator.2} parent=1 // loop_header_branch
      %14 = sbr.rel (%p12) target = $region8
    $region5: #{feature_discriminator.2} parent=1 // loop_body
      %s16 = ssub.s32 %s11, 1
      %s17 = ssub.s32 %s11, 2
      %s27 = sadd.s32 1, %s20
      %p28 = scmp.ge.s32.totalorder %s27, 4
      %s29 = scalar_select %p28, 0, %s27
      %s30 = sadd.s32 1, %s19
      %s31 = scalar_select %p28, %s30, %s19
      %p32 = scmp.ge.s32.totalorder %s31, 1
      %s33 = scalar_select %p32, 0, %s31
      %s34 = sadd.s32 1, %s18
      %s35 = scalar_select %p32, %s34, %s18
      %p36 = scmp.ge.s32.totalorder %s35, 2
      %s37 = scalar_select %p36, 0, %s35
      %s38 = smul.u32 %s18, 4
      %s39 = sadd.s32 %s38, %s20
      %s40 = smul.u32 %s37, 4
      %s41 = sadd.s32 %s40, %s29
      %s42 = ssub.s32 %s19, %s33
      %s43 = ssub.s32 %s39, %s41
      %s44 = sor.u32 %s42, %s43
      %p45 = scmp.eq.s32.totalorder %s44, 0
      %s47 = sadd.s32 %s46, 1
      %s48 = scalar_select %p45, %s46, %s47
      %p51 = pneg %p45
      %p52 = scmp.eq.s32.totalorder %s11, 7
      %p53 = por %p51, %p52
      %p54 = scmp.ne.s32.totalorder %s46, %s49
      %p55 = scmp.eq.s32.totalorder %s11, 0
      %p56 = por %p54, %p55
      %p57 = scmp.ne.s32.totalorder %s46, %s49
      %p58 = scmp.eq.s32.totalorder %s16, 7
      %p59 = por %p57, %p58
      %p60 = scmp.ne.s32.totalorder %s49, %s50
      %p61 = scmp.eq.s32.totalorder %s16, 0
      %p62 = por %p60, %p61
      %p63 = scmp.ne.s32.totalorder %s49, %s50
      %p64 = scmp.eq.s32.totalorder %s17, 7
      %p65 = por %p63, %p64
      %p67 = scmp.ne.s32.totalorder %s50, %s66
      %p68 = scmp.eq.s32.totalorder %s17, 0
      %p69 = por %p67, %p68
      %s70 = smul.u32 %s18, 4
      %s71 = sadd.s32 %s70, %s20
      %s72 = smul.u32 %s37, 4
      %s73 = sadd.s32 %s72, %s29
      %s74 = ssub.s32 %s71, %s73
      %p75 = scmp.eq.s32.totalorder %s74, 0
      %s77 = sadd.s32 %s76, 1
      %s78 = scalar_select %p75, %s76, %s77
      %p81 = pneg %p75
      %p82 = scmp.eq.s32.totalorder %s11, 7
      %p83 = por %p81, %p82
      %p84 = scmp.ne.s32.totalorder %s76, %s79
      %p85 = scmp.eq.s32.totalorder %s11, 0
      %p86 = por %p84, %p85
      %p87 = scmp.ne.s32.totalorder %s76, %s79
      %p88 = scmp.eq.s32.totalorder %s16, 7
      %p89 = por %p87, %p88
      %p90 = scmp.ne.s32.totalorder %s79, %s80
      %p91 = scmp.eq.s32.totalorder %s16, 0
      %p92 = por %p90, %p91
      %p93 = scmp.ne.s32.totalorder %s79, %s80
      %p94 = scmp.eq.s32.totalorder %s17, 7
      %p95 = por %p93, %p94
      %p97 = scmp.ne.s32.totalorder %s80, %s96
      %p98 = scmp.eq.s32.totalorder %s17, 0
      %p99 = por %p97, %p98
      %s100 = ssub.s32 %s18, %s37
      %s101 = ssub.s32 %s19, %s33
      %s102 = sor.u32 %s100, %s101
      %p103 = scmp.eq.s32.totalorder %s102, 0
      %s105 = sadd.s32 %s104, 1
      %s106 = scalar_select %p103, %s104, %s105
      %p109 = pneg %p103
      %p110 = scmp.eq.s32.totalorder %s11, 7
      %p111 = por %p109, %p110
      %p112 = scmp.ne.s32.totalorder %s104, %s107
      %p113 = scmp.eq.s32.totalorder %s11, 0
      %p114 = por %p112, %p113
      %p115 = scmp.ne.s32.totalorder %s104, %s107
      %p116 = scmp.eq.s32.totalorder %s16, 7
      %p117 = por %p115, %p116
      %p118 = scmp.ne.s32.totalorder %s107, %s108
      %p119 = scmp.eq.s32.totalorder %s16, 0
      %p120 = por %p118, %p119
      %p121 = scmp.ne.s32.totalorder %s107, %s108
      %p122 = scmp.eq.s32.totalorder %s17, 7
      %p123 = por %p121, %p122
      %p125 = scmp.ne.s32.totalorder %s108, %s124
      %p126 = scmp.eq.s32.totalorder %s17, 0
      %p127 = por %p125, %p126
      %p128 = scmp.le.s32.totalorder 1, %s11
      %p129 = scmp.lt.s32.totalorder %s11, 9
      %p130 = pnand %p128, %p129
      %p131 = pneg %p130
      // Predicated region
      $region9: #{feature_discriminator.2} parent=5 // pred_check
        _
      $region10: #{feature_discriminator.2} parent=5 // pred_check_branch
        %133 = sbr.rel (%p130) target = $region12
      $region11: #{feature_discriminator.2} parent=5 // pred_region
        %s134 = ssub.s32 %s11, 1
      $region12: #{feature_discriminator.2} parent=5 // pred_fallthru
        _
      %p135 = scmp.lt.s32.totalorder %s11, 8
      // Predicated region
      $region13: #{feature_discriminator.2} parent=5 // pred_check
        %p136 = pneg %p135
      $region14: #{feature_discriminator.2} parent=5 // pred_check_branch
        %138 = sbr.rel (%p136) target = $region16
      $region15: #{feature_discriminator.2} parent=5 // pred_region
        // Predicated region
        $region17: #{feature_discriminator.2} parent=15 // pred_check
          %p139 = pneg %p56
        $region18: #{feature_discriminator.2} parent=15 // pred_check_branch
          %141 = sbr.rel (%p139) target = $region20
        $region19: #{feature_discriminator.2} parent=15 // pred_region
          %s142 = sand.u32 %s46, 1
          %s143 = sand.u32 %s46, 1
          %s144 = smul.addr %s143, 512
          %s145 = scalar_lea.vmem [#allocation3], %s144
          %s146 = smul.u32 %s18, 4
          %s147 = sadd.s32 %s146, %s20
          %s148 = smul.u32 2, %s19
          %s149 = smul.u32 64, %s147
          %s150 = smul.addr %s148, 512
          %s151 = sadd.s32 %s149, %s150
          %s152 = smul.addr %s151, 4
          %s153 = scalar_lea.vmem %s0, %s152
          // Predicated region
          $region21: #{feature_discriminator.2} parent=19 // pred_check
            _
          $region22: #{feature_discriminator.2} parent=19 // pred_check_branch
            %155 = sbr.rel (0) target = $region24
          $region23: #{feature_discriminator.2} parent=19 // pred_region
            // Predicated region
            $region25: #{feature_discriminator.2} parent=23 // pred_check
              _
            $region26: #{feature_discriminator.2} parent=23 // pred_check_branch
              %157 = sbr.rel (0) target = $region28
            $region27: #{feature_discriminator.2} parent=23 // pred_region
              loop: start=0, step=1, limit=1
              $region29: #{feature_discriminator.2} parent=27 // loop_pre_header
                _
              $region30: #{feature_discriminator.2} parent=27 // loop_header
                %s159 = sphi 0, %s163
                %p160 = scmp.ge.s32.totalorder %s159, 1
                %s164 = sphi %s153, %s153
                %s165 = sphi %s145, %s145
              $region31: #{feature_discriminator.2} parent=27 // loop_header_branch
                %162 = sbr.rel (%p160) target = $region35
              $region32: #{feature_discriminator.2} parent=27 // loop_body
                %v166 = vld [vmem:[%s164] sm:$0xff]
                %167 = vst [vmem:[%s165] sm:$0xff] %v166
                %v168 = vld [vmem:[%s164 + $0x8] sm:$0xff]
                %169 = vst [vmem:[%s165 + $0x8] sm:$0xff] %v168
                %v170 = vld [vmem:[%s164 + $0x10] sm:$0xff]
                %171 = vst [vmem:[%s165 + $0x10] sm:$0xff] %v170
                %v172 = vld [vmem:[%s164 + $0x18] sm:$0xff]
                %173 = vst [vmem:[%s165 + $0x18] sm:$0xff] %v172
                %v174 = vld [vmem:[%s164 + $0x20] sm:$0xff]
                %175 = vst [vmem:[%s165 + $0x20] sm:$0xff] %v174
                %v176 = vld [vmem:[%s164 + $0x28] sm:$0xff]
                %177 = vst [vmem:[%s165 + $0x28] sm:$0xff] %v176
                %v178 = vld [vmem:[%s164 + $0x30] sm:$0xff]
                %179 = vst [vmem:[%s165 + $0x30] sm:$0xff] %v178
                %v180 = vld [vmem:[%s164 + $0x38] sm:$0xff]
                %181 = vst [vmem:[%s165 + $0x38] sm:$0xff] %v180
                %v182 = vld [vmem:[%s164 + $0x40] sm:$0xff]
                %183 = vst [vmem:[%s165 + $0x40] sm:$0xff] %v182
                %v184 = vld [vmem:[%s164 + $0x48] sm:$0xff]
                %185 = vst [vmem:[%s165 + $0x48] sm:$0xff] %v184
                %v186 = vld [vmem:[%s164 + $0x50] sm:$0xff]
                %187 = vst [vmem:[%s165 + $0x50] sm:$0xff] %v186
                %v188 = vld [vmem:[%s164 + $0x58] sm:$0xff]
                %189 = vst [vmem:[%s165 + $0x58] sm:$0xff] %v188
                %v190 = vld [vmem:[%s164 + $0x60] sm:$0xff]
                %191 = vst [vmem:[%s165 + $0x60] sm:$0xff] %v190
                %v192 = vld [vmem:[%s164 + $0x68] sm:$0xff]
                %193 = vst [vmem:[%s165 + $0x68] sm:$0xff] %v192
                %v194 = vld [vmem:[%s164 + $0x70] sm:$0xff]
                %195 = vst [vmem:[%s165 + $0x70] sm:$0xff] %v194
                %v196 = vld [vmem:[%s164 + $0x78] sm:$0xff]
                %197 = vst [vmem:[%s165 + $0x78] sm:$0xff] %v196
                %v198 = vld [vmem:[%s164 + $0x80] sm:$0xff]
                %199 = vst [vmem:[%s165 + $0x80] sm:$0xff] %v198
                %v200 = vld [vmem:[%s164 + $0x88] sm:$0xff]
                %201 = vst [vmem:[%s165 + $0x88] sm:$0xff] %v200
                %v202 = vld [vmem:[%s164 + $0x90] sm:$0xff]
                %203 = vst [vmem:[%s165 + $0x90] sm:$0xff] %v202
                %v204 = vld [vmem:[%s164 + $0x98] sm:$0xff]
                %205 = vst [vmem:[%s165 + $0x98] sm:$0xff] %v204
                %v206 = vld [vmem:[%s164 + $0xa0] sm:$0xff]
                %207 = vst [vmem:[%s165 + $0xa0] sm:$0xff] %v206
                %v208 = vld [vmem:[%s164 + $0xa8] sm:$0xff]
                %209 = vst [vmem:[%s165 + $0xa8] sm:$0xff] %v208
                %v210 = vld [vmem:[%s164 + $0xb0] sm:$0xff]
                %211 = vst [vmem:[%s165 + $0xb0] sm:$0xff] %v210
                %v212 = vld [vmem:[%s164 + $0xb8] sm:$0xff]
                %213 = vst [vmem:[%s165 + $0xb8] sm:$0xff] %v212
                %v214 = vld [vmem:[%s164 + $0xc0] sm:$0xff]
                %215 = vst [vmem:[%s165 + $0xc0] sm:$0xff] %v214
                %v216 = vld [vmem:[%s164 + $0xc8] sm:$0xff]
                %217 = vst [vmem:[%s165 + $0xc8] sm:$0xff] %v216
                %v218 = vld [vmem:[%s164 + $0xd0] sm:$0xff]
                %219 = vst [vmem:[%s165 + $0xd0] sm:$0xff] %v218
                %v220 = vld [vmem:[%s164 + $0xd8] sm:$0xff]
                %221 = vst [vmem:[%s165 + $0xd8] sm:$0xff] %v220
                %v222 = vld [vmem:[%s164 + $0xe0] sm:$0xff]
                %223 = vst [vmem:[%s165 + $0xe0] sm:$0xff] %v222
                %v224 = vld [vmem:[%s164 + $0xe8] sm:$0xff]
                %225 = vst [vmem:[%s165 + $0xe8] sm:$0xff] %v224
                %v226 = vld [vmem:[%s164 + $0xf0] sm:$0xff]
                %227 = vst [vmem:[%s165 + $0xf0] sm:$0xff] %v226
                %v228 = vld [vmem:[%s164 + $0xf8] sm:$0xff]
                %229 = vst [vmem:[%s165 + $0xf8] sm:$0xff] %v228
                %v230 = vld [vmem:[%s164 + $0x800] sm:$0xff]
                %231 = vst [vmem:[%s165 + $0x100] sm:$0xff] %v230
                %v232 = vld [vmem:[%s164 + $0x808] sm:$0xff]
                %233 = vst [vmem:[%s165 + $0x108] sm:$0xff] %v232
                %v234 = vld [vmem:[%s164 + $0x810] sm:$0xff]
                %235 = vst [vmem:[%s165 + $0x110] sm:$0xff] %v234
                %v236 = vld [vmem:[%s164 + $0x818] sm:$0xff]
                %237 = vst [vmem:[%s165 + $0x118] sm:$0xff] %v236
                %v238 = vld [vmem:[%s164 + $0x820] sm:$0xff]
                %239 = vst [vmem:[%s165 + $0x120] sm:$0xff] %v238
                %v240 = vld [vmem:[%s164 + $0x828] sm:$0xff]
                %241 = vst [vmem:[%s165 + $0x128] sm:$0xff] %v240
                %v242 = vld [vmem:[%s164 + $0x830] sm:$0xff]
                %243 = vst [vmem:[%s165 + $0x130] sm:$0xff] %v242
                %v244 = vld [vmem:[%s164 + $0x838] sm:$0xff]
                %245 = vst [vmem:[%s165 + $0x138] sm:$0xff] %v244
                %v246 = vld [vmem:[%s164 + $0x840] sm:$0xff]
                %247 = vst [vmem:[%s165 + $0x140] sm:$0xff] %v246
                %v248 = vld [vmem:[%s164 + $0x848] sm:$0xff]
                %249 = vst [vmem:[%s165 + $0x148] sm:$0xff] %v248
                %v250 = vld [vmem:[%s164 + $0x850] sm:$0xff]
                %251 = vst [vmem:[%s165 + $0x150] sm:$0xff] %v250
                %v252 = vld [vmem:[%s164 + $0x858] sm:$0xff]
                %253 = vst [vmem:[%s165 + $0x158] sm:$0xff] %v252
                %v254 = vld [vmem:[%s164 + $0x860] sm:$0xff]
                %255 = vst [vmem:[%s165 + $0x160] sm:$0xff] %v254
                %v256 = vld [vmem:[%s164 + $0x868] sm:$0xff]
                %257 = vst [vmem:[%s165 + $0x168] sm:$0xff] %v256
                %v258 = vld [vmem:[%s164 + $0x870] sm:$0xff]
                %259 = vst [vmem:[%s165 + $0x170] sm:$0xff] %v258
                %v260 = vld [vmem:[%s164 + $0x878] sm:$0xff]
                %261 = vst [vmem:[%s165 + $0x178] sm:$0xff] %v260
                %v262 = vld [vmem:[%s164 + $0x880] sm:$0xff]
                %263 = vst [vmem:[%s165 + $0x180] sm:$0xff] %v262
                %v264 = vld [vmem:[%s164 + $0x888] sm:$0xff]
                %265 = vst [vmem:[%s165 + $0x188] sm:$0xff] %v264
                %v266 = vld [vmem:[%s164 + $0x890] sm:$0xff]
                %267 = vst [vmem:[%s165 + $0x190] sm:$0xff] %v266
                %v268 = vld [vmem:[%s164 + $0x898] sm:$0xff]
                %269 = vst [vmem:[%s165 + $0x198] sm:$0xff] %v268
                %v270 = vld [vmem:[%s164 + $0x8a0] sm:$0xff]
                %271 = vst [vmem:[%s165 + $0x1a0] sm:$0xff] %v270
                %v272 = vld [vmem:[%s164 + $0x8a8] sm:$0xff]
                %273 = vst [vmem:[%s165 + $0x1a8] sm:$0xff] %v272
                %v274 = vld [vmem:[%s164 + $0x8b0] sm:$0xff]
                %275 = vst [vmem:[%s165 + $0x1b0] sm:$0xff] %v274
                %v276 = vld [vmem:[%s164 + $0x8b8] sm:$0xff]
                %277 = vst [vmem:[%s165 + $0x1b8] sm:$0xff] %v276
                %v278 = vld [vmem:[%s164 + $0x8c0] sm:$0xff]
                %279 = vst [vmem:[%s165 + $0x1c0] sm:$0xff] %v278
                %v280 = vld [vmem:[%s164 + $0x8c8] sm:$0xff]
                %281 = vst [vmem:[%s165 + $0x1c8] sm:$0xff] %v280
                %v282 = vld [vmem:[%s164 + $0x8d0] sm:$0xff]
                %283 = vst [vmem:[%s165 + $0x1d0] sm:$0xff] %v282
                %v284 = vld [vmem:[%s164 + $0x8d8] sm:$0xff]
                %285 = vst [vmem:[%s165 + $0x1d8] sm:$0xff] %v284
                %v286 = vld [vmem:[%s164 + $0x8e0] sm:$0xff]
                %287 = vst [vmem:[%s165 + $0x1e0] sm:$0xff] %v286
                %v288 = vld [vmem:[%s164 + $0x8e8] sm:$0xff]
                %289 = vst [vmem:[%s165 + $0x1e8] sm:$0xff] %v288
                %v290 = vld [vmem:[%s164 + $0x8f0] sm:$0xff]
                %291 = vst [vmem:[%s165 + $0x1f0] sm:$0xff] %v290
                %v292 = vld [vmem:[%s164 + $0x8f8] sm:$0xff]
                %293 = vst [vmem:[%s165 + $0x1f8] sm:$0xff] %v292
              $region33: #{feature_discriminator.2} parent=27 // loop_footer
                %s163 = sadd.s32 1, %s159
              $region34: #{feature_discriminator.2} parent=27 // loop_footer_branch
                %158 = sbr.rel target = $region30
              $region35: #{feature_discriminator.2} parent=27 // loop_exit
                _
            $region28: #{feature_discriminator.2} parent=23 // pred_fallthru
              _
            // Predicated region
            $region36: #{feature_discriminator.2} parent=23 // pred_check
              _
            $region37: #{feature_discriminator.2} parent=23 // pred_check_branch
              %295 = sbr.rel target = $region39
            $region38: #{feature_discriminator.2} parent=23 // pred_region
              _
            $region39: #{feature_discriminator.2} parent=23 // pred_fallthru
              _
          $region24: #{feature_discriminator.2} parent=19 // pred_fallthru
            _
          %296 = vnop
        $region20: #{feature_discriminator.2} parent=15 // pred_fallthru
          _
        // Predicated region
        $region40: #{feature_discriminator.2} parent=15 // pred_check
          %p297 = pneg %p86
        $region41: #{feature_discriminator.2} parent=15 // pred_check_branch
          %299 = sbr.rel (%p297) target = $region43
        $region42: #{feature_discriminator.2} parent=15 // pred_region
          %s300 = sand.u32 %s76, 1
          %s301 = scalar_lea.sflag [#allocation5], %s300
          %s302 = sand.u32 %s76, 1
          %s303 = smul.addr %s302, 8192
          %s304 = scalar_lea.vmem [#allocation4], %s303
          %s305 = smul.u32 %s18, 4
          %s306 = sadd.s32 %s305, %s20
          %s307 = smul.u32 1024, %s306
          %s309 = ssub.s32 131072, 131072
          %310 = vsyncadd %s301, %s309
          %s311 = smul.addr %s307, 2
          %s312 = smul.addr %s311, 64
          %s313 = scalar_lea.hbm %s1, %s312
          %s314 = sshll.u32 %s304, 4
          %s315 = int_to_ptr.vmem [resolvable:$true] %s314
          %320 = dma.hbm_to_vmem [thread:$0]  %s313, 131072, %s315, %s301, 128, 128, 8
        $region43: #{feature_discriminator.2} parent=15 // pred_fallthru
          _
      $region16: #{feature_discriminator.2} parent=5 // pred_fallthru
        _
      %p321 = scmp.le.s32.totalorder 1, %s11
      %p322 = scmp.lt.s32.totalorder %s11, 9
      %p323 = pnand %p321, %p322
      %p324 = pneg %p323
      // Predicated region
      $region44: #{feature_discriminator.2} parent=5 // pred_check
        _
      $region45: #{feature_discriminator.2} parent=5 // pred_check_branch
        %326 = sbr.rel (%p323) target = $region47
      $region46: #{feature_discriminator.2} parent=5 // pred_region
        %s327 = ssub.s32 %s11, 1
        %s328 = sand.u32 %s49, 1
        %s329 = sand.u32 %s49, 1
        %s330 = smul.addr %s329, 512
        %s331 = scalar_lea.vmem [#allocation3], %s330
        // Predicated region
        $region48: #{feature_discriminator.2} parent=46 // pred_check
          %p332 = pneg %p62
        $region49: #{feature_discriminator.2} parent=46 // pred_check_branch
          %334 = sbr.rel (%p332) target = $region51
        $region50: #{feature_discriminator.2} parent=46 // pred_region
          _
        $region51: #{feature_discriminator.2} parent=46 // pred_fallthru
          _
        %s335 = sand.u32 %s79, 1
        %s336 = scalar_lea.sflag [#allocation5], %s335
        %s337 = sand.u32 %s79, 1
        %s338 = smul.addr %s337, 8192
        %s339 = scalar_lea.vmem [#allocation4], %s338
        // Predicated region
        $region52: #{feature_discriminator.2} parent=46 // pred_check
          %p340 = pneg %p92
        $region53: #{feature_discriminator.2} parent=46 // pred_check_branch
          %342 = sbr.rel (%p340) target = $region55
        $region54: #{feature_discriminator.2} parent=46 // pred_region
          %343 = dma.done %s336, 131072
        $region55: #{feature_discriminator.2} parent=46 // pred_fallthru
          _
        %s344 = sand.u32 %s49, 1
        %s345 = sand.u32 %s49, 1
        %s346 = smul.addr %s345, 512
        %s347 = scalar_lea.vmem [#allocation3], %s346
        %p348 = pneg %p62
        %p349 = pneg %p59
        %s350 = sand.u32 %s79, 1
        %s351 = scalar_lea.sflag [#allocation5], %s350
        %s352 = sand.u32 %s79, 1
        %s353 = smul.addr %s352, 8192
        %s354 = scalar_lea.vmem [#allocation4], %s353
        %p355 = pneg %p92
        %p356 = pneg %p89
        %p357 = pneg %p120
        %p358 = pneg %p117
        %s359 = smul.u32 2, %s22
        %p360 = scmp.lt.s32.totalorder %s21, 1
        %s361 = scalar_select %p360, %s21, 1
        %p362 = scmp.lt.s32.totalorder %s359, 1
        %s363 = scalar_select %p362, %s359, 1
        %s364 = smul.addr %s363, 2
        %s365 = smul.addr %s361, 4
        %s366 = sadd.s32 %s364, %s365
        %s367 = smul.addr %s366, 8
        %s368 = scalar_lea.vmem %s2, %s367
        %s369 = smul.u32 %s21, 4
        %s370 = sadd.s32 %s369, %s23
        %s371 = smul.u32 2, %s22
        %s372 = smul.u32 64, %s370
        %s373 = smul.u32 %s21, 4
        %s374 = sadd.s32 %s373, %s23
        %s375 = smul.u32 1024, %s374
        %s376 = smul.u32 2, %s22
        %p377 = scmp.lt.s32.totalorder %s21, 1
        %s378 = scalar_select %p377, %s21, 1
        %p379 = scmp.lt.s32.totalorder %s376, 1
        %s380 = scalar_select %p379, %s376, 1
        %s381 = smul.addr %s380, 2
        %s382 = smul.addr %s378, 4
        %s383 = sadd.s32 %s381, %s382
        %s384 = smul.addr %s383, 8
        %s385 = scalar_lea.vmem %s2, %s384
        %s386 = smul.u32 2, %s22
        %p387 = scmp.eq.s32.totalorder %s23, 0
        // Predicated region
        $region56: #{feature_discriminator.2} parent=46 // pred_check
          %p388 = pneg %p387
        $region57: #{feature_discriminator.2} parent=46 // pred_check_branch
          %390 = sbr.rel (%p388) target = $region59
        $region58: #{feature_discriminator.2} parent=46 // pred_region
          %391 = vst [vmem:[#allocation2] sm:$0xff] 0.0
          %392 = vst [vmem:[#allocation2 + $0x8] sm:$0xff] 0.0
          %393 = vst [vmem:[#allocation2 + $0x10] sm:$0xff] 0.0
          %394 = vst [vmem:[#allocation2 + $0x18] sm:$0xff] 0.0
        $region59: #{feature_discriminator.2} parent=46 // pred_fallthru
          _
        %v395 = vld [vmem:[#allocation2] sm:$0xff]
        %v396 = vld [vmem:[#allocation2 + $0x8] sm:$0xff]
        %v397 = vld [vmem:[#allocation2 + $0x10] sm:$0xff]
        %v398 = vld [vmem:[#allocation2 + $0x18] sm:$0xff]
        %v399 = vld [vmem:[%s331] sm:$0xff]
        %v400 = vld [vmem:[%s331 + $0x8] sm:$0xff]
        %v401 = vld [vmem:[%s331 + $0x10] sm:$0xff]
        %v402 = vld [vmem:[%s331 + $0x18] sm:$0xff]
        %v403 = vld [vmem:[%s331 + $0x20] sm:$0xff]
        %v404 = vld [vmem:[%s331 + $0x28] sm:$0xff]
        %v405 = vld [vmem:[%s331 + $0x30] sm:$0xff]
        %v406 = vld [vmem:[%s331 + $0x38] sm:$0xff]
        %v407 = vld [vmem:[%s331 + $0x40] sm:$0xff]
        %v408 = vld [vmem:[%s331 + $0x48] sm:$0xff]
        %v409 = vld [vmem:[%s331 + $0x50] sm:$0xff]
        %v410 = vld [vmem:[%s331 + $0x58] sm:$0xff]
        %v411 = vld [vmem:[%s331 + $0x60] sm:$0xff]
        %v412 = vld [vmem:[%s331 + $0x68] sm:$0xff]
        %v413 = vld [vmem:[%s331 + $0x70] sm:$0xff]
        %v414 = vld [vmem:[%s331 + $0x78] sm:$0xff]
        %v415 = vld [vmem:[%s331 + $0x80] sm:$0xff]
        %v416 = vld [vmem:[%s331 + $0x88] sm:$0xff]
        %v417 = vld [vmem:[%s331 + $0x90] sm:$0xff]
        %v418 = vld [vmem:[%s331 + $0x98] sm:$0xff]
        %v419 = vld [vmem:[%s331 + $0xa0] sm:$0xff]
        %v420 = vld [vmem:[%s331 + $0xa8] sm:$0xff]
        %v421 = vld [vmem:[%s331 + $0xb0] sm:$0xff]
        %v422 = vld [vmem:[%s331 + $0xb8] sm:$0xff]
        %v423 = vld [vmem:[%s331 + $0xc0] sm:$0xff]
        %v424 = vld [vmem:[%s331 + $0xc8] sm:$0xff]
        %v425 = vld [vmem:[%s331 + $0xd0] sm:$0xff]
        %v426 = vld [vmem:[%s331 + $0xd8] sm:$0xff]
        %v427 = vld [vmem:[%s331 + $0xe0] sm:$0xff]
        %v428 = vld [vmem:[%s331 + $0xe8] sm:$0xff]
        %v429 = vld [vmem:[%s331 + $0xf0] sm:$0xff]
        %v430 = vld [vmem:[%s331 + $0xf8] sm:$0xff]
        %v431 = vld [vmem:[%s331 + $0x100] sm:$0xff]
        %v432 = vld [vmem:[%s331 + $0x108] sm:$0xff]
        %v433 = vld [vmem:[%s331 + $0x110] sm:$0xff]
        %v434 = vld [vmem:[%s331 + $0x118] sm:$0xff]
        %v435 = vld [vmem:[%s331 + $0x120] sm:$0xff]
        %v436 = vld [vmem:[%s331 + $0x128] sm:$0xff]
        %v437 = vld [vmem:[%s331 + $0x130] sm:$0xff]
        %v438 = vld [vmem:[%s331 + $0x138] sm:$0xff]
        %v439 = vld [vmem:[%s331 + $0x140] sm:$0xff]
        %v440 = vld [vmem:[%s331 + $0x148] sm:$0xff]
        %v441 = vld [vmem:[%s331 + $0x150] sm:$0xff]
        %v442 = vld [vmem:[%s331 + $0x158] sm:$0xff]
        %v443 = vld [vmem:[%s331 + $0x160] sm:$0xff]
        %v444 = vld [vmem:[%s331 + $0x168] sm:$0xff]
        %v445 = vld [vmem:[%s331 + $0x170] sm:$0xff]
        %v446 = vld [vmem:[%s331 + $0x178] sm:$0xff]
        %v447 = vld [vmem:[%s331 + $0x180] sm:$0xff]
        %v448 = vld [vmem:[%s331 + $0x188] sm:$0xff]
        %v449 = vld [vmem:[%s331 + $0x190] sm:$0xff]
        %v450 = vld [vmem:[%s331 + $0x198] sm:$0xff]
        %v451 = vld [vmem:[%s331 + $0x1a0] sm:$0xff]
        %v452 = vld [vmem:[%s331 + $0x1a8] sm:$0xff]
        %v453 = vld [vmem:[%s331 + $0x1b0] sm:$0xff]
        %v454 = vld [vmem:[%s331 + $0x1b8] sm:$0xff]
        %v455 = vld [vmem:[%s331 + $0x1c0] sm:$0xff]
        %v456 = vld [vmem:[%s331 + $0x1c8] sm:$0xff]
        %v457 = vld [vmem:[%s331 + $0x1d0] sm:$0xff]
        %v458 = vld [vmem:[%s331 + $0x1d8] sm:$0xff]
        %v459 = vld [vmem:[%s331 + $0x1e0] sm:$0xff]
        %v460 = vld [vmem:[%s331 + $0x1e8] sm:$0xff]
        %v461 = vld [vmem:[%s331 + $0x1f0] sm:$0xff]
        %v462 = vld [vmem:[%s331 + $0x1f8] sm:$0xff]
        %v463 = vld [vmem:[%s339] sm:$0xff]
        %v464 = vld [vmem:[%s339 + $0x8] sm:$0xff]
        %v465 = vld [vmem:[%s339 + $0x10] sm:$0xff]
        %v466 = vld [vmem:[%s339 + $0x18] sm:$0xff]
        %v467 = vld [vmem:[%s339 + $0x20] sm:$0xff]
        %v468 = vld [vmem:[%s339 + $0x28] sm:$0xff]
        %v469 = vld [vmem:[%s339 + $0x30] sm:$0xff]
        %v470 = vld [vmem:[%s339 + $0x38] sm:$0xff]
        %v471 = vld [vmem:[%s339 + $0x40] sm:$0xff]
        %v472 = vld [vmem:[%s339 + $0x48] sm:$0xff]
        %v473 = vld [vmem:[%s339 + $0x50] sm:$0xff]
        %v474 = vld [vmem:[%s339 + $0x58] sm:$0xff]
        %v475 = vld [vmem:[%s339 + $0x60] sm:$0xff]
        %v476 = vld [vmem:[%s339 + $0x68] sm:$0xff]
        %v477 = vld [vmem:[%s339 + $0x70] sm:$0xff]
        %v478 = vld [vmem:[%s339 + $0x78] sm:$0xff]
        %v479 = vld [vmem:[%s339 + $0x80] sm:$0xff]
        %v480 = vld [vmem:[%s339 + $0x88] sm:$0xff]
        %v481 = vld [vmem:[%s339 + $0x90] sm:$0xff]
        %v482 = vld [vmem:[%s339 + $0x98] sm:$0xff]
        %v483 = vld [vmem:[%s339 + $0xa0] sm:$0xff]
        %v484 = vld [vmem:[%s339 + $0xa8] sm:$0xff]
        %v485 = vld [vmem:[%s339 + $0xb0] sm:$0xff]
        %v486 = vld [vmem:[%s339 + $0xb8] sm:$0xff]
        %v487 = vld [vmem:[%s339 + $0xc0] sm:$0xff]
        %v488 = vld [vmem:[%s339 + $0xc8] sm:$0xff]
        %v489 = vld [vmem:[%s339 + $0xd0] sm:$0xff]
        %v490 = vld [vmem:[%s339 + $0xd8] sm:$0xff]
        %v491 = vld [vmem:[%s339 + $0xe0] sm:$0xff]
        %v492 = vld [vmem:[%s339 + $0xe8] sm:$0xff]
        %v493 = vld [vmem:[%s339 + $0xf0] sm:$0xff]
        %v494 = vld [vmem:[%s339 + $0xf8] sm:$0xff]
        %v495 = vld [vmem:[%s339 + $0x100] sm:$0xff]
        %v496 = vld [vmem:[%s339 + $0x108] sm:$0xff]
        %v497 = vld [vmem:[%s339 + $0x110] sm:$0xff]
        %v498 = vld [vmem:[%s339 + $0x118] sm:$0xff]
        %v499 = vld [vmem:[%s339 + $0x120] sm:$0xff]
        %v500 = vld [vmem:[%s339 + $0x128] sm:$0xff]
        %v501 = vld [vmem:[%s339 + $0x130] sm:$0xff]
        %v502 = vld [vmem:[%s339 + $0x138] sm:$0xff]
        %v503 = vld [vmem:[%s339 + $0x140] sm:$0xff]
        %v504 = vld [vmem:[%s339 + $0x148] sm:$0xff]
        %v505 = vld [vmem:[%s339 + $0x150] sm:$0xff]
        %v506 = vld [vmem:[%s339 + $0x158] sm:$0xff]
        %v507 = vld [vmem:[%s339 + $0x160] sm:$0xff]
        %v508 = vld [vmem:[%s339 + $0x168] sm:$0xff]
        %v509 = vld [vmem:[%s339 + $0x170] sm:$0xff]
        %v510 = vld [vmem:[%s339 + $0x178] sm:$0xff]
        %v511 = vld [vmem:[%s339 + $0x180] sm:$0xff]
        %v512 = vld [vmem:[%s339 + $0x188] sm:$0xff]
        %v513 = vld [vmem:[%s339 + $0x190] sm:$0xff]
        %v514 = vld [vmem:[%s339 + $0x198] sm:$0xff]
        %v515 = vld [vmem:[%s339 + $0x1a0] sm:$0xff]
        %v516 = vld [vmem:[%s339 + $0x1a8] sm:$0xff]
        %v517 = vld [vmem:[%s339 + $0x1b0] sm:$0xff]
        %v518 = vld [vmem:[%s339 + $0x1b8] sm:$0xff]
        %v519 = vld [vmem:[%s339 + $0x1c0] sm:$0xff]
        %v520 = vld [vmem:[%s339 + $0x1c8] sm:$0xff]
        %v521 = vld [vmem:[%s339 + $0x1d0] sm:$0xff]
        %v522 = vld [vmem:[%s339 + $0x1d8] sm:$0xff]
        %v523 = vld [vmem:[%s339 + $0x1e0] sm:$0xff]
        %v524 = vld [vmem:[%s339 + $0x1e8] sm:$0xff]
        %v525 = vld [vmem:[%s339 + $0x1f0] sm:$0xff]
        %v526 = vld [vmem:[%s339 + $0x1f8] sm:$0xff]
        %v527 = vld [vmem:[%s339 + $0x200] sm:$0xff]
        %v528 = vld [vmem:[%s339 + $0x208] sm:$0xff]
        %v529 = vld [vmem:[%s339 + $0x210] sm:$0xff]
        %v530 = vld [vmem:[%s339 + $0x218] sm:$0xff]
        %v531 = vld [vmem:[%s339 + $0x220] sm:$0xff]
        %v532 = vld [vmem:[%s339 + $0x228] sm:$0xff]
        %v533 = vld [vmem:[%s339 + $0x230] sm:$0xff]
        %v534 = vld [vmem:[%s339 + $0x238] sm:$0xff]
        %v535 = vld [vmem:[%s339 + $0x240] sm:$0xff]
        %v536 = vld [vmem:[%s339 + $0x248] sm:$0xff]
        %v537 = vld [vmem:[%s339 + $0x250] sm:$0xff]
        %v538 = vld [vmem:[%s339 + $0x258] sm:$0xff]
        %v539 = vld [vmem:[%s339 + $0x260] sm:$0xff]
        %v540 = vld [vmem:[%s339 + $0x268] sm:$0xff]
        %v541 = vld [vmem:[%s339 + $0x270] sm:$0xff]
        %v542 = vld [vmem:[%s339 + $0x278] sm:$0xff]
        %v543 = vld [vmem:[%s339 + $0x280] sm:$0xff]
        %v544 = vld [vmem:[%s339 + $0x288] sm:$0xff]
        %v545 = vld [vmem:[%s339 + $0x290] sm:$0xff]
        %v546 = vld [vmem:[%s339 + $0x298] sm:$0xff]
        %v547 = vld [vmem:[%s339 + $0x2a0] sm:$0xff]
        %v548 = vld [vmem:[%s339 + $0x2a8] sm:$0xff]
        %v549 = vld [vmem:[%s339 + $0x2b0] sm:$0xff]
        %v550 = vld [vmem:[%s339 + $0x2b8] sm:$0xff]
        %v551 = vld [vmem:[%s339 + $0x2c0] sm:$0xff]
        %v552 = vld [vmem:[%s339 + $0x2c8] sm:$0xff]
        %v553 = vld [vmem:[%s339 + $0x2d0] sm:$0xff]
        %v554 = vld [vmem:[%s339 + $0x2d8] sm:$0xff]
        %v555 = vld [vmem:[%s339 + $0x2e0] sm:$0xff]
        %v556 = vld [vmem:[%s339 + $0x2e8] sm:$0xff]
        %v557 = vld [vmem:[%s339 + $0x2f0] sm:$0xff]
        %v558 = vld [vmem:[%s339 + $0x2f8] sm:$0xff]
        %v559 = vld [vmem:[%s339 + $0x300] sm:$0xff]
        %v560 = vld [vmem:[%s339 + $0x308] sm:$0xff]
        %v561 = vld [vmem:[%s339 + $0x310] sm:$0xff]
        %v562 = vld [vmem:[%s339 + $0x318] sm:$0xff]
        %v563 = vld [vmem:[%s339 + $0x320] sm:$0xff]
        %v564 = vld [vmem:[%s339 + $0x328] sm:$0xff]
        %v565 = vld [vmem:[%s339 + $0x330] sm:$0xff]
        %v566 = vld [vmem:[%s339 + $0x338] sm:$0xff]
        %v567 = vld [vmem:[%s339 + $0x340] sm:$0xff]
        %v568 = vld [vmem:[%s339 + $0x348] sm:$0xff]
        %v569 = vld [vmem:[%s339 + $0x350] sm:$0xff]
        %v570 = vld [vmem:[%s339 + $0x358] sm:$0xff]
        %v571 = vld [vmem:[%s339 + $0x360] sm:$0xff]
        %v572 = vld [vmem:[%s339 + $0x368] sm:$0xff]
        %v573 = vld [vmem:[%s339 + $0x370] sm:$0xff]
        %v574 = vld [vmem:[%s339 + $0x378] sm:$0xff]
        %v575 = vld [vmem:[%s339 + $0x380] sm:$0xff]
        %v576 = vld [vmem:[%s339 + $0x388] sm:$0xff]
        %v577 = vld [vmem:[%s339 + $0x390] sm:$0xff]
        %v578 = vld [vmem:[%s339 + $0x398] sm:$0xff]
        %v579 = vld [vmem:[%s339 + $0x3a0] sm:$0xff]
        %v580 = vld [vmem:[%s339 + $0x3a8] sm:$0xff]
        %v581 = vld [vmem:[%s339 + $0x3b0] sm:$0xff]
        %v582 = vld [vmem:[%s339 + $0x3b8] sm:$0xff]
        %v583 = vld [vmem:[%s339 + $0x3c0] sm:$0xff]
        %v584 = vld [vmem:[%s339 + $0x3c8] sm:$0xff]
        %v585 = vld [vmem:[%s339 + $0x3d0] sm:$0xff]
        %v586 = vld [vmem:[%s339 + $0x3d8] sm:$0xff]
        %v587 = vld [vmem:[%s339 + $0x3e0] sm:$0xff]
        %v588 = vld [vmem:[%s339 + $0x3e8] sm:$0xff]
        %v589 = vld [vmem:[%s339 + $0x3f0] sm:$0xff]
        %v590 = vld [vmem:[%s339 + $0x3f8] sm:$0xff]
        %v591 = vld [vmem:[%s339 + $0x400] sm:$0xff]
        %v592 = vld [vmem:[%s339 + $0x408] sm:$0xff]
        %v593 = vld [vmem:[%s339 + $0x410] sm:$0xff]
        %v594 = vld [vmem:[%s339 + $0x418] sm:$0xff]
        %v595 = vld [vmem:[%s339 + $0x420] sm:$0xff]
        %v596 = vld [vmem:[%s339 + $0x428] sm:$0xff]
        %v597 = vld [vmem:[%s339 + $0x430] sm:$0xff]
        %v598 = vld [vmem:[%s339 + $0x438] sm:$0xff]
        %v599 = vld [vmem:[%s339 + $0x440] sm:$0xff]
        %v600 = vld [vmem:[%s339 + $0x448] sm:$0xff]
        %v601 = vld [vmem:[%s339 + $0x450] sm:$0xff]
        %v602 = vld [vmem:[%s339 + $0x458] sm:$0xff]
        %v603 = vld [vmem:[%s339 + $0x460] sm:$0xff]
        %v604 = vld [vmem:[%s339 + $0x468] sm:$0xff]
        %v605 = vld [vmem:[%s339 + $0x470] sm:$0xff]
        %v606 = vld [vmem:[%s339 + $0x478] sm:$0xff]
        %v607 = vld [vmem:[%s339 + $0x480] sm:$0xff]
        %v608 = vld [vmem:[%s339 + $0x488] sm:$0xff]
        %v609 = vld [vmem:[%s339 + $0x490] sm:$0xff]
        %v610 = vld [vmem:[%s339 + $0x498] sm:$0xff]
        %v611 = vld [vmem:[%s339 + $0x4a0] sm:$0xff]
        %v612 = vld [vmem:[%s339 + $0x4a8] sm:$0xff]
        %v613 = vld [vmem:[%s339 + $0x4b0] sm:$0xff]
        %v614 = vld [vmem:[%s339 + $0x4b8] sm:$0xff]
        %v615 = vld [vmem:[%s339 + $0x4c0] sm:$0xff]
        %v616 = vld [vmem:[%s339 + $0x4c8] sm:$0xff]
        %v617 = vld [vmem:[%s339 + $0x4d0] sm:$0xff]
        %v618 = vld [vmem:[%s339 + $0x4d8] sm:$0xff]
        %v619 = vld [vmem:[%s339 + $0x4e0] sm:$0xff]
        %v620 = vld [vmem:[%s339 + $0x4e8] sm:$0xff]
        %v621 = vld [vmem:[%s339 + $0x4f0] sm:$0xff]
        %v622 = vld [vmem:[%s339 + $0x4f8] sm:$0xff]
        %v623 = vld [vmem:[%s339 + $0x500] sm:$0xff]
        %v624 = vld [vmem:[%s339 + $0x508] sm:$0xff]
        %v625 = vld [vmem:[%s339 + $0x510] sm:$0xff]
        %v626 = vld [vmem:[%s339 + $0x518] sm:$0xff]
        %v627 = vld [vmem:[%s339 + $0x520] sm:$0xff]
        %v628 = vld [vmem:[%s339 + $0x528] sm:$0xff]
        %v629 = vld [vmem:[%s339 + $0x530] sm:$0xff]
        %v630 = vld [vmem:[%s339 + $0x538] sm:$0xff]
        %v631 = vld [vmem:[%s339 + $0x540] sm:$0xff]
        %v632 = vld [vmem:[%s339 + $0x548] sm:$0xff]
        %v633 = vld [vmem:[%s339 + $0x550] sm:$0xff]
        %v634 = vld [vmem:[%s339 + $0x558] sm:$0xff]
        %v635 = vld [vmem:[%s339 + $0x560] sm:$0xff]
        %v636 = vld [vmem:[%s339 + $0x568] sm:$0xff]
        %v637 = vld [vmem:[%s339 + $0x570] sm:$0xff]
        %v638 = vld [vmem:[%s339 + $0x578] sm:$0xff]
        %v639 = vld [vmem:[%s339 + $0x580] sm:$0xff]
        %v640 = vld [vmem:[%s339 + $0x588] sm:$0xff]
        %v641 = vld [vmem:[%s339 + $0x590] sm:$0xff]
        %v642 = vld [vmem:[%s339 + $0x598] sm:$0xff]
        %v643 = vld [vmem:[%s339 + $0x5a0] sm:$0xff]
        %v644 = vld [vmem:[%s339 + $0x5a8] sm:$0xff]
        %v645 = vld [vmem:[%s339 + $0x5b0] sm:$0xff]
        %v646 = vld [vmem:[%s339 + $0x5b8] sm:$0xff]
        %v647 = vld [vmem:[%s339 + $0x5c0] sm:$0xff]
        %v648 = vld [vmem:[%s339 + $0x5c8] sm:$0xff]
        %v649 = vld [vmem:[%s339 + $0x5d0] sm:$0xff]
        %v650 = vld [vmem:[%s339 + $0x5d8] sm:$0xff]
        %v651 = vld [vmem:[%s339 + $0x5e0] sm:$0xff]
        %v652 = vld [vmem:[%s339 + $0x5e8] sm:$0xff]
        %v653 = vld [vmem:[%s339 + $0x5f0] sm:$0xff]
        %v654 = vld [vmem:[%s339 + $0x5f8] sm:$0xff]
        %v655 = vld [vmem:[%s339 + $0x600] sm:$0xff]
        %v656 = vld [vmem:[%s339 + $0x608] sm:$0xff]
        %v657 = vld [vmem:[%s339 + $0x610] sm:$0xff]
        %v658 = vld [vmem:[%s339 + $0x618] sm:$0xff]
        %v659 = vld [vmem:[%s339 + $0x620] sm:$0xff]
        %v660 = vld [vmem:[%s339 + $0x628] sm:$0xff]
        %v661 = vld [vmem:[%s339 + $0x630] sm:$0xff]
        %v662 = vld [vmem:[%s339 + $0x638] sm:$0xff]
        %v663 = vld [vmem:[%s339 + $0x640] sm:$0xff]
        %v664 = vld [vmem:[%s339 + $0x648] sm:$0xff]
        %v665 = vld [vmem:[%s339 + $0x650] sm:$0xff]
        %v666 = vld [vmem:[%s339 + $0x658] sm:$0xff]
        %v667 = vld [vmem:[%s339 + $0x660] sm:$0xff]
        %v668 = vld [vmem:[%s339 + $0x668] sm:$0xff]
        %v669 = vld [vmem:[%s339 + $0x670] sm:$0xff]
        %v670 = vld [vmem:[%s339 + $0x678] sm:$0xff]
        %v671 = vld [vmem:[%s339 + $0x680] sm:$0xff]
        %v672 = vld [vmem:[%s339 + $0x688] sm:$0xff]
        %v673 = vld [vmem:[%s339 + $0x690] sm:$0xff]
        %v674 = vld [vmem:[%s339 + $0x698] sm:$0xff]
        %v675 = vld [vmem:[%s339 + $0x6a0] sm:$0xff]
        %v676 = vld [vmem:[%s339 + $0x6a8] sm:$0xff]
        %v677 = vld [vmem:[%s339 + $0x6b0] sm:$0xff]
        %v678 = vld [vmem:[%s339 + $0x6b8] sm:$0xff]
        %v679 = vld [vmem:[%s339 + $0x6c0] sm:$0xff]
        %v680 = vld [vmem:[%s339 + $0x6c8] sm:$0xff]
        %v681 = vld [vmem:[%s339 + $0x6d0] sm:$0xff]
        %v682 = vld [vmem:[%s339 + $0x6d8] sm:$0xff]
        %v683 = vld [vmem:[%s339 + $0x6e0] sm:$0xff]
        %v684 = vld [vmem:[%s339 + $0x6e8] sm:$0xff]
        %v685 = vld [vmem:[%s339 + $0x6f0] sm:$0xff]
        %v686 = vld [vmem:[%s339 + $0x6f8] sm:$0xff]
        %v687 = vld [vmem:[%s339 + $0x700] sm:$0xff]
        %v688 = vld [vmem:[%s339 + $0x708] sm:$0xff]
        %v689 = vld [vmem:[%s339 + $0x710] sm:$0xff]
        %v690 = vld [vmem:[%s339 + $0x718] sm:$0xff]
        %v691 = vld [vmem:[%s339 + $0x720] sm:$0xff]
        %v692 = vld [vmem:[%s339 + $0x728] sm:$0xff]
        %v693 = vld [vmem:[%s339 + $0x730] sm:$0xff]
        %v694 = vld [vmem:[%s339 + $0x738] sm:$0xff]
        %v695 = vld [vmem:[%s339 + $0x740] sm:$0xff]
        %v696 = vld [vmem:[%s339 + $0x748] sm:$0xff]
        %v697 = vld [vmem:[%s339 + $0x750] sm:$0xff]
        %v698 = vld [vmem:[%s339 + $0x758] sm:$0xff]
        %v699 = vld [vmem:[%s339 + $0x760] sm:$0xff]
        %v700 = vld [vmem:[%s339 + $0x768] sm:$0xff]
        %v701 = vld [vmem:[%s339 + $0x770] sm:$0xff]
        %v702 = vld [vmem:[%s339 + $0x778] sm:$0xff]
        %v703 = vld [vmem:[%s339 + $0x780] sm:$0xff]
        %v704 = vld [vmem:[%s339 + $0x788] sm:$0xff]
        %v705 = vld [vmem:[%s339 + $0x790] sm:$0xff]
        %v706 = vld [vmem:[%s339 + $0x798] sm:$0xff]
        %v707 = vld [vmem:[%s339 + $0x7a0] sm:$0xff]
        %v708 = vld [vmem:[%s339 + $0x7a8] sm:$0xff]
        %v709 = vld [vmem:[%s339 + $0x7b0] sm:$0xff]
        %v710 = vld [vmem:[%s339 + $0x7b8] sm:$0xff]
        %v711 = vld [vmem:[%s339 + $0x7c0] sm:$0xff]
        %v712 = vld [vmem:[%s339 + $0x7c8] sm:$0xff]
        %v713 = vld [vmem:[%s339 + $0x7d0] sm:$0xff]
        %v714 = vld [vmem:[%s339 + $0x7d8] sm:$0xff]
        %v715 = vld [vmem:[%s339 + $0x7e0] sm:$0xff]
        %v716 = vld [vmem:[%s339 + $0x7e8] sm:$0xff]
        %v717 = vld [vmem:[%s339 + $0x7f0] sm:$0xff]
        %v718 = vld [vmem:[%s339 + $0x7f8] sm:$0xff]
        %v719 = vld [vmem:[%s339 + $0x800] sm:$0xff]
        %v720 = vld [vmem:[%s339 + $0x808] sm:$0xff]
        %v721 = vld [vmem:[%s339 + $0x810] sm:$0xff]
        %v722 = vld [vmem:[%s339 + $0x818] sm:$0xff]
        %v723 = vld [vmem:[%s339 + $0x820] sm:$0xff]
        %v724 = vld [vmem:[%s339 + $0x828] sm:$0xff]
        %v725 = vld [vmem:[%s339 + $0x830] sm:$0xff]
        %v726 = vld [vmem:[%s339 + $0x838] sm:$0xff]
        %v727 = vld [vmem:[%s339 + $0x840] sm:$0xff]
        %v728 = vld [vmem:[%s339 + $0x848] sm:$0xff]
        %v729 = vld [vmem:[%s339 + $0x850] sm:$0xff]
        %v730 = vld [vmem:[%s339 + $0x858] sm:$0xff]
        %v731 = vld [vmem:[%s339 + $0x860] sm:$0xff]
        %v732 = vld [vmem:[%s339 + $0x868] sm:$0xff]
        %v733 = vld [vmem:[%s339 + $0x870] sm:$0xff]
        %v734 = vld [vmem:[%s339 + $0x878] sm:$0xff]
        %v735 = vld [vmem:[%s339 + $0x880] sm:$0xff]
        %v736 = vld [vmem:[%s339 + $0x888] sm:$0xff]
        %v737 = vld [vmem:[%s339 + $0x890] sm:$0xff]
        %v738 = vld [vmem:[%s339 + $0x898] sm:$0xff]
        %v739 = vld [vmem:[%s339 + $0x8a0] sm:$0xff]
        %v740 = vld [vmem:[%s339 + $0x8a8] sm:$0xff]
        %v741 = vld [vmem:[%s339 + $0x8b0] sm:$0xff]
        %v742 = vld [vmem:[%s339 + $0x8b8] sm:$0xff]
        %v743 = vld [vmem:[%s339 + $0x8c0] sm:$0xff]
        %v744 = vld [vmem:[%s339 + $0x8c8] sm:$0xff]
        %v745 = vld [vmem:[%s339 + $0x8d0] sm:$0xff]
        %v746 = vld [vmem:[%s339 + $0x8d8] sm:$0xff]
        %v747 = vld [vmem:[%s339 + $0x8e0] sm:$0xff]
        %v748 = vld [vmem:[%s339 + $0x8e8] sm:$0xff]
        %v749 = vld [vmem:[%s339 + $0x8f0] sm:$0xff]
        %v750 = vld [vmem:[%s339 + $0x8f8] sm:$0xff]
        %v751 = vld [vmem:[%s339 + $0x900] sm:$0xff]
        %v752 = vld [vmem:[%s339 + $0x908] sm:$0xff]
        %v753 = vld [vmem:[%s339 + $0x910] sm:$0xff]
        %v754 = vld [vmem:[%s339 + $0x918] sm:$0xff]
        %v755 = vld [vmem:[%s339 + $0x920] sm:$0xff]
        %v756 = vld [vmem:[%s339 + $0x928] sm:$0xff]
        %v757 = vld [vmem:[%s339 + $0x930] sm:$0xff]
        %v758 = vld [vmem:[%s339 + $0x938] sm:$0xff]
        %v759 = vld [vmem:[%s339 + $0x940] sm:$0xff]
        %v760 = vld [vmem:[%s339 + $0x948] sm:$0xff]
        %v761 = vld [vmem:[%s339 + $0x950] sm:$0xff]
        %v762 = vld [vmem:[%s339 + $0x958] sm:$0xff]
        %v763 = vld [vmem:[%s339 + $0x960] sm:$0xff]
        %v764 = vld [vmem:[%s339 + $0x968] sm:$0xff]
        %v765 = vld [vmem:[%s339 + $0x970] sm:$0xff]
        %v766 = vld [vmem:[%s339 + $0x978] sm:$0xff]
        %v767 = vld [vmem:[%s339 + $0x980] sm:$0xff]
        %v768 = vld [vmem:[%s339 + $0x988] sm:$0xff]
        %v769 = vld [vmem:[%s339 + $0x990] sm:$0xff]
        %v770 = vld [vmem:[%s339 + $0x998] sm:$0xff]
        %v771 = vld [vmem:[%s339 + $0x9a0] sm:$0xff]
        %v772 = vld [vmem:[%s339 + $0x9a8] sm:$0xff]
        %v773 = vld [vmem:[%s339 + $0x9b0] sm:$0xff]
        %v774 = vld [vmem:[%s339 + $0x9b8] sm:$0xff]
        %v775 = vld [vmem:[%s339 + $0x9c0] sm:$0xff]
        %v776 = vld [vmem:[%s339 + $0x9c8] sm:$0xff]
        %v777 = vld [vmem:[%s339 + $0x9d0] sm:$0xff]
        %v778 = vld [vmem:[%s339 + $0x9d8] sm:$0xff]
        %v779 = vld [vmem:[%s339 + $0x9e0] sm:$0xff]
        %v780 = vld [vmem:[%s339 + $0x9e8] sm:$0xff]
        %v781 = vld [vmem:[%s339 + $0x9f0] sm:$0xff]
        %v782 = vld [vmem:[%s339 + $0x9f8] sm:$0xff]
        %v783 = vld [vmem:[%s339 + $0xa00] sm:$0xff]
        %v784 = vld [vmem:[%s339 + $0xa08] sm:$0xff]
        %v785 = vld [vmem:[%s339 + $0xa10] sm:$0xff]
        %v786 = vld [vmem:[%s339 + $0xa18] sm:$0xff]
        %v787 = vld [vmem:[%s339 + $0xa20] sm:$0xff]
        %v788 = vld [vmem:[%s339 + $0xa28] sm:$0xff]
        %v789 = vld [vmem:[%s339 + $0xa30] sm:$0xff]
        %v790 = vld [vmem:[%s339 + $0xa38] sm:$0xff]
        %v791 = vld [vmem:[%s339 + $0xa40] sm:$0xff]
        %v792 = vld [vmem:[%s339 + $0xa48] sm:$0xff]
        %v793 = vld [vmem:[%s339 + $0xa50] sm:$0xff]
        %v794 = vld [vmem:[%s339 + $0xa58] sm:$0xff]
        %v795 = vld [vmem:[%s339 + $0xa60] sm:$0xff]
        %v796 = vld [vmem:[%s339 + $0xa68] sm:$0xff]
        %v797 = vld [vmem:[%s339 + $0xa70] sm:$0xff]
        %v798 = vld [vmem:[%s339 + $0xa78] sm:$0xff]
        %v799 = vld [vmem:[%s339 + $0xa80] sm:$0xff]
        %v800 = vld [vmem:[%s339 + $0xa88] sm:$0xff]
        %v801 = vld [vmem:[%s339 + $0xa90] sm:$0xff]
        %v802 = vld [vmem:[%s339 + $0xa98] sm:$0xff]
        %v803 = vld [vmem:[%s339 + $0xaa0] sm:$0xff]
        %v804 = vld [vmem:[%s339 + $0xaa8] sm:$0xff]
        %v805 = vld [vmem:[%s339 + $0xab0] sm:$0xff]
        %v806 = vld [vmem:[%s339 + $0xab8] sm:$0xff]
        %v807 = vld [vmem:[%s339 + $0xac0] sm:$0xff]
        %v808 = vld [vmem:[%s339 + $0xac8] sm:$0xff]
        %v809 = vld [vmem:[%s339 + $0xad0] sm:$0xff]
        %v810 = vld [vmem:[%s339 + $0xad8] sm:$0xff]
        %v811 = vld [vmem:[%s339 + $0xae0] sm:$0xff]
        %v812 = vld [vmem:[%s339 + $0xae8] sm:$0xff]
        %v813 = vld [vmem:[%s339 + $0xaf0] sm:$0xff]
        %v814 = vld [vmem:[%s339 + $0xaf8] sm:$0xff]
        %v815 = vld [vmem:[%s339 + $0xb00] sm:$0xff]
        %v816 = vld [vmem:[%s339 + $0xb08] sm:$0xff]
        %v817 = vld [vmem:[%s339 + $0xb10] sm:$0xff]
        %v818 = vld [vmem:[%s339 + $0xb18] sm:$0xff]
        %v819 = vld [vmem:[%s339 + $0xb20] sm:$0xff]
        %v820 = vld [vmem:[%s339 + $0xb28] sm:$0xff]
        %v821 = vld [vmem:[%s339 + $0xb30] sm:$0xff]
        %v822 = vld [vmem:[%s339 + $0xb38] sm:$0xff]
        %v823 = vld [vmem:[%s339 + $0xb40] sm:$0xff]
        %v824 = vld [vmem:[%s339 + $0xb48] sm:$0xff]
        %v825 = vld [vmem:[%s339 + $0xb50] sm:$0xff]
        %v826 = vld [vmem:[%s339 + $0xb58] sm:$0xff]
        %v827 = vld [vmem:[%s339 + $0xb60] sm:$0xff]
        %v828 = vld [vmem:[%s339 + $0xb68] sm:$0xff]
        %v829 = vld [vmem:[%s339 + $0xb70] sm:$0xff]
        %v830 = vld [vmem:[%s339 + $0xb78] sm:$0xff]
        %v831 = vld [vmem:[%s339 + $0xb80] sm:$0xff]
        %v832 = vld [vmem:[%s339 + $0xb88] sm:$0xff]
        %v833 = vld [vmem:[%s339 + $0xb90] sm:$0xff]
        %v834 = vld [vmem:[%s339 + $0xb98] sm:$0xff]
        %v835 = vld [vmem:[%s339 + $0xba0] sm:$0xff]
        %v836 = vld [vmem:[%s339 + $0xba8] sm:$0xff]
        %v837 = vld [vmem:[%s339 + $0xbb0] sm:$0xff]
        %v838 = vld [vmem:[%s339 + $0xbb8] sm:$0xff]
        %v839 = vld [vmem:[%s339 + $0xbc0] sm:$0xff]
        %v840 = vld [vmem:[%s339 + $0xbc8] sm:$0xff]
        %v841 = vld [vmem:[%s339 + $0xbd0] sm:$0xff]
        %v842 = vld [vmem:[%s339 + $0xbd8] sm:$0xff]
        %v843 = vld [vmem:[%s339 + $0xbe0] sm:$0xff]
        %v844 = vld [vmem:[%s339 + $0xbe8] sm:$0xff]
        %v845 = vld [vmem:[%s339 + $0xbf0] sm:$0xff]
        %v846 = vld [vmem:[%s339 + $0xbf8] sm:$0xff]
        %v847 = vld [vmem:[%s339 + $0xc00] sm:$0xff]
        %v848 = vld [vmem:[%s339 + $0xc08] sm:$0xff]
        %v849 = vld [vmem:[%s339 + $0xc10] sm:$0xff]
        %v850 = vld [vmem:[%s339 + $0xc18] sm:$0xff]
        %v851 = vld [vmem:[%s339 + $0xc20] sm:$0xff]
        %v852 = vld [vmem:[%s339 + $0xc28] sm:$0xff]
        %v853 = vld [vmem:[%s339 + $0xc30] sm:$0xff]
        %v854 = vld [vmem:[%s339 + $0xc38] sm:$0xff]
        %v855 = vld [vmem:[%s339 + $0xc40] sm:$0xff]
        %v856 = vld [vmem:[%s339 + $0xc48] sm:$0xff]
        %v857 = vld [vmem:[%s339 + $0xc50] sm:$0xff]
        %v858 = vld [vmem:[%s339 + $0xc58] sm:$0xff]
        %v859 = vld [vmem:[%s339 + $0xc60] sm:$0xff]
        %v860 = vld [vmem:[%s339 + $0xc68] sm:$0xff]
        %v861 = vld [vmem:[%s339 + $0xc70] sm:$0xff]
        %v862 = vld [vmem:[%s339 + $0xc78] sm:$0xff]
        %v863 = vld [vmem:[%s339 + $0xc80] sm:$0xff]
        %v864 = vld [vmem:[%s339 + $0xc88] sm:$0xff]
        %v865 = vld [vmem:[%s339 + $0xc90] sm:$0xff]
        %v866 = vld [vmem:[%s339 + $0xc98] sm:$0xff]
        %v867 = vld [vmem:[%s339 + $0xca0] sm:$0xff]
        %v868 = vld [vmem:[%s339 + $0xca8] sm:$0xff]
        %v869 = vld [vmem:[%s339 + $0xcb0] sm:$0xff]
        %v870 = vld [vmem:[%s339 + $0xcb8] sm:$0xff]
        %v871 = vld [vmem:[%s339 + $0xcc0] sm:$0xff]
        %v872 = vld [vmem:[%s339 + $0xcc8] sm:$0xff]
        %v873 = vld [vmem:[%s339 + $0xcd0] sm:$0xff]
        %v874 = vld [vmem:[%s339 + $0xcd8] sm:$0xff]
        %v875 = vld [vmem:[%s339 + $0xce0] sm:$0xff]
        %v876 = vld [vmem:[%s339 + $0xce8] sm:$0xff]
        %v877 = vld [vmem:[%s339 + $0xcf0] sm:$0xff]
        %v878 = vld [vmem:[%s339 + $0xcf8] sm:$0xff]
        %v879 = vld [vmem:[%s339 + $0xd00] sm:$0xff]
        %v880 = vld [vmem:[%s339 + $0xd08] sm:$0xff]
        %v881 = vld [vmem:[%s339 + $0xd10] sm:$0xff]
        %v882 = vld [vmem:[%s339 + $0xd18] sm:$0xff]
        %v883 = vld [vmem:[%s339 + $0xd20] sm:$0xff]
        %v884 = vld [vmem:[%s339 + $0xd28] sm:$0xff]
        %v885 = vld [vmem:[%s339 + $0xd30] sm:$0xff]
        %v886 = vld [vmem:[%s339 + $0xd38] sm:$0xff]
        %v887 = vld [vmem:[%s339 + $0xd40] sm:$0xff]
        %v888 = vld [vmem:[%s339 + $0xd48] sm:$0xff]
        %v889 = vld [vmem:[%s339 + $0xd50] sm:$0xff]
        %v890 = vld [vmem:[%s339 + $0xd58] sm:$0xff]
        %v891 = vld [vmem:[%s339 + $0xd60] sm:$0xff]
        %v892 = vld [vmem:[%s339 + $0xd68] sm:$0xff]
        %v893 = vld [vmem:[%s339 + $0xd70] sm:$0xff]
        %v894 = vld [vmem:[%s339 + $0xd78] sm:$0xff]
        %v895 = vld [vmem:[%s339 + $0xd80] sm:$0xff]
        %v896 = vld [vmem:[%s339 + $0xd88] sm:$0xff]
        %v897 = vld [vmem:[%s339 + $0xd90] sm:$0xff]
        %v898 = vld [vmem:[%s339 + $0xd98] sm:$0xff]
        %v899 = vld [vmem:[%s339 + $0xda0] sm:$0xff]
        %v900 = vld [vmem:[%s339 + $0xda8] sm:$0xff]
        %v901 = vld [vmem:[%s339 + $0xdb0] sm:$0xff]
        %v902 = vld [vmem:[%s339 + $0xdb8] sm:$0xff]
        %v903 = vld [vmem:[%s339 + $0xdc0] sm:$0xff]
        %v904 = vld [vmem:[%s339 + $0xdc8] sm:$0xff]
        %v905 = vld [vmem:[%s339 + $0xdd0] sm:$0xff]
        %v906 = vld [vmem:[%s339 + $0xdd8] sm:$0xff]
        %v907 = vld [vmem:[%s339 + $0xde0] sm:$0xff]
        %v908 = vld [vmem:[%s339 + $0xde8] sm:$0xff]
        %v909 = vld [vmem:[%s339 + $0xdf0] sm:$0xff]
        %v910 = vld [vmem:[%s339 + $0xdf8] sm:$0xff]
        %v911 = vld [vmem:[%s339 + $0xe00] sm:$0xff]
        %v912 = vld [vmem:[%s339 + $0xe08] sm:$0xff]
        %v913 = vld [vmem:[%s339 + $0xe10] sm:$0xff]
        %v914 = vld [vmem:[%s339 + $0xe18] sm:$0xff]
        %v915 = vld [vmem:[%s339 + $0xe20] sm:$0xff]
        %v916 = vld [vmem:[%s339 + $0xe28] sm:$0xff]
        %v917 = vld [vmem:[%s339 + $0xe30] sm:$0xff]
        %v918 = vld [vmem:[%s339 + $0xe38] sm:$0xff]
        %v919 = vld [vmem:[%s339 + $0xe40] sm:$0xff]
        %v920 = vld [vmem:[%s339 + $0xe48] sm:$0xff]
        %v921 = vld [vmem:[%s339 + $0xe50] sm:$0xff]
        %v922 = vld [vmem:[%s339 + $0xe58] sm:$0xff]
        %v923 = vld [vmem:[%s339 + $0xe60] sm:$0xff]
        %v924 = vld [vmem:[%s339 + $0xe68] sm:$0xff]
        %v925 = vld [vmem:[%s339 + $0xe70] sm:$0xff]
        %v926 = vld [vmem:[%s339 + $0xe78] sm:$0xff]
        %v927 = vld [vmem:[%s339 + $0xe80] sm:$0xff]
        %v928 = vld [vmem:[%s339 + $0xe88] sm:$0xff]
        %v929 = vld [vmem:[%s339 + $0xe90] sm:$0xff]
        %v930 = vld [vmem:[%s339 + $0xe98] sm:$0xff]
        %v931 = vld [vmem:[%s339 + $0xea0] sm:$0xff]
        %v932 = vld [vmem:[%s339 + $0xea8] sm:$0xff]
        %v933 = vld [vmem:[%s339 + $0xeb0] sm:$0xff]
        %v934 = vld [vmem:[%s339 + $0xeb8] sm:$0xff]
        %v935 = vld [vmem:[%s339 + $0xec0] sm:$0xff]
        %v936 = vld [vmem:[%s339 + $0xec8] sm:$0xff]
        %v937 = vld [vmem:[%s339 + $0xed0] sm:$0xff]
        %v938 = vld [vmem:[%s339 + $0xed8] sm:$0xff]
        %v939 = vld [vmem:[%s339 + $0xee0] sm:$0xff]
        %v940 = vld [vmem:[%s339 + $0xee8] sm:$0xff]
        %v941 = vld [vmem:[%s339 + $0xef0] sm:$0xff]
        %v942 = vld [vmem:[%s339 + $0xef8] sm:$0xff]
        %v943 = vld [vmem:[%s339 + $0xf00] sm:$0xff]
        %v944 = vld [vmem:[%s339 + $0xf08] sm:$0xff]
        %v945 = vld [vmem:[%s339 + $0xf10] sm:$0xff]
        %v946 = vld [vmem:[%s339 + $0xf18] sm:$0xff]
        %v947 = vld [vmem:[%s339 + $0xf20] sm:$0xff]
        %v948 = vld [vmem:[%s339 + $0xf28] sm:$0xff]
        %v949 = vld [vmem:[%s339 + $0xf30] sm:$0xff]
        %v950 = vld [vmem:[%s339 + $0xf38] sm:$0xff]
        %v951 = vld [vmem:[%s339 + $0xf40] sm:$0xff]
        %v952 = vld [vmem:[%s339 + $0xf48] sm:$0xff]
        %v953 = vld [vmem:[%s339 + $0xf50] sm:$0xff]
        %v954 = vld [vmem:[%s339 + $0xf58] sm:$0xff]
        %v955 = vld [vmem:[%s339 + $0xf60] sm:$0xff]
        %v956 = vld [vmem:[%s339 + $0xf68] sm:$0xff]
        %v957 = vld [vmem:[%s339 + $0xf70] sm:$0xff]
        %v958 = vld [vmem:[%s339 + $0xf78] sm:$0xff]
        %v959 = vld [vmem:[%s339 + $0xf80] sm:$0xff]
        %v960 = vld [vmem:[%s339 + $0xf88] sm:$0xff]
        %v961 = vld [vmem:[%s339 + $0xf90] sm:$0xff]
        %v962 = vld [vmem:[%s339 + $0xf98] sm:$0xff]
        %v963 = vld [vmem:[%s339 + $0xfa0] sm:$0xff]
        %v964 = vld [vmem:[%s339 + $0xfa8] sm:$0xff]
        %v965 = vld [vmem:[%s339 + $0xfb0] sm:$0xff]
        %v966 = vld [vmem:[%s339 + $0xfb8] sm:$0xff]
        %v967 = vld [vmem:[%s339 + $0xfc0] sm:$0xff]
        %v968 = vld [vmem:[%s339 + $0xfc8] sm:$0xff]
        %v969 = vld [vmem:[%s339 + $0xfd0] sm:$0xff]
        %v970 = vld [vmem:[%s339 + $0xfd8] sm:$0xff]
        %v971 = vld [vmem:[%s339 + $0xfe0] sm:$0xff]
        %v972 = vld [vmem:[%s339 + $0xfe8] sm:$0xff]
        %v973 = vld [vmem:[%s339 + $0xff0] sm:$0xff]
        %v974 = vld [vmem:[%s339 + $0xff8] sm:$0xff]
        %v975 = vld [vmem:[%s339 + $0x1000] sm:$0xff]
        %v976 = vld [vmem:[%s339 + $0x1008] sm:$0xff]
        %v977 = vld [vmem:[%s339 + $0x1010] sm:$0xff]
        %v978 = vld [vmem:[%s339 + $0x1018] sm:$0xff]
        %v979 = vld [vmem:[%s339 + $0x1020] sm:$0xff]
        %v980 = vld [vmem:[%s339 + $0x1028] sm:$0xff]
        %v981 = vld [vmem:[%s339 + $0x1030] sm:$0xff]
        %v982 = vld [vmem:[%s339 + $0x1038] sm:$0xff]
        %v983 = vld [vmem:[%s339 + $0x1040] sm:$0xff]
        %v984 = vld [vmem:[%s339 + $0x1048] sm:$0xff]
        %v985 = vld [vmem:[%s339 + $0x1050] sm:$0xff]
        %v986 = vld [vmem:[%s339 + $0x1058] sm:$0xff]
        %v987 = vld [vmem:[%s339 + $0x1060] sm:$0xff]
        %v988 = vld [vmem:[%s339 + $0x1068] sm:$0xff]
        %v989 = vld [vmem:[%s339 + $0x1070] sm:$0xff]
        %v990 = vld [vmem:[%s339 + $0x1078] sm:$0xff]
        %v991 = vld [vmem:[%s339 + $0x1080] sm:$0xff]
        %v992 = vld [vmem:[%s339 + $0x1088] sm:$0xff]
        %v993 = vld [vmem:[%s339 + $0x1090] sm:$0xff]
        %v994 = vld [vmem:[%s339 + $0x1098] sm:$0xff]
        %v995 = vld [vmem:[%s339 + $0x10a0] sm:$0xff]
        %v996 = vld [vmem:[%s339 + $0x10a8] sm:$0xff]
        %v997 = vld [vmem:[%s339 + $0x10b0] sm:$0xff]
        %v998 = vld [vmem:[%s339 + $0x10b8] sm:$0xff]
        %v999 = vld [vmem:[%s339 + $0x10c0] sm:$0xff]
        %v1000 = vld [vmem:[%s339 + $0x10c8] sm:$0xff]
        %v1001 = vld [vmem:[%s339 + $0x10d0] sm:$0xff]
        %v1002 = vld [vmem:[%s339 + $0x10d8] sm:$0xff]
        %v1003 = vld [vmem:[%s339 + $0x10e0] sm:$0xff]
        %v1004 = vld [vmem:[%s339 + $0x10e8] sm:$0xff]
        %v1005 = vld [vmem:[%s339 + $0x10f0] sm:$0xff]
        %v1006 = vld [vmem:[%s339 + $0x10f8] sm:$0xff]
        %v1007 = vld [vmem:[%s339 + $0x1100] sm:$0xff]
        %v1008 = vld [vmem:[%s339 + $0x1108] sm:$0xff]
        %v1009 = vld [vmem:[%s339 + $0x1110] sm:$0xff]
        %v1010 = vld [vmem:[%s339 + $0x1118] sm:$0xff]
        %v1011 = vld [vmem:[%s339 + $0x1120] sm:$0xff]
        %v1012 = vld [vmem:[%s339 + $0x1128] sm:$0xff]
        %v1013 = vld [vmem:[%s339 + $0x1130] sm:$0xff]
        %v1014 = vld [vmem:[%s339 + $0x1138] sm:$0xff]
        %v1015 = vld [vmem:[%s339 + $0x1140] sm:$0xff]
        %v1016 = vld [vmem:[%s339 + $0x1148] sm:$0xff]
        %v1017 = vld [vmem:[%s339 + $0x1150] sm:$0xff]
        %v1018 = vld [vmem:[%s339 + $0x1158] sm:$0xff]
        %v1019 = vld [vmem:[%s339 + $0x1160] sm:$0xff]
        %v1020 = vld [vmem:[%s339 + $0x1168] sm:$0xff]
        %v1021 = vld [vmem:[%s339 + $0x1170] sm:$0xff]
        %v1022 = vld [vmem:[%s339 + $0x1178] sm:$0xff]
        %v1023 = vld [vmem:[%s339 + $0x1180] sm:$0xff]
        %v1024 = vld [vmem:[%s339 + $0x1188] sm:$0xff]
        %v1025 = vld [vmem:[%s339 + $0x1190] sm:$0xff]
        %v1026 = vld [vmem:[%s339 + $0x1198] sm:$0xff]
        %v1027 = vld [vmem:[%s339 + $0x11a0] sm:$0xff]
        %v1028 = vld [vmem:[%s339 + $0x11a8] sm:$0xff]
        %v1029 = vld [vmem:[%s339 + $0x11b0] sm:$0xff]
        %v1030 = vld [vmem:[%s339 + $0x11b8] sm:$0xff]
        %v1031 = vld [vmem:[%s339 + $0x11c0] sm:$0xff]
        %v1032 = vld [vmem:[%s339 + $0x11c8] sm:$0xff]
        %v1033 = vld [vmem:[%s339 + $0x11d0] sm:$0xff]
        %v1034 = vld [vmem:[%s339 + $0x11d8] sm:$0xff]
        %v1035 = vld [vmem:[%s339 + $0x11e0] sm:$0xff]
        %v1036 = vld [vmem:[%s339 + $0x11e8] sm:$0xff]
        %v1037 = vld [vmem:[%s339 + $0x11f0] sm:$0xff]
        %v1038 = vld [vmem:[%s339 + $0x11f8] sm:$0xff]
        %v1039 = vld [vmem:[%s339 + $0x1200] sm:$0xff]
        %v1040 = vld [vmem:[%s339 + $0x1208] sm:$0xff]
        %v1041 = vld [vmem:[%s339 + $0x1210] sm:$0xff]
        %v1042 = vld [vmem:[%s339 + $0x1218] sm:$0xff]
        %v1043 = vld [vmem:[%s339 + $0x1220] sm:$0xff]
        %v1044 = vld [vmem:[%s339 + $0x1228] sm:$0xff]
        %v1045 = vld [vmem:[%s339 + $0x1230] sm:$0xff]
        %v1046 = vld [vmem:[%s339 + $0x1238] sm:$0xff]
        %v1047 = vld [vmem:[%s339 + $0x1240] sm:$0xff]
        %v1048 = vld [vmem:[%s339 + $0x1248] sm:$0xff]
        %v1049 = vld [vmem:[%s339 + $0x1250] sm:$0xff]
        %v1050 = vld [vmem:[%s339 + $0x1258] sm:$0xff]
        %v1051 = vld [vmem:[%s339 + $0x1260] sm:$0xff]
        %v1052 = vld [vmem:[%s339 + $0x1268] sm:$0xff]
        %v1053 = vld [vmem:[%s339 + $0x1270] sm:$0xff]
        %v1054 = vld [vmem:[%s339 + $0x1278] sm:$0xff]
        %v1055 = vld [vmem:[%s339 + $0x1280] sm:$0xff]
        %v1056 = vld [vmem:[%s339 + $0x1288] sm:$0xff]
        %v1057 = vld [vmem:[%s339 + $0x1290] sm:$0xff]
        %v1058 = vld [vmem:[%s339 + $0x1298] sm:$0xff]
        %v1059 = vld [vmem:[%s339 + $0x12a0] sm:$0xff]
        %v1060 = vld [vmem:[%s339 + $0x12a8] sm:$0xff]
        %v1061 = vld [vmem:[%s339 + $0x12b0] sm:$0xff]
        %v1062 = vld [vmem:[%s339 + $0x12b8] sm:$0xff]
        %v1063 = vld [vmem:[%s339 + $0x12c0] sm:$0xff]
        %v1064 = vld [vmem:[%s339 + $0x12c8] sm:$0xff]
        %v1065 = vld [vmem:[%s339 + $0x12d0] sm:$0xff]
        %v1066 = vld [vmem:[%s339 + $0x12d8] sm:$0xff]
        %v1067 = vld [vmem:[%s339 + $0x12e0] sm:$0xff]
        %v1068 = vld [vmem:[%s339 + $0x12e8] sm:$0xff]
        %v1069 = vld [vmem:[%s339 + $0x12f0] sm:$0xff]
        %v1070 = vld [vmem:[%s339 + $0x12f8] sm:$0xff]
        %v1071 = vld [vmem:[%s339 + $0x1300] sm:$0xff]
        %v1072 = vld [vmem:[%s339 + $0x1308] sm:$0xff]
        %v1073 = vld [vmem:[%s339 + $0x1310] sm:$0xff]
        %v1074 = vld [vmem:[%s339 + $0x1318] sm:$0xff]
        %v1075 = vld [vmem:[%s339 + $0x1320] sm:$0xff]
        %v1076 = vld [vmem:[%s339 + $0x1328] sm:$0xff]
        %v1077 = vld [vmem:[%s339 + $0x1330] sm:$0xff]
        %v1078 = vld [vmem:[%s339 + $0x1338] sm:$0xff]
        %v1079 = vld [vmem:[%s339 + $0x1340] sm:$0xff]
        %v1080 = vld [vmem:[%s339 + $0x1348] sm:$0xff]
        %v1081 = vld [vmem:[%s339 + $0x1350] sm:$0xff]
        %v1082 = vld [vmem:[%s339 + $0x1358] sm:$0xff]
        %v1083 = vld [vmem:[%s339 + $0x1360] sm:$0xff]
        %v1084 = vld [vmem:[%s339 + $0x1368] sm:$0xff]
        %v1085 = vld [vmem:[%s339 + $0x1370] sm:$0xff]
        %v1086 = vld [vmem:[%s339 + $0x1378] sm:$0xff]
        %v1087 = vld [vmem:[%s339 + $0x1380] sm:$0xff]
        %v1088 = vld [vmem:[%s339 + $0x1388] sm:$0xff]
        %v1089 = vld [vmem:[%s339 + $0x1390] sm:$0xff]
        %v1090 = vld [vmem:[%s339 + $0x1398] sm:$0xff]
        %v1091 = vld [vmem:[%s339 + $0x13a0] sm:$0xff]
        %v1092 = vld [vmem:[%s339 + $0x13a8] sm:$0xff]
        %v1093 = vld [vmem:[%s339 + $0x13b0] sm:$0xff]
        %v1094 = vld [vmem:[%s339 + $0x13b8] sm:$0xff]
        %v1095 = vld [vmem:[%s339 + $0x13c0] sm:$0xff]
        %v1096 = vld [vmem:[%s339 + $0x13c8] sm:$0xff]
        %v1097 = vld [vmem:[%s339 + $0x13d0] sm:$0xff]
        %v1098 = vld [vmem:[%s339 + $0x13d8] sm:$0xff]
        %v1099 = vld [vmem:[%s339 + $0x13e0] sm:$0xff]
        %v1100 = vld [vmem:[%s339 + $0x13e8] sm:$0xff]
        %v1101 = vld [vmem:[%s339 + $0x13f0] sm:$0xff]
        %v1102 = vld [vmem:[%s339 + $0x13f8] sm:$0xff]
        %v1103 = vld [vmem:[%s339 + $0x1400] sm:$0xff]
        %v1104 = vld [vmem:[%s339 + $0x1408] sm:$0xff]
        %v1105 = vld [vmem:[%s339 + $0x1410] sm:$0xff]
        %v1106 = vld [vmem:[%s339 + $0x1418] sm:$0xff]
        %v1107 = vld [vmem:[%s339 + $0x1420] sm:$0xff]
        %v1108 = vld [vmem:[%s339 + $0x1428] sm:$0xff]
        %v1109 = vld [vmem:[%s339 + $0x1430] sm:$0xff]
        %v1110 = vld [vmem:[%s339 + $0x1438] sm:$0xff]
        %v1111 = vld [vmem:[%s339 + $0x1440] sm:$0xff]
        %v1112 = vld [vmem:[%s339 + $0x1448] sm:$0xff]
        %v1113 = vld [vmem:[%s339 + $0x1450] sm:$0xff]
        %v1114 = vld [vmem:[%s339 + $0x1458] sm:$0xff]
        %v1115 = vld [vmem:[%s339 + $0x1460] sm:$0xff]
        %v1116 = vld [vmem:[%s339 + $0x1468] sm:$0xff]
        %v1117 = vld [vmem:[%s339 + $0x1470] sm:$0xff]
        %v1118 = vld [vmem:[%s339 + $0x1478] sm:$0xff]
        %v1119 = vld [vmem:[%s339 + $0x1480] sm:$0xff]
        %v1120 = vld [vmem:[%s339 + $0x1488] sm:$0xff]
        %v1121 = vld [vmem:[%s339 + $0x1490] sm:$0xff]
        %v1122 = vld [vmem:[%s339 + $0x1498] sm:$0xff]
        %v1123 = vld [vmem:[%s339 + $0x14a0] sm:$0xff]
        %v1124 = vld [vmem:[%s339 + $0x14a8] sm:$0xff]
        %v1125 = vld [vmem:[%s339 + $0x14b0] sm:$0xff]
        %v1126 = vld [vmem:[%s339 + $0x14b8] sm:$0xff]
        %v1127 = vld [vmem:[%s339 + $0x14c0] sm:$0xff]
        %v1128 = vld [vmem:[%s339 + $0x14c8] sm:$0xff]
        %v1129 = vld [vmem:[%s339 + $0x14d0] sm:$0xff]
        %v1130 = vld [vmem:[%s339 + $0x14d8] sm:$0xff]
        %v1131 = vld [vmem:[%s339 + $0x14e0] sm:$0xff]
        %v1132 = vld [vmem:[%s339 + $0x14e8] sm:$0xff]
        %v1133 = vld [vmem:[%s339 + $0x14f0] sm:$0xff]
        %v1134 = vld [vmem:[%s339 + $0x14f8] sm:$0xff]
        %v1135 = vld [vmem:[%s339 + $0x1500] sm:$0xff]
        %v1136 = vld [vmem:[%s339 + $0x1508] sm:$0xff]
        %v1137 = vld [vmem:[%s339 + $0x1510] sm:$0xff]
        %v1138 = vld [vmem:[%s339 + $0x1518] sm:$0xff]
        %v1139 = vld [vmem:[%s339 + $0x1520] sm:$0xff]
        %v1140 = vld [vmem:[%s339 + $0x1528] sm:$0xff]
        %v1141 = vld [vmem:[%s339 + $0x1530] sm:$0xff]
        %v1142 = vld [vmem:[%s339 + $0x1538] sm:$0xff]
        %v1143 = vld [vmem:[%s339 + $0x1540] sm:$0xff]
        %v1144 = vld [vmem:[%s339 + $0x1548] sm:$0xff]
        %v1145 = vld [vmem:[%s339 + $0x1550] sm:$0xff]
        %v1146 = vld [vmem:[%s339 + $0x1558] sm:$0xff]
        %v1147 = vld [vmem:[%s339 + $0x1560] sm:$0xff]
        %v1148 = vld [vmem:[%s339 + $0x1568] sm:$0xff]
        %v1149 = vld [vmem:[%s339 + $0x1570] sm:$0xff]
        %v1150 = vld [vmem:[%s339 + $0x1578] sm:$0xff]
        %v1151 = vld [vmem:[%s339 + $0x1580] sm:$0xff]
        %v1152 = vld [vmem:[%s339 + $0x1588] sm:$0xff]
        %v1153 = vld [vmem:[%s339 + $0x1590] sm:$0xff]
        %v1154 = vld [vmem:[%s339 + $0x1598] sm:$0xff]
        %v1155 = vld [vmem:[%s339 + $0x15a0] sm:$0xff]
        %v1156 = vld [vmem:[%s339 + $0x15a8] sm:$0xff]
        %v1157 = vld [vmem:[%s339 + $0x15b0] sm:$0xff]
        %v1158 = vld [vmem:[%s339 + $0x15b8] sm:$0xff]
        %v1159 = vld [vmem:[%s339 + $0x15c0] sm:$0xff]
        %v1160 = vld [vmem:[%s339 + $0x15c8] sm:$0xff]
        %v1161 = vld [vmem:[%s339 + $0x15d0] sm:$0xff]
        %v1162 = vld [vmem:[%s339 + $0x15d8] sm:$0xff]
        %v1163 = vld [vmem:[%s339 + $0x15e0] sm:$0xff]
        %v1164 = vld [vmem:[%s339 + $0x15e8] sm:$0xff]
        %v1165 = vld [vmem:[%s339 + $0x15f0] sm:$0xff]
        %v1166 = vld [vmem:[%s339 + $0x15f8] sm:$0xff]
        %v1167 = vld [vmem:[%s339 + $0x1600] sm:$0xff]
        %v1168 = vld [vmem:[%s339 + $0x1608] sm:$0xff]
        %v1169 = vld [vmem:[%s339 + $0x1610] sm:$0xff]
        %v1170 = vld [vmem:[%s339 + $0x1618] sm:$0xff]
        %v1171 = vld [vmem:[%s339 + $0x1620] sm:$0xff]
        %v1172 = vld [vmem:[%s339 + $0x1628] sm:$0xff]
        %v1173 = vld [vmem:[%s339 + $0x1630] sm:$0xff]
        %v1174 = vld [vmem:[%s339 + $0x1638] sm:$0xff]
        %v1175 = vld [vmem:[%s339 + $0x1640] sm:$0xff]
        %v1176 = vld [vmem:[%s339 + $0x1648] sm:$0xff]
        %v1177 = vld [vmem:[%s339 + $0x1650] sm:$0xff]
        %v1178 = vld [vmem:[%s339 + $0x1658] sm:$0xff]
        %v1179 = vld [vmem:[%s339 + $0x1660] sm:$0xff]
        %v1180 = vld [vmem:[%s339 + $0x1668] sm:$0xff]
        %v1181 = vld [vmem:[%s339 + $0x1670] sm:$0xff]
        %v1182 = vld [vmem:[%s339 + $0x1678] sm:$0xff]
        %v1183 = vld [vmem:[%s339 + $0x1680] sm:$0xff]
        %v1184 = vld [vmem:[%s339 + $0x1688] sm:$0xff]
        %v1185 = vld [vmem:[%s339 + $0x1690] sm:$0xff]
        %v1186 = vld [vmem:[%s339 + $0x1698] sm:$0xff]
        %v1187 = vld [vmem:[%s339 + $0x16a0] sm:$0xff]
        %v1188 = vld [vmem:[%s339 + $0x16a8] sm:$0xff]
        %v1189 = vld [vmem:[%s339 + $0x16b0] sm:$0xff]
        %v1190 = vld [vmem:[%s339 + $0x16b8] sm:$0xff]
        %v1191 = vld [vmem:[%s339 + $0x16c0] sm:$0xff]
        %v1192 = vld [vmem:[%s339 + $0x16c8] sm:$0xff]
        %v1193 = vld [vmem:[%s339 + $0x16d0] sm:$0xff]
        %v1194 = vld [vmem:[%s339 + $0x16d8] sm:$0xff]
        %v1195 = vld [vmem:[%s339 + $0x16e0] sm:$0xff]
        %v1196 = vld [vmem:[%s339 + $0x16e8] sm:$0xff]
        %v1197 = vld [vmem:[%s339 + $0x16f0] sm:$0xff]
        %v1198 = vld [vmem:[%s339 + $0x16f8] sm:$0xff]
        %v1199 = vld [vmem:[%s339 + $0x1700] sm:$0xff]
        %v1200 = vld [vmem:[%s339 + $0x1708] sm:$0xff]
        %v1201 = vld [vmem:[%s339 + $0x1710] sm:$0xff]
        %v1202 = vld [vmem:[%s339 + $0x1718] sm:$0xff]
        %v1203 = vld [vmem:[%s339 + $0x1720] sm:$0xff]
        %v1204 = vld [vmem:[%s339 + $0x1728] sm:$0xff]
        %v1205 = vld [vmem:[%s339 + $0x1730] sm:$0xff]
        %v1206 = vld [vmem:[%s339 + $0x1738] sm:$0xff]
        %v1207 = vld [vmem:[%s339 + $0x1740] sm:$0xff]
        %v1208 = vld [vmem:[%s339 + $0x1748] sm:$0xff]
        %v1209 = vld [vmem:[%s339 + $0x1750] sm:$0xff]
        %v1210 = vld [vmem:[%s339 + $0x1758] sm:$0xff]
        %v1211 = vld [vmem:[%s339 + $0x1760] sm:$0xff]
        %v1212 = vld [vmem:[%s339 + $0x1768] sm:$0xff]
        %v1213 = vld [vmem:[%s339 + $0x1770] sm:$0xff]
        %v1214 = vld [vmem:[%s339 + $0x1778] sm:$0xff]
        %v1215 = vld [vmem:[%s339 + $0x1780] sm:$0xff]
        %v1216 = vld [vmem:[%s339 + $0x1788] sm:$0xff]
        %v1217 = vld [vmem:[%s339 + $0x1790] sm:$0xff]
        %v1218 = vld [vmem:[%s339 + $0x1798] sm:$0xff]
        %v1219 = vld [vmem:[%s339 + $0x17a0] sm:$0xff]
        %v1220 = vld [vmem:[%s339 + $0x17a8] sm:$0xff]
        %v1221 = vld [vmem:[%s339 + $0x17b0] sm:$0xff]
        %v1222 = vld [vmem:[%s339 + $0x17b8] sm:$0xff]
        %v1223 = vld [vmem:[%s339 + $0x17c0] sm:$0xff]
        %v1224 = vld [vmem:[%s339 + $0x17c8] sm:$0xff]
        %v1225 = vld [vmem:[%s339 + $0x17d0] sm:$0xff]
        %v1226 = vld [vmem:[%s339 + $0x17d8] sm:$0xff]
        %v1227 = vld [vmem:[%s339 + $0x17e0] sm:$0xff]
        %v1228 = vld [vmem:[%s339 + $0x17e8] sm:$0xff]
        %v1229 = vld [vmem:[%s339 + $0x17f0] sm:$0xff]
        %v1230 = vld [vmem:[%s339 + $0x17f8] sm:$0xff]
        %v1231 = vld [vmem:[%s339 + $0x1800] sm:$0xff]
        %v1232 = vld [vmem:[%s339 + $0x1808] sm:$0xff]
        %v1233 = vld [vmem:[%s339 + $0x1810] sm:$0xff]
        %v1234 = vld [vmem:[%s339 + $0x1818] sm:$0xff]
        %v1235 = vld [vmem:[%s339 + $0x1820] sm:$0xff]
        %v1236 = vld [vmem:[%s339 + $0x1828] sm:$0xff]
        %v1237 = vld [vmem:[%s339 + $0x1830] sm:$0xff]
        %v1238 = vld [vmem:[%s339 + $0x1838] sm:$0xff]
        %v1239 = vld [vmem:[%s339 + $0x1840] sm:$0xff]
        %v1240 = vld [vmem:[%s339 + $0x1848] sm:$0xff]
        %v1241 = vld [vmem:[%s339 + $0x1850] sm:$0xff]
        %v1242 = vld [vmem:[%s339 + $0x1858] sm:$0xff]
        %v1243 = vld [vmem:[%s339 + $0x1860] sm:$0xff]
        %v1244 = vld [vmem:[%s339 + $0x1868] sm:$0xff]
        %v1245 = vld [vmem:[%s339 + $0x1870] sm:$0xff]
        %v1246 = vld [vmem:[%s339 + $0x1878] sm:$0xff]
        %v1247 = vld [vmem:[%s339 + $0x1880] sm:$0xff]
        %v1248 = vld [vmem:[%s339 + $0x1888] sm:$0xff]
        %v1249 = vld [vmem:[%s339 + $0x1890] sm:$0xff]
        %v1250 = vld [vmem:[%s339 + $0x1898] sm:$0xff]
        %v1251 = vld [vmem:[%s339 + $0x18a0] sm:$0xff]
        %v1252 = vld [vmem:[%s339 + $0x18a8] sm:$0xff]
        %v1253 = vld [vmem:[%s339 + $0x18b0] sm:$0xff]
        %v1254 = vld [vmem:[%s339 + $0x18b8] sm:$0xff]
        %v1255 = vld [vmem:[%s339 + $0x18c0] sm:$0xff]
        %v1256 = vld [vmem:[%s339 + $0x18c8] sm:$0xff]
        %v1257 = vld [vmem:[%s339 + $0x18d0] sm:$0xff]
        %v1258 = vld [vmem:[%s339 + $0x18d8] sm:$0xff]
        %v1259 = vld [vmem:[%s339 + $0x18e0] sm:$0xff]
        %v1260 = vld [vmem:[%s339 + $0x18e8] sm:$0xff]
        %v1261 = vld [vmem:[%s339 + $0x18f0] sm:$0xff]
        %v1262 = vld [vmem:[%s339 + $0x18f8] sm:$0xff]
        %v1263 = vld [vmem:[%s339 + $0x1900] sm:$0xff]
        %v1264 = vld [vmem:[%s339 + $0x1908] sm:$0xff]
        %v1265 = vld [vmem:[%s339 + $0x1910] sm:$0xff]
        %v1266 = vld [vmem:[%s339 + $0x1918] sm:$0xff]
        %v1267 = vld [vmem:[%s339 + $0x1920] sm:$0xff]
        %v1268 = vld [vmem:[%s339 + $0x1928] sm:$0xff]
        %v1269 = vld [vmem:[%s339 + $0x1930] sm:$0xff]
        %v1270 = vld [vmem:[%s339 + $0x1938] sm:$0xff]
        %v1271 = vld [vmem:[%s339 + $0x1940] sm:$0xff]
        %v1272 = vld [vmem:[%s339 + $0x1948] sm:$0xff]
        %v1273 = vld [vmem:[%s339 + $0x1950] sm:$0xff]
        %v1274 = vld [vmem:[%s339 + $0x1958] sm:$0xff]
        %v1275 = vld [vmem:[%s339 + $0x1960] sm:$0xff]
        %v1276 = vld [vmem:[%s339 + $0x1968] sm:$0xff]
        %v1277 = vld [vmem:[%s339 + $0x1970] sm:$0xff]
        %v1278 = vld [vmem:[%s339 + $0x1978] sm:$0xff]
        %v1279 = vld [vmem:[%s339 + $0x1980] sm:$0xff]
        %v1280 = vld [vmem:[%s339 + $0x1988] sm:$0xff]
        %v1281 = vld [vmem:[%s339 + $0x1990] sm:$0xff]
        %v1282 = vld [vmem:[%s339 + $0x1998] sm:$0xff]
        %v1283 = vld [vmem:[%s339 + $0x19a0] sm:$0xff]
        %v1284 = vld [vmem:[%s339 + $0x19a8] sm:$0xff]
        %v1285 = vld [vmem:[%s339 + $0x19b0] sm:$0xff]
        %v1286 = vld [vmem:[%s339 + $0x19b8] sm:$0xff]
        %v1287 = vld [vmem:[%s339 + $0x19c0] sm:$0xff]
        %v1288 = vld [vmem:[%s339 + $0x19c8] sm:$0xff]
        %v1289 = vld [vmem:[%s339 + $0x19d0] sm:$0xff]
        %v1290 = vld [vmem:[%s339 + $0x19d8] sm:$0xff]
        %v1291 = vld [vmem:[%s339 + $0x19e0] sm:$0xff]
        %v1292 = vld [vmem:[%s339 + $0x19e8] sm:$0xff]
        %v1293 = vld [vmem:[%s339 + $0x19f0] sm:$0xff]
        %v1294 = vld [vmem:[%s339 + $0x19f8] sm:$0xff]
        %v1295 = vld [vmem:[%s339 + $0x1a00] sm:$0xff]
        %v1296 = vld [vmem:[%s339 + $0x1a08] sm:$0xff]
        %v1297 = vld [vmem:[%s339 + $0x1a10] sm:$0xff]
        %v1298 = vld [vmem:[%s339 + $0x1a18] sm:$0xff]
        %v1299 = vld [vmem:[%s339 + $0x1a20] sm:$0xff]
        %v1300 = vld [vmem:[%s339 + $0x1a28] sm:$0xff]
        %v1301 = vld [vmem:[%s339 + $0x1a30] sm:$0xff]
        %v1302 = vld [vmem:[%s339 + $0x1a38] sm:$0xff]
        %v1303 = vld [vmem:[%s339 + $0x1a40] sm:$0xff]
        %v1304 = vld [vmem:[%s339 + $0x1a48] sm:$0xff]
        %v1305 = vld [vmem:[%s339 + $0x1a50] sm:$0xff]
        %v1306 = vld [vmem:[%s339 + $0x1a58] sm:$0xff]
        %v1307 = vld [vmem:[%s339 + $0x1a60] sm:$0xff]
        %v1308 = vld [vmem:[%s339 + $0x1a68] sm:$0xff]
        %v1309 = vld [vmem:[%s339 + $0x1a70] sm:$0xff]
        %v1310 = vld [vmem:[%s339 + $0x1a78] sm:$0xff]
        %v1311 = vld [vmem:[%s339 + $0x1a80] sm:$0xff]
        %v1312 = vld [vmem:[%s339 + $0x1a88] sm:$0xff]
        %v1313 = vld [vmem:[%s339 + $0x1a90] sm:$0xff]
        %v1314 = vld [vmem:[%s339 + $0x1a98] sm:$0xff]
        %v1315 = vld [vmem:[%s339 + $0x1aa0] sm:$0xff]
        %v1316 = vld [vmem:[%s339 + $0x1aa8] sm:$0xff]
        %v1317 = vld [vmem:[%s339 + $0x1ab0] sm:$0xff]
        %v1318 = vld [vmem:[%s339 + $0x1ab8] sm:$0xff]
        %v1319 = vld [vmem:[%s339 + $0x1ac0] sm:$0xff]
        %v1320 = vld [vmem:[%s339 + $0x1ac8] sm:$0xff]
        %v1321 = vld [vmem:[%s339 + $0x1ad0] sm:$0xff]
        %v1322 = vld [vmem:[%s339 + $0x1ad8] sm:$0xff]
        %v1323 = vld [vmem:[%s339 + $0x1ae0] sm:$0xff]
        %v1324 = vld [vmem:[%s339 + $0x1ae8] sm:$0xff]
        %v1325 = vld [vmem:[%s339 + $0x1af0] sm:$0xff]
        %v1326 = vld [vmem:[%s339 + $0x1af8] sm:$0xff]
        %v1327 = vld [vmem:[%s339 + $0x1b00] sm:$0xff]
        %v1328 = vld [vmem:[%s339 + $0x1b08] sm:$0xff]
        %v1329 = vld [vmem:[%s339 + $0x1b10] sm:$0xff]
        %v1330 = vld [vmem:[%s339 + $0x1b18] sm:$0xff]
        %v1331 = vld [vmem:[%s339 + $0x1b20] sm:$0xff]
        %v1332 = vld [vmem:[%s339 + $0x1b28] sm:$0xff]
        %v1333 = vld [vmem:[%s339 + $0x1b30] sm:$0xff]
        %v1334 = vld [vmem:[%s339 + $0x1b38] sm:$0xff]
        %v1335 = vld [vmem:[%s339 + $0x1b40] sm:$0xff]
        %v1336 = vld [vmem:[%s339 + $0x1b48] sm:$0xff]
        %v1337 = vld [vmem:[%s339 + $0x1b50] sm:$0xff]
        %v1338 = vld [vmem:[%s339 + $0x1b58] sm:$0xff]
        %v1339 = vld [vmem:[%s339 + $0x1b60] sm:$0xff]
        %v1340 = vld [vmem:[%s339 + $0x1b68] sm:$0xff]
        %v1341 = vld [vmem:[%s339 + $0x1b70] sm:$0xff]
        %v1342 = vld [vmem:[%s339 + $0x1b78] sm:$0xff]
        %v1343 = vld [vmem:[%s339 + $0x1b80] sm:$0xff]
        %v1344 = vld [vmem:[%s339 + $0x1b88] sm:$0xff]
        %v1345 = vld [vmem:[%s339 + $0x1b90] sm:$0xff]
        %v1346 = vld [vmem:[%s339 + $0x1b98] sm:$0xff]
        %v1347 = vld [vmem:[%s339 + $0x1ba0] sm:$0xff]
        %v1348 = vld [vmem:[%s339 + $0x1ba8] sm:$0xff]
        %v1349 = vld [vmem:[%s339 + $0x1bb0] sm:$0xff]
        %v1350 = vld [vmem:[%s339 + $0x1bb8] sm:$0xff]
        %v1351 = vld [vmem:[%s339 + $0x1bc0] sm:$0xff]
        %v1352 = vld [vmem:[%s339 + $0x1bc8] sm:$0xff]
        %v1353 = vld [vmem:[%s339 + $0x1bd0] sm:$0xff]
        %v1354 = vld [vmem:[%s339 + $0x1bd8] sm:$0xff]
        %v1355 = vld [vmem:[%s339 + $0x1be0] sm:$0xff]
        %v1356 = vld [vmem:[%s339 + $0x1be8] sm:$0xff]
        %v1357 = vld [vmem:[%s339 + $0x1bf0] sm:$0xff]
        %v1358 = vld [vmem:[%s339 + $0x1bf8] sm:$0xff]
        %v1359 = vld [vmem:[%s339 + $0x1c00] sm:$0xff]
        %v1360 = vld [vmem:[%s339 + $0x1c08] sm:$0xff]
        %v1361 = vld [vmem:[%s339 + $0x1c10] sm:$0xff]
        %v1362 = vld [vmem:[%s339 + $0x1c18] sm:$0xff]
        %v1363 = vld [vmem:[%s339 + $0x1c20] sm:$0xff]
        %v1364 = vld [vmem:[%s339 + $0x1c28] sm:$0xff]
        %v1365 = vld [vmem:[%s339 + $0x1c30] sm:$0xff]
        %v1366 = vld [vmem:[%s339 + $0x1c38] sm:$0xff]
        %v1367 = vld [vmem:[%s339 + $0x1c40] sm:$0xff]
        %v1368 = vld [vmem:[%s339 + $0x1c48] sm:$0xff]
        %v1369 = vld [vmem:[%s339 + $0x1c50] sm:$0xff]
        %v1370 = vld [vmem:[%s339 + $0x1c58] sm:$0xff]
        %v1371 = vld [vmem:[%s339 + $0x1c60] sm:$0xff]
        %v1372 = vld [vmem:[%s339 + $0x1c68] sm:$0xff]
        %v1373 = vld [vmem:[%s339 + $0x1c70] sm:$0xff]
        %v1374 = vld [vmem:[%s339 + $0x1c78] sm:$0xff]
        %v1375 = vld [vmem:[%s339 + $0x1c80] sm:$0xff]
        %v1376 = vld [vmem:[%s339 + $0x1c88] sm:$0xff]
        %v1377 = vld [vmem:[%s339 + $0x1c90] sm:$0xff]
        %v1378 = vld [vmem:[%s339 + $0x1c98] sm:$0xff]
        %v1379 = vld [vmem:[%s339 + $0x1ca0] sm:$0xff]
        %v1380 = vld [vmem:[%s339 + $0x1ca8] sm:$0xff]
        %v1381 = vld [vmem:[%s339 + $0x1cb0] sm:$0xff]
        %v1382 = vld [vmem:[%s339 + $0x1cb8] sm:$0xff]
        %v1383 = vld [vmem:[%s339 + $0x1cc0] sm:$0xff]
        %v1384 = vld [vmem:[%s339 + $0x1cc8] sm:$0xff]
        %v1385 = vld [vmem:[%s339 + $0x1cd0] sm:$0xff]
        %v1386 = vld [vmem:[%s339 + $0x1cd8] sm:$0xff]
        %v1387 = vld [vmem:[%s339 + $0x1ce0] sm:$0xff]
        %v1388 = vld [vmem:[%s339 + $0x1ce8] sm:$0xff]
        %v1389 = vld [vmem:[%s339 + $0x1cf0] sm:$0xff]
        %v1390 = vld [vmem:[%s339 + $0x1cf8] sm:$0xff]
        %v1391 = vld [vmem:[%s339 + $0x1d00] sm:$0xff]
        %v1392 = vld [vmem:[%s339 + $0x1d08] sm:$0xff]
        %v1393 = vld [vmem:[%s339 + $0x1d10] sm:$0xff]
        %v1394 = vld [vmem:[%s339 + $0x1d18] sm:$0xff]
        %v1395 = vld [vmem:[%s339 + $0x1d20] sm:$0xff]
        %v1396 = vld [vmem:[%s339 + $0x1d28] sm:$0xff]
        %v1397 = vld [vmem:[%s339 + $0x1d30] sm:$0xff]
        %v1398 = vld [vmem:[%s339 + $0x1d38] sm:$0xff]
        %v1399 = vld [vmem:[%s339 + $0x1d40] sm:$0xff]
        %v1400 = vld [vmem:[%s339 + $0x1d48] sm:$0xff]
        %v1401 = vld [vmem:[%s339 + $0x1d50] sm:$0xff]
        %v1402 = vld [vmem:[%s339 + $0x1d58] sm:$0xff]
        %v1403 = vld [vmem:[%s339 + $0x1d60] sm:$0xff]
        %v1404 = vld [vmem:[%s339 + $0x1d68] sm:$0xff]
        %v1405 = vld [vmem:[%s339 + $0x1d70] sm:$0xff]
        %v1406 = vld [vmem:[%s339 + $0x1d78] sm:$0xff]
        %v1407 = vld [vmem:[%s339 + $0x1d80] sm:$0xff]
        %v1408 = vld [vmem:[%s339 + $0x1d88] sm:$0xff]
        %v1409 = vld [vmem:[%s339 + $0x1d90] sm:$0xff]
        %v1410 = vld [vmem:[%s339 + $0x1d98] sm:$0xff]
        %v1411 = vld [vmem:[%s339 + $0x1da0] sm:$0xff]
        %v1412 = vld [vmem:[%s339 + $0x1da8] sm:$0xff]
        %v1413 = vld [vmem:[%s339 + $0x1db0] sm:$0xff]
        %v1414 = vld [vmem:[%s339 + $0x1db8] sm:$0xff]
        %v1415 = vld [vmem:[%s339 + $0x1dc0] sm:$0xff]
        %v1416 = vld [vmem:[%s339 + $0x1dc8] sm:$0xff]
        %v1417 = vld [vmem:[%s339 + $0x1dd0] sm:$0xff]
        %v1418 = vld [vmem:[%s339 + $0x1dd8] sm:$0xff]
        %v1419 = vld [vmem:[%s339 + $0x1de0] sm:$0xff]
        %v1420 = vld [vmem:[%s339 + $0x1de8] sm:$0xff]
        %v1421 = vld [vmem:[%s339 + $0x1df0] sm:$0xff]
        %v1422 = vld [vmem:[%s339 + $0x1df8] sm:$0xff]
        %v1423 = vld [vmem:[%s339 + $0x1e00] sm:$0xff]
        %v1424 = vld [vmem:[%s339 + $0x1e08] sm:$0xff]
        %v1425 = vld [vmem:[%s339 + $0x1e10] sm:$0xff]
        %v1426 = vld [vmem:[%s339 + $0x1e18] sm:$0xff]
        %v1427 = vld [vmem:[%s339 + $0x1e20] sm:$0xff]
        %v1428 = vld [vmem:[%s339 + $0x1e28] sm:$0xff]
        %v1429 = vld [vmem:[%s339 + $0x1e30] sm:$0xff]
        %v1430 = vld [vmem:[%s339 + $0x1e38] sm:$0xff]
        %v1431 = vld [vmem:[%s339 + $0x1e40] sm:$0xff]
        %v1432 = vld [vmem:[%s339 + $0x1e48] sm:$0xff]
        %v1433 = vld [vmem:[%s339 + $0x1e50] sm:$0xff]
        %v1434 = vld [vmem:[%s339 + $0x1e58] sm:$0xff]
        %v1435 = vld [vmem:[%s339 + $0x1e60] sm:$0xff]
        %v1436 = vld [vmem:[%s339 + $0x1e68] sm:$0xff]
        %v1437 = vld [vmem:[%s339 + $0x1e70] sm:$0xff]
        %v1438 = vld [vmem:[%s339 + $0x1e78] sm:$0xff]
        %v1439 = vld [vmem:[%s339 + $0x1e80] sm:$0xff]
        %v1440 = vld [vmem:[%s339 + $0x1e88] sm:$0xff]
        %v1441 = vld [vmem:[%s339 + $0x1e90] sm:$0xff]
        %v1442 = vld [vmem:[%s339 + $0x1e98] sm:$0xff]
        %v1443 = vld [vmem:[%s339 + $0x1ea0] sm:$0xff]
        %v1444 = vld [vmem:[%s339 + $0x1ea8] sm:$0xff]
        %v1445 = vld [vmem:[%s339 + $0x1eb0] sm:$0xff]
        %v1446 = vld [vmem:[%s339 + $0x1eb8] sm:$0xff]
        %v1447 = vld [vmem:[%s339 + $0x1ec0] sm:$0xff]
        %v1448 = vld [vmem:[%s339 + $0x1ec8] sm:$0xff]
        %v1449 = vld [vmem:[%s339 + $0x1ed0] sm:$0xff]
        %v1450 = vld [vmem:[%s339 + $0x1ed8] sm:$0xff]
        %v1451 = vld [vmem:[%s339 + $0x1ee0] sm:$0xff]
        %v1452 = vld [vmem:[%s339 + $0x1ee8] sm:$0xff]
        %v1453 = vld [vmem:[%s339 + $0x1ef0] sm:$0xff]
        %v1454 = vld [vmem:[%s339 + $0x1ef8] sm:$0xff]
        %v1455 = vld [vmem:[%s339 + $0x1f00] sm:$0xff]
        %v1456 = vld [vmem:[%s339 + $0x1f08] sm:$0xff]
        %v1457 = vld [vmem:[%s339 + $0x1f10] sm:$0xff]
        %v1458 = vld [vmem:[%s339 + $0x1f18] sm:$0xff]
        %v1459 = vld [vmem:[%s339 + $0x1f20] sm:$0xff]
        %v1460 = vld [vmem:[%s339 + $0x1f28] sm:$0xff]
        %v1461 = vld [vmem:[%s339 + $0x1f30] sm:$0xff]
        %v1462 = vld [vmem:[%s339 + $0x1f38] sm:$0xff]
        %v1463 = vld [vmem:[%s339 + $0x1f40] sm:$0xff]
        %v1464 = vld [vmem:[%s339 + $0x1f48] sm:$0xff]
        %v1465 = vld [vmem:[%s339 + $0x1f50] sm:$0xff]
        %v1466 = vld [vmem:[%s339 + $0x1f58] sm:$0xff]
        %v1467 = vld [vmem:[%s339 + $0x1f60] sm:$0xff]
        %v1468 = vld [vmem:[%s339 + $0x1f68] sm:$0xff]
        %v1469 = vld [vmem:[%s339 + $0x1f70] sm:$0xff]
        %v1470 = vld [vmem:[%s339 + $0x1f78] sm:$0xff]
        %v1471 = vld [vmem:[%s339 + $0x1f80] sm:$0xff]
        %v1472 = vld [vmem:[%s339 + $0x1f88] sm:$0xff]
        %v1473 = vld [vmem:[%s339 + $0x1f90] sm:$0xff]
        %v1474 = vld [vmem:[%s339 + $0x1f98] sm:$0xff]
        %v1475 = vld [vmem:[%s339 + $0x1fa0] sm:$0xff]
        %v1476 = vld [vmem:[%s339 + $0x1fa8] sm:$0xff]
        %v1477 = vld [vmem:[%s339 + $0x1fb0] sm:$0xff]
        %v1478 = vld [vmem:[%s339 + $0x1fb8] sm:$0xff]
        %v1479 = vld [vmem:[%s339 + $0x1fc0] sm:$0xff]
        %v1480 = vld [vmem:[%s339 + $0x1fc8] sm:$0xff]
        %v1481 = vld [vmem:[%s339 + $0x1fd0] sm:$0xff]
        %v1482 = vld [vmem:[%s339 + $0x1fd8] sm:$0xff]
        %v1483 = vld [vmem:[%s339 + $0x1fe0] sm:$0xff]
        %v1484 = vld [vmem:[%s339 + $0x1fe8] sm:$0xff]
        %v1485 = vld [vmem:[%s339 + $0x1ff0] sm:$0xff]
        %v1486 = vld [vmem:[%s339 + $0x1ff8] sm:$0xff]
        %v1551 = vunpack.c.l.b16 %v399
        %v1552 = vunpack.c.h.b16 %v399
        %v1553 = vunpack.c.l.b16 %v400
        %v1554 = vunpack.c.h.b16 %v400
        %v1555 = vunpack.c.l.b16 %v401
        %v1556 = vunpack.c.h.b16 %v401
        %v1557 = vunpack.c.l.b16 %v402
        %v1558 = vunpack.c.h.b16 %v402
        %v1559 = vunpack.c.l.b16 %v403
        %v1560 = vunpack.c.h.b16 %v403
        %v1561 = vunpack.c.l.b16 %v404
        %v1562 = vunpack.c.h.b16 %v404
        %v1563 = vunpack.c.l.b16 %v405
        %v1564 = vunpack.c.h.b16 %v405
        %v1565 = vunpack.c.l.b16 %v406
        %v1566 = vunpack.c.h.b16 %v406
        %v1567 = vunpack.c.l.b16 %v407
        %v1568 = vunpack.c.h.b16 %v407
        %v1569 = vunpack.c.l.b16 %v408
        %v1570 = vunpack.c.h.b16 %v408
        %v1571 = vunpack.c.l.b16 %v409
        %v1572 = vunpack.c.h.b16 %v409
        %v1573 = vunpack.c.l.b16 %v410
        %v1574 = vunpack.c.h.b16 %v410
        %v1575 = vunpack.c.l.b16 %v411
        %v1576 = vunpack.c.h.b16 %v411
        %v1577 = vunpack.c.l.b16 %v412
        %v1578 = vunpack.c.h.b16 %v412
        %v1579 = vunpack.c.l.b16 %v413
        %v1580 = vunpack.c.h.b16 %v413
        %v1581 = vunpack.c.l.b16 %v414
        %v1582 = vunpack.c.h.b16 %v414
        %v1583 = vunpack.c.l.b16 %v415
        %v1584 = vunpack.c.h.b16 %v415
        %v1585 = vunpack.c.l.b16 %v416
        %v1586 = vunpack.c.h.b16 %v416
        %v1587 = vunpack.c.l.b16 %v417
        %v1588 = vunpack.c.h.b16 %v417
        %v1589 = vunpack.c.l.b16 %v418
        %v1590 = vunpack.c.h.b16 %v418
        %v1591 = vunpack.c.l.b16 %v419
        %v1592 = vunpack.c.h.b16 %v419
        %v1593 = vunpack.c.l.b16 %v420
        %v1594 = vunpack.c.h.b16 %v420
        %v1595 = vunpack.c.l.b16 %v421
        %v1596 = vunpack.c.h.b16 %v421
        %v1597 = vunpack.c.l.b16 %v422
        %v1598 = vunpack.c.h.b16 %v422
        %v1599 = vunpack.c.l.b16 %v423
        %v1600 = vunpack.c.h.b16 %v423
        %v1601 = vunpack.c.l.b16 %v424
        %v1602 = vunpack.c.h.b16 %v424
        %v1603 = vunpack.c.l.b16 %v425
        %v1604 = vunpack.c.h.b16 %v425
        %v1605 = vunpack.c.l.b16 %v426
        %v1606 = vunpack.c.h.b16 %v426
        %v1607 = vunpack.c.l.b16 %v427
        %v1608 = vunpack.c.h.b16 %v427
        %v1609 = vunpack.c.l.b16 %v428
        %v1610 = vunpack.c.h.b16 %v428
        %v1611 = vunpack.c.l.b16 %v429
        %v1612 = vunpack.c.h.b16 %v429
        %v1613 = vunpack.c.l.b16 %v430
        %v1614 = vunpack.c.h.b16 %v430
        %v1615 = vunpack.c.l.b16 %v431
        %v1616 = vunpack.c.h.b16 %v431
        %v1617 = vunpack.c.l.b16 %v432
        %v1618 = vunpack.c.h.b16 %v432
        %v1619 = vunpack.c.l.b16 %v433
        %v1620 = vunpack.c.h.b16 %v433
        %v1621 = vunpack.c.l.b16 %v434
        %v1622 = vunpack.c.h.b16 %v434
        %v1623 = vunpack.c.l.b16 %v435
        %v1624 = vunpack.c.h.b16 %v435
        %v1625 = vunpack.c.l.b16 %v436
        %v1626 = vunpack.c.h.b16 %v436
        %v1627 = vunpack.c.l.b16 %v437
        %v1628 = vunpack.c.h.b16 %v437
        %v1629 = vunpack.c.l.b16 %v438
        %v1630 = vunpack.c.h.b16 %v438
        %v1631 = vunpack.c.l.b16 %v439
        %v1632 = vunpack.c.h.b16 %v439
        %v1633 = vunpack.c.l.b16 %v440
        %v1634 = vunpack.c.h.b16 %v440
        %v1635 = vunpack.c.l.b16 %v441
        %v1636 = vunpack.c.h.b16 %v441
        %v1637 = vunpack.c.l.b16 %v442
        %v1638 = vunpack.c.h.b16 %v442
        %v1639 = vunpack.c.l.b16 %v443
        %v1640 = vunpack.c.h.b16 %v443
        %v1641 = vunpack.c.l.b16 %v444
        %v1642 = vunpack.c.h.b16 %v444
        %v1643 = vunpack.c.l.b16 %v445
        %v1644 = vunpack.c.h.b16 %v445
        %v1645 = vunpack.c.l.b16 %v446
        %v1646 = vunpack.c.h.b16 %v446
        %v1647 = vunpack.c.l.b16 %v447
        %v1648 = vunpack.c.h.b16 %v447
        %v1649 = vunpack.c.l.b16 %v448
        %v1650 = vunpack.c.h.b16 %v448
        %v1651 = vunpack.c.l.b16 %v449
        %v1652 = vunpack.c.h.b16 %v449
        %v1653 = vunpack.c.l.b16 %v450
        %v1654 = vunpack.c.h.b16 %v450
        %v1655 = vunpack.c.l.b16 %v451
        %v1656 = vunpack.c.h.b16 %v451
        %v1657 = vunpack.c.l.b16 %v452
        %v1658 = vunpack.c.h.b16 %v452
        %v1659 = vunpack.c.l.b16 %v453
        %v1660 = vunpack.c.h.b16 %v453
        %v1661 = vunpack.c.l.b16 %v454
        %v1662 = vunpack.c.h.b16 %v454
        %v1663 = vunpack.c.l.b16 %v455
        %v1664 = vunpack.c.h.b16 %v455
        %v1665 = vunpack.c.l.b16 %v456
        %v1666 = vunpack.c.h.b16 %v456
        %v1667 = vunpack.c.l.b16 %v457
        %v1668 = vunpack.c.h.b16 %v457
        %v1669 = vunpack.c.l.b16 %v458
        %v1670 = vunpack.c.h.b16 %v458
        %v1671 = vunpack.c.l.b16 %v459
        %v1672 = vunpack.c.h.b16 %v459
        %v1673 = vunpack.c.l.b16 %v460
        %v1674 = vunpack.c.h.b16 %v460
        %v1675 = vunpack.c.l.b16 %v461
        %v1676 = vunpack.c.h.b16 %v461
        %v1677 = vunpack.c.l.b16 %v462
        %v1678 = vunpack.c.h.b16 %v462
        %v1679 = vpack.c.b16 %v1615, %v1551
        %v1680 = vpack.c.b16 %v1616, %v1552
        %v1681 = vpack.c.b16 %v1617, %v1553
        %v1682 = vpack.c.b16 %v1618, %v1554
        %v1683 = vpack.c.b16 %v1619, %v1555
        %v1684 = vpack.c.b16 %v1620, %v1556
        %v1685 = vpack.c.b16 %v1621, %v1557
        %v1686 = vpack.c.b16 %v1622, %v1558
        %v1687 = vpack.c.b16 %v1623, %v1559
        %v1688 = vpack.c.b16 %v1624, %v1560
        %v1689 = vpack.c.b16 %v1625, %v1561
        %v1690 = vpack.c.b16 %v1626, %v1562
        %v1691 = vpack.c.b16 %v1627, %v1563
        %v1692 = vpack.c.b16 %v1628, %v1564
        %v1693 = vpack.c.b16 %v1629, %v1565
        %v1694 = vpack.c.b16 %v1630, %v1566
        %v1695 = vpack.c.b16 %v1631, %v1567
        %v1696 = vpack.c.b16 %v1632, %v1568
        %v1697 = vpack.c.b16 %v1633, %v1569
        %v1698 = vpack.c.b16 %v1634, %v1570
        %v1699 = vpack.c.b16 %v1635, %v1571
        %v1700 = vpack.c.b16 %v1636, %v1572
        %v1701 = vpack.c.b16 %v1637, %v1573
        %v1702 = vpack.c.b16 %v1638, %v1574
        %v1703 = vpack.c.b16 %v1639, %v1575
        %v1704 = vpack.c.b16 %v1640, %v1576
        %v1705 = vpack.c.b16 %v1641, %v1577
        %v1706 = vpack.c.b16 %v1642, %v1578
        %v1707 = vpack.c.b16 %v1643, %v1579
        %v1708 = vpack.c.b16 %v1644, %v1580
        %v1709 = vpack.c.b16 %v1645, %v1581
        %v1710 = vpack.c.b16 %v1646, %v1582
        %v1711 = vpack.c.b16 %v1647, %v1583
        %v1712 = vpack.c.b16 %v1648, %v1584
        %v1713 = vpack.c.b16 %v1649, %v1585
        %v1714 = vpack.c.b16 %v1650, %v1586
        %v1715 = vpack.c.b16 %v1651, %v1587
        %v1716 = vpack.c.b16 %v1652, %v1588
        %v1717 = vpack.c.b16 %v1653, %v1589
        %v1718 = vpack.c.b16 %v1654, %v1590
        %v1719 = vpack.c.b16 %v1655, %v1591
        %v1720 = vpack.c.b16 %v1656, %v1592
        %v1721 = vpack.c.b16 %v1657, %v1593
        %v1722 = vpack.c.b16 %v1658, %v1594
        %v1723 = vpack.c.b16 %v1659, %v1595
        %v1724 = vpack.c.b16 %v1660, %v1596
        %v1725 = vpack.c.b16 %v1661, %v1597
        %v1726 = vpack.c.b16 %v1662, %v1598
        %v1727 = vpack.c.b16 %v1663, %v1599
        %v1728 = vpack.c.b16 %v1664, %v1600
        %v1729 = vpack.c.b16 %v1665, %v1601
        %v1730 = vpack.c.b16 %v1666, %v1602
        %v1731 = vpack.c.b16 %v1667, %v1603
        %v1732 = vpack.c.b16 %v1668, %v1604
        %v1733 = vpack.c.b16 %v1669, %v1605
        %v1734 = vpack.c.b16 %v1670, %v1606
        %v1735 = vpack.c.b16 %v1671, %v1607
        %v1736 = vpack.c.b16 %v1672, %v1608
        %v1737 = vpack.c.b16 %v1673, %v1609
        %v1738 = vpack.c.b16 %v1674, %v1610
        %v1739 = vpack.c.b16 %v1675, %v1611
        %v1740 = vpack.c.b16 %v1676, %v1612
        %v1741 = vpack.c.b16 %v1677, %v1613
        %v1742 = vpack.c.b16 %v1678, %v1614
        %v2831 = vunpack.c.l.b16 %v463
        %v2832 = vunpack.c.h.b16 %v463
        %v2833 = vunpack.c.l.b16 %v464
        %v2834 = vunpack.c.h.b16 %v464
        %v2835 = vunpack.c.l.b16 %v465
        %v2836 = vunpack.c.h.b16 %v465
        %v2837 = vunpack.c.l.b16 %v466
        %v2838 = vunpack.c.h.b16 %v466
        %v2839 = vunpack.c.l.b16 %v467
        %v2840 = vunpack.c.h.b16 %v467
        %v2841 = vunpack.c.l.b16 %v468
        %v2842 = vunpack.c.h.b16 %v468
        %v2843 = vunpack.c.l.b16 %v469
        %v2844 = vunpack.c.h.b16 %v469
        %v2845 = vunpack.c.l.b16 %v470
        %v2846 = vunpack.c.h.b16 %v470
        %v2847 = vunpack.c.l.b16 %v471
        %v2848 = vunpack.c.h.b16 %v471
        %v2849 = vunpack.c.l.b16 %v472
        %v2850 = vunpack.c.h.b16 %v472
        %v2851 = vunpack.c.l.b16 %v473
        %v2852 = vunpack.c.h.b16 %v473
        %v2853 = vunpack.c.l.b16 %v474
        %v2854 = vunpack.c.h.b16 %v474
        %v2855 = vunpack.c.l.b16 %v475
        %v2856 = vunpack.c.h.b16 %v475
        %v2857 = vunpack.c.l.b16 %v476
        %v2858 = vunpack.c.h.b16 %v476
        %v2859 = vunpack.c.l.b16 %v477
        %v2860 = vunpack.c.h.b16 %v477
        %v2861 = vunpack.c.l.b16 %v478
        %v2862 = vunpack.c.h.b16 %v478
        %v2863 = vunpack.c.l.b16 %v479
        %v2864 = vunpack.c.h.b16 %v479
        %v2865 = vunpack.c.l.b16 %v480
        %v2866 = vunpack.c.h.b16 %v480
        %v2867 = vunpack.c.l.b16 %v481
        %v2868 = vunpack.c.h.b16 %v481
        %v2869 = vunpack.c.l.b16 %v482
        %v2870 = vunpack.c.h.b16 %v482
        %v2871 = vunpack.c.l.b16 %v483
        %v2872 = vunpack.c.h.b16 %v483
        %v2873 = vunpack.c.l.b16 %v484
        %v2874 = vunpack.c.h.b16 %v484
        %v2875 = vunpack.c.l.b16 %v485
        %v2876 = vunpack.c.h.b16 %v485
        %v2877 = vunpack.c.l.b16 %v486
        %v2878 = vunpack.c.h.b16 %v486
        %v2879 = vunpack.c.l.b16 %v487
        %v2880 = vunpack.c.h.b16 %v487
        %v2881 = vunpack.c.l.b16 %v488
        %v2882 = vunpack.c.h.b16 %v488
        %v2883 = vunpack.c.l.b16 %v489
        %v2884 = vunpack.c.h.b16 %v489
        %v2885 = vunpack.c.l.b16 %v490
        %v2886 = vunpack.c.h.b16 %v490
        %v2887 = vunpack.c.l.b16 %v491
        %v2888 = vunpack.c.h.b16 %v491
        %v2889 = vunpack.c.l.b16 %v492
        %v2890 = vunpack.c.h.b16 %v492
        %v2891 = vunpack.c.l.b16 %v493
        %v2892 = vunpack.c.h.b16 %v493
        %v2893 = vunpack.c.l.b16 %v494
        %v2894 = vunpack.c.h.b16 %v494
        %v2895 = vunpack.c.l.b16 %v495
        %v2896 = vunpack.c.h.b16 %v495
        %v2897 = vunpack.c.l.b16 %v496
        %v2898 = vunpack.c.h.b16 %v496
        %v2899 = vunpack.c.l.b16 %v497
        %v2900 = vunpack.c.h.b16 %v497
        %v2901 = vunpack.c.l.b16 %v498
        %v2902 = vunpack.c.h.b16 %v498
        %v2903 = vunpack.c.l.b16 %v499
        %v2904 = vunpack.c.h.b16 %v499
        %v2905 = vunpack.c.l.b16 %v500
        %v2906 = vunpack.c.h.b16 %v500
        %v2907 = vunpack.c.l.b16 %v501
        %v2908 = vunpack.c.h.b16 %v501
        %v2909 = vunpack.c.l.b16 %v502
        %v2910 = vunpack.c.h.b16 %v502
        %v2911 = vunpack.c.l.b16 %v503
        %v2912 = vunpack.c.h.b16 %v503
        %v2913 = vunpack.c.l.b16 %v504
        %v2914 = vunpack.c.h.b16 %v504
        %v2915 = vunpack.c.l.b16 %v505
        %v2916 = vunpack.c.h.b16 %v505
        %v2917 = vunpack.c.l.b16 %v506
        %v2918 = vunpack.c.h.b16 %v506
        %v2919 = vunpack.c.l.b16 %v507
        %v2920 = vunpack.c.h.b16 %v507
        %v2921 = vunpack.c.l.b16 %v508
        %v2922 = vunpack.c.h.b16 %v508
        %v2923 = vunpack.c.l.b16 %v509
        %v2924 = vunpack.c.h.b16 %v509
        %v2925 = vunpack.c.l.b16 %v510
        %v2926 = vunpack.c.h.b16 %v510
        %v2927 = vunpack.c.l.b16 %v511
        %v2928 = vunpack.c.h.b16 %v511
        %v2929 = vunpack.c.l.b16 %v512
        %v2930 = vunpack.c.h.b16 %v512
        %v2931 = vunpack.c.l.b16 %v513
        %v2932 = vunpack.c.h.b16 %v513
        %v2933 = vunpack.c.l.b16 %v514
        %v2934 = vunpack.c.h.b16 %v514
        %v2935 = vunpack.c.l.b16 %v515
        %v2936 = vunpack.c.h.b16 %v515
        %v2937 = vunpack.c.l.b16 %v516
        %v2938 = vunpack.c.h.b16 %v516
        %v2939 = vunpack.c.l.b16 %v517
        %v2940 = vunpack.c.h.b16 %v517
        %v2941 = vunpack.c.l.b16 %v518
        %v2942 = vunpack.c.h.b16 %v518
        %v2943 = vunpack.c.l.b16 %v519
        %v2944 = vunpack.c.h.b16 %v519
        %v2945 = vunpack.c.l.b16 %v520
        %v2946 = vunpack.c.h.b16 %v520
        %v2947 = vunpack.c.l.b16 %v521
        %v2948 = vunpack.c.h.b16 %v521
        %v2949 = vunpack.c.l.b16 %v522
        %v2950 = vunpack.c.h.b16 %v522
        %v2951 = vunpack.c.l.b16 %v523
        %v2952 = vunpack.c.h.b16 %v523
        %v2953 = vunpack.c.l.b16 %v524
        %v2954 = vunpack.c.h.b16 %v524
        %v2955 = vunpack.c.l.b16 %v525
        %v2956 = vunpack.c.h.b16 %v525
        %v2957 = vunpack.c.l.b16 %v526
        %v2958 = vunpack.c.h.b16 %v526
        %v2959 = vunpack.c.l.b16 %v527
        %v2960 = vunpack.c.h.b16 %v527
        %v2961 = vunpack.c.l.b16 %v528
        %v2962 = vunpack.c.h.b16 %v528
        %v2963 = vunpack.c.l.b16 %v529
        %v2964 = vunpack.c.h.b16 %v529
        %v2965 = vunpack.c.l.b16 %v530
        %v2966 = vunpack.c.h.b16 %v530
        %v2967 = vunpack.c.l.b16 %v531
        %v2968 = vunpack.c.h.b16 %v531
        %v2969 = vunpack.c.l.b16 %v532
        %v2970 = vunpack.c.h.b16 %v532
        %v2971 = vunpack.c.l.b16 %v533
        %v2972 = vunpack.c.h.b16 %v533
        %v2973 = vunpack.c.l.b16 %v534
        %v2974 = vunpack.c.h.b16 %v534
        %v2975 = vunpack.c.l.b16 %v535
        %v2976 = vunpack.c.h.b16 %v535
        %v2977 = vunpack.c.l.b16 %v536
        %v2978 = vunpack.c.h.b16 %v536
        %v2979 = vunpack.c.l.b16 %v537
        %v2980 = vunpack.c.h.b16 %v537
        %v2981 = vunpack.c.l.b16 %v538
        %v2982 = vunpack.c.h.b16 %v538
        %v2983 = vunpack.c.l.b16 %v539
        %v2984 = vunpack.c.h.b16 %v539
        %v2985 = vunpack.c.l.b16 %v540
        %v2986 = vunpack.c.h.b16 %v540
        %v2987 = vunpack.c.l.b16 %v541
        %v2988 = vunpack.c.h.b16 %v541
        %v2989 = vunpack.c.l.b16 %v542
        %v2990 = vunpack.c.h.b16 %v542
        %v2991 = vunpack.c.l.b16 %v543
        %v2992 = vunpack.c.h.b16 %v543
        %v2993 = vunpack.c.l.b16 %v544
        %v2994 = vunpack.c.h.b16 %v544
        %v2995 = vunpack.c.l.b16 %v545
        %v2996 = vunpack.c.h.b16 %v545
        %v2997 = vunpack.c.l.b16 %v546
        %v2998 = vunpack.c.h.b16 %v546
        %v2999 = vunpack.c.l.b16 %v547
        %v3000 = vunpack.c.h.b16 %v547
        %v3001 = vunpack.c.l.b16 %v548
        %v3002 = vunpack.c.h.b16 %v548
        %v3003 = vunpack.c.l.b16 %v549
        %v3004 = vunpack.c.h.b16 %v549
        %v3005 = vunpack.c.l.b16 %v550
        %v3006 = vunpack.c.h.b16 %v550
        %v3007 = vunpack.c.l.b16 %v551
        %v3008 = vunpack.c.h.b16 %v551
        %v3009 = vunpack.c.l.b16 %v552
        %v3010 = vunpack.c.h.b16 %v552
        %v3011 = vunpack.c.l.b16 %v553
        %v3012 = vunpack.c.h.b16 %v553
        %v3013 = vunpack.c.l.b16 %v554
        %v3014 = vunpack.c.h.b16 %v554
        %v3015 = vunpack.c.l.b16 %v555
        %v3016 = vunpack.c.h.b16 %v555
        %v3017 = vunpack.c.l.b16 %v556
        %v3018 = vunpack.c.h.b16 %v556
        %v3019 = vunpack.c.l.b16 %v557
        %v3020 = vunpack.c.h.b16 %v557
        %v3021 = vunpack.c.l.b16 %v558
        %v3022 = vunpack.c.h.b16 %v558
        %v3023 = vunpack.c.l.b16 %v559
        %v3024 = vunpack.c.h.b16 %v559
        %v3025 = vunpack.c.l.b16 %v560
        %v3026 = vunpack.c.h.b16 %v560
        %v3027 = vunpack.c.l.b16 %v561
        %v3028 = vunpack.c.h.b16 %v561
        %v3029 = vunpack.c.l.b16 %v562
        %v3030 = vunpack.c.h.b16 %v562
        %v3031 = vunpack.c.l.b16 %v563
        %v3032 = vunpack.c.h.b16 %v563
        %v3033 = vunpack.c.l.b16 %v564
        %v3034 = vunpack.c.h.b16 %v564
        %v3035 = vunpack.c.l.b16 %v565
        %v3036 = vunpack.c.h.b16 %v565
        %v3037 = vunpack.c.l.b16 %v566
        %v3038 = vunpack.c.h.b16 %v566
        %v3039 = vunpack.c.l.b16 %v567
        %v3040 = vunpack.c.h.b16 %v567
        %v3041 = vunpack.c.l.b16 %v568
        %v3042 = vunpack.c.h.b16 %v568
        %v3043 = vunpack.c.l.b16 %v569
        %v3044 = vunpack.c.h.b16 %v569
        %v3045 = vunpack.c.l.b16 %v570
        %v3046 = vunpack.c.h.b16 %v570
        %v3047 = vunpack.c.l.b16 %v571
        %v3048 = vunpack.c.h.b16 %v571
        %v3049 = vunpack.c.l.b16 %v572
        %v3050 = vunpack.c.h.b16 %v572
        %v3051 = vunpack.c.l.b16 %v573
        %v3052 = vunpack.c.h.b16 %v573
        %v3053 = vunpack.c.l.b16 %v574
        %v3054 = vunpack.c.h.b16 %v574
        %v3055 = vunpack.c.l.b16 %v575
        %v3056 = vunpack.c.h.b16 %v575
        %v3057 = vunpack.c.l.b16 %v576
        %v3058 = vunpack.c.h.b16 %v576
        %v3059 = vunpack.c.l.b16 %v577
        %v3060 = vunpack.c.h.b16 %v577
        %v3061 = vunpack.c.l.b16 %v578
        %v3062 = vunpack.c.h.b16 %v578
        %v3063 = vunpack.c.l.b16 %v579
        %v3064 = vunpack.c.h.b16 %v579
        %v3065 = vunpack.c.l.b16 %v580
        %v3066 = vunpack.c.h.b16 %v580
        %v3067 = vunpack.c.l.b16 %v581
        %v3068 = vunpack.c.h.b16 %v581
        %v3069 = vunpack.c.l.b16 %v582
        %v3070 = vunpack.c.h.b16 %v582
        %v3071 = vunpack.c.l.b16 %v583
        %v3072 = vunpack.c.h.b16 %v583
        %v3073 = vunpack.c.l.b16 %v584
        %v3074 = vunpack.c.h.b16 %v584
        %v3075 = vunpack.c.l.b16 %v585
        %v3076 = vunpack.c.h.b16 %v585
        %v3077 = vunpack.c.l.b16 %v586
        %v3078 = vunpack.c.h.b16 %v586
        %v3079 = vunpack.c.l.b16 %v587
        %v3080 = vunpack.c.h.b16 %v587
        %v3081 = vunpack.c.l.b16 %v588
        %v3082 = vunpack.c.h.b16 %v588
        %v3083 = vunpack.c.l.b16 %v589
        %v3084 = vunpack.c.h.b16 %v589
        %v3085 = vunpack.c.l.b16 %v590
        %v3086 = vunpack.c.h.b16 %v590
        %v3087 = vunpack.c.l.b16 %v591
        %v3088 = vunpack.c.h.b16 %v591
        %v3089 = vunpack.c.l.b16 %v592
        %v3090 = vunpack.c.h.b16 %v592
        %v3091 = vunpack.c.l.b16 %v593
        %v3092 = vunpack.c.h.b16 %v593
        %v3093 = vunpack.c.l.b16 %v594
        %v3094 = vunpack.c.h.b16 %v594
        %v3095 = vunpack.c.l.b16 %v595
        %v3096 = vunpack.c.h.b16 %v595
        %v3097 = vunpack.c.l.b16 %v596
        %v3098 = vunpack.c.h.b16 %v596
        %v3099 = vunpack.c.l.b16 %v597
        %v3100 = vunpack.c.h.b16 %v597
        %v3101 = vunpack.c.l.b16 %v598
        %v3102 = vunpack.c.h.b16 %v598
        %v3103 = vunpack.c.l.b16 %v599
        %v3104 = vunpack.c.h.b16 %v599
        %v3105 = vunpack.c.l.b16 %v600
        %v3106 = vunpack.c.h.b16 %v600
        %v3107 = vunpack.c.l.b16 %v601
        %v3108 = vunpack.c.h.b16 %v601
        %v3109 = vunpack.c.l.b16 %v602
        %v3110 = vunpack.c.h.b16 %v602
        %v3111 = vunpack.c.l.b16 %v603
        %v3112 = vunpack.c.h.b16 %v603
        %v3113 = vunpack.c.l.b16 %v604
        %v3114 = vunpack.c.h.b16 %v604
        %v3115 = vunpack.c.l.b16 %v605
        %v3116 = vunpack.c.h.b16 %v605
        %v3117 = vunpack.c.l.b16 %v606
        %v3118 = vunpack.c.h.b16 %v606
        %v3119 = vunpack.c.l.b16 %v607
        %v3120 = vunpack.c.h.b16 %v607
        %v3121 = vunpack.c.l.b16 %v608
        %v3122 = vunpack.c.h.b16 %v608
        %v3123 = vunpack.c.l.b16 %v609
        %v3124 = vunpack.c.h.b16 %v609
        %v3125 = vunpack.c.l.b16 %v610
        %v3126 = vunpack.c.h.b16 %v610
        %v3127 = vunpack.c.l.b16 %v611
        %v3128 = vunpack.c.h.b16 %v611
        %v3129 = vunpack.c.l.b16 %v612
        %v3130 = vunpack.c.h.b16 %v612
        %v3131 = vunpack.c.l.b16 %v613
        %v3132 = vunpack.c.h.b16 %v613
        %v3133 = vunpack.c.l.b16 %v614
        %v3134 = vunpack.c.h.b16 %v614
        %v3135 = vunpack.c.l.b16 %v615
        %v3136 = vunpack.c.h.b16 %v615
        %v3137 = vunpack.c.l.b16 %v616
        %v3138 = vunpack.c.h.b16 %v616
        %v3139 = vunpack.c.l.b16 %v617
        %v3140 = vunpack.c.h.b16 %v617
        %v3141 = vunpack.c.l.b16 %v618
        %v3142 = vunpack.c.h.b16 %v618
        %v3143 = vunpack.c.l.b16 %v619
        %v3144 = vunpack.c.h.b16 %v619
        %v3145 = vunpack.c.l.b16 %v620
        %v3146 = vunpack.c.h.b16 %v620
        %v3147 = vunpack.c.l.b16 %v621
        %v3148 = vunpack.c.h.b16 %v621
        %v3149 = vunpack.c.l.b16 %v622
        %v3150 = vunpack.c.h.b16 %v622
        %v3151 = vunpack.c.l.b16 %v623
        %v3152 = vunpack.c.h.b16 %v623
        %v3153 = vunpack.c.l.b16 %v624
        %v3154 = vunpack.c.h.b16 %v624
        %v3155 = vunpack.c.l.b16 %v625
        %v3156 = vunpack.c.h.b16 %v625
        %v3157 = vunpack.c.l.b16 %v626
        %v3158 = vunpack.c.h.b16 %v626
        %v3159 = vunpack.c.l.b16 %v627
        %v3160 = vunpack.c.h.b16 %v627
        %v3161 = vunpack.c.l.b16 %v628
        %v3162 = vunpack.c.h.b16 %v628
        %v3163 = vunpack.c.l.b16 %v629
        %v3164 = vunpack.c.h.b16 %v629
        %v3165 = vunpack.c.l.b16 %v630
        %v3166 = vunpack.c.h.b16 %v630
        %v3167 = vunpack.c.l.b16 %v631
        %v3168 = vunpack.c.h.b16 %v631
        %v3169 = vunpack.c.l.b16 %v632
        %v3170 = vunpack.c.h.b16 %v632
        %v3171 = vunpack.c.l.b16 %v633
        %v3172 = vunpack.c.h.b16 %v633
        %v3173 = vunpack.c.l.b16 %v634
        %v3174 = vunpack.c.h.b16 %v634
        %v3175 = vunpack.c.l.b16 %v635
        %v3176 = vunpack.c.h.b16 %v635
        %v3177 = vunpack.c.l.b16 %v636
        %v3178 = vunpack.c.h.b16 %v636
        %v3179 = vunpack.c.l.b16 %v637
        %v3180 = vunpack.c.h.b16 %v637
        %v3181 = vunpack.c.l.b16 %v638
        %v3182 = vunpack.c.h.b16 %v638
        %v3183 = vunpack.c.l.b16 %v639
        %v3184 = vunpack.c.h.b16 %v639
        %v3185 = vunpack.c.l.b16 %v640
        %v3186 = vunpack.c.h.b16 %v640
        %v3187 = vunpack.c.l.b16 %v641
        %v3188 = vunpack.c.h.b16 %v641
        %v3189 = vunpack.c.l.b16 %v642
        %v3190 = vunpack.c.h.b16 %v642
        %v3191 = vunpack.c.l.b16 %v643
        %v3192 = vunpack.c.h.b16 %v643
        %v3193 = vunpack.c.l.b16 %v644
        %v3194 = vunpack.c.h.b16 %v644
        %v3195 = vunpack.c.l.b16 %v645
        %v3196 = vunpack.c.h.b16 %v645
        %v3197 = vunpack.c.l.b16 %v646
        %v3198 = vunpack.c.h.b16 %v646
        %v3199 = vunpack.c.l.b16 %v647
        %v3200 = vunpack.c.h.b16 %v647
        %v3201 = vunpack.c.l.b16 %v648
        %v3202 = vunpack.c.h.b16 %v648
        %v3203 = vunpack.c.l.b16 %v649
        %v3204 = vunpack.c.h.b16 %v649
        %v3205 = vunpack.c.l.b16 %v650
        %v3206 = vunpack.c.h.b16 %v650
        %v3207 = vunpack.c.l.b16 %v651
        %v3208 = vunpack.c.h.b16 %v651
        %v3209 = vunpack.c.l.b16 %v652
        %v3210 = vunpack.c.h.b16 %v652
        %v3211 = vunpack.c.l.b16 %v653
        %v3212 = vunpack.c.h.b16 %v653
        %v3213 = vunpack.c.l.b16 %v654
        %v3214 = vunpack.c.h.b16 %v654
        %v3215 = vunpack.c.l.b16 %v655
        %v3216 = vunpack.c.h.b16 %v655
        %v3217 = vunpack.c.l.b16 %v656
        %v3218 = vunpack.c.h.b16 %v656
        %v3219 = vunpack.c.l.b16 %v657
        %v3220 = vunpack.c.h.b16 %v657
        %v3221 = vunpack.c.l.b16 %v658
        %v3222 = vunpack.c.h.b16 %v658
        %v3223 = vunpack.c.l.b16 %v659
        %v3224 = vunpack.c.h.b16 %v659
        %v3225 = vunpack.c.l.b16 %v660
        %v3226 = vunpack.c.h.b16 %v660
        %v3227 = vunpack.c.l.b16 %v661
        %v3228 = vunpack.c.h.b16 %v661
        %v3229 = vunpack.c.l.b16 %v662
        %v3230 = vunpack.c.h.b16 %v662
        %v3231 = vunpack.c.l.b16 %v663
        %v3232 = vunpack.c.h.b16 %v663
        %v3233 = vunpack.c.l.b16 %v664
        %v3234 = vunpack.c.h.b16 %v664
        %v3235 = vunpack.c.l.b16 %v665
        %v3236 = vunpack.c.h.b16 %v665
        %v3237 = vunpack.c.l.b16 %v666
        %v3238 = vunpack.c.h.b16 %v666
        %v3239 = vunpack.c.l.b16 %v667
        %v3240 = vunpack.c.h.b16 %v667
        %v3241 = vunpack.c.l.b16 %v668
        %v3242 = vunpack.c.h.b16 %v668
        %v3243 = vunpack.c.l.b16 %v669
        %v3244 = vunpack.c.h.b16 %v669
        %v3245 = vunpack.c.l.b16 %v670
        %v3246 = vunpack.c.h.b16 %v670
        %v3247 = vunpack.c.l.b16 %v671
        %v3248 = vunpack.c.h.b16 %v671
        %v3249 = vunpack.c.l.b16 %v672
        %v3250 = vunpack.c.h.b16 %v672
        %v3251 = vunpack.c.l.b16 %v673
        %v3252 = vunpack.c.h.b16 %v673
        %v3253 = vunpack.c.l.b16 %v674
        %v3254 = vunpack.c.h.b16 %v674
        %v3255 = vunpack.c.l.b16 %v675
        %v3256 = vunpack.c.h.b16 %v675
        %v3257 = vunpack.c.l.b16 %v676
        %v3258 = vunpack.c.h.b16 %v676
        %v3259 = vunpack.c.l.b16 %v677
        %v3260 = vunpack.c.h.b16 %v677
        %v3261 = vunpack.c.l.b16 %v678
        %v3262 = vunpack.c.h.b16 %v678
        %v3263 = vunpack.c.l.b16 %v679
        %v3264 = vunpack.c.h.b16 %v679
        %v3265 = vunpack.c.l.b16 %v680
        %v3266 = vunpack.c.h.b16 %v680
        %v3267 = vunpack.c.l.b16 %v681
        %v3268 = vunpack.c.h.b16 %v681
        %v3269 = vunpack.c.l.b16 %v682
        %v3270 = vunpack.c.h.b16 %v682
        %v3271 = vunpack.c.l.b16 %v683
        %v3272 = vunpack.c.h.b16 %v683
        %v3273 = vunpack.c.l.b16 %v684
        %v3274 = vunpack.c.h.b16 %v684
        %v3275 = vunpack.c.l.b16 %v685
        %v3276 = vunpack.c.h.b16 %v685
        %v3277 = vunpack.c.l.b16 %v686
        %v3278 = vunpack.c.h.b16 %v686
        %v3279 = vunpack.c.l.b16 %v687
        %v3280 = vunpack.c.h.b16 %v687
        %v3281 = vunpack.c.l.b16 %v688
        %v3282 = vunpack.c.h.b16 %v688
        %v3283 = vunpack.c.l.b16 %v689
        %v3284 = vunpack.c.h.b16 %v689
        %v3285 = vunpack.c.l.b16 %v690
        %v3286 = vunpack.c.h.b16 %v690
        %v3287 = vunpack.c.l.b16 %v691
        %v3288 = vunpack.c.h.b16 %v691
        %v3289 = vunpack.c.l.b16 %v692
        %v3290 = vunpack.c.h.b16 %v692
        %v3291 = vunpack.c.l.b16 %v693
        %v3292 = vunpack.c.h.b16 %v693
        %v3293 = vunpack.c.l.b16 %v694
        %v3294 = vunpack.c.h.b16 %v694
        %v3295 = vunpack.c.l.b16 %v695
        %v3296 = vunpack.c.h.b16 %v695
        %v3297 = vunpack.c.l.b16 %v696
        %v3298 = vunpack.c.h.b16 %v696
        %v3299 = vunpack.c.l.b16 %v697
        %v3300 = vunpack.c.h.b16 %v697
        %v3301 = vunpack.c.l.b16 %v698
        %v3302 = vunpack.c.h.b16 %v698
        %v3303 = vunpack.c.l.b16 %v699
        %v3304 = vunpack.c.h.b16 %v699
        %v3305 = vunpack.c.l.b16 %v700
        %v3306 = vunpack.c.h.b16 %v700
        %v3307 = vunpack.c.l.b16 %v701
        %v3308 = vunpack.c.h.b16 %v701
        %v3309 = vunpack.c.l.b16 %v702
        %v3310 = vunpack.c.h.b16 %v702
        %v3311 = vunpack.c.l.b16 %v703
        %v3312 = vunpack.c.h.b16 %v703
        %v3313 = vunpack.c.l.b16 %v704
        %v3314 = vunpack.c.h.b16 %v704
        %v3315 = vunpack.c.l.b16 %v705
        %v3316 = vunpack.c.h.b16 %v705
        %v3317 = vunpack.c.l.b16 %v706
        %v3318 = vunpack.c.h.b16 %v706
        %v3319 = vunpack.c.l.b16 %v707
        %v3320 = vunpack.c.h.b16 %v707
        %v3321 = vunpack.c.l.b16 %v708
        %v3322 = vunpack.c.h.b16 %v708
        %v3323 = vunpack.c.l.b16 %v709
        %v3324 = vunpack.c.h.b16 %v709
        %v3325 = vunpack.c.l.b16 %v710
        %v3326 = vunpack.c.h.b16 %v710
        %v3327 = vunpack.c.l.b16 %v711
        %v3328 = vunpack.c.h.b16 %v711
        %v3329 = vunpack.c.l.b16 %v712
        %v3330 = vunpack.c.h.b16 %v712
        %v3331 = vunpack.c.l.b16 %v713
        %v3332 = vunpack.c.h.b16 %v713
        %v3333 = vunpack.c.l.b16 %v714
        %v3334 = vunpack.c.h.b16 %v714
        %v3335 = vunpack.c.l.b16 %v715
        %v3336 = vunpack.c.h.b16 %v715
        %v3337 = vunpack.c.l.b16 %v716
        %v3338 = vunpack.c.h.b16 %v716
        %v3339 = vunpack.c.l.b16 %v717
        %v3340 = vunpack.c.h.b16 %v717
        %v3341 = vunpack.c.l.b16 %v718
        %v3342 = vunpack.c.h.b16 %v718
        %v3343 = vunpack.c.l.b16 %v719
        %v3344 = vunpack.c.h.b16 %v719
        %v3345 = vunpack.c.l.b16 %v720
        %v3346 = vunpack.c.h.b16 %v720
        %v3347 = vunpack.c.l.b16 %v721
        %v3348 = vunpack.c.h.b16 %v721
        %v3349 = vunpack.c.l.b16 %v722
        %v3350 = vunpack.c.h.b16 %v722
        %v3351 = vunpack.c.l.b16 %v723
        %v3352 = vunpack.c.h.b16 %v723
        %v3353 = vunpack.c.l.b16 %v724
        %v3354 = vunpack.c.h.b16 %v724
        %v3355 = vunpack.c.l.b16 %v725
        %v3356 = vunpack.c.h.b16 %v725
        %v3357 = vunpack.c.l.b16 %v726
        %v3358 = vunpack.c.h.b16 %v726
        %v3359 = vunpack.c.l.b16 %v727
        %v3360 = vunpack.c.h.b16 %v727
        %v3361 = vunpack.c.l.b16 %v728
        %v3362 = vunpack.c.h.b16 %v728
        %v3363 = vunpack.c.l.b16 %v729
        %v3364 = vunpack.c.h.b16 %v729
        %v3365 = vunpack.c.l.b16 %v730
        %v3366 = vunpack.c.h.b16 %v730
        %v3367 = vunpack.c.l.b16 %v731
        %v3368 = vunpack.c.h.b16 %v731
        %v3369 = vunpack.c.l.b16 %v732
        %v3370 = vunpack.c.h.b16 %v732
        %v3371 = vunpack.c.l.b16 %v733
        %v3372 = vunpack.c.h.b16 %v733
        %v3373 = vunpack.c.l.b16 %v734
        %v3374 = vunpack.c.h.b16 %v734
        %v3375 = vunpack.c.l.b16 %v735
        %v3376 = vunpack.c.h.b16 %v735
        %v3377 = vunpack.c.l.b16 %v736
        %v3378 = vunpack.c.h.b16 %v736
        %v3379 = vunpack.c.l.b16 %v737
        %v3380 = vunpack.c.h.b16 %v737
        %v3381 = vunpack.c.l.b16 %v738
        %v3382 = vunpack.c.h.b16 %v738
        %v3383 = vunpack.c.l.b16 %v739
        %v3384 = vunpack.c.h.b16 %v739
        %v3385 = vunpack.c.l.b16 %v740
        %v3386 = vunpack.c.h.b16 %v740
        %v3387 = vunpack.c.l.b16 %v741
        %v3388 = vunpack.c.h.b16 %v741
        %v3389 = vunpack.c.l.b16 %v742
        %v3390 = vunpack.c.h.b16 %v742
        %v3391 = vunpack.c.l.b16 %v743
        %v3392 = vunpack.c.h.b16 %v743
        %v3393 = vunpack.c.l.b16 %v744
        %v3394 = vunpack.c.h.b16 %v744
        %v3395 = vunpack.c.l.b16 %v745
        %v3396 = vunpack.c.h.b16 %v745
        %v3397 = vunpack.c.l.b16 %v746
        %v3398 = vunpack.c.h.b16 %v746
        %v3399 = vunpack.c.l.b16 %v747
        %v3400 = vunpack.c.h.b16 %v747
        %v3401 = vunpack.c.l.b16 %v748
        %v3402 = vunpack.c.h.b16 %v748
        %v3403 = vunpack.c.l.b16 %v749
        %v3404 = vunpack.c.h.b16 %v749
        %v3405 = vunpack.c.l.b16 %v750
        %v3406 = vunpack.c.h.b16 %v750
        %v3407 = vunpack.c.l.b16 %v751
        %v3408 = vunpack.c.h.b16 %v751
        %v3409 = vunpack.c.l.b16 %v752
        %v3410 = vunpack.c.h.b16 %v752
        %v3411 = vunpack.c.l.b16 %v753
        %v3412 = vunpack.c.h.b16 %v753
        %v3413 = vunpack.c.l.b16 %v754
        %v3414 = vunpack.c.h.b16 %v754
        %v3415 = vunpack.c.l.b16 %v755
        %v3416 = vunpack.c.h.b16 %v755
        %v3417 = vunpack.c.l.b16 %v756
        %v3418 = vunpack.c.h.b16 %v756
        %v3419 = vunpack.c.l.b16 %v757
        %v3420 = vunpack.c.h.b16 %v757
        %v3421 = vunpack.c.l.b16 %v758
        %v3422 = vunpack.c.h.b16 %v758
        %v3423 = vunpack.c.l.b16 %v759
        %v3424 = vunpack.c.h.b16 %v759
        %v3425 = vunpack.c.l.b16 %v760
        %v3426 = vunpack.c.h.b16 %v760
        %v3427 = vunpack.c.l.b16 %v761
        %v3428 = vunpack.c.h.b16 %v761
        %v3429 = vunpack.c.l.b16 %v762
        %v3430 = vunpack.c.h.b16 %v762
        %v3431 = vunpack.c.l.b16 %v763
        %v3432 = vunpack.c.h.b16 %v763
        %v3433 = vunpack.c.l.b16 %v764
        %v3434 = vunpack.c.h.b16 %v764
        %v3435 = vunpack.c.l.b16 %v765
        %v3436 = vunpack.c.h.b16 %v765
        %v3437 = vunpack.c.l.b16 %v766
        %v3438 = vunpack.c.h.b16 %v766
        %v3439 = vunpack.c.l.b16 %v767
        %v3440 = vunpack.c.h.b16 %v767
        %v3441 = vunpack.c.l.b16 %v768
        %v3442 = vunpack.c.h.b16 %v768
        %v3443 = vunpack.c.l.b16 %v769
        %v3444 = vunpack.c.h.b16 %v769
        %v3445 = vunpack.c.l.b16 %v770
        %v3446 = vunpack.c.h.b16 %v770
        %v3447 = vunpack.c.l.b16 %v771
        %v3448 = vunpack.c.h.b16 %v771
        %v3449 = vunpack.c.l.b16 %v772
        %v3450 = vunpack.c.h.b16 %v772
        %v3451 = vunpack.c.l.b16 %v773
        %v3452 = vunpack.c.h.b16 %v773
        %v3453 = vunpack.c.l.b16 %v774
        %v3454 = vunpack.c.h.b16 %v774
        %v3455 = vunpack.c.l.b16 %v775
        %v3456 = vunpack.c.h.b16 %v775
        %v3457 = vunpack.c.l.b16 %v776
        %v3458 = vunpack.c.h.b16 %v776
        %v3459 = vunpack.c.l.b16 %v777
        %v3460 = vunpack.c.h.b16 %v777
        %v3461 = vunpack.c.l.b16 %v778
        %v3462 = vunpack.c.h.b16 %v778
        %v3463 = vunpack.c.l.b16 %v779
        %v3464 = vunpack.c.h.b16 %v779
        %v3465 = vunpack.c.l.b16 %v780
        %v3466 = vunpack.c.h.b16 %v780
        %v3467 = vunpack.c.l.b16 %v781
        %v3468 = vunpack.c.h.b16 %v781
        %v3469 = vunpack.c.l.b16 %v782
        %v3470 = vunpack.c.h.b16 %v782
        %v3471 = vunpack.c.l.b16 %v783
        %v3472 = vunpack.c.h.b16 %v783
        %v3473 = vunpack.c.l.b16 %v784
        %v3474 = vunpack.c.h.b16 %v784
        %v3475 = vunpack.c.l.b16 %v785
        %v3476 = vunpack.c.h.b16 %v785
        %v3477 = vunpack.c.l.b16 %v786
        %v3478 = vunpack.c.h.b16 %v786
        %v3479 = vunpack.c.l.b16 %v787
        %v3480 = vunpack.c.h.b16 %v787
        %v3481 = vunpack.c.l.b16 %v788
        %v3482 = vunpack.c.h.b16 %v788
        %v3483 = vunpack.c.l.b16 %v789
        %v3484 = vunpack.c.h.b16 %v789
        %v3485 = vunpack.c.l.b16 %v790
        %v3486 = vunpack.c.h.b16 %v790
        %v3487 = vunpack.c.l.b16 %v791
        %v3488 = vunpack.c.h.b16 %v791
        %v3489 = vunpack.c.l.b16 %v792
        %v3490 = vunpack.c.h.b16 %v792
        %v3491 = vunpack.c.l.b16 %v793
        %v3492 = vunpack.c.h.b16 %v793
        %v3493 = vunpack.c.l.b16 %v794
        %v3494 = vunpack.c.h.b16 %v794
        %v3495 = vunpack.c.l.b16 %v795
        %v3496 = vunpack.c.h.b16 %v795
        %v3497 = vunpack.c.l.b16 %v796
        %v3498 = vunpack.c.h.b16 %v796
        %v3499 = vunpack.c.l.b16 %v797
        %v3500 = vunpack.c.h.b16 %v797
        %v3501 = vunpack.c.l.b16 %v798
        %v3502 = vunpack.c.h.b16 %v798
        %v3503 = vunpack.c.l.b16 %v799
        %v3504 = vunpack.c.h.b16 %v799
        %v3505 = vunpack.c.l.b16 %v800
        %v3506 = vunpack.c.h.b16 %v800
        %v3507 = vunpack.c.l.b16 %v801
        %v3508 = vunpack.c.h.b16 %v801
        %v3509 = vunpack.c.l.b16 %v802
        %v3510 = vunpack.c.h.b16 %v802
        %v3511 = vunpack.c.l.b16 %v803
        %v3512 = vunpack.c.h.b16 %v803
        %v3513 = vunpack.c.l.b16 %v804
        %v3514 = vunpack.c.h.b16 %v804
        %v3515 = vunpack.c.l.b16 %v805
        %v3516 = vunpack.c.h.b16 %v805
        %v3517 = vunpack.c.l.b16 %v806
        %v3518 = vunpack.c.h.b16 %v806
        %v3519 = vunpack.c.l.b16 %v807
        %v3520 = vunpack.c.h.b16 %v807
        %v3521 = vunpack.c.l.b16 %v808
        %v3522 = vunpack.c.h.b16 %v808
        %v3523 = vunpack.c.l.b16 %v809
        %v3524 = vunpack.c.h.b16 %v809
        %v3525 = vunpack.c.l.b16 %v810
        %v3526 = vunpack.c.h.b16 %v810
        %v3527 = vunpack.c.l.b16 %v811
        %v3528 = vunpack.c.h.b16 %v811
        %v3529 = vunpack.c.l.b16 %v812
        %v3530 = vunpack.c.h.b16 %v812
        %v3531 = vunpack.c.l.b16 %v813
        %v3532 = vunpack.c.h.b16 %v813
        %v3533 = vunpack.c.l.b16 %v814
        %v3534 = vunpack.c.h.b16 %v814
        %v3535 = vunpack.c.l.b16 %v815
        %v3536 = vunpack.c.h.b16 %v815
        %v3537 = vunpack.c.l.b16 %v816
        %v3538 = vunpack.c.h.b16 %v816
        %v3539 = vunpack.c.l.b16 %v817
        %v3540 = vunpack.c.h.b16 %v817
        %v3541 = vunpack.c.l.b16 %v818
        %v3542 = vunpack.c.h.b16 %v818
        %v3543 = vunpack.c.l.b16 %v819
        %v3544 = vunpack.c.h.b16 %v819
        %v3545 = vunpack.c.l.b16 %v820
        %v3546 = vunpack.c.h.b16 %v820
        %v3547 = vunpack.c.l.b16 %v821
        %v3548 = vunpack.c.h.b16 %v821
        %v3549 = vunpack.c.l.b16 %v822
        %v3550 = vunpack.c.h.b16 %v822
        %v3551 = vunpack.c.l.b16 %v823
        %v3552 = vunpack.c.h.b16 %v823
        %v3553 = vunpack.c.l.b16 %v824
        %v3554 = vunpack.c.h.b16 %v824
        %v3555 = vunpack.c.l.b16 %v825
        %v3556 = vunpack.c.h.b16 %v825
        %v3557 = vunpack.c.l.b16 %v826
        %v3558 = vunpack.c.h.b16 %v826
        %v3559 = vunpack.c.l.b16 %v827
        %v3560 = vunpack.c.h.b16 %v827
        %v3561 = vunpack.c.l.b16 %v828
        %v3562 = vunpack.c.h.b16 %v828
        %v3563 = vunpack.c.l.b16 %v829
        %v3564 = vunpack.c.h.b16 %v829
        %v3565 = vunpack.c.l.b16 %v830
        %v3566 = vunpack.c.h.b16 %v830
        %v3567 = vunpack.c.l.b16 %v831
        %v3568 = vunpack.c.h.b16 %v831
        %v3569 = vunpack.c.l.b16 %v832
        %v3570 = vunpack.c.h.b16 %v832
        %v3571 = vunpack.c.l.b16 %v833
        %v3572 = vunpack.c.h.b16 %v833
        %v3573 = vunpack.c.l.b16 %v834
        %v3574 = vunpack.c.h.b16 %v834
        %v3575 = vunpack.c.l.b16 %v835
        %v3576 = vunpack.c.h.b16 %v835
        %v3577 = vunpack.c.l.b16 %v836
        %v3578 = vunpack.c.h.b16 %v836
        %v3579 = vunpack.c.l.b16 %v837
        %v3580 = vunpack.c.h.b16 %v837
        %v3581 = vunpack.c.l.b16 %v838
        %v3582 = vunpack.c.h.b16 %v838
        %v3583 = vunpack.c.l.b16 %v839
        %v3584 = vunpack.c.h.b16 %v839
        %v3585 = vunpack.c.l.b16 %v840
        %v3586 = vunpack.c.h.b16 %v840
        %v3587 = vunpack.c.l.b16 %v841
        %v3588 = vunpack.c.h.b16 %v841
        %v3589 = vunpack.c.l.b16 %v842
        %v3590 = vunpack.c.h.b16 %v842
        %v3591 = vunpack.c.l.b16 %v843
        %v3592 = vunpack.c.h.b16 %v843
        %v3593 = vunpack.c.l.b16 %v844
        %v3594 = vunpack.c.h.b16 %v844
        %v3595 = vunpack.c.l.b16 %v845
        %v3596 = vunpack.c.h.b16 %v845
        %v3597 = vunpack.c.l.b16 %v846
        %v3598 = vunpack.c.h.b16 %v846
        %v3599 = vunpack.c.l.b16 %v847
        %v3600 = vunpack.c.h.b16 %v847
        %v3601 = vunpack.c.l.b16 %v848
        %v3602 = vunpack.c.h.b16 %v848
        %v3603 = vunpack.c.l.b16 %v849
        %v3604 = vunpack.c.h.b16 %v849
        %v3605 = vunpack.c.l.b16 %v850
        %v3606 = vunpack.c.h.b16 %v850
        %v3607 = vunpack.c.l.b16 %v851
        %v3608 = vunpack.c.h.b16 %v851
        %v3609 = vunpack.c.l.b16 %v852
        %v3610 = vunpack.c.h.b16 %v852
        %v3611 = vunpack.c.l.b16 %v853
        %v3612 = vunpack.c.h.b16 %v853
        %v3613 = vunpack.c.l.b16 %v854
        %v3614 = vunpack.c.h.b16 %v854
        %v3615 = vunpack.c.l.b16 %v855
        %v3616 = vunpack.c.h.b16 %v855
        %v3617 = vunpack.c.l.b16 %v856
        %v3618 = vunpack.c.h.b16 %v856
        %v3619 = vunpack.c.l.b16 %v857
        %v3620 = vunpack.c.h.b16 %v857
        %v3621 = vunpack.c.l.b16 %v858
        %v3622 = vunpack.c.h.b16 %v858
        %v3623 = vunpack.c.l.b16 %v859
        %v3624 = vunpack.c.h.b16 %v859
        %v3625 = vunpack.c.l.b16 %v860
        %v3626 = vunpack.c.h.b16 %v860
        %v3627 = vunpack.c.l.b16 %v861
        %v3628 = vunpack.c.h.b16 %v861
        %v3629 = vunpack.c.l.b16 %v862
        %v3630 = vunpack.c.h.b16 %v862
        %v3631 = vunpack.c.l.b16 %v863
        %v3632 = vunpack.c.h.b16 %v863
        %v3633 = vunpack.c.l.b16 %v864
        %v3634 = vunpack.c.h.b16 %v864
        %v3635 = vunpack.c.l.b16 %v865
        %v3636 = vunpack.c.h.b16 %v865
        %v3637 = vunpack.c.l.b16 %v866
        %v3638 = vunpack.c.h.b16 %v866
        %v3639 = vunpack.c.l.b16 %v867
        %v3640 = vunpack.c.h.b16 %v867
        %v3641 = vunpack.c.l.b16 %v868
        %v3642 = vunpack.c.h.b16 %v868
        %v3643 = vunpack.c.l.b16 %v869
        %v3644 = vunpack.c.h.b16 %v869
        %v3645 = vunpack.c.l.b16 %v870
        %v3646 = vunpack.c.h.b16 %v870
        %v3647 = vunpack.c.l.b16 %v871
        %v3648 = vunpack.c.h.b16 %v871
        %v3649 = vunpack.c.l.b16 %v872
        %v3650 = vunpack.c.h.b16 %v872
        %v3651 = vunpack.c.l.b16 %v873
        %v3652 = vunpack.c.h.b16 %v873
        %v3653 = vunpack.c.l.b16 %v874
        %v3654 = vunpack.c.h.b16 %v874
        %v3655 = vunpack.c.l.b16 %v875
        %v3656 = vunpack.c.h.b16 %v875
        %v3657 = vunpack.c.l.b16 %v876
        %v3658 = vunpack.c.h.b16 %v876
        %v3659 = vunpack.c.l.b16 %v877
        %v3660 = vunpack.c.h.b16 %v877
        %v3661 = vunpack.c.l.b16 %v878
        %v3662 = vunpack.c.h.b16 %v878
        %v3663 = vunpack.c.l.b16 %v879
        %v3664 = vunpack.c.h.b16 %v879
        %v3665 = vunpack.c.l.b16 %v880
        %v3666 = vunpack.c.h.b16 %v880
        %v3667 = vunpack.c.l.b16 %v881
        %v3668 = vunpack.c.h.b16 %v881
        %v3669 = vunpack.c.l.b16 %v882
        %v3670 = vunpack.c.h.b16 %v882
        %v3671 = vunpack.c.l.b16 %v883
        %v3672 = vunpack.c.h.b16 %v883
        %v3673 = vunpack.c.l.b16 %v884
        %v3674 = vunpack.c.h.b16 %v884
        %v3675 = vunpack.c.l.b16 %v885
        %v3676 = vunpack.c.h.b16 %v885
        %v3677 = vunpack.c.l.b16 %v886
        %v3678 = vunpack.c.h.b16 %v886
        %v3679 = vunpack.c.l.b16 %v887
        %v3680 = vunpack.c.h.b16 %v887
        %v3681 = vunpack.c.l.b16 %v888
        %v3682 = vunpack.c.h.b16 %v888
        %v3683 = vunpack.c.l.b16 %v889
        %v3684 = vunpack.c.h.b16 %v889
        %v3685 = vunpack.c.l.b16 %v890
        %v3686 = vunpack.c.h.b16 %v890
        %v3687 = vunpack.c.l.b16 %v891
        %v3688 = vunpack.c.h.b16 %v891
        %v3689 = vunpack.c.l.b16 %v892
        %v3690 = vunpack.c.h.b16 %v892
        %v3691 = vunpack.c.l.b16 %v893
        %v3692 = vunpack.c.h.b16 %v893
        %v3693 = vunpack.c.l.b16 %v894
        %v3694 = vunpack.c.h.b16 %v894
        %v3695 = vunpack.c.l.b16 %v895
        %v3696 = vunpack.c.h.b16 %v895
        %v3697 = vunpack.c.l.b16 %v896
        %v3698 = vunpack.c.h.b16 %v896
        %v3699 = vunpack.c.l.b16 %v897
        %v3700 = vunpack.c.h.b16 %v897
        %v3701 = vunpack.c.l.b16 %v898
        %v3702 = vunpack.c.h.b16 %v898
        %v3703 = vunpack.c.l.b16 %v899
        %v3704 = vunpack.c.h.b16 %v899
        %v3705 = vunpack.c.l.b16 %v900
        %v3706 = vunpack.c.h.b16 %v900
        %v3707 = vunpack.c.l.b16 %v901
        %v3708 = vunpack.c.h.b16 %v901
        %v3709 = vunpack.c.l.b16 %v902
        %v3710 = vunpack.c.h.b16 %v902
        %v3711 = vunpack.c.l.b16 %v903
        %v3712 = vunpack.c.h.b16 %v903
        %v3713 = vunpack.c.l.b16 %v904
        %v3714 = vunpack.c.h.b16 %v904
        %v3715 = vunpack.c.l.b16 %v905
        %v3716 = vunpack.c.h.b16 %v905
        %v3717 = vunpack.c.l.b16 %v906
        %v3718 = vunpack.c.h.b16 %v906
        %v3719 = vunpack.c.l.b16 %v907
        %v3720 = vunpack.c.h.b16 %v907
        %v3721 = vunpack.c.l.b16 %v908
        %v3722 = vunpack.c.h.b16 %v908
        %v3723 = vunpack.c.l.b16 %v909
        %v3724 = vunpack.c.h.b16 %v909
        %v3725 = vunpack.c.l.b16 %v910
        %v3726 = vunpack.c.h.b16 %v910
        %v3727 = vunpack.c.l.b16 %v911
        %v3728 = vunpack.c.h.b16 %v911
        %v3729 = vunpack.c.l.b16 %v912
        %v3730 = vunpack.c.h.b16 %v912
        %v3731 = vunpack.c.l.b16 %v913
        %v3732 = vunpack.c.h.b16 %v913
        %v3733 = vunpack.c.l.b16 %v914
        %v3734 = vunpack.c.h.b16 %v914
        %v3735 = vunpack.c.l.b16 %v915
        %v3736 = vunpack.c.h.b16 %v915
        %v3737 = vunpack.c.l.b16 %v916
        %v3738 = vunpack.c.h.b16 %v916
        %v3739 = vunpack.c.l.b16 %v917
        %v3740 = vunpack.c.h.b16 %v917
        %v3741 = vunpack.c.l.b16 %v918
        %v3742 = vunpack.c.h.b16 %v918
        %v3743 = vunpack.c.l.b16 %v919
        %v3744 = vunpack.c.h.b16 %v919
        %v3745 = vunpack.c.l.b16 %v920
        %v3746 = vunpack.c.h.b16 %v920
        %v3747 = vunpack.c.l.b16 %v921
        %v3748 = vunpack.c.h.b16 %v921
        %v3749 = vunpack.c.l.b16 %v922
        %v3750 = vunpack.c.h.b16 %v922
        %v3751 = vunpack.c.l.b16 %v923
        %v3752 = vunpack.c.h.b16 %v923
        %v3753 = vunpack.c.l.b16 %v924
        %v3754 = vunpack.c.h.b16 %v924
        %v3755 = vunpack.c.l.b16 %v925
        %v3756 = vunpack.c.h.b16 %v925
        %v3757 = vunpack.c.l.b16 %v926
        %v3758 = vunpack.c.h.b16 %v926
        %v3759 = vunpack.c.l.b16 %v927
        %v3760 = vunpack.c.h.b16 %v927
        %v3761 = vunpack.c.l.b16 %v928
        %v3762 = vunpack.c.h.b16 %v928
        %v3763 = vunpack.c.l.b16 %v929
        %v3764 = vunpack.c.h.b16 %v929
        %v3765 = vunpack.c.l.b16 %v930
        %v3766 = vunpack.c.h.b16 %v930
        %v3767 = vunpack.c.l.b16 %v931
        %v3768 = vunpack.c.h.b16 %v931
        %v3769 = vunpack.c.l.b16 %v932
        %v3770 = vunpack.c.h.b16 %v932
        %v3771 = vunpack.c.l.b16 %v933
        %v3772 = vunpack.c.h.b16 %v933
        %v3773 = vunpack.c.l.b16 %v934
        %v3774 = vunpack.c.h.b16 %v934
        %v3775 = vunpack.c.l.b16 %v935
        %v3776 = vunpack.c.h.b16 %v935
        %v3777 = vunpack.c.l.b16 %v936
        %v3778 = vunpack.c.h.b16 %v936
        %v3779 = vunpack.c.l.b16 %v937
        %v3780 = vunpack.c.h.b16 %v937
        %v3781 = vunpack.c.l.b16 %v938
        %v3782 = vunpack.c.h.b16 %v938
        %v3783 = vunpack.c.l.b16 %v939
        %v3784 = vunpack.c.h.b16 %v939
        %v3785 = vunpack.c.l.b16 %v940
        %v3786 = vunpack.c.h.b16 %v940
        %v3787 = vunpack.c.l.b16 %v941
        %v3788 = vunpack.c.h.b16 %v941
        %v3789 = vunpack.c.l.b16 %v942
        %v3790 = vunpack.c.h.b16 %v942
        %v3791 = vunpack.c.l.b16 %v943
        %v3792 = vunpack.c.h.b16 %v943
        %v3793 = vunpack.c.l.b16 %v944
        %v3794 = vunpack.c.h.b16 %v944
        %v3795 = vunpack.c.l.b16 %v945
        %v3796 = vunpack.c.h.b16 %v945
        %v3797 = vunpack.c.l.b16 %v946
        %v3798 = vunpack.c.h.b16 %v946
        %v3799 = vunpack.c.l.b16 %v947
        %v3800 = vunpack.c.h.b16 %v947
        %v3801 = vunpack.c.l.b16 %v948
        %v3802 = vunpack.c.h.b16 %v948
        %v3803 = vunpack.c.l.b16 %v949
        %v3804 = vunpack.c.h.b16 %v949
        %v3805 = vunpack.c.l.b16 %v950
        %v3806 = vunpack.c.h.b16 %v950
        %v3807 = vunpack.c.l.b16 %v951
        %v3808 = vunpack.c.h.b16 %v951
        %v3809 = vunpack.c.l.b16 %v952
        %v3810 = vunpack.c.h.b16 %v952
        %v3811 = vunpack.c.l.b16 %v953
        %v3812 = vunpack.c.h.b16 %v953
        %v3813 = vunpack.c.l.b16 %v954
        %v3814 = vunpack.c.h.b16 %v954
        %v3815 = vunpack.c.l.b16 %v955
        %v3816 = vunpack.c.h.b16 %v955
        %v3817 = vunpack.c.l.b16 %v956
        %v3818 = vunpack.c.h.b16 %v956
        %v3819 = vunpack.c.l.b16 %v957
        %v3820 = vunpack.c.h.b16 %v957
        %v3821 = vunpack.c.l.b16 %v958
        %v3822 = vunpack.c.h.b16 %v958
        %v3823 = vunpack.c.l.b16 %v959
        %v3824 = vunpack.c.h.b16 %v959
        %v3825 = vunpack.c.l.b16 %v960
        %v3826 = vunpack.c.h.b16 %v960
        %v3827 = vunpack.c.l.b16 %v961
        %v3828 = vunpack.c.h.b16 %v961
        %v3829 = vunpack.c.l.b16 %v962
        %v3830 = vunpack.c.h.b16 %v962
        %v3831 = vunpack.c.l.b16 %v963
        %v3832 = vunpack.c.h.b16 %v963
        %v3833 = vunpack.c.l.b16 %v964
        %v3834 = vunpack.c.h.b16 %v964
        %v3835 = vunpack.c.l.b16 %v965
        %v3836 = vunpack.c.h.b16 %v965
        %v3837 = vunpack.c.l.b16 %v966
        %v3838 = vunpack.c.h.b16 %v966
        %v3839 = vunpack.c.l.b16 %v967
        %v3840 = vunpack.c.h.b16 %v967
        %v3841 = vunpack.c.l.b16 %v968
        %v3842 = vunpack.c.h.b16 %v968
        %v3843 = vunpack.c.l.b16 %v969
        %v3844 = vunpack.c.h.b16 %v969
        %v3845 = vunpack.c.l.b16 %v970
        %v3846 = vunpack.c.h.b16 %v970
        %v3847 = vunpack.c.l.b16 %v971
        %v3848 = vunpack.c.h.b16 %v971
        %v3849 = vunpack.c.l.b16 %v972
        %v3850 = vunpack.c.h.b16 %v972
        %v3851 = vunpack.c.l.b16 %v973
        %v3852 = vunpack.c.h.b16 %v973
        %v3853 = vunpack.c.l.b16 %v974
        %v3854 = vunpack.c.h.b16 %v974
        %v3855 = vunpack.c.l.b16 %v975
        %v3856 = vunpack.c.h.b16 %v975
        %v3857 = vunpack.c.l.b16 %v976
        %v3858 = vunpack.c.h.b16 %v976
        %v3859 = vunpack.c.l.b16 %v977
        %v3860 = vunpack.c.h.b16 %v977
        %v3861 = vunpack.c.l.b16 %v978
        %v3862 = vunpack.c.h.b16 %v978
        %v3863 = vunpack.c.l.b16 %v979
        %v3864 = vunpack.c.h.b16 %v979
        %v3865 = vunpack.c.l.b16 %v980
        %v3866 = vunpack.c.h.b16 %v980
        %v3867 = vunpack.c.l.b16 %v981
        %v3868 = vunpack.c.h.b16 %v981
        %v3869 = vunpack.c.l.b16 %v982
        %v3870 = vunpack.c.h.b16 %v982
        %v3871 = vunpack.c.l.b16 %v983
        %v3872 = vunpack.c.h.b16 %v983
        %v3873 = vunpack.c.l.b16 %v984
        %v3874 = vunpack.c.h.b16 %v984
        %v3875 = vunpack.c.l.b16 %v985
        %v3876 = vunpack.c.h.b16 %v985
        %v3877 = vunpack.c.l.b16 %v986
        %v3878 = vunpack.c.h.b16 %v986
        %v3879 = vunpack.c.l.b16 %v987
        %v3880 = vunpack.c.h.b16 %v987
        %v3881 = vunpack.c.l.b16 %v988
        %v3882 = vunpack.c.h.b16 %v988
        %v3883 = vunpack.c.l.b16 %v989
        %v3884 = vunpack.c.h.b16 %v989
        %v3885 = vunpack.c.l.b16 %v990
        %v3886 = vunpack.c.h.b16 %v990
        %v3887 = vunpack.c.l.b16 %v991
        %v3888 = vunpack.c.h.b16 %v991
        %v3889 = vunpack.c.l.b16 %v992
        %v3890 = vunpack.c.h.b16 %v992
        %v3891 = vunpack.c.l.b16 %v993
        %v3892 = vunpack.c.h.b16 %v993
        %v3893 = vunpack.c.l.b16 %v994
        %v3894 = vunpack.c.h.b16 %v994
        %v3895 = vunpack.c.l.b16 %v995
        %v3896 = vunpack.c.h.b16 %v995
        %v3897 = vunpack.c.l.b16 %v996
        %v3898 = vunpack.c.h.b16 %v996
        %v3899 = vunpack.c.l.b16 %v997
        %v3900 = vunpack.c.h.b16 %v997
        %v3901 = vunpack.c.l.b16 %v998
        %v3902 = vunpack.c.h.b16 %v998
        %v3903 = vunpack.c.l.b16 %v999
        %v3904 = vunpack.c.h.b16 %v999
        %v3905 = vunpack.c.l.b16 %v1000
        %v3906 = vunpack.c.h.b16 %v1000
        %v3907 = vunpack.c.l.b16 %v1001
        %v3908 = vunpack.c.h.b16 %v1001
        %v3909 = vunpack.c.l.b16 %v1002
        %v3910 = vunpack.c.h.b16 %v1002
        %v3911 = vunpack.c.l.b16 %v1003
        %v3912 = vunpack.c.h.b16 %v1003
        %v3913 = vunpack.c.l.b16 %v1004
        %v3914 = vunpack.c.h.b16 %v1004
        %v3915 = vunpack.c.l.b16 %v1005
        %v3916 = vunpack.c.h.b16 %v1005
        %v3917 = vunpack.c.l.b16 %v1006
        %v3918 = vunpack.c.h.b16 %v1006
        %v3919 = vunpack.c.l.b16 %v1007
        %v3920 = vunpack.c.h.b16 %v1007
        %v3921 = vunpack.c.l.b16 %v1008
        %v3922 = vunpack.c.h.b16 %v1008
        %v3923 = vunpack.c.l.b16 %v1009
        %v3924 = vunpack.c.h.b16 %v1009
        %v3925 = vunpack.c.l.b16 %v1010
        %v3926 = vunpack.c.h.b16 %v1010
        %v3927 = vunpack.c.l.b16 %v1011
        %v3928 = vunpack.c.h.b16 %v1011
        %v3929 = vunpack.c.l.b16 %v1012
        %v3930 = vunpack.c.h.b16 %v1012
        %v3931 = vunpack.c.l.b16 %v1013
        %v3932 = vunpack.c.h.b16 %v1013
        %v3933 = vunpack.c.l.b16 %v1014
        %v3934 = vunpack.c.h.b16 %v1014
        %v3935 = vunpack.c.l.b16 %v1015
        %v3936 = vunpack.c.h.b16 %v1015
        %v3937 = vunpack.c.l.b16 %v1016
        %v3938 = vunpack.c.h.b16 %v1016
        %v3939 = vunpack.c.l.b16 %v1017
        %v3940 = vunpack.c.h.b16 %v1017
        %v3941 = vunpack.c.l.b16 %v1018
        %v3942 = vunpack.c.h.b16 %v1018
        %v3943 = vunpack.c.l.b16 %v1019
        %v3944 = vunpack.c.h.b16 %v1019
        %v3945 = vunpack.c.l.b16 %v1020
        %v3946 = vunpack.c.h.b16 %v1020
        %v3947 = vunpack.c.l.b16 %v1021
        %v3948 = vunpack.c.h.b16 %v1021
        %v3949 = vunpack.c.l.b16 %v1022
        %v3950 = vunpack.c.h.b16 %v1022
        %v3951 = vunpack.c.l.b16 %v1023
        %v3952 = vunpack.c.h.b16 %v1023
        %v3953 = vunpack.c.l.b16 %v1024
        %v3954 = vunpack.c.h.b16 %v1024
        %v3955 = vunpack.c.l.b16 %v1025
        %v3956 = vunpack.c.h.b16 %v1025
        %v3957 = vunpack.c.l.b16 %v1026
        %v3958 = vunpack.c.h.b16 %v1026
        %v3959 = vunpack.c.l.b16 %v1027
        %v3960 = vunpack.c.h.b16 %v1027
        %v3961 = vunpack.c.l.b16 %v1028
        %v3962 = vunpack.c.h.b16 %v1028
        %v3963 = vunpack.c.l.b16 %v1029
        %v3964 = vunpack.c.h.b16 %v1029
        %v3965 = vunpack.c.l.b16 %v1030
        %v3966 = vunpack.c.h.b16 %v1030
        %v3967 = vunpack.c.l.b16 %v1031
        %v3968 = vunpack.c.h.b16 %v1031
        %v3969 = vunpack.c.l.b16 %v1032
        %v3970 = vunpack.c.h.b16 %v1032
        %v3971 = vunpack.c.l.b16 %v1033
        %v3972 = vunpack.c.h.b16 %v1033
        %v3973 = vunpack.c.l.b16 %v1034
        %v3974 = vunpack.c.h.b16 %v1034
        %v3975 = vunpack.c.l.b16 %v1035
        %v3976 = vunpack.c.h.b16 %v1035
        %v3977 = vunpack.c.l.b16 %v1036
        %v3978 = vunpack.c.h.b16 %v1036
        %v3979 = vunpack.c.l.b16 %v1037
        %v3980 = vunpack.c.h.b16 %v1037
        %v3981 = vunpack.c.l.b16 %v1038
        %v3982 = vunpack.c.h.b16 %v1038
        %v3983 = vunpack.c.l.b16 %v1039
        %v3984 = vunpack.c.h.b16 %v1039
        %v3985 = vunpack.c.l.b16 %v1040
        %v3986 = vunpack.c.h.b16 %v1040
        %v3987 = vunpack.c.l.b16 %v1041
        %v3988 = vunpack.c.h.b16 %v1041
        %v3989 = vunpack.c.l.b16 %v1042
        %v3990 = vunpack.c.h.b16 %v1042
        %v3991 = vunpack.c.l.b16 %v1043
        %v3992 = vunpack.c.h.b16 %v1043
        %v3993 = vunpack.c.l.b16 %v1044
        %v3994 = vunpack.c.h.b16 %v1044
        %v3995 = vunpack.c.l.b16 %v1045
        %v3996 = vunpack.c.h.b16 %v1045
        %v3997 = vunpack.c.l.b16 %v1046
        %v3998 = vunpack.c.h.b16 %v1046
        %v3999 = vunpack.c.l.b16 %v1047
        %v4000 = vunpack.c.h.b16 %v1047
        %v4001 = vunpack.c.l.b16 %v1048
        %v4002 = vunpack.c.h.b16 %v1048
        %v4003 = vunpack.c.l.b16 %v1049
        %v4004 = vunpack.c.h.b16 %v1049
        %v4005 = vunpack.c.l.b16 %v1050
        %v4006 = vunpack.c.h.b16 %v1050
        %v4007 = vunpack.c.l.b16 %v1051
        %v4008 = vunpack.c.h.b16 %v1051
        %v4009 = vunpack.c.l.b16 %v1052
        %v4010 = vunpack.c.h.b16 %v1052
        %v4011 = vunpack.c.l.b16 %v1053
        %v4012 = vunpack.c.h.b16 %v1053
        %v4013 = vunpack.c.l.b16 %v1054
        %v4014 = vunpack.c.h.b16 %v1054
        %v4015 = vunpack.c.l.b16 %v1055
        %v4016 = vunpack.c.h.b16 %v1055
        %v4017 = vunpack.c.l.b16 %v1056
        %v4018 = vunpack.c.h.b16 %v1056
        %v4019 = vunpack.c.l.b16 %v1057
        %v4020 = vunpack.c.h.b16 %v1057
        %v4021 = vunpack.c.l.b16 %v1058
        %v4022 = vunpack.c.h.b16 %v1058
        %v4023 = vunpack.c.l.b16 %v1059
        %v4024 = vunpack.c.h.b16 %v1059
        %v4025 = vunpack.c.l.b16 %v1060
        %v4026 = vunpack.c.h.b16 %v1060
        %v4027 = vunpack.c.l.b16 %v1061
        %v4028 = vunpack.c.h.b16 %v1061
        %v4029 = vunpack.c.l.b16 %v1062
        %v4030 = vunpack.c.h.b16 %v1062
        %v4031 = vunpack.c.l.b16 %v1063
        %v4032 = vunpack.c.h.b16 %v1063
        %v4033 = vunpack.c.l.b16 %v1064
        %v4034 = vunpack.c.h.b16 %v1064
        %v4035 = vunpack.c.l.b16 %v1065
        %v4036 = vunpack.c.h.b16 %v1065
        %v4037 = vunpack.c.l.b16 %v1066
        %v4038 = vunpack.c.h.b16 %v1066
        %v4039 = vunpack.c.l.b16 %v1067
        %v4040 = vunpack.c.h.b16 %v1067
        %v4041 = vunpack.c.l.b16 %v1068
        %v4042 = vunpack.c.h.b16 %v1068
        %v4043 = vunpack.c.l.b16 %v1069
        %v4044 = vunpack.c.h.b16 %v1069
        %v4045 = vunpack.c.l.b16 %v1070
        %v4046 = vunpack.c.h.b16 %v1070
        %v4047 = vunpack.c.l.b16 %v1071
        %v4048 = vunpack.c.h.b16 %v1071
        %v4049 = vunpack.c.l.b16 %v1072
        %v4050 = vunpack.c.h.b16 %v1072
        %v4051 = vunpack.c.l.b16 %v1073
        %v4052 = vunpack.c.h.b16 %v1073
        %v4053 = vunpack.c.l.b16 %v1074
        %v4054 = vunpack.c.h.b16 %v1074
        %v4055 = vunpack.c.l.b16 %v1075
        %v4056 = vunpack.c.h.b16 %v1075
        %v4057 = vunpack.c.l.b16 %v1076
        %v4058 = vunpack.c.h.b16 %v1076
        %v4059 = vunpack.c.l.b16 %v1077
        %v4060 = vunpack.c.h.b16 %v1077
        %v4061 = vunpack.c.l.b16 %v1078
        %v4062 = vunpack.c.h.b16 %v1078
        %v4063 = vunpack.c.l.b16 %v1079
        %v4064 = vunpack.c.h.b16 %v1079
        %v4065 = vunpack.c.l.b16 %v1080
        %v4066 = vunpack.c.h.b16 %v1080
        %v4067 = vunpack.c.l.b16 %v1081
        %v4068 = vunpack.c.h.b16 %v1081
        %v4069 = vunpack.c.l.b16 %v1082
        %v4070 = vunpack.c.h.b16 %v1082
        %v4071 = vunpack.c.l.b16 %v1083
        %v4072 = vunpack.c.h.b16 %v1083
        %v4073 = vunpack.c.l.b16 %v1084
        %v4074 = vunpack.c.h.b16 %v1084
        %v4075 = vunpack.c.l.b16 %v1085
        %v4076 = vunpack.c.h.b16 %v1085
        %v4077 = vunpack.c.l.b16 %v1086
        %v4078 = vunpack.c.h.b16 %v1086
        %v4079 = vunpack.c.l.b16 %v1087
        %v4080 = vunpack.c.h.b16 %v1087
        %v4081 = vunpack.c.l.b16 %v1088
        %v4082 = vunpack.c.h.b16 %v1088
        %v4083 = vunpack.c.l.b16 %v1089
        %v4084 = vunpack.c.h.b16 %v1089
        %v4085 = vunpack.c.l.b16 %v1090
        %v4086 = vunpack.c.h.b16 %v1090
        %v4087 = vunpack.c.l.b16 %v1091
        %v4088 = vunpack.c.h.b16 %v1091
        %v4089 = vunpack.c.l.b16 %v1092
        %v4090 = vunpack.c.h.b16 %v1092
        %v4091 = vunpack.c.l.b16 %v1093
        %v4092 = vunpack.c.h.b16 %v1093
        %v4093 = vunpack.c.l.b16 %v1094
        %v4094 = vunpack.c.h.b16 %v1094
        %v4095 = vunpack.c.l.b16 %v1095
        %v4096 = vunpack.c.h.b16 %v1095
        %v4097 = vunpack.c.l.b16 %v1096
        %v4098 = vunpack.c.h.b16 %v1096
        %v4099 = vunpack.c.l.b16 %v1097
        %v4100 = vunpack.c.h.b16 %v1097
        %v4101 = vunpack.c.l.b16 %v1098
        %v4102 = vunpack.c.h.b16 %v1098
        %v4103 = vunpack.c.l.b16 %v1099
        %v4104 = vunpack.c.h.b16 %v1099
        %v4105 = vunpack.c.l.b16 %v1100
        %v4106 = vunpack.c.h.b16 %v1100
        %v4107 = vunpack.c.l.b16 %v1101
        %v4108 = vunpack.c.h.b16 %v1101
        %v4109 = vunpack.c.l.b16 %v1102
        %v4110 = vunpack.c.h.b16 %v1102
        %v4111 = vunpack.c.l.b16 %v1103
        %v4112 = vunpack.c.h.b16 %v1103
        %v4113 = vunpack.c.l.b16 %v1104
        %v4114 = vunpack.c.h.b16 %v1104
        %v4115 = vunpack.c.l.b16 %v1105
        %v4116 = vunpack.c.h.b16 %v1105
        %v4117 = vunpack.c.l.b16 %v1106
        %v4118 = vunpack.c.h.b16 %v1106
        %v4119 = vunpack.c.l.b16 %v1107
        %v4120 = vunpack.c.h.b16 %v1107
        %v4121 = vunpack.c.l.b16 %v1108
        %v4122 = vunpack.c.h.b16 %v1108
        %v4123 = vunpack.c.l.b16 %v1109
        %v4124 = vunpack.c.h.b16 %v1109
        %v4125 = vunpack.c.l.b16 %v1110
        %v4126 = vunpack.c.h.b16 %v1110
        %v4127 = vunpack.c.l.b16 %v1111
        %v4128 = vunpack.c.h.b16 %v1111
        %v4129 = vunpack.c.l.b16 %v1112
        %v4130 = vunpack.c.h.b16 %v1112
        %v4131 = vunpack.c.l.b16 %v1113
        %v4132 = vunpack.c.h.b16 %v1113
        %v4133 = vunpack.c.l.b16 %v1114
        %v4134 = vunpack.c.h.b16 %v1114
        %v4135 = vunpack.c.l.b16 %v1115
        %v4136 = vunpack.c.h.b16 %v1115
        %v4137 = vunpack.c.l.b16 %v1116
        %v4138 = vunpack.c.h.b16 %v1116
        %v4139 = vunpack.c.l.b16 %v1117
        %v4140 = vunpack.c.h.b16 %v1117
        %v4141 = vunpack.c.l.b16 %v1118
        %v4142 = vunpack.c.h.b16 %v1118
        %v4143 = vunpack.c.l.b16 %v1119
        %v4144 = vunpack.c.h.b16 %v1119
        %v4145 = vunpack.c.l.b16 %v1120
        %v4146 = vunpack.c.h.b16 %v1120
        %v4147 = vunpack.c.l.b16 %v1121
        %v4148 = vunpack.c.h.b16 %v1121
        %v4149 = vunpack.c.l.b16 %v1122
        %v4150 = vunpack.c.h.b16 %v1122
        %v4151 = vunpack.c.l.b16 %v1123
        %v4152 = vunpack.c.h.b16 %v1123
        %v4153 = vunpack.c.l.b16 %v1124
        %v4154 = vunpack.c.h.b16 %v1124
        %v4155 = vunpack.c.l.b16 %v1125
        %v4156 = vunpack.c.h.b16 %v1125
        %v4157 = vunpack.c.l.b16 %v1126
        %v4158 = vunpack.c.h.b16 %v1126
        %v4159 = vunpack.c.l.b16 %v1127
        %v4160 = vunpack.c.h.b16 %v1127
        %v4161 = vunpack.c.l.b16 %v1128
        %v4162 = vunpack.c.h.b16 %v1128
        %v4163 = vunpack.c.l.b16 %v1129
        %v4164 = vunpack.c.h.b16 %v1129
        %v4165 = vunpack.c.l.b16 %v1130
        %v4166 = vunpack.c.h.b16 %v1130
        %v4167 = vunpack.c.l.b16 %v1131
        %v4168 = vunpack.c.h.b16 %v1131
        %v4169 = vunpack.c.l.b16 %v1132
        %v4170 = vunpack.c.h.b16 %v1132
        %v4171 = vunpack.c.l.b16 %v1133
        %v4172 = vunpack.c.h.b16 %v1133
        %v4173 = vunpack.c.l.b16 %v1134
        %v4174 = vunpack.c.h.b16 %v1134
        %v4175 = vunpack.c.l.b16 %v1135
        %v4176 = vunpack.c.h.b16 %v1135
        %v4177 = vunpack.c.l.b16 %v1136
        %v4178 = vunpack.c.h.b16 %v1136
        %v4179 = vunpack.c.l.b16 %v1137
        %v4180 = vunpack.c.h.b16 %v1137
        %v4181 = vunpack.c.l.b16 %v1138
        %v4182 = vunpack.c.h.b16 %v1138
        %v4183 = vunpack.c.l.b16 %v1139
        %v4184 = vunpack.c.h.b16 %v1139
        %v4185 = vunpack.c.l.b16 %v1140
        %v4186 = vunpack.c.h.b16 %v1140
        %v4187 = vunpack.c.l.b16 %v1141
        %v4188 = vunpack.c.h.b16 %v1141
        %v4189 = vunpack.c.l.b16 %v1142
        %v4190 = vunpack.c.h.b16 %v1142
        %v4191 = vunpack.c.l.b16 %v1143
        %v4192 = vunpack.c.h.b16 %v1143
        %v4193 = vunpack.c.l.b16 %v1144
        %v4194 = vunpack.c.h.b16 %v1144
        %v4195 = vunpack.c.l.b16 %v1145
        %v4196 = vunpack.c.h.b16 %v1145
        %v4197 = vunpack.c.l.b16 %v1146
        %v4198 = vunpack.c.h.b16 %v1146
        %v4199 = vunpack.c.l.b16 %v1147
        %v4200 = vunpack.c.h.b16 %v1147
        %v4201 = vunpack.c.l.b16 %v1148
        %v4202 = vunpack.c.h.b16 %v1148
        %v4203 = vunpack.c.l.b16 %v1149
        %v4204 = vunpack.c.h.b16 %v1149
        %v4205 = vunpack.c.l.b16 %v1150
        %v4206 = vunpack.c.h.b16 %v1150
        %v4207 = vunpack.c.l.b16 %v1151
        %v4208 = vunpack.c.h.b16 %v1151
        %v4209 = vunpack.c.l.b16 %v1152
        %v4210 = vunpack.c.h.b16 %v1152
        %v4211 = vunpack.c.l.b16 %v1153
        %v4212 = vunpack.c.h.b16 %v1153
        %v4213 = vunpack.c.l.b16 %v1154
        %v4214 = vunpack.c.h.b16 %v1154
        %v4215 = vunpack.c.l.b16 %v1155
        %v4216 = vunpack.c.h.b16 %v1155
        %v4217 = vunpack.c.l.b16 %v1156
        %v4218 = vunpack.c.h.b16 %v1156
        %v4219 = vunpack.c.l.b16 %v1157
        %v4220 = vunpack.c.h.b16 %v1157
        %v4221 = vunpack.c.l.b16 %v1158
        %v4222 = vunpack.c.h.b16 %v1158
        %v4223 = vunpack.c.l.b16 %v1159
        %v4224 = vunpack.c.h.b16 %v1159
        %v4225 = vunpack.c.l.b16 %v1160
        %v4226 = vunpack.c.h.b16 %v1160
        %v4227 = vunpack.c.l.b16 %v1161
        %v4228 = vunpack.c.h.b16 %v1161
        %v4229 = vunpack.c.l.b16 %v1162
        %v4230 = vunpack.c.h.b16 %v1162
        %v4231 = vunpack.c.l.b16 %v1163
        %v4232 = vunpack.c.h.b16 %v1163
        %v4233 = vunpack.c.l.b16 %v1164
        %v4234 = vunpack.c.h.b16 %v1164
        %v4235 = vunpack.c.l.b16 %v1165
        %v4236 = vunpack.c.h.b16 %v1165
        %v4237 = vunpack.c.l.b16 %v1166
        %v4238 = vunpack.c.h.b16 %v1166
        %v4239 = vunpack.c.l.b16 %v1167
        %v4240 = vunpack.c.h.b16 %v1167
        %v4241 = vunpack.c.l.b16 %v1168
        %v4242 = vunpack.c.h.b16 %v1168
        %v4243 = vunpack.c.l.b16 %v1169
        %v4244 = vunpack.c.h.b16 %v1169
        %v4245 = vunpack.c.l.b16 %v1170
        %v4246 = vunpack.c.h.b16 %v1170
        %v4247 = vunpack.c.l.b16 %v1171
        %v4248 = vunpack.c.h.b16 %v1171
        %v4249 = vunpack.c.l.b16 %v1172
        %v4250 = vunpack.c.h.b16 %v1172
        %v4251 = vunpack.c.l.b16 %v1173
        %v4252 = vunpack.c.h.b16 %v1173
        %v4253 = vunpack.c.l.b16 %v1174
        %v4254 = vunpack.c.h.b16 %v1174
        %v4255 = vunpack.c.l.b16 %v1175
        %v4256 = vunpack.c.h.b16 %v1175
        %v4257 = vunpack.c.l.b16 %v1176
        %v4258 = vunpack.c.h.b16 %v1176
        %v4259 = vunpack.c.l.b16 %v1177
        %v4260 = vunpack.c.h.b16 %v1177
        %v4261 = vunpack.c.l.b16 %v1178
        %v4262 = vunpack.c.h.b16 %v1178
        %v4263 = vunpack.c.l.b16 %v1179
        %v4264 = vunpack.c.h.b16 %v1179
        %v4265 = vunpack.c.l.b16 %v1180
        %v4266 = vunpack.c.h.b16 %v1180
        %v4267 = vunpack.c.l.b16 %v1181
        %v4268 = vunpack.c.h.b16 %v1181
        %v4269 = vunpack.c.l.b16 %v1182
        %v4270 = vunpack.c.h.b16 %v1182
        %v4271 = vunpack.c.l.b16 %v1183
        %v4272 = vunpack.c.h.b16 %v1183
        %v4273 = vunpack.c.l.b16 %v1184
        %v4274 = vunpack.c.h.b16 %v1184
        %v4275 = vunpack.c.l.b16 %v1185
        %v4276 = vunpack.c.h.b16 %v1185
        %v4277 = vunpack.c.l.b16 %v1186
        %v4278 = vunpack.c.h.b16 %v1186
        %v4279 = vunpack.c.l.b16 %v1187
        %v4280 = vunpack.c.h.b16 %v1187
        %v4281 = vunpack.c.l.b16 %v1188
        %v4282 = vunpack.c.h.b16 %v1188
        %v4283 = vunpack.c.l.b16 %v1189
        %v4284 = vunpack.c.h.b16 %v1189
        %v4285 = vunpack.c.l.b16 %v1190
        %v4286 = vunpack.c.h.b16 %v1190
        %v4287 = vunpack.c.l.b16 %v1191
        %v4288 = vunpack.c.h.b16 %v1191
        %v4289 = vunpack.c.l.b16 %v1192
        %v4290 = vunpack.c.h.b16 %v1192
        %v4291 = vunpack.c.l.b16 %v1193
        %v4292 = vunpack.c.h.b16 %v1193
        %v4293 = vunpack.c.l.b16 %v1194
        %v4294 = vunpack.c.h.b16 %v1194
        %v4295 = vunpack.c.l.b16 %v1195
        %v4296 = vunpack.c.h.b16 %v1195
        %v4297 = vunpack.c.l.b16 %v1196
        %v4298 = vunpack.c.h.b16 %v1196
        %v4299 = vunpack.c.l.b16 %v1197
        %v4300 = vunpack.c.h.b16 %v1197
        %v4301 = vunpack.c.l.b16 %v1198
        %v4302 = vunpack.c.h.b16 %v1198
        %v4303 = vunpack.c.l.b16 %v1199
        %v4304 = vunpack.c.h.b16 %v1199
        %v4305 = vunpack.c.l.b16 %v1200
        %v4306 = vunpack.c.h.b16 %v1200
        %v4307 = vunpack.c.l.b16 %v1201
        %v4308 = vunpack.c.h.b16 %v1201
        %v4309 = vunpack.c.l.b16 %v1202
        %v4310 = vunpack.c.h.b16 %v1202
        %v4311 = vunpack.c.l.b16 %v1203
        %v4312 = vunpack.c.h.b16 %v1203
        %v4313 = vunpack.c.l.b16 %v1204
        %v4314 = vunpack.c.h.b16 %v1204
        %v4315 = vunpack.c.l.b16 %v1205
        %v4316 = vunpack.c.h.b16 %v1205
        %v4317 = vunpack.c.l.b16 %v1206
        %v4318 = vunpack.c.h.b16 %v1206
        %v4319 = vunpack.c.l.b16 %v1207
        %v4320 = vunpack.c.h.b16 %v1207
        %v4321 = vunpack.c.l.b16 %v1208
        %v4322 = vunpack.c.h.b16 %v1208
        %v4323 = vunpack.c.l.b16 %v1209
        %v4324 = vunpack.c.h.b16 %v1209
        %v4325 = vunpack.c.l.b16 %v1210
        %v4326 = vunpack.c.h.b16 %v1210
        %v4327 = vunpack.c.l.b16 %v1211
        %v4328 = vunpack.c.h.b16 %v1211
        %v4329 = vunpack.c.l.b16 %v1212
        %v4330 = vunpack.c.h.b16 %v1212
        %v4331 = vunpack.c.l.b16 %v1213
        %v4332 = vunpack.c.h.b16 %v1213
        %v4333 = vunpack.c.l.b16 %v1214
        %v4334 = vunpack.c.h.b16 %v1214
        %v4335 = vunpack.c.l.b16 %v1215
        %v4336 = vunpack.c.h.b16 %v1215
        %v4337 = vunpack.c.l.b16 %v1216
        %v4338 = vunpack.c.h.b16 %v1216
        %v4339 = vunpack.c.l.b16 %v1217
        %v4340 = vunpack.c.h.b16 %v1217
        %v4341 = vunpack.c.l.b16 %v1218
        %v4342 = vunpack.c.h.b16 %v1218
        %v4343 = vunpack.c.l.b16 %v1219
        %v4344 = vunpack.c.h.b16 %v1219
        %v4345 = vunpack.c.l.b16 %v1220
        %v4346 = vunpack.c.h.b16 %v1220
        %v4347 = vunpack.c.l.b16 %v1221
        %v4348 = vunpack.c.h.b16 %v1221
        %v4349 = vunpack.c.l.b16 %v1222
        %v4350 = vunpack.c.h.b16 %v1222
        %v4351 = vunpack.c.l.b16 %v1223
        %v4352 = vunpack.c.h.b16 %v1223
        %v4353 = vunpack.c.l.b16 %v1224
        %v4354 = vunpack.c.h.b16 %v1224
        %v4355 = vunpack.c.l.b16 %v1225
        %v4356 = vunpack.c.h.b16 %v1225
        %v4357 = vunpack.c.l.b16 %v1226
        %v4358 = vunpack.c.h.b16 %v1226
        %v4359 = vunpack.c.l.b16 %v1227
        %v4360 = vunpack.c.h.b16 %v1227
        %v4361 = vunpack.c.l.b16 %v1228
        %v4362 = vunpack.c.h.b16 %v1228
        %v4363 = vunpack.c.l.b16 %v1229
        %v4364 = vunpack.c.h.b16 %v1229
        %v4365 = vunpack.c.l.b16 %v1230
        %v4366 = vunpack.c.h.b16 %v1230
        %v4367 = vunpack.c.l.b16 %v1231
        %v4368 = vunpack.c.h.b16 %v1231
        %v4369 = vunpack.c.l.b16 %v1232
        %v4370 = vunpack.c.h.b16 %v1232
        %v4371 = vunpack.c.l.b16 %v1233
        %v4372 = vunpack.c.h.b16 %v1233
        %v4373 = vunpack.c.l.b16 %v1234
        %v4374 = vunpack.c.h.b16 %v1234
        %v4375 = vunpack.c.l.b16 %v1235
        %v4376 = vunpack.c.h.b16 %v1235
        %v4377 = vunpack.c.l.b16 %v1236
        %v4378 = vunpack.c.h.b16 %v1236
        %v4379 = vunpack.c.l.b16 %v1237
        %v4380 = vunpack.c.h.b16 %v1237
        %v4381 = vunpack.c.l.b16 %v1238
        %v4382 = vunpack.c.h.b16 %v1238
        %v4383 = vunpack.c.l.b16 %v1239
        %v4384 = vunpack.c.h.b16 %v1239
        %v4385 = vunpack.c.l.b16 %v1240
        %v4386 = vunpack.c.h.b16 %v1240
        %v4387 = vunpack.c.l.b16 %v1241
        %v4388 = vunpack.c.h.b16 %v1241
        %v4389 = vunpack.c.l.b16 %v1242
        %v4390 = vunpack.c.h.b16 %v1242
        %v4391 = vunpack.c.l.b16 %v1243
        %v4392 = vunpack.c.h.b16 %v1243
        %v4393 = vunpack.c.l.b16 %v1244
        %v4394 = vunpack.c.h.b16 %v1244
        %v4395 = vunpack.c.l.b16 %v1245
        %v4396 = vunpack.c.h.b16 %v1245
        %v4397 = vunpack.c.l.b16 %v1246
        %v4398 = vunpack.c.h.b16 %v1246
        %v4399 = vunpack.c.l.b16 %v1247
        %v4400 = vunpack.c.h.b16 %v1247
        %v4401 = vunpack.c.l.b16 %v1248
        %v4402 = vunpack.c.h.b16 %v1248
        %v4403 = vunpack.c.l.b16 %v1249
        %v4404 = vunpack.c.h.b16 %v1249
        %v4405 = vunpack.c.l.b16 %v1250
        %v4406 = vunpack.c.h.b16 %v1250
        %v4407 = vunpack.c.l.b16 %v1251
        %v4408 = vunpack.c.h.b16 %v1251
        %v4409 = vunpack.c.l.b16 %v1252
        %v4410 = vunpack.c.h.b16 %v1252
        %v4411 = vunpack.c.l.b16 %v1253
        %v4412 = vunpack.c.h.b16 %v1253
        %v4413 = vunpack.c.l.b16 %v1254
        %v4414 = vunpack.c.h.b16 %v1254
        %v4415 = vunpack.c.l.b16 %v1255
        %v4416 = vunpack.c.h.b16 %v1255
        %v4417 = vunpack.c.l.b16 %v1256
        %v4418 = vunpack.c.h.b16 %v1256
        %v4419 = vunpack.c.l.b16 %v1257
        %v4420 = vunpack.c.h.b16 %v1257
        %v4421 = vunpack.c.l.b16 %v1258
        %v4422 = vunpack.c.h.b16 %v1258
        %v4423 = vunpack.c.l.b16 %v1259
        %v4424 = vunpack.c.h.b16 %v1259
        %v4425 = vunpack.c.l.b16 %v1260
        %v4426 = vunpack.c.h.b16 %v1260
        %v4427 = vunpack.c.l.b16 %v1261
        %v4428 = vunpack.c.h.b16 %v1261
        %v4429 = vunpack.c.l.b16 %v1262
        %v4430 = vunpack.c.h.b16 %v1262
        %v4431 = vunpack.c.l.b16 %v1263
        %v4432 = vunpack.c.h.b16 %v1263
        %v4433 = vunpack.c.l.b16 %v1264
        %v4434 = vunpack.c.h.b16 %v1264
        %v4435 = vunpack.c.l.b16 %v1265
        %v4436 = vunpack.c.h.b16 %v1265
        %v4437 = vunpack.c.l.b16 %v1266
        %v4438 = vunpack.c.h.b16 %v1266
        %v4439 = vunpack.c.l.b16 %v1267
        %v4440 = vunpack.c.h.b16 %v1267
        %v4441 = vunpack.c.l.b16 %v1268
        %v4442 = vunpack.c.h.b16 %v1268
        %v4443 = vunpack.c.l.b16 %v1269
        %v4444 = vunpack.c.h.b16 %v1269
        %v4445 = vunpack.c.l.b16 %v1270
        %v4446 = vunpack.c.h.b16 %v1270
        %v4447 = vunpack.c.l.b16 %v1271
        %v4448 = vunpack.c.h.b16 %v1271
        %v4449 = vunpack.c.l.b16 %v1272
        %v4450 = vunpack.c.h.b16 %v1272
        %v4451 = vunpack.c.l.b16 %v1273
        %v4452 = vunpack.c.h.b16 %v1273
        %v4453 = vunpack.c.l.b16 %v1274
        %v4454 = vunpack.c.h.b16 %v1274
        %v4455 = vunpack.c.l.b16 %v1275
        %v4456 = vunpack.c.h.b16 %v1275
        %v4457 = vunpack.c.l.b16 %v1276
        %v4458 = vunpack.c.h.b16 %v1276
        %v4459 = vunpack.c.l.b16 %v1277
        %v4460 = vunpack.c.h.b16 %v1277
        %v4461 = vunpack.c.l.b16 %v1278
        %v4462 = vunpack.c.h.b16 %v1278
        %v4463 = vunpack.c.l.b16 %v1279
        %v4464 = vunpack.c.h.b16 %v1279
        %v4465 = vunpack.c.l.b16 %v1280
        %v4466 = vunpack.c.h.b16 %v1280
        %v4467 = vunpack.c.l.b16 %v1281
        %v4468 = vunpack.c.h.b16 %v1281
        %v4469 = vunpack.c.l.b16 %v1282
        %v4470 = vunpack.c.h.b16 %v1282
        %v4471 = vunpack.c.l.b16 %v1283
        %v4472 = vunpack.c.h.b16 %v1283
        %v4473 = vunpack.c.l.b16 %v1284
        %v4474 = vunpack.c.h.b16 %v1284
        %v4475 = vunpack.c.l.b16 %v1285
        %v4476 = vunpack.c.h.b16 %v1285
        %v4477 = vunpack.c.l.b16 %v1286
        %v4478 = vunpack.c.h.b16 %v1286
        %v4479 = vunpack.c.l.b16 %v1287
        %v4480 = vunpack.c.h.b16 %v1287
        %v4481 = vunpack.c.l.b16 %v1288
        %v4482 = vunpack.c.h.b16 %v1288
        %v4483 = vunpack.c.l.b16 %v1289
        %v4484 = vunpack.c.h.b16 %v1289
        %v4485 = vunpack.c.l.b16 %v1290
        %v4486 = vunpack.c.h.b16 %v1290
        %v4487 = vunpack.c.l.b16 %v1291
        %v4488 = vunpack.c.h.b16 %v1291
        %v4489 = vunpack.c.l.b16 %v1292
        %v4490 = vunpack.c.h.b16 %v1292
        %v4491 = vunpack.c.l.b16 %v1293
        %v4492 = vunpack.c.h.b16 %v1293
        %v4493 = vunpack.c.l.b16 %v1294
        %v4494 = vunpack.c.h.b16 %v1294
        %v4495 = vunpack.c.l.b16 %v1295
        %v4496 = vunpack.c.h.b16 %v1295
        %v4497 = vunpack.c.l.b16 %v1296
        %v4498 = vunpack.c.h.b16 %v1296
        %v4499 = vunpack.c.l.b16 %v1297
        %v4500 = vunpack.c.h.b16 %v1297
        %v4501 = vunpack.c.l.b16 %v1298
        %v4502 = vunpack.c.h.b16 %v1298
        %v4503 = vunpack.c.l.b16 %v1299
        %v4504 = vunpack.c.h.b16 %v1299
        %v4505 = vunpack.c.l.b16 %v1300
        %v4506 = vunpack.c.h.b16 %v1300
        %v4507 = vunpack.c.l.b16 %v1301
        %v4508 = vunpack.c.h.b16 %v1301
        %v4509 = vunpack.c.l.b16 %v1302
        %v4510 = vunpack.c.h.b16 %v1302
        %v4511 = vunpack.c.l.b16 %v1303
        %v4512 = vunpack.c.h.b16 %v1303
        %v4513 = vunpack.c.l.b16 %v1304
        %v4514 = vunpack.c.h.b16 %v1304
        %v4515 = vunpack.c.l.b16 %v1305
        %v4516 = vunpack.c.h.b16 %v1305
        %v4517 = vunpack.c.l.b16 %v1306
        %v4518 = vunpack.c.h.b16 %v1306
        %v4519 = vunpack.c.l.b16 %v1307
        %v4520 = vunpack.c.h.b16 %v1307
        %v4521 = vunpack.c.l.b16 %v1308
        %v4522 = vunpack.c.h.b16 %v1308
        %v4523 = vunpack.c.l.b16 %v1309
        %v4524 = vunpack.c.h.b16 %v1309
        %v4525 = vunpack.c.l.b16 %v1310
        %v4526 = vunpack.c.h.b16 %v1310
        %v4527 = vunpack.c.l.b16 %v1311
        %v4528 = vunpack.c.h.b16 %v1311
        %v4529 = vunpack.c.l.b16 %v1312
        %v4530 = vunpack.c.h.b16 %v1312
        %v4531 = vunpack.c.l.b16 %v1313
        %v4532 = vunpack.c.h.b16 %v1313
        %v4533 = vunpack.c.l.b16 %v1314
        %v4534 = vunpack.c.h.b16 %v1314
        %v4535 = vunpack.c.l.b16 %v1315
        %v4536 = vunpack.c.h.b16 %v1315
        %v4537 = vunpack.c.l.b16 %v1316
        %v4538 = vunpack.c.h.b16 %v1316
        %v4539 = vunpack.c.l.b16 %v1317
        %v4540 = vunpack.c.h.b16 %v1317
        %v4541 = vunpack.c.l.b16 %v1318
        %v4542 = vunpack.c.h.b16 %v1318
        %v4543 = vunpack.c.l.b16 %v1319
        %v4544 = vunpack.c.h.b16 %v1319
        %v4545 = vunpack.c.l.b16 %v1320
        %v4546 = vunpack.c.h.b16 %v1320
        %v4547 = vunpack.c.l.b16 %v1321
        %v4548 = vunpack.c.h.b16 %v1321
        %v4549 = vunpack.c.l.b16 %v1322
        %v4550 = vunpack.c.h.b16 %v1322
        %v4551 = vunpack.c.l.b16 %v1323
        %v4552 = vunpack.c.h.b16 %v1323
        %v4553 = vunpack.c.l.b16 %v1324
        %v4554 = vunpack.c.h.b16 %v1324
        %v4555 = vunpack.c.l.b16 %v1325
        %v4556 = vunpack.c.h.b16 %v1325
        %v4557 = vunpack.c.l.b16 %v1326
        %v4558 = vunpack.c.h.b16 %v1326
        %v4559 = vunpack.c.l.b16 %v1327
        %v4560 = vunpack.c.h.b16 %v1327
        %v4561 = vunpack.c.l.b16 %v1328
        %v4562 = vunpack.c.h.b16 %v1328
        %v4563 = vunpack.c.l.b16 %v1329
        %v4564 = vunpack.c.h.b16 %v1329
        %v4565 = vunpack.c.l.b16 %v1330
        %v4566 = vunpack.c.h.b16 %v1330
        %v4567 = vunpack.c.l.b16 %v1331
        %v4568 = vunpack.c.h.b16 %v1331
        %v4569 = vunpack.c.l.b16 %v1332
        %v4570 = vunpack.c.h.b16 %v1332
        %v4571 = vunpack.c.l.b16 %v1333
        %v4572 = vunpack.c.h.b16 %v1333
        %v4573 = vunpack.c.l.b16 %v1334
        %v4574 = vunpack.c.h.b16 %v1334
        %v4575 = vunpack.c.l.b16 %v1335
        %v4576 = vunpack.c.h.b16 %v1335
        %v4577 = vunpack.c.l.b16 %v1336
        %v4578 = vunpack.c.h.b16 %v1336
        %v4579 = vunpack.c.l.b16 %v1337
        %v4580 = vunpack.c.h.b16 %v1337
        %v4581 = vunpack.c.l.b16 %v1338
        %v4582 = vunpack.c.h.b16 %v1338
        %v4583 = vunpack.c.l.b16 %v1339
        %v4584 = vunpack.c.h.b16 %v1339
        %v4585 = vunpack.c.l.b16 %v1340
        %v4586 = vunpack.c.h.b16 %v1340
        %v4587 = vunpack.c.l.b16 %v1341
        %v4588 = vunpack.c.h.b16 %v1341
        %v4589 = vunpack.c.l.b16 %v1342
        %v4590 = vunpack.c.h.b16 %v1342
        %v4591 = vunpack.c.l.b16 %v1343
        %v4592 = vunpack.c.h.b16 %v1343
        %v4593 = vunpack.c.l.b16 %v1344
        %v4594 = vunpack.c.h.b16 %v1344
        %v4595 = vunpack.c.l.b16 %v1345
        %v4596 = vunpack.c.h.b16 %v1345
        %v4597 = vunpack.c.l.b16 %v1346
        %v4598 = vunpack.c.h.b16 %v1346
        %v4599 = vunpack.c.l.b16 %v1347
        %v4600 = vunpack.c.h.b16 %v1347
        %v4601 = vunpack.c.l.b16 %v1348
        %v4602 = vunpack.c.h.b16 %v1348
        %v4603 = vunpack.c.l.b16 %v1349
        %v4604 = vunpack.c.h.b16 %v1349
        %v4605 = vunpack.c.l.b16 %v1350
        %v4606 = vunpack.c.h.b16 %v1350
        %v4607 = vunpack.c.l.b16 %v1351
        %v4608 = vunpack.c.h.b16 %v1351
        %v4609 = vunpack.c.l.b16 %v1352
        %v4610 = vunpack.c.h.b16 %v1352
        %v4611 = vunpack.c.l.b16 %v1353
        %v4612 = vunpack.c.h.b16 %v1353
        %v4613 = vunpack.c.l.b16 %v1354
        %v4614 = vunpack.c.h.b16 %v1354
        %v4615 = vunpack.c.l.b16 %v1355
        %v4616 = vunpack.c.h.b16 %v1355
        %v4617 = vunpack.c.l.b16 %v1356
        %v4618 = vunpack.c.h.b16 %v1356
        %v4619 = vunpack.c.l.b16 %v1357
        %v4620 = vunpack.c.h.b16 %v1357
        %v4621 = vunpack.c.l.b16 %v1358
        %v4622 = vunpack.c.h.b16 %v1358
        %v4623 = vunpack.c.l.b16 %v1359
        %v4624 = vunpack.c.h.b16 %v1359
        %v4625 = vunpack.c.l.b16 %v1360
        %v4626 = vunpack.c.h.b16 %v1360
        %v4627 = vunpack.c.l.b16 %v1361
        %v4628 = vunpack.c.h.b16 %v1361
        %v4629 = vunpack.c.l.b16 %v1362
        %v4630 = vunpack.c.h.b16 %v1362
        %v4631 = vunpack.c.l.b16 %v1363
        %v4632 = vunpack.c.h.b16 %v1363
        %v4633 = vunpack.c.l.b16 %v1364
        %v4634 = vunpack.c.h.b16 %v1364
        %v4635 = vunpack.c.l.b16 %v1365
        %v4636 = vunpack.c.h.b16 %v1365
        %v4637 = vunpack.c.l.b16 %v1366
        %v4638 = vunpack.c.h.b16 %v1366
        %v4639 = vunpack.c.l.b16 %v1367
        %v4640 = vunpack.c.h.b16 %v1367
        %v4641 = vunpack.c.l.b16 %v1368
        %v4642 = vunpack.c.h.b16 %v1368
        %v4643 = vunpack.c.l.b16 %v1369
        %v4644 = vunpack.c.h.b16 %v1369
        %v4645 = vunpack.c.l.b16 %v1370
        %v4646 = vunpack.c.h.b16 %v1370
        %v4647 = vunpack.c.l.b16 %v1371
        %v4648 = vunpack.c.h.b16 %v1371
        %v4649 = vunpack.c.l.b16 %v1372
        %v4650 = vunpack.c.h.b16 %v1372
        %v4651 = vunpack.c.l.b16 %v1373
        %v4652 = vunpack.c.h.b16 %v1373
        %v4653 = vunpack.c.l.b16 %v1374
        %v4654 = vunpack.c.h.b16 %v1374
        %v4655 = vunpack.c.l.b16 %v1375
        %v4656 = vunpack.c.h.b16 %v1375
        %v4657 = vunpack.c.l.b16 %v1376
        %v4658 = vunpack.c.h.b16 %v1376
        %v4659 = vunpack.c.l.b16 %v1377
        %v4660 = vunpack.c.h.b16 %v1377
        %v4661 = vunpack.c.l.b16 %v1378
        %v4662 = vunpack.c.h.b16 %v1378
        %v4663 = vunpack.c.l.b16 %v1379
        %v4664 = vunpack.c.h.b16 %v1379
        %v4665 = vunpack.c.l.b16 %v1380
        %v4666 = vunpack.c.h.b16 %v1380
        %v4667 = vunpack.c.l.b16 %v1381
        %v4668 = vunpack.c.h.b16 %v1381
        %v4669 = vunpack.c.l.b16 %v1382
        %v4670 = vunpack.c.h.b16 %v1382
        %v4671 = vunpack.c.l.b16 %v1383
        %v4672 = vunpack.c.h.b16 %v1383
        %v4673 = vunpack.c.l.b16 %v1384
        %v4674 = vunpack.c.h.b16 %v1384
        %v4675 = vunpack.c.l.b16 %v1385
        %v4676 = vunpack.c.h.b16 %v1385
        %v4677 = vunpack.c.l.b16 %v1386
        %v4678 = vunpack.c.h.b16 %v1386
        %v4679 = vunpack.c.l.b16 %v1387
        %v4680 = vunpack.c.h.b16 %v1387
        %v4681 = vunpack.c.l.b16 %v1388
        %v4682 = vunpack.c.h.b16 %v1388
        %v4683 = vunpack.c.l.b16 %v1389
        %v4684 = vunpack.c.h.b16 %v1389
        %v4685 = vunpack.c.l.b16 %v1390
        %v4686 = vunpack.c.h.b16 %v1390
        %v4687 = vunpack.c.l.b16 %v1391
        %v4688 = vunpack.c.h.b16 %v1391
        %v4689 = vunpack.c.l.b16 %v1392
        %v4690 = vunpack.c.h.b16 %v1392
        %v4691 = vunpack.c.l.b16 %v1393
        %v4692 = vunpack.c.h.b16 %v1393
        %v4693 = vunpack.c.l.b16 %v1394
        %v4694 = vunpack.c.h.b16 %v1394
        %v4695 = vunpack.c.l.b16 %v1395
        %v4696 = vunpack.c.h.b16 %v1395
        %v4697 = vunpack.c.l.b16 %v1396
        %v4698 = vunpack.c.h.b16 %v1396
        %v4699 = vunpack.c.l.b16 %v1397
        %v4700 = vunpack.c.h.b16 %v1397
        %v4701 = vunpack.c.l.b16 %v1398
        %v4702 = vunpack.c.h.b16 %v1398
        %v4703 = vunpack.c.l.b16 %v1399
        %v4704 = vunpack.c.h.b16 %v1399
        %v4705 = vunpack.c.l.b16 %v1400
        %v4706 = vunpack.c.h.b16 %v1400
        %v4707 = vunpack.c.l.b16 %v1401
        %v4708 = vunpack.c.h.b16 %v1401
        %v4709 = vunpack.c.l.b16 %v1402
        %v4710 = vunpack.c.h.b16 %v1402
        %v4711 = vunpack.c.l.b16 %v1403
        %v4712 = vunpack.c.h.b16 %v1403
        %v4713 = vunpack.c.l.b16 %v1404
        %v4714 = vunpack.c.h.b16 %v1404
        %v4715 = vunpack.c.l.b16 %v1405
        %v4716 = vunpack.c.h.b16 %v1405
        %v4717 = vunpack.c.l.b16 %v1406
        %v4718 = vunpack.c.h.b16 %v1406
        %v4719 = vunpack.c.l.b16 %v1407
        %v4720 = vunpack.c.h.b16 %v1407
        %v4721 = vunpack.c.l.b16 %v1408
        %v4722 = vunpack.c.h.b16 %v1408
        %v4723 = vunpack.c.l.b16 %v1409
        %v4724 = vunpack.c.h.b16 %v1409
        %v4725 = vunpack.c.l.b16 %v1410
        %v4726 = vunpack.c.h.b16 %v1410
        %v4727 = vunpack.c.l.b16 %v1411
        %v4728 = vunpack.c.h.b16 %v1411
        %v4729 = vunpack.c.l.b16 %v1412
        %v4730 = vunpack.c.h.b16 %v1412
        %v4731 = vunpack.c.l.b16 %v1413
        %v4732 = vunpack.c.h.b16 %v1413
        %v4733 = vunpack.c.l.b16 %v1414
        %v4734 = vunpack.c.h.b16 %v1414
        %v4735 = vunpack.c.l.b16 %v1415
        %v4736 = vunpack.c.h.b16 %v1415
        %v4737 = vunpack.c.l.b16 %v1416
        %v4738 = vunpack.c.h.b16 %v1416
        %v4739 = vunpack.c.l.b16 %v1417
        %v4740 = vunpack.c.h.b16 %v1417
        %v4741 = vunpack.c.l.b16 %v1418
        %v4742 = vunpack.c.h.b16 %v1418
        %v4743 = vunpack.c.l.b16 %v1419
        %v4744 = vunpack.c.h.b16 %v1419
        %v4745 = vunpack.c.l.b16 %v1420
        %v4746 = vunpack.c.h.b16 %v1420
        %v4747 = vunpack.c.l.b16 %v1421
        %v4748 = vunpack.c.h.b16 %v1421
        %v4749 = vunpack.c.l.b16 %v1422
        %v4750 = vunpack.c.h.b16 %v1422
        %v4751 = vunpack.c.l.b16 %v1423
        %v4752 = vunpack.c.h.b16 %v1423
        %v4753 = vunpack.c.l.b16 %v1424
        %v4754 = vunpack.c.h.b16 %v1424
        %v4755 = vunpack.c.l.b16 %v1425
        %v4756 = vunpack.c.h.b16 %v1425
        %v4757 = vunpack.c.l.b16 %v1426
        %v4758 = vunpack.c.h.b16 %v1426
        %v4759 = vunpack.c.l.b16 %v1427
        %v4760 = vunpack.c.h.b16 %v1427
        %v4761 = vunpack.c.l.b16 %v1428
        %v4762 = vunpack.c.h.b16 %v1428
        %v4763 = vunpack.c.l.b16 %v1429
        %v4764 = vunpack.c.h.b16 %v1429
        %v4765 = vunpack.c.l.b16 %v1430
        %v4766 = vunpack.c.h.b16 %v1430
        %v4767 = vunpack.c.l.b16 %v1431
        %v4768 = vunpack.c.h.b16 %v1431
        %v4769 = vunpack.c.l.b16 %v1432
        %v4770 = vunpack.c.h.b16 %v1432
        %v4771 = vunpack.c.l.b16 %v1433
        %v4772 = vunpack.c.h.b16 %v1433
        %v4773 = vunpack.c.l.b16 %v1434
        %v4774 = vunpack.c.h.b16 %v1434
        %v4775 = vunpack.c.l.b16 %v1435
        %v4776 = vunpack.c.h.b16 %v1435
        %v4777 = vunpack.c.l.b16 %v1436
        %v4778 = vunpack.c.h.b16 %v1436
        %v4779 = vunpack.c.l.b16 %v1437
        %v4780 = vunpack.c.h.b16 %v1437
        %v4781 = vunpack.c.l.b16 %v1438
        %v4782 = vunpack.c.h.b16 %v1438
        %v4783 = vunpack.c.l.b16 %v1439
        %v4784 = vunpack.c.h.b16 %v1439
        %v4785 = vunpack.c.l.b16 %v1440
        %v4786 = vunpack.c.h.b16 %v1440
        %v4787 = vunpack.c.l.b16 %v1441
        %v4788 = vunpack.c.h.b16 %v1441
        %v4789 = vunpack.c.l.b16 %v1442
        %v4790 = vunpack.c.h.b16 %v1442
        %v4791 = vunpack.c.l.b16 %v1443
        %v4792 = vunpack.c.h.b16 %v1443
        %v4793 = vunpack.c.l.b16 %v1444
        %v4794 = vunpack.c.h.b16 %v1444
        %v4795 = vunpack.c.l.b16 %v1445
        %v4796 = vunpack.c.h.b16 %v1445
        %v4797 = vunpack.c.l.b16 %v1446
        %v4798 = vunpack.c.h.b16 %v1446
        %v4799 = vunpack.c.l.b16 %v1447
        %v4800 = vunpack.c.h.b16 %v1447
        %v4801 = vunpack.c.l.b16 %v1448
        %v4802 = vunpack.c.h.b16 %v1448
        %v4803 = vunpack.c.l.b16 %v1449
        %v4804 = vunpack.c.h.b16 %v1449
        %v4805 = vunpack.c.l.b16 %v1450
        %v4806 = vunpack.c.h.b16 %v1450
        %v4807 = vunpack.c.l.b16 %v1451
        %v4808 = vunpack.c.h.b16 %v1451
        %v4809 = vunpack.c.l.b16 %v1452
        %v4810 = vunpack.c.h.b16 %v1452
        %v4811 = vunpack.c.l.b16 %v1453
        %v4812 = vunpack.c.h.b16 %v1453
        %v4813 = vunpack.c.l.b16 %v1454
        %v4814 = vunpack.c.h.b16 %v1454
        %v4815 = vunpack.c.l.b16 %v1455
        %v4816 = vunpack.c.h.b16 %v1455
        %v4817 = vunpack.c.l.b16 %v1456
        %v4818 = vunpack.c.h.b16 %v1456
        %v4819 = vunpack.c.l.b16 %v1457
        %v4820 = vunpack.c.h.b16 %v1457
        %v4821 = vunpack.c.l.b16 %v1458
        %v4822 = vunpack.c.h.b16 %v1458
        %v4823 = vunpack.c.l.b16 %v1459
        %v4824 = vunpack.c.h.b16 %v1459
        %v4825 = vunpack.c.l.b16 %v1460
        %v4826 = vunpack.c.h.b16 %v1460
        %v4827 = vunpack.c.l.b16 %v1461
        %v4828 = vunpack.c.h.b16 %v1461
        %v4829 = vunpack.c.l.b16 %v1462
        %v4830 = vunpack.c.h.b16 %v1462
        %v4831 = vunpack.c.l.b16 %v1463
        %v4832 = vunpack.c.h.b16 %v1463
        %v4833 = vunpack.c.l.b16 %v1464
        %v4834 = vunpack.c.h.b16 %v1464
        %v4835 = vunpack.c.l.b16 %v1465
        %v4836 = vunpack.c.h.b16 %v1465
        %v4837 = vunpack.c.l.b16 %v1466
        %v4838 = vunpack.c.h.b16 %v1466
        %v4839 = vunpack.c.l.b16 %v1467
        %v4840 = vunpack.c.h.b16 %v1467
        %v4841 = vunpack.c.l.b16 %v1468
        %v4842 = vunpack.c.h.b16 %v1468
        %v4843 = vunpack.c.l.b16 %v1469
        %v4844 = vunpack.c.h.b16 %v1469
        %v4845 = vunpack.c.l.b16 %v1470
        %v4846 = vunpack.c.h.b16 %v1470
        %v4847 = vunpack.c.l.b16 %v1471
        %v4848 = vunpack.c.h.b16 %v1471
        %v4849 = vunpack.c.l.b16 %v1472
        %v4850 = vunpack.c.h.b16 %v1472
        %v4851 = vunpack.c.l.b16 %v1473
        %v4852 = vunpack.c.h.b16 %v1473
        %v4853 = vunpack.c.l.b16 %v1474
        %v4854 = vunpack.c.h.b16 %v1474
        %v4855 = vunpack.c.l.b16 %v1475
        %v4856 = vunpack.c.h.b16 %v1475
        %v4857 = vunpack.c.l.b16 %v1476
        %v4858 = vunpack.c.h.b16 %v1476
        %v4859 = vunpack.c.l.b16 %v1477
        %v4860 = vunpack.c.h.b16 %v1477
        %v4861 = vunpack.c.l.b16 %v1478
        %v4862 = vunpack.c.h.b16 %v1478
        %v4863 = vunpack.c.l.b16 %v1479
        %v4864 = vunpack.c.h.b16 %v1479
        %v4865 = vunpack.c.l.b16 %v1480
        %v4866 = vunpack.c.h.b16 %v1480
        %v4867 = vunpack.c.l.b16 %v1481
        %v4868 = vunpack.c.h.b16 %v1481
        %v4869 = vunpack.c.l.b16 %v1482
        %v4870 = vunpack.c.h.b16 %v1482
        %v4871 = vunpack.c.l.b16 %v1483
        %v4872 = vunpack.c.h.b16 %v1483
        %v4873 = vunpack.c.l.b16 %v1484
        %v4874 = vunpack.c.h.b16 %v1484
        %v4875 = vunpack.c.l.b16 %v1485
        %v4876 = vunpack.c.h.b16 %v1485
        %v4877 = vunpack.c.l.b16 %v1486
        %v4878 = vunpack.c.h.b16 %v1486
        %v4879 = vpack.c.b16 %v2833, %v2831
        %v4880 = vpack.c.b16 %v2834, %v2832
        %v4881 = vpack.c.b16 %v2837, %v2835
        %v4882 = vpack.c.b16 %v2838, %v2836
        %v4883 = vpack.c.b16 %v2841, %v2839
        %v4884 = vpack.c.b16 %v2842, %v2840
        %v4885 = vpack.c.b16 %v2845, %v2843
        %v4886 = vpack.c.b16 %v2846, %v2844
        %v4887 = vpack.c.b16 %v2849, %v2847
        %v4888 = vpack.c.b16 %v2850, %v2848
        %v4889 = vpack.c.b16 %v2853, %v2851
        %v4890 = vpack.c.b16 %v2854, %v2852
        %v4891 = vpack.c.b16 %v2857, %v2855
        %v4892 = vpack.c.b16 %v2858, %v2856
        %v4893 = vpack.c.b16 %v2861, %v2859
        %v4894 = vpack.c.b16 %v2862, %v2860
        %v4895 = vpack.c.b16 %v2865, %v2863
        %v4896 = vpack.c.b16 %v2866, %v2864
        %v4897 = vpack.c.b16 %v2869, %v2867
        %v4898 = vpack.c.b16 %v2870, %v2868
        %v4899 = vpack.c.b16 %v2873, %v2871
        %v4900 = vpack.c.b16 %v2874, %v2872
        %v4901 = vpack.c.b16 %v2877, %v2875
        %v4902 = vpack.c.b16 %v2878, %v2876
        %v4903 = vpack.c.b16 %v2881, %v2879
        %v4904 = vpack.c.b16 %v2882, %v2880
        %v4905 = vpack.c.b16 %v2885, %v2883
        %v4906 = vpack.c.b16 %v2886, %v2884
        %v4907 = vpack.c.b16 %v2889, %v2887
        %v4908 = vpack.c.b16 %v2890, %v2888
        %v4909 = vpack.c.b16 %v2893, %v2891
        %v4910 = vpack.c.b16 %v2894, %v2892
        %v4911 = vpack.c.b16 %v2897, %v2895
        %v4912 = vpack.c.b16 %v2898, %v2896
        %v4913 = vpack.c.b16 %v2901, %v2899
        %v4914 = vpack.c.b16 %v2902, %v2900
        %v4915 = vpack.c.b16 %v2905, %v2903
        %v4916 = vpack.c.b16 %v2906, %v2904
        %v4917 = vpack.c.b16 %v2909, %v2907
        %v4918 = vpack.c.b16 %v2910, %v2908
        %v4919 = vpack.c.b16 %v2913, %v2911
        %v4920 = vpack.c.b16 %v2914, %v2912
        %v4921 = vpack.c.b16 %v2917, %v2915
        %v4922 = vpack.c.b16 %v2918, %v2916
        %v4923 = vpack.c.b16 %v2921, %v2919
        %v4924 = vpack.c.b16 %v2922, %v2920
        %v4925 = vpack.c.b16 %v2925, %v2923
        %v4926 = vpack.c.b16 %v2926, %v2924
        %v4927 = vpack.c.b16 %v2929, %v2927
        %v4928 = vpack.c.b16 %v2930, %v2928
        %v4929 = vpack.c.b16 %v2933, %v2931
        %v4930 = vpack.c.b16 %v2934, %v2932
        %v4931 = vpack.c.b16 %v2937, %v2935
        %v4932 = vpack.c.b16 %v2938, %v2936
        %v4933 = vpack.c.b16 %v2941, %v2939
        %v4934 = vpack.c.b16 %v2942, %v2940
        %v4935 = vpack.c.b16 %v2945, %v2943
        %v4936 = vpack.c.b16 %v2946, %v2944
        %v4937 = vpack.c.b16 %v2949, %v2947
        %v4938 = vpack.c.b16 %v2950, %v2948
        %v4939 = vpack.c.b16 %v2953, %v2951
        %v4940 = vpack.c.b16 %v2954, %v2952
        %v4941 = vpack.c.b16 %v2957, %v2955
        %v4942 = vpack.c.b16 %v2958, %v2956
        %v4943 = vpack.c.b16 %v2961, %v2959
        %v4944 = vpack.c.b16 %v2962, %v2960
        %v4945 = vpack.c.b16 %v2965, %v2963
        %v4946 = vpack.c.b16 %v2966, %v2964
        %v4947 = vpack.c.b16 %v2969, %v2967
        %v4948 = vpack.c.b16 %v2970, %v2968
        %v4949 = vpack.c.b16 %v2973, %v2971
        %v4950 = vpack.c.b16 %v2974, %v2972
        %v4951 = vpack.c.b16 %v2977, %v2975
        %v4952 = vpack.c.b16 %v2978, %v2976
        %v4953 = vpack.c.b16 %v2981, %v2979
        %v4954 = vpack.c.b16 %v2982, %v2980
        %v4955 = vpack.c.b16 %v2985, %v2983
        %v4956 = vpack.c.b16 %v2986, %v2984
        %v4957 = vpack.c.b16 %v2989, %v2987
        %v4958 = vpack.c.b16 %v2990, %v2988
        %v4959 = vpack.c.b16 %v2993, %v2991
        %v4960 = vpack.c.b16 %v2994, %v2992
        %v4961 = vpack.c.b16 %v2997, %v2995
        %v4962 = vpack.c.b16 %v2998, %v2996
        %v4963 = vpack.c.b16 %v3001, %v2999
        %v4964 = vpack.c.b16 %v3002, %v3000
        %v4965 = vpack.c.b16 %v3005, %v3003
        %v4966 = vpack.c.b16 %v3006, %v3004
        %v4967 = vpack.c.b16 %v3009, %v3007
        %v4968 = vpack.c.b16 %v3010, %v3008
        %v4969 = vpack.c.b16 %v3013, %v3011
        %v4970 = vpack.c.b16 %v3014, %v3012
        %v4971 = vpack.c.b16 %v3017, %v3015
        %v4972 = vpack.c.b16 %v3018, %v3016
        %v4973 = vpack.c.b16 %v3021, %v3019
        %v4974 = vpack.c.b16 %v3022, %v3020
        %v4975 = vpack.c.b16 %v3025, %v3023
        %v4976 = vpack.c.b16 %v3026, %v3024
        %v4977 = vpack.c.b16 %v3029, %v3027
        %v4978 = vpack.c.b16 %v3030, %v3028
        %v4979 = vpack.c.b16 %v3033, %v3031
        %v4980 = vpack.c.b16 %v3034, %v3032
        %v4981 = vpack.c.b16 %v3037, %v3035
        %v4982 = vpack.c.b16 %v3038, %v3036
        %v4983 = vpack.c.b16 %v3041, %v3039
        %v4984 = vpack.c.b16 %v3042, %v3040
        %v4985 = vpack.c.b16 %v3045, %v3043
        %v4986 = vpack.c.b16 %v3046, %v3044
        %v4987 = vpack.c.b16 %v3049, %v3047
        %v4988 = vpack.c.b16 %v3050, %v3048
        %v4989 = vpack.c.b16 %v3053, %v3051
        %v4990 = vpack.c.b16 %v3054, %v3052
        %v4991 = vpack.c.b16 %v3057, %v3055
        %v4992 = vpack.c.b16 %v3058, %v3056
        %v4993 = vpack.c.b16 %v3061, %v3059
        %v4994 = vpack.c.b16 %v3062, %v3060
        %v4995 = vpack.c.b16 %v3065, %v3063
        %v4996 = vpack.c.b16 %v3066, %v3064
        %v4997 = vpack.c.b16 %v3069, %v3067
        %v4998 = vpack.c.b16 %v3070, %v3068
        %v4999 = vpack.c.b16 %v3073, %v3071
        %v5000 = vpack.c.b16 %v3074, %v3072
        %v5001 = vpack.c.b16 %v3077, %v3075
        %v5002 = vpack.c.b16 %v3078, %v3076
        %v5003 = vpack.c.b16 %v3081, %v3079
        %v5004 = vpack.c.b16 %v3082, %v3080
        %v5005 = vpack.c.b16 %v3085, %v3083
        %v5006 = vpack.c.b16 %v3086, %v3084
        %v5007 = vpack.c.b16 %v3089, %v3087
        %v5008 = vpack.c.b16 %v3090, %v3088
        %v5009 = vpack.c.b16 %v3093, %v3091
        %v5010 = vpack.c.b16 %v3094, %v3092
        %v5011 = vpack.c.b16 %v3097, %v3095
        %v5012 = vpack.c.b16 %v3098, %v3096
        %v5013 = vpack.c.b16 %v3101, %v3099
        %v5014 = vpack.c.b16 %v3102, %v3100
        %v5015 = vpack.c.b16 %v3105, %v3103
        %v5016 = vpack.c.b16 %v3106, %v3104
        %v5017 = vpack.c.b16 %v3109, %v3107
        %v5018 = vpack.c.b16 %v3110, %v3108
        %v5019 = vpack.c.b16 %v3113, %v3111
        %v5020 = vpack.c.b16 %v3114, %v3112
        %v5021 = vpack.c.b16 %v3117, %v3115
        %v5022 = vpack.c.b16 %v3118, %v3116
        %v5023 = vpack.c.b16 %v3121, %v3119
        %v5024 = vpack.c.b16 %v3122, %v3120
        %v5025 = vpack.c.b16 %v3125, %v3123
        %v5026 = vpack.c.b16 %v3126, %v3124
        %v5027 = vpack.c.b16 %v3129, %v3127
        %v5028 = vpack.c.b16 %v3130, %v3128
        %v5029 = vpack.c.b16 %v3133, %v3131
        %v5030 = vpack.c.b16 %v3134, %v3132
        %v5031 = vpack.c.b16 %v3137, %v3135
        %v5032 = vpack.c.b16 %v3138, %v3136
        %v5033 = vpack.c.b16 %v3141, %v3139
        %v5034 = vpack.c.b16 %v3142, %v3140
        %v5035 = vpack.c.b16 %v3145, %v3143
        %v5036 = vpack.c.b16 %v3146, %v3144
        %v5037 = vpack.c.b16 %v3149, %v3147
        %v5038 = vpack.c.b16 %v3150, %v3148
        %v5039 = vpack.c.b16 %v3153, %v3151
        %v5040 = vpack.c.b16 %v3154, %v3152
        %v5041 = vpack.c.b16 %v3157, %v3155
        %v5042 = vpack.c.b16 %v3158, %v3156
        %v5043 = vpack.c.b16 %v3161, %v3159
        %v5044 = vpack.c.b16 %v3162, %v3160
        %v5045 = vpack.c.b16 %v3165, %v3163
        %v5046 = vpack.c.b16 %v3166, %v3164
        %v5047 = vpack.c.b16 %v3169, %v3167
        %v5048 = vpack.c.b16 %v3170, %v3168
        %v5049 = vpack.c.b16 %v3173, %v3171
        %v5050 = vpack.c.b16 %v3174, %v3172
        %v5051 = vpack.c.b16 %v3177, %v3175
        %v5052 = vpack.c.b16 %v3178, %v3176
        %v5053 = vpack.c.b16 %v3181, %v3179
        %v5054 = vpack.c.b16 %v3182, %v3180
        %v5055 = vpack.c.b16 %v3185, %v3183
        %v5056 = vpack.c.b16 %v3186, %v3184
        %v5057 = vpack.c.b16 %v3189, %v3187
        %v5058 = vpack.c.b16 %v3190, %v3188
        %v5059 = vpack.c.b16 %v3193, %v3191
        %v5060 = vpack.c.b16 %v3194, %v3192
        %v5061 = vpack.c.b16 %v3197, %v3195
        %v5062 = vpack.c.b16 %v3198, %v3196
        %v5063 = vpack.c.b16 %v3201, %v3199
        %v5064 = vpack.c.b16 %v3202, %v3200
        %v5065 = vpack.c.b16 %v3205, %v3203
        %v5066 = vpack.c.b16 %v3206, %v3204
        %v5067 = vpack.c.b16 %v3209, %v3207
        %v5068 = vpack.c.b16 %v3210, %v3208
        %v5069 = vpack.c.b16 %v3213, %v3211
        %v5070 = vpack.c.b16 %v3214, %v3212
        %v5071 = vpack.c.b16 %v3217, %v3215
        %v5072 = vpack.c.b16 %v3218, %v3216
        %v5073 = vpack.c.b16 %v3221, %v3219
        %v5074 = vpack.c.b16 %v3222, %v3220
        %v5075 = vpack.c.b16 %v3225, %v3223
        %v5076 = vpack.c.b16 %v3226, %v3224
        %v5077 = vpack.c.b16 %v3229, %v3227
        %v5078 = vpack.c.b16 %v3230, %v3228
        %v5079 = vpack.c.b16 %v3233, %v3231
        %v5080 = vpack.c.b16 %v3234, %v3232
        %v5081 = vpack.c.b16 %v3237, %v3235
        %v5082 = vpack.c.b16 %v3238, %v3236
        %v5083 = vpack.c.b16 %v3241, %v3239
        %v5084 = vpack.c.b16 %v3242, %v3240
        %v5085 = vpack.c.b16 %v3245, %v3243
        %v5086 = vpack.c.b16 %v3246, %v3244
        %v5087 = vpack.c.b16 %v3249, %v3247
        %v5088 = vpack.c.b16 %v3250, %v3248
        %v5089 = vpack.c.b16 %v3253, %v3251
        %v5090 = vpack.c.b16 %v3254, %v3252
        %v5091 = vpack.c.b16 %v3257, %v3255
        %v5092 = vpack.c.b16 %v3258, %v3256
        %v5093 = vpack.c.b16 %v3261, %v3259
        %v5094 = vpack.c.b16 %v3262, %v3260
        %v5095 = vpack.c.b16 %v3265, %v3263
        %v5096 = vpack.c.b16 %v3266, %v3264
        %v5097 = vpack.c.b16 %v3269, %v3267
        %v5098 = vpack.c.b16 %v3270, %v3268
        %v5099 = vpack.c.b16 %v3273, %v3271
        %v5100 = vpack.c.b16 %v3274, %v3272
        %v5101 = vpack.c.b16 %v3277, %v3275
        %v5102 = vpack.c.b16 %v3278, %v3276
        %v5103 = vpack.c.b16 %v3281, %v3279
        %v5104 = vpack.c.b16 %v3282, %v3280
        %v5105 = vpack.c.b16 %v3285, %v3283
        %v5106 = vpack.c.b16 %v3286, %v3284
        %v5107 = vpack.c.b16 %v3289, %v3287
        %v5108 = vpack.c.b16 %v3290, %v3288
        %v5109 = vpack.c.b16 %v3293, %v3291
        %v5110 = vpack.c.b16 %v3294, %v3292
        %v5111 = vpack.c.b16 %v3297, %v3295
        %v5112 = vpack.c.b16 %v3298, %v3296
        %v5113 = vpack.c.b16 %v3301, %v3299
        %v5114 = vpack.c.b16 %v3302, %v3300
        %v5115 = vpack.c.b16 %v3305, %v3303
        %v5116 = vpack.c.b16 %v3306, %v3304
        %v5117 = vpack.c.b16 %v3309, %v3307
        %v5118 = vpack.c.b16 %v3310, %v3308
        %v5119 = vpack.c.b16 %v3313, %v3311
        %v5120 = vpack.c.b16 %v3314, %v3312
        %v5121 = vpack.c.b16 %v3317, %v3315
        %v5122 = vpack.c.b16 %v3318, %v3316
        %v5123 = vpack.c.b16 %v3321, %v3319
        %v5124 = vpack.c.b16 %v3322, %v3320
        %v5125 = vpack.c.b16 %v3325, %v3323
        %v5126 = vpack.c.b16 %v3326, %v3324
        %v5127 = vpack.c.b16 %v3329, %v3327
        %v5128 = vpack.c.b16 %v3330, %v3328
        %v5129 = vpack.c.b16 %v3333, %v3331
        %v5130 = vpack.c.b16 %v3334, %v3332
        %v5131 = vpack.c.b16 %v3337, %v3335
        %v5132 = vpack.c.b16 %v3338, %v3336
        %v5133 = vpack.c.b16 %v3341, %v3339
        %v5134 = vpack.c.b16 %v3342, %v3340
        %v5135 = vpack.c.b16 %v3345, %v3343
        %v5136 = vpack.c.b16 %v3346, %v3344
        %v5137 = vpack.c.b16 %v3349, %v3347
        %v5138 = vpack.c.b16 %v3350, %v3348
        %v5139 = vpack.c.b16 %v3353, %v3351
        %v5140 = vpack.c.b16 %v3354, %v3352
        %v5141 = vpack.c.b16 %v3357, %v3355
        %v5142 = vpack.c.b16 %v3358, %v3356
        %v5143 = vpack.c.b16 %v3361, %v3359
        %v5144 = vpack.c.b16 %v3362, %v3360
        %v5145 = vpack.c.b16 %v3365, %v3363
        %v5146 = vpack.c.b16 %v3366, %v3364
        %v5147 = vpack.c.b16 %v3369, %v3367
        %v5148 = vpack.c.b16 %v3370, %v3368
        %v5149 = vpack.c.b16 %v3373, %v3371
        %v5150 = vpack.c.b16 %v3374, %v3372
        %v5151 = vpack.c.b16 %v3377, %v3375
        %v5152 = vpack.c.b16 %v3378, %v3376
        %v5153 = vpack.c.b16 %v3381, %v3379
        %v5154 = vpack.c.b16 %v3382, %v3380
        %v5155 = vpack.c.b16 %v3385, %v3383
        %v5156 = vpack.c.b16 %v3386, %v3384
        %v5157 = vpack.c.b16 %v3389, %v3387
        %v5158 = vpack.c.b16 %v3390, %v3388
        %v5159 = vpack.c.b16 %v3393, %v3391
        %v5160 = vpack.c.b16 %v3394, %v3392
        %v5161 = vpack.c.b16 %v3397, %v3395
        %v5162 = vpack.c.b16 %v3398, %v3396
        %v5163 = vpack.c.b16 %v3401, %v3399
        %v5164 = vpack.c.b16 %v3402, %v3400
        %v5165 = vpack.c.b16 %v3405, %v3403
        %v5166 = vpack.c.b16 %v3406, %v3404
        %v5167 = vpack.c.b16 %v3409, %v3407
        %v5168 = vpack.c.b16 %v3410, %v3408
        %v5169 = vpack.c.b16 %v3413, %v3411
        %v5170 = vpack.c.b16 %v3414, %v3412
        %v5171 = vpack.c.b16 %v3417, %v3415
        %v5172 = vpack.c.b16 %v3418, %v3416
        %v5173 = vpack.c.b16 %v3421, %v3419
        %v5174 = vpack.c.b16 %v3422, %v3420
        %v5175 = vpack.c.b16 %v3425, %v3423
        %v5176 = vpack.c.b16 %v3426, %v3424
        %v5177 = vpack.c.b16 %v3429, %v3427
        %v5178 = vpack.c.b16 %v3430, %v3428
        %v5179 = vpack.c.b16 %v3433, %v3431
        %v5180 = vpack.c.b16 %v3434, %v3432
        %v5181 = vpack.c.b16 %v3437, %v3435
        %v5182 = vpack.c.b16 %v3438, %v3436
        %v5183 = vpack.c.b16 %v3441, %v3439
        %v5184 = vpack.c.b16 %v3442, %v3440
        %v5185 = vpack.c.b16 %v3445, %v3443
        %v5186 = vpack.c.b16 %v3446, %v3444
        %v5187 = vpack.c.b16 %v3449, %v3447
        %v5188 = vpack.c.b16 %v3450, %v3448
        %v5189 = vpack.c.b16 %v3453, %v3451
        %v5190 = vpack.c.b16 %v3454, %v3452
        %v5191 = vpack.c.b16 %v3457, %v3455
        %v5192 = vpack.c.b16 %v3458, %v3456
        %v5193 = vpack.c.b16 %v3461, %v3459
        %v5194 = vpack.c.b16 %v3462, %v3460
        %v5195 = vpack.c.b16 %v3465, %v3463
        %v5196 = vpack.c.b16 %v3466, %v3464
        %v5197 = vpack.c.b16 %v3469, %v3467
        %v5198 = vpack.c.b16 %v3470, %v3468
        %v5199 = vpack.c.b16 %v3473, %v3471
        %v5200 = vpack.c.b16 %v3474, %v3472
        %v5201 = vpack.c.b16 %v3477, %v3475
        %v5202 = vpack.c.b16 %v3478, %v3476
        %v5203 = vpack.c.b16 %v3481, %v3479
        %v5204 = vpack.c.b16 %v3482, %v3480
        %v5205 = vpack.c.b16 %v3485, %v3483
        %v5206 = vpack.c.b16 %v3486, %v3484
        %v5207 = vpack.c.b16 %v3489, %v3487
        %v5208 = vpack.c.b16 %v3490, %v3488
        %v5209 = vpack.c.b16 %v3493, %v3491
        %v5210 = vpack.c.b16 %v3494, %v3492
        %v5211 = vpack.c.b16 %v3497, %v3495
        %v5212 = vpack.c.b16 %v3498, %v3496
        %v5213 = vpack.c.b16 %v3501, %v3499
        %v5214 = vpack.c.b16 %v3502, %v3500
        %v5215 = vpack.c.b16 %v3505, %v3503
        %v5216 = vpack.c.b16 %v3506, %v3504
        %v5217 = vpack.c.b16 %v3509, %v3507
        %v5218 = vpack.c.b16 %v3510, %v3508
        %v5219 = vpack.c.b16 %v3513, %v3511
        %v5220 = vpack.c.b16 %v3514, %v3512
        %v5221 = vpack.c.b16 %v3517, %v3515
        %v5222 = vpack.c.b16 %v3518, %v3516
        %v5223 = vpack.c.b16 %v3521, %v3519
        %v5224 = vpack.c.b16 %v3522, %v3520
        %v5225 = vpack.c.b16 %v3525, %v3523
        %v5226 = vpack.c.b16 %v3526, %v3524
        %v5227 = vpack.c.b16 %v3529, %v3527
        %v5228 = vpack.c.b16 %v3530, %v3528
        %v5229 = vpack.c.b16 %v3533, %v3531
        %v5230 = vpack.c.b16 %v3534, %v3532
        %v5231 = vpack.c.b16 %v3537, %v3535
        %v5232 = vpack.c.b16 %v3538, %v3536
        %v5233 = vpack.c.b16 %v3541, %v3539
        %v5234 = vpack.c.b16 %v3542, %v3540
        %v5235 = vpack.c.b16 %v3545, %v3543
        %v5236 = vpack.c.b16 %v3546, %v3544
        %v5237 = vpack.c.b16 %v3549, %v3547
        %v5238 = vpack.c.b16 %v3550, %v3548
        %v5239 = vpack.c.b16 %v3553, %v3551
        %v5240 = vpack.c.b16 %v3554, %v3552
        %v5241 = vpack.c.b16 %v3557, %v3555
        %v5242 = vpack.c.b16 %v3558, %v3556
        %v5243 = vpack.c.b16 %v3561, %v3559
        %v5244 = vpack.c.b16 %v3562, %v3560
        %v5245 = vpack.c.b16 %v3565, %v3563
        %v5246 = vpack.c.b16 %v3566, %v3564
        %v5247 = vpack.c.b16 %v3569, %v3567
        %v5248 = vpack.c.b16 %v3570, %v3568
        %v5249 = vpack.c.b16 %v3573, %v3571
        %v5250 = vpack.c.b16 %v3574, %v3572
        %v5251 = vpack.c.b16 %v3577, %v3575
        %v5252 = vpack.c.b16 %v3578, %v3576
        %v5253 = vpack.c.b16 %v3581, %v3579
        %v5254 = vpack.c.b16 %v3582, %v3580
        %v5255 = vpack.c.b16 %v3585, %v3583
        %v5256 = vpack.c.b16 %v3586, %v3584
        %v5257 = vpack.c.b16 %v3589, %v3587
        %v5258 = vpack.c.b16 %v3590, %v3588
        %v5259 = vpack.c.b16 %v3593, %v3591
        %v5260 = vpack.c.b16 %v3594, %v3592
        %v5261 = vpack.c.b16 %v3597, %v3595
        %v5262 = vpack.c.b16 %v3598, %v3596
        %v5263 = vpack.c.b16 %v3601, %v3599
        %v5264 = vpack.c.b16 %v3602, %v3600
        %v5265 = vpack.c.b16 %v3605, %v3603
        %v5266 = vpack.c.b16 %v3606, %v3604
        %v5267 = vpack.c.b16 %v3609, %v3607
        %v5268 = vpack.c.b16 %v3610, %v3608
        %v5269 = vpack.c.b16 %v3613, %v3611
        %v5270 = vpack.c.b16 %v3614, %v3612
        %v5271 = vpack.c.b16 %v3617, %v3615
        %v5272 = vpack.c.b16 %v3618, %v3616
        %v5273 = vpack.c.b16 %v3621, %v3619
        %v5274 = vpack.c.b16 %v3622, %v3620
        %v5275 = vpack.c.b16 %v3625, %v3623
        %v5276 = vpack.c.b16 %v3626, %v3624
        %v5277 = vpack.c.b16 %v3629, %v3627
        %v5278 = vpack.c.b16 %v3630, %v3628
        %v5279 = vpack.c.b16 %v3633, %v3631
        %v5280 = vpack.c.b16 %v3634, %v3632
        %v5281 = vpack.c.b16 %v3637, %v3635
        %v5282 = vpack.c.b16 %v3638, %v3636
        %v5283 = vpack.c.b16 %v3641, %v3639
        %v5284 = vpack.c.b16 %v3642, %v3640
        %v5285 = vpack.c.b16 %v3645, %v3643
        %v5286 = vpack.c.b16 %v3646, %v3644
        %v5287 = vpack.c.b16 %v3649, %v3647
        %v5288 = vpack.c.b16 %v3650, %v3648
        %v5289 = vpack.c.b16 %v3653, %v3651
        %v5290 = vpack.c.b16 %v3654, %v3652
        %v5291 = vpack.c.b16 %v3657, %v3655
        %v5292 = vpack.c.b16 %v3658, %v3656
        %v5293 = vpack.c.b16 %v3661, %v3659
        %v5294 = vpack.c.b16 %v3662, %v3660
        %v5295 = vpack.c.b16 %v3665, %v3663
        %v5296 = vpack.c.b16 %v3666, %v3664
        %v5297 = vpack.c.b16 %v3669, %v3667
        %v5298 = vpack.c.b16 %v3670, %v3668
        %v5299 = vpack.c.b16 %v3673, %v3671
        %v5300 = vpack.c.b16 %v3674, %v3672
        %v5301 = vpack.c.b16 %v3677, %v3675
        %v5302 = vpack.c.b16 %v3678, %v3676
        %v5303 = vpack.c.b16 %v3681, %v3679
        %v5304 = vpack.c.b16 %v3682, %v3680
        %v5305 = vpack.c.b16 %v3685, %v3683
        %v5306 = vpack.c.b16 %v3686, %v3684
        %v5307 = vpack.c.b16 %v3689, %v3687
        %v5308 = vpack.c.b16 %v3690, %v3688
        %v5309 = vpack.c.b16 %v3693, %v3691
        %v5310 = vpack.c.b16 %v3694, %v3692
        %v5311 = vpack.c.b16 %v3697, %v3695
        %v5312 = vpack.c.b16 %v3698, %v3696
        %v5313 = vpack.c.b16 %v3701, %v3699
        %v5314 = vpack.c.b16 %v3702, %v3700
        %v5315 = vpack.c.b16 %v3705, %v3703
        %v5316 = vpack.c.b16 %v3706, %v3704
        %v5317 = vpack.c.b16 %v3709, %v3707
        %v5318 = vpack.c.b16 %v3710, %v3708
        %v5319 = vpack.c.b16 %v3713, %v3711
        %v5320 = vpack.c.b16 %v3714, %v3712
        %v5321 = vpack.c.b16 %v3717, %v3715
        %v5322 = vpack.c.b16 %v3718, %v3716
        %v5323 = vpack.c.b16 %v3721, %v3719
        %v5324 = vpack.c.b16 %v3722, %v3720
        %v5325 = vpack.c.b16 %v3725, %v3723
        %v5326 = vpack.c.b16 %v3726, %v3724
        %v5327 = vpack.c.b16 %v3729, %v3727
        %v5328 = vpack.c.b16 %v3730, %v3728
        %v5329 = vpack.c.b16 %v3733, %v3731
        %v5330 = vpack.c.b16 %v3734, %v3732
        %v5331 = vpack.c.b16 %v3737, %v3735
        %v5332 = vpack.c.b16 %v3738, %v3736
        %v5333 = vpack.c.b16 %v3741, %v3739
        %v5334 = vpack.c.b16 %v3742, %v3740
        %v5335 = vpack.c.b16 %v3745, %v3743
        %v5336 = vpack.c.b16 %v3746, %v3744
        %v5337 = vpack.c.b16 %v3749, %v3747
        %v5338 = vpack.c.b16 %v3750, %v3748
        %v5339 = vpack.c.b16 %v3753, %v3751
        %v5340 = vpack.c.b16 %v3754, %v3752
        %v5341 = vpack.c.b16 %v3757, %v3755
        %v5342 = vpack.c.b16 %v3758, %v3756
        %v5343 = vpack.c.b16 %v3761, %v3759
        %v5344 = vpack.c.b16 %v3762, %v3760
        %v5345 = vpack.c.b16 %v3765, %v3763
        %v5346 = vpack.c.b16 %v3766, %v3764
        %v5347 = vpack.c.b16 %v3769, %v3767
        %v5348 = vpack.c.b16 %v3770, %v3768
        %v5349 = vpack.c.b16 %v3773, %v3771
        %v5350 = vpack.c.b16 %v3774, %v3772
        %v5351 = vpack.c.b16 %v3777, %v3775
        %v5352 = vpack.c.b16 %v3778, %v3776
        %v5353 = vpack.c.b16 %v3781, %v3779
        %v5354 = vpack.c.b16 %v3782, %v3780
        %v5355 = vpack.c.b16 %v3785, %v3783
        %v5356 = vpack.c.b16 %v3786, %v3784
        %v5357 = vpack.c.b16 %v3789, %v3787
        %v5358 = vpack.c.b16 %v3790, %v3788
        %v5359 = vpack.c.b16 %v3793, %v3791
        %v5360 = vpack.c.b16 %v3794, %v3792
        %v5361 = vpack.c.b16 %v3797, %v3795
        %v5362 = vpack.c.b16 %v3798, %v3796
        %v5363 = vpack.c.b16 %v3801, %v3799
        %v5364 = vpack.c.b16 %v3802, %v3800
        %v5365 = vpack.c.b16 %v3805, %v3803
        %v5366 = vpack.c.b16 %v3806, %v3804
        %v5367 = vpack.c.b16 %v3809, %v3807
        %v5368 = vpack.c.b16 %v3810, %v3808
        %v5369 = vpack.c.b16 %v3813, %v3811
        %v5370 = vpack.c.b16 %v3814, %v3812
        %v5371 = vpack.c.b16 %v3817, %v3815
        %v5372 = vpack.c.b16 %v3818, %v3816
        %v5373 = vpack.c.b16 %v3821, %v3819
        %v5374 = vpack.c.b16 %v3822, %v3820
        %v5375 = vpack.c.b16 %v3825, %v3823
        %v5376 = vpack.c.b16 %v3826, %v3824
        %v5377 = vpack.c.b16 %v3829, %v3827
        %v5378 = vpack.c.b16 %v3830, %v3828
        %v5379 = vpack.c.b16 %v3833, %v3831
        %v5380 = vpack.c.b16 %v3834, %v3832
        %v5381 = vpack.c.b16 %v3837, %v3835
        %v5382 = vpack.c.b16 %v3838, %v3836
        %v5383 = vpack.c.b16 %v3841, %v3839
        %v5384 = vpack.c.b16 %v3842, %v3840
        %v5385 = vpack.c.b16 %v3845, %v3843
        %v5386 = vpack.c.b16 %v3846, %v3844
        %v5387 = vpack.c.b16 %v3849, %v3847
        %v5388 = vpack.c.b16 %v3850, %v3848
        %v5389 = vpack.c.b16 %v3853, %v3851
        %v5390 = vpack.c.b16 %v3854, %v3852
        %v5391 = vpack.c.b16 %v3857, %v3855
        %v5392 = vpack.c.b16 %v3858, %v3856
        %v5393 = vpack.c.b16 %v3861, %v3859
        %v5394 = vpack.c.b16 %v3862, %v3860
        %v5395 = vpack.c.b16 %v3865, %v3863
        %v5396 = vpack.c.b16 %v3866, %v3864
        %v5397 = vpack.c.b16 %v3869, %v3867
        %v5398 = vpack.c.b16 %v3870, %v3868
        %v5399 = vpack.c.b16 %v3873, %v3871
        %v5400 = vpack.c.b16 %v3874, %v3872
        %v5401 = vpack.c.b16 %v3877, %v3875
        %v5402 = vpack.c.b16 %v3878, %v3876
        %v5403 = vpack.c.b16 %v3881, %v3879
        %v5404 = vpack.c.b16 %v3882, %v3880
        %v5405 = vpack.c.b16 %v3885, %v3883
        %v5406 = vpack.c.b16 %v3886, %v3884
        %v5407 = vpack.c.b16 %v3889, %v3887
        %v5408 = vpack.c.b16 %v3890, %v3888
        %v5409 = vpack.c.b16 %v3893, %v3891
        %v5410 = vpack.c.b16 %v3894, %v3892
        %v5411 = vpack.c.b16 %v3897, %v3895
        %v5412 = vpack.c.b16 %v3898, %v3896
        %v5413 = vpack.c.b16 %v3901, %v3899
        %v5414 = vpack.c.b16 %v3902, %v3900
        %v5415 = vpack.c.b16 %v3905, %v3903
        %v5416 = vpack.c.b16 %v3906, %v3904
        %v5417 = vpack.c.b16 %v3909, %v3907
        %v5418 = vpack.c.b16 %v3910, %v3908
        %v5419 = vpack.c.b16 %v3913, %v3911
        %v5420 = vpack.c.b16 %v3914, %v3912
        %v5421 = vpack.c.b16 %v3917, %v3915
        %v5422 = vpack.c.b16 %v3918, %v3916
        %v5423 = vpack.c.b16 %v3921, %v3919
        %v5424 = vpack.c.b16 %v3922, %v3920
        %v5425 = vpack.c.b16 %v3925, %v3923
        %v5426 = vpack.c.b16 %v3926, %v3924
        %v5427 = vpack.c.b16 %v3929, %v3927
        %v5428 = vpack.c.b16 %v3930, %v3928
        %v5429 = vpack.c.b16 %v3933, %v3931
        %v5430 = vpack.c.b16 %v3934, %v3932
        %v5431 = vpack.c.b16 %v3937, %v3935
        %v5432 = vpack.c.b16 %v3938, %v3936
        %v5433 = vpack.c.b16 %v3941, %v3939
        %v5434 = vpack.c.b16 %v3942, %v3940
        %v5435 = vpack.c.b16 %v3945, %v3943
        %v5436 = vpack.c.b16 %v3946, %v3944
        %v5437 = vpack.c.b16 %v3949, %v3947
        %v5438 = vpack.c.b16 %v3950, %v3948
        %v5439 = vpack.c.b16 %v3953, %v3951
        %v5440 = vpack.c.b16 %v3954, %v3952
        %v5441 = vpack.c.b16 %v3957, %v3955
        %v5442 = vpack.c.b16 %v3958, %v3956
        %v5443 = vpack.c.b16 %v3961, %v3959
        %v5444 = vpack.c.b16 %v3962, %v3960
        %v5445 = vpack.c.b16 %v3965, %v3963
        %v5446 = vpack.c.b16 %v3966, %v3964
        %v5447 = vpack.c.b16 %v3969, %v3967
        %v5448 = vpack.c.b16 %v3970, %v3968
        %v5449 = vpack.c.b16 %v3973, %v3971
        %v5450 = vpack.c.b16 %v3974, %v3972
        %v5451 = vpack.c.b16 %v3977, %v3975
        %v5452 = vpack.c.b16 %v3978, %v3976
        %v5453 = vpack.c.b16 %v3981, %v3979
        %v5454 = vpack.c.b16 %v3982, %v3980
        %v5455 = vpack.c.b16 %v3985, %v3983
        %v5456 = vpack.c.b16 %v3986, %v3984
        %v5457 = vpack.c.b16 %v3989, %v3987
        %v5458 = vpack.c.b16 %v3990, %v3988
        %v5459 = vpack.c.b16 %v3993, %v3991
        %v5460 = vpack.c.b16 %v3994, %v3992
        %v5461 = vpack.c.b16 %v3997, %v3995
        %v5462 = vpack.c.b16 %v3998, %v3996
        %v5463 = vpack.c.b16 %v4001, %v3999
        %v5464 = vpack.c.b16 %v4002, %v4000
        %v5465 = vpack.c.b16 %v4005, %v4003
        %v5466 = vpack.c.b16 %v4006, %v4004
        %v5467 = vpack.c.b16 %v4009, %v4007
        %v5468 = vpack.c.b16 %v4010, %v4008
        %v5469 = vpack.c.b16 %v4013, %v4011
        %v5470 = vpack.c.b16 %v4014, %v4012
        %v5471 = vpack.c.b16 %v4017, %v4015
        %v5472 = vpack.c.b16 %v4018, %v4016
        %v5473 = vpack.c.b16 %v4021, %v4019
        %v5474 = vpack.c.b16 %v4022, %v4020
        %v5475 = vpack.c.b16 %v4025, %v4023
        %v5476 = vpack.c.b16 %v4026, %v4024
        %v5477 = vpack.c.b16 %v4029, %v4027
        %v5478 = vpack.c.b16 %v4030, %v4028
        %v5479 = vpack.c.b16 %v4033, %v4031
        %v5480 = vpack.c.b16 %v4034, %v4032
        %v5481 = vpack.c.b16 %v4037, %v4035
        %v5482 = vpack.c.b16 %v4038, %v4036
        %v5483 = vpack.c.b16 %v4041, %v4039
        %v5484 = vpack.c.b16 %v4042, %v4040
        %v5485 = vpack.c.b16 %v4045, %v4043
        %v5486 = vpack.c.b16 %v4046, %v4044
        %v5487 = vpack.c.b16 %v4049, %v4047
        %v5488 = vpack.c.b16 %v4050, %v4048
        %v5489 = vpack.c.b16 %v4053, %v4051
        %v5490 = vpack.c.b16 %v4054, %v4052
        %v5491 = vpack.c.b16 %v4057, %v4055
        %v5492 = vpack.c.b16 %v4058, %v4056
        %v5493 = vpack.c.b16 %v4061, %v4059
        %v5494 = vpack.c.b16 %v4062, %v4060
        %v5495 = vpack.c.b16 %v4065, %v4063
        %v5496 = vpack.c.b16 %v4066, %v4064
        %v5497 = vpack.c.b16 %v4069, %v4067
        %v5498 = vpack.c.b16 %v4070, %v4068
        %v5499 = vpack.c.b16 %v4073, %v4071
        %v5500 = vpack.c.b16 %v4074, %v4072
        %v5501 = vpack.c.b16 %v4077, %v4075
        %v5502 = vpack.c.b16 %v4078, %v4076
        %v5503 = vpack.c.b16 %v4081, %v4079
        %v5504 = vpack.c.b16 %v4082, %v4080
        %v5505 = vpack.c.b16 %v4085, %v4083
        %v5506 = vpack.c.b16 %v4086, %v4084
        %v5507 = vpack.c.b16 %v4089, %v4087
        %v5508 = vpack.c.b16 %v4090, %v4088
        %v5509 = vpack.c.b16 %v4093, %v4091
        %v5510 = vpack.c.b16 %v4094, %v4092
        %v5511 = vpack.c.b16 %v4097, %v4095
        %v5512 = vpack.c.b16 %v4098, %v4096
        %v5513 = vpack.c.b16 %v4101, %v4099
        %v5514 = vpack.c.b16 %v4102, %v4100
        %v5515 = vpack.c.b16 %v4105, %v4103
        %v5516 = vpack.c.b16 %v4106, %v4104
        %v5517 = vpack.c.b16 %v4109, %v4107
        %v5518 = vpack.c.b16 %v4110, %v4108
        %v5519 = vpack.c.b16 %v4113, %v4111
        %v5520 = vpack.c.b16 %v4114, %v4112
        %v5521 = vpack.c.b16 %v4117, %v4115
        %v5522 = vpack.c.b16 %v4118, %v4116
        %v5523 = vpack.c.b16 %v4121, %v4119
        %v5524 = vpack.c.b16 %v4122, %v4120
        %v5525 = vpack.c.b16 %v4125, %v4123
        %v5526 = vpack.c.b16 %v4126, %v4124
        %v5527 = vpack.c.b16 %v4129, %v4127
        %v5528 = vpack.c.b16 %v4130, %v4128
        %v5529 = vpack.c.b16 %v4133, %v4131
        %v5530 = vpack.c.b16 %v4134, %v4132
        %v5531 = vpack.c.b16 %v4137, %v4135
        %v5532 = vpack.c.b16 %v4138, %v4136
        %v5533 = vpack.c.b16 %v4141, %v4139
        %v5534 = vpack.c.b16 %v4142, %v4140
        %v5535 = vpack.c.b16 %v4145, %v4143
        %v5536 = vpack.c.b16 %v4146, %v4144
        %v5537 = vpack.c.b16 %v4149, %v4147
        %v5538 = vpack.c.b16 %v4150, %v4148
        %v5539 = vpack.c.b16 %v4153, %v4151
        %v5540 = vpack.c.b16 %v4154, %v4152
        %v5541 = vpack.c.b16 %v4157, %v4155
        %v5542 = vpack.c.b16 %v4158, %v4156
        %v5543 = vpack.c.b16 %v4161, %v4159
        %v5544 = vpack.c.b16 %v4162, %v4160
        %v5545 = vpack.c.b16 %v4165, %v4163
        %v5546 = vpack.c.b16 %v4166, %v4164
        %v5547 = vpack.c.b16 %v4169, %v4167
        %v5548 = vpack.c.b16 %v4170, %v4168
        %v5549 = vpack.c.b16 %v4173, %v4171
        %v5550 = vpack.c.b16 %v4174, %v4172
        %v5551 = vpack.c.b16 %v4177, %v4175
        %v5552 = vpack.c.b16 %v4178, %v4176
        %v5553 = vpack.c.b16 %v4181, %v4179
        %v5554 = vpack.c.b16 %v4182, %v4180
        %v5555 = vpack.c.b16 %v4185, %v4183
        %v5556 = vpack.c.b16 %v4186, %v4184
        %v5557 = vpack.c.b16 %v4189, %v4187
        %v5558 = vpack.c.b16 %v4190, %v4188
        %v5559 = vpack.c.b16 %v4193, %v4191
        %v5560 = vpack.c.b16 %v4194, %v4192
        %v5561 = vpack.c.b16 %v4197, %v4195
        %v5562 = vpack.c.b16 %v4198, %v4196
        %v5563 = vpack.c.b16 %v4201, %v4199
        %v5564 = vpack.c.b16 %v4202, %v4200
        %v5565 = vpack.c.b16 %v4205, %v4203
        %v5566 = vpack.c.b16 %v4206, %v4204
        %v5567 = vpack.c.b16 %v4209, %v4207
        %v5568 = vpack.c.b16 %v4210, %v4208
        %v5569 = vpack.c.b16 %v4213, %v4211
        %v5570 = vpack.c.b16 %v4214, %v4212
        %v5571 = vpack.c.b16 %v4217, %v4215
        %v5572 = vpack.c.b16 %v4218, %v4216
        %v5573 = vpack.c.b16 %v4221, %v4219
        %v5574 = vpack.c.b16 %v4222, %v4220
        %v5575 = vpack.c.b16 %v4225, %v4223
        %v5576 = vpack.c.b16 %v4226, %v4224
        %v5577 = vpack.c.b16 %v4229, %v4227
        %v5578 = vpack.c.b16 %v4230, %v4228
        %v5579 = vpack.c.b16 %v4233, %v4231
        %v5580 = vpack.c.b16 %v4234, %v4232
        %v5581 = vpack.c.b16 %v4237, %v4235
        %v5582 = vpack.c.b16 %v4238, %v4236
        %v5583 = vpack.c.b16 %v4241, %v4239
        %v5584 = vpack.c.b16 %v4242, %v4240
        %v5585 = vpack.c.b16 %v4245, %v4243
        %v5586 = vpack.c.b16 %v4246, %v4244
        %v5587 = vpack.c.b16 %v4249, %v4247
        %v5588 = vpack.c.b16 %v4250, %v4248
        %v5589 = vpack.c.b16 %v4253, %v4251
        %v5590 = vpack.c.b16 %v4254, %v4252
        %v5591 = vpack.c.b16 %v4257, %v4255
        %v5592 = vpack.c.b16 %v4258, %v4256
        %v5593 = vpack.c.b16 %v4261, %v4259
        %v5594 = vpack.c.b16 %v4262, %v4260
        %v5595 = vpack.c.b16 %v4265, %v4263
        %v5596 = vpack.c.b16 %v4266, %v4264
        %v5597 = vpack.c.b16 %v4269, %v4267
        %v5598 = vpack.c.b16 %v4270, %v4268
        %v5599 = vpack.c.b16 %v4273, %v4271
        %v5600 = vpack.c.b16 %v4274, %v4272
        %v5601 = vpack.c.b16 %v4277, %v4275
        %v5602 = vpack.c.b16 %v4278, %v4276
        %v5603 = vpack.c.b16 %v4281, %v4279
        %v5604 = vpack.c.b16 %v4282, %v4280
        %v5605 = vpack.c.b16 %v4285, %v4283
        %v5606 = vpack.c.b16 %v4286, %v4284
        %v5607 = vpack.c.b16 %v4289, %v4287
        %v5608 = vpack.c.b16 %v4290, %v4288
        %v5609 = vpack.c.b16 %v4293, %v4291
        %v5610 = vpack.c.b16 %v4294, %v4292
        %v5611 = vpack.c.b16 %v4297, %v4295
        %v5612 = vpack.c.b16 %v4298, %v4296
        %v5613 = vpack.c.b16 %v4301, %v4299
        %v5614 = vpack.c.b16 %v4302, %v4300
        %v5615 = vpack.c.b16 %v4305, %v4303
        %v5616 = vpack.c.b16 %v4306, %v4304
        %v5617 = vpack.c.b16 %v4309, %v4307
        %v5618 = vpack.c.b16 %v4310, %v4308
        %v5619 = vpack.c.b16 %v4313, %v4311
        %v5620 = vpack.c.b16 %v4314, %v4312
        %v5621 = vpack.c.b16 %v4317, %v4315
        %v5622 = vpack.c.b16 %v4318, %v4316
        %v5623 = vpack.c.b16 %v4321, %v4319
        %v5624 = vpack.c.b16 %v4322, %v4320
        %v5625 = vpack.c.b16 %v4325, %v4323
        %v5626 = vpack.c.b16 %v4326, %v4324
        %v5627 = vpack.c.b16 %v4329, %v4327
        %v5628 = vpack.c.b16 %v4330, %v4328
        %v5629 = vpack.c.b16 %v4333, %v4331
        %v5630 = vpack.c.b16 %v4334, %v4332
        %v5631 = vpack.c.b16 %v4337, %v4335
        %v5632 = vpack.c.b16 %v4338, %v4336
        %v5633 = vpack.c.b16 %v4341, %v4339
        %v5634 = vpack.c.b16 %v4342, %v4340
        %v5635 = vpack.c.b16 %v4345, %v4343
        %v5636 = vpack.c.b16 %v4346, %v4344
        %v5637 = vpack.c.b16 %v4349, %v4347
        %v5638 = vpack.c.b16 %v4350, %v4348
        %v5639 = vpack.c.b16 %v4353, %v4351
        %v5640 = vpack.c.b16 %v4354, %v4352
        %v5641 = vpack.c.b16 %v4357, %v4355
        %v5642 = vpack.c.b16 %v4358, %v4356
        %v5643 = vpack.c.b16 %v4361, %v4359
        %v5644 = vpack.c.b16 %v4362, %v4360
        %v5645 = vpack.c.b16 %v4365, %v4363
        %v5646 = vpack.c.b16 %v4366, %v4364
        %v5647 = vpack.c.b16 %v4369, %v4367
        %v5648 = vpack.c.b16 %v4370, %v4368
        %v5649 = vpack.c.b16 %v4373, %v4371
        %v5650 = vpack.c.b16 %v4374, %v4372
        %v5651 = vpack.c.b16 %v4377, %v4375
        %v5652 = vpack.c.b16 %v4378, %v4376
        %v5653 = vpack.c.b16 %v4381, %v4379
        %v5654 = vpack.c.b16 %v4382, %v4380
        %v5655 = vpack.c.b16 %v4385, %v4383
        %v5656 = vpack.c.b16 %v4386, %v4384
        %v5657 = vpack.c.b16 %v4389, %v4387
        %v5658 = vpack.c.b16 %v4390, %v4388
        %v5659 = vpack.c.b16 %v4393, %v4391
        %v5660 = vpack.c.b16 %v4394, %v4392
        %v5661 = vpack.c.b16 %v4397, %v4395
        %v5662 = vpack.c.b16 %v4398, %v4396
        %v5663 = vpack.c.b16 %v4401, %v4399
        %v5664 = vpack.c.b16 %v4402, %v4400
        %v5665 = vpack.c.b16 %v4405, %v4403
        %v5666 = vpack.c.b16 %v4406, %v4404
        %v5667 = vpack.c.b16 %v4409, %v4407
        %v5668 = vpack.c.b16 %v4410, %v4408
        %v5669 = vpack.c.b16 %v4413, %v4411
        %v5670 = vpack.c.b16 %v4414, %v4412
        %v5671 = vpack.c.b16 %v4417, %v4415
        %v5672 = vpack.c.b16 %v4418, %v4416
        %v5673 = vpack.c.b16 %v4421, %v4419
        %v5674 = vpack.c.b16 %v4422, %v4420
        %v5675 = vpack.c.b16 %v4425, %v4423
        %v5676 = vpack.c.b16 %v4426, %v4424
        %v5677 = vpack.c.b16 %v4429, %v4427
        %v5678 = vpack.c.b16 %v4430, %v4428
        %v5679 = vpack.c.b16 %v4433, %v4431
        %v5680 = vpack.c.b16 %v4434, %v4432
        %v5681 = vpack.c.b16 %v4437, %v4435
        %v5682 = vpack.c.b16 %v4438, %v4436
        %v5683 = vpack.c.b16 %v4441, %v4439
        %v5684 = vpack.c.b16 %v4442, %v4440
        %v5685 = vpack.c.b16 %v4445, %v4443
        %v5686 = vpack.c.b16 %v4446, %v4444
        %v5687 = vpack.c.b16 %v4449, %v4447
        %v5688 = vpack.c.b16 %v4450, %v4448
        %v5689 = vpack.c.b16 %v4453, %v4451
        %v5690 = vpack.c.b16 %v4454, %v4452
        %v5691 = vpack.c.b16 %v4457, %v4455
        %v5692 = vpack.c.b16 %v4458, %v4456
        %v5693 = vpack.c.b16 %v4461, %v4459
        %v5694 = vpack.c.b16 %v4462, %v4460
        %v5695 = vpack.c.b16 %v4465, %v4463
        %v5696 = vpack.c.b16 %v4466, %v4464
        %v5697 = vpack.c.b16 %v4469, %v4467
        %v5698 = vpack.c.b16 %v4470, %v4468
        %v5699 = vpack.c.b16 %v4473, %v4471
        %v5700 = vpack.c.b16 %v4474, %v4472
        %v5701 = vpack.c.b16 %v4477, %v4475
        %v5702 = vpack.c.b16 %v4478, %v4476
        %v5703 = vpack.c.b16 %v4481, %v4479
        %v5704 = vpack.c.b16 %v4482, %v4480
        %v5705 = vpack.c.b16 %v4485, %v4483
        %v5706 = vpack.c.b16 %v4486, %v4484
        %v5707 = vpack.c.b16 %v4489, %v4487
        %v5708 = vpack.c.b16 %v4490, %v4488
        %v5709 = vpack.c.b16 %v4493, %v4491
        %v5710 = vpack.c.b16 %v4494, %v4492
        %v5711 = vpack.c.b16 %v4497, %v4495
        %v5712 = vpack.c.b16 %v4498, %v4496
        %v5713 = vpack.c.b16 %v4501, %v4499
        %v5714 = vpack.c.b16 %v4502, %v4500
        %v5715 = vpack.c.b16 %v4505, %v4503
        %v5716 = vpack.c.b16 %v4506, %v4504
        %v5717 = vpack.c.b16 %v4509, %v4507
        %v5718 = vpack.c.b16 %v4510, %v4508
        %v5719 = vpack.c.b16 %v4513, %v4511
        %v5720 = vpack.c.b16 %v4514, %v4512
        %v5721 = vpack.c.b16 %v4517, %v4515
        %v5722 = vpack.c.b16 %v4518, %v4516
        %v5723 = vpack.c.b16 %v4521, %v4519
        %v5724 = vpack.c.b16 %v4522, %v4520
        %v5725 = vpack.c.b16 %v4525, %v4523
        %v5726 = vpack.c.b16 %v4526, %v4524
        %v5727 = vpack.c.b16 %v4529, %v4527
        %v5728 = vpack.c.b16 %v4530, %v4528
        %v5729 = vpack.c.b16 %v4533, %v4531
        %v5730 = vpack.c.b16 %v4534, %v4532
        %v5731 = vpack.c.b16 %v4537, %v4535
        %v5732 = vpack.c.b16 %v4538, %v4536
        %v5733 = vpack.c.b16 %v4541, %v4539
        %v5734 = vpack.c.b16 %v4542, %v4540
        %v5735 = vpack.c.b16 %v4545, %v4543
        %v5736 = vpack.c.b16 %v4546, %v4544
        %v5737 = vpack.c.b16 %v4549, %v4547
        %v5738 = vpack.c.b16 %v4550, %v4548
        %v5739 = vpack.c.b16 %v4553, %v4551
        %v5740 = vpack.c.b16 %v4554, %v4552
        %v5741 = vpack.c.b16 %v4557, %v4555
        %v5742 = vpack.c.b16 %v4558, %v4556
        %v5743 = vpack.c.b16 %v4561, %v4559
        %v5744 = vpack.c.b16 %v4562, %v4560
        %v5745 = vpack.c.b16 %v4565, %v4563
        %v5746 = vpack.c.b16 %v4566, %v4564
        %v5747 = vpack.c.b16 %v4569, %v4567
        %v5748 = vpack.c.b16 %v4570, %v4568
        %v5749 = vpack.c.b16 %v4573, %v4571
        %v5750 = vpack.c.b16 %v4574, %v4572
        %v5751 = vpack.c.b16 %v4577, %v4575
        %v5752 = vpack.c.b16 %v4578, %v4576
        %v5753 = vpack.c.b16 %v4581, %v4579
        %v5754 = vpack.c.b16 %v4582, %v4580
        %v5755 = vpack.c.b16 %v4585, %v4583
        %v5756 = vpack.c.b16 %v4586, %v4584
        %v5757 = vpack.c.b16 %v4589, %v4587
        %v5758 = vpack.c.b16 %v4590, %v4588
        %v5759 = vpack.c.b16 %v4593, %v4591
        %v5760 = vpack.c.b16 %v4594, %v4592
        %v5761 = vpack.c.b16 %v4597, %v4595
        %v5762 = vpack.c.b16 %v4598, %v4596
        %v5763 = vpack.c.b16 %v4601, %v4599
        %v5764 = vpack.c.b16 %v4602, %v4600
        %v5765 = vpack.c.b16 %v4605, %v4603
        %v5766 = vpack.c.b16 %v4606, %v4604
        %v5767 = vpack.c.b16 %v4609, %v4607
        %v5768 = vpack.c.b16 %v4610, %v4608
        %v5769 = vpack.c.b16 %v4613, %v4611
        %v5770 = vpack.c.b16 %v4614, %v4612
        %v5771 = vpack.c.b16 %v4617, %v4615
        %v5772 = vpack.c.b16 %v4618, %v4616
        %v5773 = vpack.c.b16 %v4621, %v4619
        %v5774 = vpack.c.b16 %v4622, %v4620
        %v5775 = vpack.c.b16 %v4625, %v4623
        %v5776 = vpack.c.b16 %v4626, %v4624
        %v5777 = vpack.c.b16 %v4629, %v4627
        %v5778 = vpack.c.b16 %v4630, %v4628
        %v5779 = vpack.c.b16 %v4633, %v4631
        %v5780 = vpack.c.b16 %v4634, %v4632
        %v5781 = vpack.c.b16 %v4637, %v4635
        %v5782 = vpack.c.b16 %v4638, %v4636
        %v5783 = vpack.c.b16 %v4641, %v4639
        %v5784 = vpack.c.b16 %v4642, %v4640
        %v5785 = vpack.c.b16 %v4645, %v4643
        %v5786 = vpack.c.b16 %v4646, %v4644
        %v5787 = vpack.c.b16 %v4649, %v4647
        %v5788 = vpack.c.b16 %v4650, %v4648
        %v5789 = vpack.c.b16 %v4653, %v4651
        %v5790 = vpack.c.b16 %v4654, %v4652
        %v5791 = vpack.c.b16 %v4657, %v4655
        %v5792 = vpack.c.b16 %v4658, %v4656
        %v5793 = vpack.c.b16 %v4661, %v4659
        %v5794 = vpack.c.b16 %v4662, %v4660
        %v5795 = vpack.c.b16 %v4665, %v4663
        %v5796 = vpack.c.b16 %v4666, %v4664
        %v5797 = vpack.c.b16 %v4669, %v4667
        %v5798 = vpack.c.b16 %v4670, %v4668
        %v5799 = vpack.c.b16 %v4673, %v4671
        %v5800 = vpack.c.b16 %v4674, %v4672
        %v5801 = vpack.c.b16 %v4677, %v4675
        %v5802 = vpack.c.b16 %v4678, %v4676
        %v5803 = vpack.c.b16 %v4681, %v4679
        %v5804 = vpack.c.b16 %v4682, %v4680
        %v5805 = vpack.c.b16 %v4685, %v4683
        %v5806 = vpack.c.b16 %v4686, %v4684
        %v5807 = vpack.c.b16 %v4689, %v4687
        %v5808 = vpack.c.b16 %v4690, %v4688
        %v5809 = vpack.c.b16 %v4693, %v4691
        %v5810 = vpack.c.b16 %v4694, %v4692
        %v5811 = vpack.c.b16 %v4697, %v4695
        %v5812 = vpack.c.b16 %v4698, %v4696
        %v5813 = vpack.c.b16 %v4701, %v4699
        %v5814 = vpack.c.b16 %v4702, %v4700
        %v5815 = vpack.c.b16 %v4705, %v4703
        %v5816 = vpack.c.b16 %v4706, %v4704
        %v5817 = vpack.c.b16 %v4709, %v4707
        %v5818 = vpack.c.b16 %v4710, %v4708
        %v5819 = vpack.c.b16 %v4713, %v4711
        %v5820 = vpack.c.b16 %v4714, %v4712
        %v5821 = vpack.c.b16 %v4717, %v4715
        %v5822 = vpack.c.b16 %v4718, %v4716
        %v5823 = vpack.c.b16 %v4721, %v4719
        %v5824 = vpack.c.b16 %v4722, %v4720
        %v5825 = vpack.c.b16 %v4725, %v4723
        %v5826 = vpack.c.b16 %v4726, %v4724
        %v5827 = vpack.c.b16 %v4729, %v4727
        %v5828 = vpack.c.b16 %v4730, %v4728
        %v5829 = vpack.c.b16 %v4733, %v4731
        %v5830 = vpack.c.b16 %v4734, %v4732
        %v5831 = vpack.c.b16 %v4737, %v4735
        %v5832 = vpack.c.b16 %v4738, %v4736
        %v5833 = vpack.c.b16 %v4741, %v4739
        %v5834 = vpack.c.b16 %v4742, %v4740
        %v5835 = vpack.c.b16 %v4745, %v4743
        %v5836 = vpack.c.b16 %v4746, %v4744
        %v5837 = vpack.c.b16 %v4749, %v4747
        %v5838 = vpack.c.b16 %v4750, %v4748
        %v5839 = vpack.c.b16 %v4753, %v4751
        %v5840 = vpack.c.b16 %v4754, %v4752
        %v5841 = vpack.c.b16 %v4757, %v4755
        %v5842 = vpack.c.b16 %v4758, %v4756
        %v5843 = vpack.c.b16 %v4761, %v4759
        %v5844 = vpack.c.b16 %v4762, %v4760
        %v5845 = vpack.c.b16 %v4765, %v4763
        %v5846 = vpack.c.b16 %v4766, %v4764
        %v5847 = vpack.c.b16 %v4769, %v4767
        %v5848 = vpack.c.b16 %v4770, %v4768
        %v5849 = vpack.c.b16 %v4773, %v4771
        %v5850 = vpack.c.b16 %v4774, %v4772
        %v5851 = vpack.c.b16 %v4777, %v4775
        %v5852 = vpack.c.b16 %v4778, %v4776
        %v5853 = vpack.c.b16 %v4781, %v4779
        %v5854 = vpack.c.b16 %v4782, %v4780
        %v5855 = vpack.c.b16 %v4785, %v4783
        %v5856 = vpack.c.b16 %v4786, %v4784
        %v5857 = vpack.c.b16 %v4789, %v4787
        %v5858 = vpack.c.b16 %v4790, %v4788
        %v5859 = vpack.c.b16 %v4793, %v4791
        %v5860 = vpack.c.b16 %v4794, %v4792
        %v5861 = vpack.c.b16 %v4797, %v4795
        %v5862 = vpack.c.b16 %v4798, %v4796
        %v5863 = vpack.c.b16 %v4801, %v4799
        %v5864 = vpack.c.b16 %v4802, %v4800
        %v5865 = vpack.c.b16 %v4805, %v4803
        %v5866 = vpack.c.b16 %v4806, %v4804
        %v5867 = vpack.c.b16 %v4809, %v4807
        %v5868 = vpack.c.b16 %v4810, %v4808
        %v5869 = vpack.c.b16 %v4813, %v4811
        %v5870 = vpack.c.b16 %v4814, %v4812
        %v5871 = vpack.c.b16 %v4817, %v4815
        %v5872 = vpack.c.b16 %v4818, %v4816
        %v5873 = vpack.c.b16 %v4821, %v4819
        %v5874 = vpack.c.b16 %v4822, %v4820
        %v5875 = vpack.c.b16 %v4825, %v4823
        %v5876 = vpack.c.b16 %v4826, %v4824
        %v5877 = vpack.c.b16 %v4829, %v4827
        %v5878 = vpack.c.b16 %v4830, %v4828
        %v5879 = vpack.c.b16 %v4833, %v4831
        %v5880 = vpack.c.b16 %v4834, %v4832
        %v5881 = vpack.c.b16 %v4837, %v4835
        %v5882 = vpack.c.b16 %v4838, %v4836
        %v5883 = vpack.c.b16 %v4841, %v4839
        %v5884 = vpack.c.b16 %v4842, %v4840
        %v5885 = vpack.c.b16 %v4845, %v4843
        %v5886 = vpack.c.b16 %v4846, %v4844
        %v5887 = vpack.c.b16 %v4849, %v4847
        %v5888 = vpack.c.b16 %v4850, %v4848
        %v5889 = vpack.c.b16 %v4853, %v4851
        %v5890 = vpack.c.b16 %v4854, %v4852
        %v5891 = vpack.c.b16 %v4857, %v4855
        %v5892 = vpack.c.b16 %v4858, %v4856
        %v5893 = vpack.c.b16 %v4861, %v4859
        %v5894 = vpack.c.b16 %v4862, %v4860
        %v5895 = vpack.c.b16 %v4865, %v4863
        %v5896 = vpack.c.b16 %v4866, %v4864
        %v5897 = vpack.c.b16 %v4869, %v4867
        %v5898 = vpack.c.b16 %v4870, %v4868
        %v5899 = vpack.c.b16 %v4873, %v4871
        %v5900 = vpack.c.b16 %v4874, %v4872
        %v5901 = vpack.c.b16 %v4877, %v4875
        %v5902 = vpack.c.b16 %v4878, %v4876
        %6927 = vmatprep.subr.bf16.mxu0 %v4880
        %6928 = vmatpush1.bf16.msra.mxu0 %v4879
        %6929 = vmatprep.subr.bf16.mxu0 %v4882
        %6930 = vmatpush1.bf16.msra.mxu0 %v4881
        %6931 = vmatprep.subr.bf16.mxu0 %v4884
        %6932 = vmatpush1.bf16.msra.mxu0 %v4883
        %6933 = vmatprep.subr.bf16.mxu0 %v4886
        %6934 = vmatpush1.bf16.msra.mxu0 %v4885
        %6935 = vmatprep.subr.bf16.mxu0 %v4888
        %6936 = vmatpush1.bf16.msra.mxu0 %v4887
        %6937 = vmatprep.subr.bf16.mxu0 %v4890
        %6938 = vmatpush1.bf16.msra.mxu0 %v4889
        %6939 = vmatprep.subr.bf16.mxu0 %v4892
        %6940 = vmatpush1.bf16.msra.mxu0 %v4891
        %6941 = vmatprep.subr.bf16.mxu0 %v4894
        %6942 = vmatpush1.bf16.msra.mxu0 %v4893
        %6943 = vmatprep.subr.bf16.mxu0 %v4896
        %6944 = vmatpush1.bf16.msra.mxu0 %v4895
        %6945 = vmatprep.subr.bf16.mxu0 %v4898
        %6946 = vmatpush1.bf16.msra.mxu0 %v4897
        %6947 = vmatprep.subr.bf16.mxu0 %v4900
        %6948 = vmatpush1.bf16.msra.mxu0 %v4899
        %6949 = vmatprep.subr.bf16.mxu0 %v4902
        %6950 = vmatpush1.bf16.msra.mxu0 %v4901
        %6951 = vmatprep.subr.bf16.mxu0 %v4904
        %6952 = vmatpush1.bf16.msra.mxu0 %v4903
        %6953 = vmatprep.subr.bf16.mxu0 %v4906
        %6954 = vmatpush1.bf16.msra.mxu0 %v4905
        %6955 = vmatprep.subr.bf16.mxu0 %v4908
        %6956 = vmatpush1.bf16.msra.mxu0 %v4907
        %6957 = vmatprep.subr.bf16.mxu0 %v4910
        %6958 = vmatpush1.bf16.msra.mxu0 %v4909
        %6959 = vmatprep.mubr.bf16.mxu0 %v1680
        %6960 = vmatmul.mubr.bf16.gmra.mrb[0].mxu0 %v1679
        %v6961 = vpop.f32.mrb[0].mxu0
        %v6962 = vadd.f32 0.0, %v6961
        %v6963 = vpop.f32.mrb[0].mxu0
        %v6964 = vadd.f32 0.0, %v6963
        %v6965 = vpop.f32.mrb[0].mxu0
        %v6966 = vadd.f32 0.0, %v6965
        %v6967 = vpop.f32.mrb[0].mxu0
        %v6968 = vadd.f32 0.0, %v6967
        %6969 = vdwg.mxu0
        %6970 = vmatprep.subr.bf16.mxu0 %v4912
        %6971 = vmatpush1.bf16.msra.mxu0 %v4911
        %6972 = vmatprep.subr.bf16.mxu0 %v4914
        %6973 = vmatpush1.bf16.msra.mxu0 %v4913
        %6974 = vmatprep.subr.bf16.mxu0 %v4916
        %6975 = vmatpush1.bf16.msra.mxu0 %v4915
        %6976 = vmatprep.subr.bf16.mxu0 %v4918
        %6977 = vmatpush1.bf16.msra.mxu0 %v4917
        %6978 = vmatprep.subr.bf16.mxu0 %v4920
        %6979 = vmatpush1.bf16.msra.mxu0 %v4919
        %6980 = vmatprep.subr.bf16.mxu0 %v4922
        %6981 = vmatpush1.bf16.msra.mxu0 %v4921
        %6982 = vmatprep.subr.bf16.mxu0 %v4924
        %6983 = vmatpush1.bf16.msra.mxu0 %v4923
        %6984 = vmatprep.subr.bf16.mxu0 %v4926
        %6985 = vmatpush1.bf16.msra.mxu0 %v4925
        %6986 = vmatprep.subr.bf16.mxu0 %v4928
        %6987 = vmatpush1.bf16.msra.mxu0 %v4927
        %6988 = vmatprep.subr.bf16.mxu0 %v4930
        %6989 = vmatpush1.bf16.msra.mxu0 %v4929
        %6990 = vmatprep.subr.bf16.mxu0 %v4932
        %6991 = vmatpush1.bf16.msra.mxu0 %v4931
        %6992 = vmatprep.subr.bf16.mxu0 %v4934
        %6993 = vmatpush1.bf16.msra.mxu0 %v4933
        %6994 = vmatprep.subr.bf16.mxu0 %v4936
        %6995 = vmatpush1.bf16.msra.mxu0 %v4935
        %6996 = vmatprep.subr.bf16.mxu0 %v4938
        %6997 = vmatpush1.bf16.msra.mxu0 %v4937
        %6998 = vmatprep.subr.bf16.mxu0 %v4940
        %6999 = vmatpush1.bf16.msra.mxu0 %v4939
        %7000 = vmatprep.subr.bf16.mxu0 %v4942
        %7001 = vmatpush1.bf16.msra.mxu0 %v4941
        %7002 = vmatprep.mubr.bf16.mxu0 %v1682
        %7003 = vmatmul.mubr.bf16.gmra.mrb[0].mxu0 %v1681
        %v7004 = vpop.f32.mrb[0].mxu0
        %v7005 = vadd.f32 %v6962, %v7004
        %v7006 = vpop.f32.mrb[0].mxu0
        %v7007 = vadd.f32 %v6964, %v7006
        %v7008 = vpop.f32.mrb[0].mxu0
        %v7009 = vadd.f32 %v6966, %v7008
        %v7010 = vpop.f32.mrb[0].mxu0
        %v7011 = vadd.f32 %v6968, %v7010
        %7012 = vdwg.mxu0
        %7013 = vmatprep.subr.bf16.mxu0 %v4944
        %7014 = vmatpush1.bf16.msra.mxu0 %v4943
        %7015 = vmatprep.subr.bf16.mxu0 %v4946
        %7016 = vmatpush1.bf16.msra.mxu0 %v4945
        %7017 = vmatprep.subr.bf16.mxu0 %v4948
        %7018 = vmatpush1.bf16.msra.mxu0 %v4947
        %7019 = vmatprep.subr.bf16.mxu0 %v4950
        %7020 = vmatpush1.bf16.msra.mxu0 %v4949
        %7021 = vmatprep.subr.bf16.mxu0 %v4952
        %7022 = vmatpush1.bf16.msra.mxu0 %v4951
        %7023 = vmatprep.subr.bf16.mxu0 %v4954
        %7024 = vmatpush1.bf16.msra.mxu0 %v4953
        %7025 = vmatprep.subr.bf16.mxu0 %v4956
        %7026 = vmatpush1.bf16.msra.mxu0 %v4955
        %7027 = vmatprep.subr.bf16.mxu0 %v4958
        %7028 = vmatpush1.bf16.msra.mxu0 %v4957
        %7029 = vmatprep.subr.bf16.mxu0 %v4960
        %7030 = vmatpush1.bf16.msra.mxu0 %v4959
        %7031 = vmatprep.subr.bf16.mxu0 %v4962
        %7032 = vmatpush1.bf16.msra.mxu0 %v4961
        %7033 = vmatprep.subr.bf16.mxu0 %v4964
        %7034 = vmatpush1.bf16.msra.mxu0 %v4963
        %7035 = vmatprep.subr.bf16.mxu0 %v4966
        %7036 = vmatpush1.bf16.msra.mxu0 %v4965
        %7037 = vmatprep.subr.bf16.mxu0 %v4968
        %7038 = vmatpush1.bf16.msra.mxu0 %v4967
        %7039 = vmatprep.subr.bf16.mxu0 %v4970
        %7040 = vmatpush1.bf16.msra.mxu0 %v4969
        %7041 = vmatprep.subr.bf16.mxu0 %v4972
        %7042 = vmatpush1.bf16.msra.mxu0 %v4971
        %7043 = vmatprep.subr.bf16.mxu0 %v4974
        %7044 = vmatpush1.bf16.msra.mxu0 %v4973
        %7045 = vmatprep.mubr.bf16.mxu0 %v1684
        %7046 = vmatmul.mubr.bf16.gmra.mrb[0].mxu0 %v1683
        %v7047 = vpop.f32.mrb[0].mxu0
        %v7048 = vadd.f32 %v7005, %v7047
        %v7049 = vpop.f32.mrb[0].mxu0
        %v7050 = vadd.f32 %v7007, %v7049
        %v7051 = vpop.f32.mrb[0].mxu0
        %v7052 = vadd.f32 %v7009, %v7051
        %v7053 = vpop.f32.mrb[0].mxu0
        %v7054 = vadd.f32 %v7011, %v7053
        %7055 = vdwg.mxu0
        %7056 = vmatprep.subr.bf16.mxu0 %v4976
        %7057 = vmatpush1.bf16.msra.mxu0 %v4975
        %7058 = vmatprep.subr.bf16.mxu0 %v4978
        %7059 = vmatpush1.bf16.msra.mxu0 %v4977
        %7060 = vmatprep.subr.bf16.mxu0 %v4980
        %7061 = vmatpush1.bf16.msra.mxu0 %v4979
        %7062 = vmatprep.subr.bf16.mxu0 %v4982
        %7063 = vmatpush1.bf16.msra.mxu0 %v4981
        %7064 = vmatprep.subr.bf16.mxu0 %v4984
        %7065 = vmatpush1.bf16.msra.mxu0 %v4983
        %7066 = vmatprep.subr.bf16.mxu0 %v4986
        %7067 = vmatpush1.bf16.msra.mxu0 %v4985
        %7068 = vmatprep.subr.bf16.mxu0 %v4988
        %7069 = vmatpush1.bf16.msra.mxu0 %v4987
        %7070 = vmatprep.subr.bf16.mxu0 %v4990
        %7071 = vmatpush1.bf16.msra.mxu0 %v4989
        %7072 = vmatprep.subr.bf16.mxu0 %v4992
        %7073 = vmatpush1.bf16.msra.mxu0 %v4991
        %7074 = vmatprep.subr.bf16.mxu0 %v4994
        %7075 = vmatpush1.bf16.msra.mxu0 %v4993
        %7076 = vmatprep.subr.bf16.mxu0 %v4996
        %7077 = vmatpush1.bf16.msra.mxu0 %v4995
        %7078 = vmatprep.subr.bf16.mxu0 %v4998
        %7079 = vmatpush1.bf16.msra.mxu0 %v4997
        %7080 = vmatprep.subr.bf16.mxu0 %v5000
        %7081 = vmatpush1.bf16.msra.mxu0 %v4999
        %7082 = vmatprep.subr.bf16.mxu0 %v5002
        %7083 = vmatpush1.bf16.msra.mxu0 %v5001
        %7084 = vmatprep.subr.bf16.mxu0 %v5004
        %7085 = vmatpush1.bf16.msra.mxu0 %v5003
        %7086 = vmatprep.subr.bf16.mxu0 %v5006
        %7087 = vmatpush1.bf16.msra.mxu0 %v5005
        %7088 = vmatprep.mubr.bf16.mxu0 %v1686
        %7089 = vmatmul.mubr.bf16.gmra.mrb[0].mxu0 %v1685
        %v7090 = vpop.f32.mrb[0].mxu0
        %v7091 = vadd.f32 %v7048, %v7090
        %v7092 = vpop.f32.mrb[0].mxu0
        %v7093 = vadd.f32 %v7050, %v7092
        %v7094 = vpop.f32.mrb[0].mxu0
        %v7095 = vadd.f32 %v7052, %v7094
        %v7096 = vpop.f32.mrb[0].mxu0
        %v7097 = vadd.f32 %v7054, %v7096
        %7098 = vdwg.mxu0
        %7099 = vmatprep.subr.bf16.mxu0 %v5008
        %7100 = vmatpush1.bf16.msra.mxu0 %v5007
        %7101 = vmatprep.subr.bf16.mxu0 %v5010
        %7102 = vmatpush1.bf16.msra.mxu0 %v5009
        %7103 = vmatprep.subr.bf16.mxu0 %v5012
        %7104 = vmatpush1.bf16.msra.mxu0 %v5011
        %7105 = vmatprep.subr.bf16.mxu0 %v5014
        %7106 = vmatpush1.bf16.msra.mxu0 %v5013
        %7107 = vmatprep.subr.bf16.mxu0 %v5016
        %7108 = vmatpush1.bf16.msra.mxu0 %v5015
        %7109 = vmatprep.subr.bf16.mxu0 %v5018
        %7110 = vmatpush1.bf16.msra.mxu0 %v5017
        %7111 = vmatprep.subr.bf16.mxu0 %v5020
        %7112 = vmatpush1.bf16.msra.mxu0 %v5019
        %7113 = vmatprep.subr.bf16.mxu0 %v5022
        %7114 = vmatpush1.bf16.msra.mxu0 %v5021
        %7115 = vmatprep.subr.bf16.mxu0 %v5024
        %7116 = vmatpush1.bf16.msra.mxu0 %v5023
        %7117 = vmatprep.subr.bf16.mxu0 %v5026
        %7118 = vmatpush1.bf16.msra.mxu0 %v5025
        %7119 = vmatprep.subr.bf16.mxu0 %v5028
        %7120 = vmatpush1.bf16.msra.mxu0 %v5027
        %7121 = vmatprep.subr.bf16.mxu0 %v5030
        %7122 = vmatpush1.bf16.msra.mxu0 %v5029
        %7123 = vmatprep.subr.bf16.mxu0 %v5032
        %7124 = vmatpush1.bf16.msra.mxu0 %v5031
        %7125 = vmatprep.subr.bf16.mxu0 %v5034
        %7126 = vmatpush1.bf16.msra.mxu0 %v5033
        %7127 = vmatprep.subr.bf16.mxu0 %v5036
        %7128 = vmatpush1.bf16.msra.mxu0 %v5035
        %7129 = vmatprep.subr.bf16.mxu0 %v5038
        %7130 = vmatpush1.bf16.msra.mxu0 %v5037
        %7131 = vmatprep.mubr.bf16.mxu0 %v1688
        %7132 = vmatmul.mubr.bf16.gmra.mrb[0].mxu0 %v1687
        %v7133 = vpop.f32.mrb[0].mxu0
        %v7134 = vadd.f32 %v7091, %v7133
        %v7135 = vpop.f32.mrb[0].mxu0
        %v7136 = vadd.f32 %v7093, %v7135
        %v7137 = vpop.f32.mrb[0].mxu0
        %v7138 = vadd.f32 %v7095, %v7137
        %v7139 = vpop.f32.mrb[0].mxu0
        %v7140 = vadd.f32 %v7097, %v7139
        %7141 = vdwg.mxu0
        %7142 = vmatprep.subr.bf16.mxu0 %v5040
        %7143 = vmatpush1.bf16.msra.mxu0 %v5039
        %7144 = vmatprep.subr.bf16.mxu0 %v5042
        %7145 = vmatpush1.bf16.msra.mxu0 %v5041
        %7146 = vmatprep.subr.bf16.mxu0 %v5044
        %7147 = vmatpush1.bf16.msra.mxu0 %v5043
        %7148 = vmatprep.subr.bf16.mxu0 %v5046
        %7149 = vmatpush1.bf16.msra.mxu0 %v5045
        %7150 = vmatprep.subr.bf16.mxu0 %v5048
        %7151 = vmatpush1.bf16.msra.mxu0 %v5047
        %7152 = vmatprep.subr.bf16.mxu0 %v5050
        %7153 = vmatpush1.bf16.msra.mxu0 %v5049
        %7154 = vmatprep.subr.bf16.mxu0 %v5052
        %7155 = vmatpush1.bf16.msra.mxu0 %v5051
        %7156 = vmatprep.subr.bf16.mxu0 %v5054
        %7157 = vmatpush1.bf16.msra.mxu0 %v5053
        %7158 = vmatprep.subr.bf16.mxu0 %v5056
        %7159 = vmatpush1.bf16.msra.mxu0 %v5055
        %7160 = vmatprep.subr.bf16.mxu0 %v5058
        %7161 = vmatpush1.bf16.msra.mxu0 %v5057
        %7162 = vmatprep.subr.bf16.mxu0 %v5060
        %7163 = vmatpush1.bf16.msra.mxu0 %v5059
        %7164 = vmatprep.subr.bf16.mxu0 %v5062
        %7165 = vmatpush1.bf16.msra.mxu0 %v5061
        %7166 = vmatprep.subr.bf16.mxu0 %v5064
        %7167 = vmatpush1.bf16.msra.mxu0 %v5063
        %7168 = vmatprep.subr.bf16.mxu0 %v5066
        %7169 = vmatpush1.bf16.msra.mxu0 %v5065
        %7170 = vmatprep.subr.bf16.mxu0 %v5068
        %7171 = vmatpush1.bf16.msra.mxu0 %v5067
        %7172 = vmatprep.subr.bf16.mxu0 %v5070
        %7173 = vmatpush1.bf16.msra.mxu0 %v5069
        %7174 = vmatprep.mubr.bf16.mxu0 %v1690
        %7175 = vmatmul.mubr.bf16.gmra.mrb[0].mxu0 %v1689
        %v7176 = vpop.f32.mrb[0].mxu0
        %v7177 = vadd.f32 %v7134, %v7176
        %v7178 = vpop.f32.mrb[0].mxu0
        %v7179 = vadd.f32 %v7136, %v7178
        %v7180 = vpop.f32.mrb[0].mxu0
        %v7181 = vadd.f32 %v7138, %v7180
        %v7182 = vpop.f32.mrb[0].mxu0
        %v7183 = vadd.f32 %v7140, %v7182
        %7184 = vdwg.mxu0
        %7185 = vmatprep.subr.bf16.mxu0 %v5072
        %7186 = vmatpush1.bf16.msra.mxu0 %v5071
        %7187 = vmatprep.subr.bf16.mxu0 %v5074
        %7188 = vmatpush1.bf16.msra.mxu0 %v5073
        %7189 = vmatprep.subr.bf16.mxu0 %v5076
        %7190 = vmatpush1.bf16.msra.mxu0 %v5075
        %7191 = vmatprep.subr.bf16.mxu0 %v5078
        %7192 = vmatpush1.bf16.msra.mxu0 %v5077
        %7193 = vmatprep.subr.bf16.mxu0 %v5080
        %7194 = vmatpush1.bf16.msra.mxu0 %v5079
        %7195 = vmatprep.subr.bf16.mxu0 %v5082
        %7196 = vmatpush1.bf16.msra.mxu0 %v5081
        %7197 = vmatprep.subr.bf16.mxu0 %v5084
        %7198 = vmatpush1.bf16.msra.mxu0 %v5083
        %7199 = vmatprep.subr.bf16.mxu0 %v5086
        %7200 = vmatpush1.bf16.msra.mxu0 %v5085
        %7201 = vmatprep.subr.bf16.mxu0 %v5088
        %7202 = vmatpush1.bf16.msra.mxu0 %v5087
        %7203 = vmatprep.subr.bf16.mxu0 %v5090
        %7204 = vmatpush1.bf16.msra.mxu0 %v5089
        %7205 = vmatprep.subr.bf16.mxu0 %v5092
        %7206 = vmatpush1.bf16.msra.mxu0 %v5091
        %7207 = vmatprep.subr.bf16.mxu0 %v5094
        %7208 = vmatpush1.bf16.msra.mxu0 %v5093
        %7209 = vmatprep.subr.bf16.mxu0 %v5096
        %7210 = vmatpush1.bf16.msra.mxu0 %v5095
        %7211 = vmatprep.subr.bf16.mxu0 %v5098
        %7212 = vmatpush1.bf16.msra.mxu0 %v5097
        %7213 = vmatprep.subr.bf16.mxu0 %v5100
        %7214 = vmatpush1.bf16.msra.mxu0 %v5099
        %7215 = vmatprep.subr.bf16.mxu0 %v5102
        %7216 = vmatpush1.bf16.msra.mxu0 %v5101
        %7217 = vmatprep.mubr.bf16.mxu0 %v1692
        %7218 = vmatmul.mubr.bf16.gmra.mrb[0].mxu0 %v1691
        %v7219 = vpop.f32.mrb[0].mxu0
        %v7220 = vadd.f32 %v7177, %v7219
        %v7221 = vpop.f32.mrb[0].mxu0
        %v7222 = vadd.f32 %v7179, %v7221
        %v7223 = vpop.f32.mrb[0].mxu0
        %v7224 = vadd.f32 %v7181, %v7223
        %v7225 = vpop.f32.mrb[0].mxu0
        %v7226 = vadd.f32 %v7183, %v7225
        %7227 = vdwg.mxu0
        %7228 = vmatprep.subr.bf16.mxu0 %v5104
        %7229 = vmatpush1.bf16.msra.mxu0 %v5103
        %7230 = vmatprep.subr.bf16.mxu0 %v5106
        %7231 = vmatpush1.bf16.msra.mxu0 %v5105
        %7232 = vmatprep.subr.bf16.mxu0 %v5108
        %7233 = vmatpush1.bf16.msra.mxu0 %v5107
        %7234 = vmatprep.subr.bf16.mxu0 %v5110
        %7235 = vmatpush1.bf16.msra.mxu0 %v5109
        %7236 = vmatprep.subr.bf16.mxu0 %v5112
        %7237 = vmatpush1.bf16.msra.mxu0 %v5111
        %7238 = vmatprep.subr.bf16.mxu0 %v5114
        %7239 = vmatpush1.bf16.msra.mxu0 %v5113
        %7240 = vmatprep.subr.bf16.mxu0 %v5116
        %7241 = vmatpush1.bf16.msra.mxu0 %v5115
        %7242 = vmatprep.subr.bf16.mxu0 %v5118
        %7243 = vmatpush1.bf16.msra.mxu0 %v5117
        %7244 = vmatprep.subr.bf16.mxu0 %v5120
        %7245 = vmatpush1.bf16.msra.mxu0 %v5119
        %7246 = vmatprep.subr.bf16.mxu0 %v5122
        %7247 = vmatpush1.bf16.msra.mxu0 %v5121
        %7248 = vmatprep.subr.bf16.mxu0 %v5124
        %7249 = vmatpush1.bf16.msra.mxu0 %v5123
        %7250 = vmatprep.subr.bf16.mxu0 %v5126
        %7251 = vmatpush1.bf16.msra.mxu0 %v5125
        %7252 = vmatprep.subr.bf16.mxu0 %v5128
        %7253 = vmatpush1.bf16.msra.mxu0 %v5127
        %7254 = vmatprep.subr.bf16.mxu0 %v5130
        %7255 = vmatpush1.bf16.msra.mxu0 %v5129
        %7256 = vmatprep.subr.bf16.mxu0 %v5132
        %7257 = vmatpush1.bf16.msra.mxu0 %v5131
        %7258 = vmatprep.subr.bf16.mxu0 %v5134
        %7259 = vmatpush1.bf16.msra.mxu0 %v5133
        %7260 = vmatprep.mubr.bf16.mxu0 %v1694
        %7261 = vmatmul.mubr.bf16.gmra.mrb[0].mxu0 %v1693
        %v7262 = vpop.f32.mrb[0].mxu0
        %v7263 = vadd.f32 %v7220, %v7262
        %v7264 = vpop.f32.mrb[0].mxu0
        %v7265 = vadd.f32 %v7222, %v7264
        %v7266 = vpop.f32.mrb[0].mxu0
        %v7267 = vadd.f32 %v7224, %v7266
        %v7268 = vpop.f32.mrb[0].mxu0
        %v7269 = vadd.f32 %v7226, %v7268
        %7270 = vdwg.mxu0
        %7271 = vmatprep.subr.bf16.mxu0 %v5136
        %7272 = vmatpush1.bf16.msra.mxu0 %v5135
        %7273 = vmatprep.subr.bf16.mxu0 %v5138
        %7274 = vmatpush1.bf16.msra.mxu0 %v5137
        %7275 = vmatprep.subr.bf16.mxu0 %v5140
        %7276 = vmatpush1.bf16.msra.mxu0 %v5139
        %7277 = vmatprep.subr.bf16.mxu0 %v5142
        %7278 = vmatpush1.bf16.msra.mxu0 %v5141
        %7279 = vmatprep.subr.bf16.mxu0 %v5144
        %7280 = vmatpush1.bf16.msra.mxu0 %v5143
        %7281 = vmatprep.subr.bf16.mxu0 %v5146
        %7282 = vmatpush1.bf16.msra.mxu0 %v5145
        %7283 = vmatprep.subr.bf16.mxu0 %v5148
        %7284 = vmatpush1.bf16.msra.mxu0 %v5147
        %7285 = vmatprep.subr.bf16.mxu0 %v5150
        %7286 = vmatpush1.bf16.msra.mxu0 %v5149
        %7287 = vmatprep.subr.bf16.mxu0 %v5152
        %7288 = vmatpush1.bf16.msra.mxu0 %v5151
        %7289 = vmatprep.subr.bf16.mxu0 %v5154
        %7290 = vmatpush1.bf16.msra.mxu0 %v5153
        %7291 = vmatprep.subr.bf16.mxu0 %v5156
        %7292 = vmatpush1.bf16.msra.mxu0 %v5155
        %7293 = vmatprep.subr.bf16.mxu0 %v5158
        %7294 = vmatpush1.bf16.msra.mxu0 %v5157
        %7295 = vmatprep.subr.bf16.mxu0 %v5160
        %7296 = vmatpush1.bf16.msra.mxu0 %v5159
        %7297 = vmatprep.subr.bf16.mxu0 %v5162
        %7298 = vmatpush1.bf16.msra.mxu0 %v5161
        %7299 = vmatprep.subr.bf16.mxu0 %v5164
        %7300 = vmatpush1.bf16.msra.mxu0 %v5163
        %7301 = vmatprep.subr.bf16.mxu0 %v5166
        %7302 = vmatpush1.bf16.msra.mxu0 %v5165
        %7303 = vmatprep.mubr.bf16.mxu0 %v1696
        %7304 = vmatmul.mubr.bf16.gmra.mrb[0].mxu0 %v1695
        %v7305 = vpop.f32.mrb[0].mxu0
        %v7306 = vadd.f32 %v7263, %v7305
        %v7307 = vpop.f32.mrb[0].mxu0
        %v7308 = vadd.f32 %v7265, %v7307
        %v7309 = vpop.f32.mrb[0].mxu0
        %v7310 = vadd.f32 %v7267, %v7309
        %v7311 = vpop.f32.mrb[0].mxu0
        %v7312 = vadd.f32 %v7269, %v7311
        %7313 = vdwg.mxu0
        %7314 = vmatprep.subr.bf16.mxu0 %v5168
        %7315 = vmatpush1.bf16.msra.mxu0 %v5167
        %7316 = vmatprep.subr.bf16.mxu0 %v5170
        %7317 = vmatpush1.bf16.msra.mxu0 %v5169
        %7318 = vmatprep.subr.bf16.mxu0 %v5172
        %7319 = vmatpush1.bf16.msra.mxu0 %v5171
        %7320 = vmatprep.subr.bf16.mxu0 %v5174
        %7321 = vmatpush1.bf16.msra.mxu0 %v5173
        %7322 = vmatprep.subr.bf16.mxu0 %v5176
        %7323 = vmatpush1.bf16.msra.mxu0 %v5175
        %7324 = vmatprep.subr.bf16.mxu0 %v5178
        %7325 = vmatpush1.bf16.msra.mxu0 %v5177
        %7326 = vmatprep.subr.bf16.mxu0 %v5180
        %7327 = vmatpush1.bf16.msra.mxu0 %v5179
        %7328 = vmatprep.subr.bf16.mxu0 %v5182
        %7329 = vmatpush1.bf16.msra.mxu0 %v5181
        %7330 = vmatprep.subr.bf16.mxu0 %v5184
        %7331 = vmatpush1.bf16.msra.mxu0 %v5183
        %7332 = vmatprep.subr.bf16.mxu0 %v5186
        %7333 = vmatpush1.bf16.msra.mxu0 %v5185
        %7334 = vmatprep.subr.bf16.mxu0 %v5188
        %7335 = vmatpush1.bf16.msra.mxu0 %v5187
        %7336 = vmatprep.subr.bf16.mxu0 %v5190
        %7337 = vmatpush1.bf16.msra.mxu0 %v5189
        %7338 = vmatprep.subr.bf16.mxu0 %v5192
        %7339 = vmatpush1.bf16.msra.mxu0 %v5191
        %7340 = vmatprep.subr.bf16.mxu0 %v5194
        %7341 = vmatpush1.bf16.msra.mxu0 %v5193
        %7342 = vmatprep.subr.bf16.mxu0 %v5196
        %7343 = vmatpush1.bf16.msra.mxu0 %v5195
        %7344 = vmatprep.subr.bf16.mxu0 %v5198
        %7345 = vmatpush1.bf16.msra.mxu0 %v5197
        %7346 = vmatprep.mubr.bf16.mxu0 %v1698
        %7347 = vmatmul.mubr.bf16.gmra.mrb[0].mxu0 %v1697
        %v7348 = vpop.f32.mrb[0].mxu0
        %v7349 = vadd.f32 %v7306, %v7348
        %v7350 = vpop.f32.mrb[0].mxu0
        %v7351 = vadd.f32 %v7308, %v7350
        %v7352 = vpop.f32.mrb[0].mxu0
        %v7353 = vadd.f32 %v7310, %v7352
        %v7354 = vpop.f32.mrb[0].mxu0
        %v7355 = vadd.f32 %v7312, %v7354
        %7356 = vdwg.mxu0
        %7357 = vmatprep.subr.bf16.mxu0 %v5200
        %7358 = vmatpush1.bf16.msra.mxu0 %v5199
        %7359 = vmatprep.subr.bf16.mxu0 %v5202
        %7360 = vmatpush1.bf16.msra.mxu0 %v5201
        %7361 = vmatprep.subr.bf16.mxu0 %v5204
        %7362 = vmatpush1.bf16.msra.mxu0 %v5203
        %7363 = vmatprep.subr.bf16.mxu0 %v5206
        %7364 = vmatpush1.bf16.msra.mxu0 %v5205
        %7365 = vmatprep.subr.bf16.mxu0 %v5208
        %7366 = vmatpush1.bf16.msra.mxu0 %v5207
        %7367 = vmatprep.subr.bf16.mxu0 %v5210
        %7368 = vmatpush1.bf16.msra.mxu0 %v5209
        %7369 = vmatprep.subr.bf16.mxu0 %v5212
        %7370 = vmatpush1.bf16.msra.mxu0 %v5211
        %7371 = vmatprep.subr.bf16.mxu0 %v5214
        %7372 = vmatpush1.bf16.msra.mxu0 %v5213
        %7373 = vmatprep.subr.bf16.mxu0 %v5216
        %7374 = vmatpush1.bf16.msra.mxu0 %v5215
        %7375 = vmatprep.subr.bf16.mxu0 %v5218
        %7376 = vmatpush1.bf16.msra.mxu0 %v5217
        %7377 = vmatprep.subr.bf16.mxu0 %v5220
        %7378 = vmatpush1.bf16.msra.mxu0 %v5219
        %7379 = vmatprep.subr.bf16.mxu0 %v5222
        %7380 = vmatpush1.bf16.msra.mxu0 %v5221
        %7381 = vmatprep.subr.bf16.mxu0 %v5224
        %7382 = vmatpush1.bf16.msra.mxu0 %v5223
        %7383 = vmatprep.subr.bf16.mxu0 %v5226
        %7384 = vmatpush1.bf16.msra.mxu0 %v5225
        %7385 = vmatprep.subr.bf16.mxu0 %v5228
        %7386 = vmatpush1.bf16.msra.mxu0 %v5227
        %7387 = vmatprep.subr.bf16.mxu0 %v5230
        %7388 = vmatpush1.bf16.msra.mxu0 %v5229
        %7389 = vmatprep.mubr.bf16.mxu0 %v1700
        %7390 = vmatmul.mubr.bf16.gmra.mrb[0].mxu0 %v1699
        %v7391 = vpop.f32.mrb[0].mxu0
        %v7392 = vadd.f32 %v7349, %v7391
        %v7393 = vpop.f32.mrb[0].mxu0
        %v7394 = vadd.f32 %v7351, %v7393
        %v7395 = vpop.f32.mrb[0].mxu0
        %v7396 = vadd.f32 %v7353, %v7395
        %v7397 = vpop.f32.mrb[0].mxu0
        %v7398 = vadd.f32 %v7355, %v7397
        %7399 = vdwg.mxu0
        %7400 = vmatprep.subr.bf16.mxu0 %v5232
        %7401 = vmatpush1.bf16.msra.mxu0 %v5231
        %7402 = vmatprep.subr.bf16.mxu0 %v5234
        %7403 = vmatpush1.bf16.msra.mxu0 %v5233
        %7404 = vmatprep.subr.bf16.mxu0 %v5236
        %7405 = vmatpush1.bf16.msra.mxu0 %v5235
        %7406 = vmatprep.subr.bf16.mxu0 %v5238
        %7407 = vmatpush1.bf16.msra.mxu0 %v5237
        %7408 = vmatprep.subr.bf16.mxu0 %v5240
        %7409 = vmatpush1.bf16.msra.mxu0 %v5239
        %7410 = vmatprep.subr.bf16.mxu0 %v5242
        %7411 = vmatpush1.bf16.msra.mxu0 %v5241
        %7412 = vmatprep.subr.bf16.mxu0 %v5244
        %7413 = vmatpush1.bf16.msra.mxu0 %v5243
        %7414 = vmatprep.subr.bf16.mxu0 %v5246
        %7415 = vmatpush1.bf16.msra.mxu0 %v5245
        %7416 = vmatprep.subr.bf16.mxu0 %v5248
        %7417 = vmatpush1.bf16.msra.mxu0 %v5247
        %7418 = vmatprep.subr.bf16.mxu0 %v5250
        %7419 = vmatpush1.bf16.msra.mxu0 %v5249
        %7420 = vmatprep.subr.bf16.mxu0 %v5252
        %7421 = vmatpush1.bf16.msra.mxu0 %v5251
        %7422 = vmatprep.subr.bf16.mxu0 %v5254
        %7423 = vmatpush1.bf16.msra.mxu0 %v5253
        %7424 = vmatprep.subr.bf16.mxu0 %v5256
        %7425 = vmatpush1.bf16.msra.mxu0 %v5255
        %7426 = vmatprep.subr.bf16.mxu0 %v5258
        %7427 = vmatpush1.bf16.msra.mxu0 %v5257
        %7428 = vmatprep.subr.bf16.mxu0 %v5260
        %7429 = vmatpush1.bf16.msra.mxu0 %v5259
        %7430 = vmatprep.subr.bf16.mxu0 %v5262
        %7431 = vmatpush1.bf16.msra.mxu0 %v5261
        %7432 = vmatprep.mubr.bf16.mxu0 %v1702
        %7433 = vmatmul.mubr.bf16.gmra.mrb[0].mxu0 %v1701
        %v7434 = vpop.f32.mrb[0].mxu0
        %v7435 = vadd.f32 %v7392, %v7434
        %v7436 = vpop.f32.mrb[0].mxu0
        %v7437 = vadd.f32 %v7394, %v7436
        %v7438 = vpop.f32.mrb[0].mxu0
        %v7439 = vadd.f32 %v7396, %v7438
        %v7440 = vpop.f32.mrb[0].mxu0
        %v7441 = vadd.f32 %v7398, %v7440
        %7442 = vdwg.mxu0
        %7443 = vmatprep.subr.bf16.mxu0 %v5264
        %7444 = vmatpush1.bf16.msra.mxu0 %v5263
        %7445 = vmatprep.subr.bf16.mxu0 %v5266
        %7446 = vmatpush1.bf16.msra.mxu0 %v5265
        %7447 = vmatprep.subr.bf16.mxu0 %v5268
        %7448 = vmatpush1.bf16.msra.mxu0 %v5267
        %7449 = vmatprep.subr.bf16.mxu0 %v5270
        %7450 = vmatpush1.bf16.msra.mxu0 %v5269
        %7451 = vmatprep.subr.bf16.mxu0 %v5272
        %7452 = vmatpush1.bf16.msra.mxu0 %v5271
        %7453 = vmatprep.subr.bf16.mxu0 %v5274
        %7454 = vmatpush1.bf16.msra.mxu0 %v5273
        %7455 = vmatprep.subr.bf16.mxu0 %v5276
        %7456 = vmatpush1.bf16.msra.mxu0 %v5275
        %7457 = vmatprep.subr.bf16.mxu0 %v5278
        %7458 = vmatpush1.bf16.msra.mxu0 %v5277
        %7459 = vmatprep.subr.bf16.mxu0 %v5280
        %7460 = vmatpush1.bf16.msra.mxu0 %v5279
        %7461 = vmatprep.subr.bf16.mxu0 %v5282
        %7462 = vmatpush1.bf16.msra.mxu0 %v5281
        %7463 = vmatprep.subr.bf16.mxu0 %v5284
        %7464 = vmatpush1.bf16.msra.mxu0 %v5283
        %7465 = vmatprep.subr.bf16.mxu0 %v5286
        %7466 = vmatpush1.bf16.msra.mxu0 %v5285
        %7467 = vmatprep.subr.bf16.mxu0 %v5288
        %7468 = vmatpush1.bf16.msra.mxu0 %v5287
        %7469 = vmatprep.subr.bf16.mxu0 %v5290
        %7470 = vmatpush1.bf16.msra.mxu0 %v5289
        %7471 = vmatprep.subr.bf16.mxu0 %v5292
        %7472 = vmatpush1.bf16.msra.mxu0 %v5291
        %7473 = vmatprep.subr.bf16.mxu0 %v5294
        %7474 = vmatpush1.bf16.msra.mxu0 %v5293
        %7475 = vmatprep.mubr.bf16.mxu0 %v1704
        %7476 = vmatmul.mubr.bf16.gmra.mrb[0].mxu0 %v1703
        %v7477 = vpop.f32.mrb[0].mxu0
        %v7478 = vadd.f32 %v7435, %v7477
        %v7479 = vpop.f32.mrb[0].mxu0
        %v7480 = vadd.f32 %v7437, %v7479
        %v7481 = vpop.f32.mrb[0].mxu0
        %v7482 = vadd.f32 %v7439, %v7481
        %v7483 = vpop.f32.mrb[0].mxu0
        %v7484 = vadd.f32 %v7441, %v7483
        %7485 = vdwg.mxu0
        %7486 = vmatprep.subr.bf16.mxu0 %v5296
        %7487 = vmatpush1.bf16.msra.mxu0 %v5295
        %7488 = vmatprep.subr.bf16.mxu0 %v5298
        %7489 = vmatpush1.bf16.msra.mxu0 %v5297
        %7490 = vmatprep.subr.bf16.mxu0 %v5300
        %7491 = vmatpush1.bf16.msra.mxu0 %v5299
        %7492 = vmatprep.subr.bf16.mxu0 %v5302
        %7493 = vmatpush1.bf16.msra.mxu0 %v5301
        %7494 = vmatprep.subr.bf16.mxu0 %v5304
        %7495 = vmatpush1.bf16.msra.mxu0 %v5303
        %7496 = vmatprep.subr.bf16.mxu0 %v5306
        %7497 = vmatpush1.bf16.msra.mxu0 %v5305
        %7498 = vmatprep.subr.bf16.mxu0 %v5308
        %7499 = vmatpush1.bf16.msra.mxu0 %v5307
        %7500 = vmatprep.subr.bf16.mxu0 %v5310
        %7501 = vmatpush1.bf16.msra.mxu0 %v5309
        %7502 = vmatprep.subr.bf16.mxu0 %v5312
        %7503 = vmatpush1.bf16.msra.mxu0 %v5311
        %7504 = vmatprep.subr.bf16.mxu0 %v5314
        %7505 = vmatpush1.bf16.msra.mxu0 %v5313
        %7506 = vmatprep.subr.bf16.mxu0 %v5316
        %7507 = vmatpush1.bf16.msra.mxu0 %v5315
        %7508 = vmatprep.subr.bf16.mxu0 %v5318
        %7509 = vmatpush1.bf16.msra.mxu0 %v5317
        %7510 = vmatprep.subr.bf16.mxu0 %v5320
        %7511 = vmatpush1.bf16.msra.mxu0 %v5319
        %7512 = vmatprep.subr.bf16.mxu0 %v5322
        %7513 = vmatpush1.bf16.msra.mxu0 %v5321
        %7514 = vmatprep.subr.bf16.mxu0 %v5324
        %7515 = vmatpush1.bf16.msra.mxu0 %v5323
        %7516 = vmatprep.subr.bf16.mxu0 %v5326
        %7517 = vmatpush1.bf16.msra.mxu0 %v5325
        %7518 = vmatprep.mubr.bf16.mxu0 %v1706
        %7519 = vmatmul.mubr.bf16.gmra.mrb[0].mxu0 %v1705
        %v7520 = vpop.f32.mrb[0].mxu0
        %v7521 = vadd.f32 %v7478, %v7520
        %v7522 = vpop.f32.mrb[0].mxu0
        %v7523 = vadd.f32 %v7480, %v7522
        %v7524 = vpop.f32.mrb[0].mxu0
        %v7525 = vadd.f32 %v7482, %v7524
        %v7526 = vpop.f32.mrb[0].mxu0
        %v7527 = vadd.f32 %v7484, %v7526
        %7528 = vdwg.mxu0
        %7529 = vmatprep.subr.bf16.mxu0 %v5328
        %7530 = vmatpush1.bf16.msra.mxu0 %v5327
        %7531 = vmatprep.subr.bf16.mxu0 %v5330
        %7532 = vmatpush1.bf16.msra.mxu0 %v5329
        %7533 = vmatprep.subr.bf16.mxu0 %v5332
        %7534 = vmatpush1.bf16.msra.mxu0 %v5331
        %7535 = vmatprep.subr.bf16.mxu0 %v5334
        %7536 = vmatpush1.bf16.msra.mxu0 %v5333
        %7537 = vmatprep.subr.bf16.mxu0 %v5336
        %7538 = vmatpush1.bf16.msra.mxu0 %v5335
        %7539 = vmatprep.subr.bf16.mxu0 %v5338
        %7540 = vmatpush1.bf16.msra.mxu0 %v5337
        %7541 = vmatprep.subr.bf16.mxu0 %v5340
        %7542 = vmatpush1.bf16.msra.mxu0 %v5339
        %7543 = vmatprep.subr.bf16.mxu0 %v5342
        %7544 = vmatpush1.bf16.msra.mxu0 %v5341
        %7545 = vmatprep.subr.bf16.mxu0 %v5344
        %7546 = vmatpush1.bf16.msra.mxu0 %v5343
        %7547 = vmatprep.subr.bf16.mxu0 %v5346
        %7548 = vmatpush1.bf16.msra.mxu0 %v5345
        %7549 = vmatprep.subr.bf16.mxu0 %v5348
        %7550 = vmatpush1.bf16.msra.mxu0 %v5347
        %7551 = vmatprep.subr.bf16.mxu0 %v5350
        %7552 = vmatpush1.bf16.msra.mxu0 %v5349
        %7553 = vmatprep.subr.bf16.mxu0 %v5352
        %7554 = vmatpush1.bf16.msra.mxu0 %v5351
        %7555 = vmatprep.subr.bf16.mxu0 %v5354
        %7556 = vmatpush1.bf16.msra.mxu0 %v5353
        %7557 = vmatprep.subr.bf16.mxu0 %v5356
        %7558 = vmatpush1.bf16.msra.mxu0 %v5355
        %7559 = vmatprep.subr.bf16.mxu0 %v5358
        %7560 = vmatpush1.bf16.msra.mxu0 %v5357
        %7561 = vmatprep.mubr.bf16.mxu0 %v1708
        %7562 = vmatmul.mubr.bf16.gmra.mrb[0].mxu0 %v1707
        %v7563 = vpop.f32.mrb[0].mxu0
        %v7564 = vadd.f32 %v7521, %v7563
        %v7565 = vpop.f32.mrb[0].mxu0
        %v7566 = vadd.f32 %v7523, %v7565
        %v7567 = vpop.f32.mrb[0].mxu0
        %v7568 = vadd.f32 %v7525, %v7567
        %v7569 = vpop.f32.mrb[0].mxu0
        %v7570 = vadd.f32 %v7527, %v7569
        %7571 = vdwg.mxu0
        %7572 = vmatprep.subr.bf16.mxu0 %v5360
        %7573 = vmatpush1.bf16.msra.mxu0 %v5359
        %7574 = vmatprep.subr.bf16.mxu0 %v5362
        %7575 = vmatpush1.bf16.msra.mxu0 %v5361
        %7576 = vmatprep.subr.bf16.mxu0 %v5364
        %7577 = vmatpush1.bf16.msra.mxu0 %v5363
        %7578 = vmatprep.subr.bf16.mxu0 %v5366
        %7579 = vmatpush1.bf16.msra.mxu0 %v5365
        %7580 = vmatprep.subr.bf16.mxu0 %v5368
        %7581 = vmatpush1.bf16.msra.mxu0 %v5367
        %7582 = vmatprep.subr.bf16.mxu0 %v5370
        %7583 = vmatpush1.bf16.msra.mxu0 %v5369
        %7584 = vmatprep.subr.bf16.mxu0 %v5372
        %7585 = vmatpush1.bf16.msra.mxu0 %v5371
        %7586 = vmatprep.subr.bf16.mxu0 %v5374
        %7587 = vmatpush1.bf16.msra.mxu0 %v5373
        %7588 = vmatprep.subr.bf16.mxu0 %v5376
        %7589 = vmatpush1.bf16.msra.mxu0 %v5375
        %7590 = vmatprep.subr.bf16.mxu0 %v5378
        %7591 = vmatpush1.bf16.msra.mxu0 %v5377
        %7592 = vmatprep.subr.bf16.mxu0 %v5380
        %7593 = vmatpush1.bf16.msra.mxu0 %v5379
        %7594 = vmatprep.subr.bf16.mxu0 %v5382
        %7595 = vmatpush1.bf16.msra.mxu0 %v5381
        %7596 = vmatprep.subr.bf16.mxu0 %v5384
        %7597 = vmatpush1.bf16.msra.mxu0 %v5383
        %7598 = vmatprep.subr.bf16.mxu0 %v5386
        %7599 = vmatpush1.bf16.msra.mxu0 %v5385
        %7600 = vmatprep.subr.bf16.mxu0 %v5388
        %7601 = vmatpush1.bf16.msra.mxu0 %v5387
        %7602 = vmatprep.subr.bf16.mxu0 %v5390
        %7603 = vmatpush1.bf16.msra.mxu0 %v5389
        %7604 = vmatprep.mubr.bf16.mxu0 %v1710
        %7605 = vmatmul.mubr.bf16.gmra.mrb[0].mxu0 %v1709
        %v7606 = vpop.f32.mrb[0].mxu0
        %v7607 = vadd.f32 %v7564, %v7606
        %v7608 = vpop.f32.mrb[0].mxu0
        %v7609 = vadd.f32 %v7566, %v7608
        %v7610 = vpop.f32.mrb[0].mxu0
        %v7611 = vadd.f32 %v7568, %v7610
        %v7612 = vpop.f32.mrb[0].mxu0
        %v7613 = vadd.f32 %v7570, %v7612
        %7614 = vdwg.mxu0
        %7615 = vmatprep.subr.bf16.mxu0 %v5392
        %7616 = vmatpush1.bf16.msra.mxu0 %v5391
        %7617 = vmatprep.subr.bf16.mxu0 %v5394
        %7618 = vmatpush1.bf16.msra.mxu0 %v5393
        %7619 = vmatprep.subr.bf16.mxu0 %v5396
        %7620 = vmatpush1.bf16.msra.mxu0 %v5395
        %7621 = vmatprep.subr.bf16.mxu0 %v5398
        %7622 = vmatpush1.bf16.msra.mxu0 %v5397
        %7623 = vmatprep.subr.bf16.mxu0 %v5400
        %7624 = vmatpush1.bf16.msra.mxu0 %v5399
        %7625 = vmatprep.subr.bf16.mxu0 %v5402
        %7626 = vmatpush1.bf16.msra.mxu0 %v5401
        %7627 = vmatprep.subr.bf16.mxu0 %v5404
        %7628 = vmatpush1.bf16.msra.mxu0 %v5403
        %7629 = vmatprep.subr.bf16.mxu0 %v5406
        %7630 = vmatpush1.bf16.msra.mxu0 %v5405
        %7631 = vmatprep.subr.bf16.mxu0 %v5408
        %7632 = vmatpush1.bf16.msra.mxu0 %v5407
        %7633 = vmatprep.subr.bf16.mxu0 %v5410
        %7634 = vmatpush1.bf16.msra.mxu0 %v5409
        %7635 = vmatprep.subr.bf16.mxu0 %v5412
        %7636 = vmatpush1.bf16.msra.mxu0 %v5411
        %7637 = vmatprep.subr.bf16.mxu0 %v5414
        %7638 = vmatpush1.bf16.msra.mxu0 %v5413
        %7639 = vmatprep.subr.bf16.mxu0 %v5416
        %7640 = vmatpush1.bf16.msra.mxu0 %v5415
        %7641 = vmatprep.subr.bf16.mxu0 %v5418
        %7642 = vmatpush1.bf16.msra.mxu0 %v5417
        %7643 = vmatprep.subr.bf16.mxu0 %v5420
        %7644 = vmatpush1.bf16.msra.mxu0 %v5419
        %7645 = vmatprep.subr.bf16.mxu0 %v5422
        %7646 = vmatpush1.bf16.msra.mxu0 %v5421
        %7647 = vmatprep.mubr.bf16.mxu0 %v1712
        %7648 = vmatmul.mubr.bf16.gmra.mrb[0].mxu0 %v1711
        %v7649 = vpop.f32.mrb[0].mxu0
        %v7650 = vadd.f32 %v7607, %v7649
        %v7651 = vpop.f32.mrb[0].mxu0
        %v7652 = vadd.f32 %v7609, %v7651
        %v7653 = vpop.f32.mrb[0].mxu0
        %v7654 = vadd.f32 %v7611, %v7653
        %v7655 = vpop.f32.mrb[0].mxu0
        %v7656 = vadd.f32 %v7613, %v7655
        %7657 = vdwg.mxu0
        %7658 = vmatprep.subr.bf16.mxu0 %v5424
        %7659 = vmatpush1.bf16.msra.mxu0 %v5423
        %7660 = vmatprep.subr.bf16.mxu0 %v5426
        %7661 = vmatpush1.bf16.msra.mxu0 %v5425
        %7662 = vmatprep.subr.bf16.mxu0 %v5428
        %7663 = vmatpush1.bf16.msra.mxu0 %v5427
        %7664 = vmatprep.subr.bf16.mxu0 %v5430
        %7665 = vmatpush1.bf16.msra.mxu0 %v5429
        %7666 = vmatprep.subr.bf16.mxu0 %v5432
        %7667 = vmatpush1.bf16.msra.mxu0 %v5431
        %7668 = vmatprep.subr.bf16.mxu0 %v5434
        %7669 = vmatpush1.bf16.msra.mxu0 %v5433
        %7670 = vmatprep.subr.bf16.mxu0 %v5436
        %7671 = vmatpush1.bf16.msra.mxu0 %v5435
        %7672 = vmatprep.subr.bf16.mxu0 %v5438
        %7673 = vmatpush1.bf16.msra.mxu0 %v5437
        %7674 = vmatprep.subr.bf16.mxu0 %v5440
        %7675 = vmatpush1.bf16.msra.mxu0 %v5439
        %7676 = vmatprep.subr.bf16.mxu0 %v5442
        %7677 = vmatpush1.bf16.msra.mxu0 %v5441
        %7678 = vmatprep.subr.bf16.mxu0 %v5444
        %7679 = vmatpush1.bf16.msra.mxu0 %v5443
        %7680 = vmatprep.subr.bf16.mxu0 %v5446
        %7681 = vmatpush1.bf16.msra.mxu0 %v5445
        %7682 = vmatprep.subr.bf16.mxu0 %v5448
        %7683 = vmatpush1.bf16.msra.mxu0 %v5447
        %7684 = vmatprep.subr.bf16.mxu0 %v5450
        %7685 = vmatpush1.bf16.msra.mxu0 %v5449
        %7686 = vmatprep.subr.bf16.mxu0 %v5452
        %7687 = vmatpush1.bf16.msra.mxu0 %v5451
        %7688 = vmatprep.subr.bf16.mxu0 %v5454
        %7689 = vmatpush1.bf16.msra.mxu0 %v5453
        %7690 = vmatprep.mubr.bf16.mxu0 %v1714
        %7691 = vmatmul.mubr.bf16.gmra.mrb[0].mxu0 %v1713
        %v7692 = vpop.f32.mrb[0].mxu0
        %v7693 = vadd.f32 %v7650, %v7692
        %v7694 = vpop.f32.mrb[0].mxu0
        %v7695 = vadd.f32 %v7652, %v7694
        %v7696 = vpop.f32.mrb[0].mxu0
        %v7697 = vadd.f32 %v7654, %v7696
        %v7698 = vpop.f32.mrb[0].mxu0
        %v7699 = vadd.f32 %v7656, %v7698
        %7700 = vdwg.mxu0
        %7701 = vmatprep.subr.bf16.mxu0 %v5456
        %7702 = vmatpush1.bf16.msra.mxu0 %v5455
        %7703 = vmatprep.subr.bf16.mxu0 %v5458
        %7704 = vmatpush1.bf16.msra.mxu0 %v5457
        %7705 = vmatprep.subr.bf16.mxu0 %v5460
        %7706 = vmatpush1.bf16.msra.mxu0 %v5459
        %7707 = vmatprep.subr.bf16.mxu0 %v5462
        %7708 = vmatpush1.bf16.msra.mxu0 %v5461
        %7709 = vmatprep.subr.bf16.mxu0 %v5464
        %7710 = vmatpush1.bf16.msra.mxu0 %v5463
        %7711 = vmatprep.subr.bf16.mxu0 %v5466
        %7712 = vmatpush1.bf16.msra.mxu0 %v5465
        %7713 = vmatprep.subr.bf16.mxu0 %v5468
        %7714 = vmatpush1.bf16.msra.mxu0 %v5467
        %7715 = vmatprep.subr.bf16.mxu0 %v5470
        %7716 = vmatpush1.bf16.msra.mxu0 %v5469
        %7717 = vmatprep.subr.bf16.mxu0 %v5472
        %7718 = vmatpush1.bf16.msra.mxu0 %v5471
        %7719 = vmatprep.subr.bf16.mxu0 %v5474
        %7720 = vmatpush1.bf16.msra.mxu0 %v5473
        %7721 = vmatprep.subr.bf16.mxu0 %v5476
        %7722 = vmatpush1.bf16.msra.mxu0 %v5475
        %7723 = vmatprep.subr.bf16.mxu0 %v5478
        %7724 = vmatpush1.bf16.msra.mxu0 %v5477
        %7725 = vmatprep.subr.bf16.mxu0 %v5480
        %7726 = vmatpush1.bf16.msra.mxu0 %v5479
        %7727 = vmatprep.subr.bf16.mxu0 %v5482
        %7728 = vmatpush1.bf16.msra.mxu0 %v5481
        %7729 = vmatprep.subr.bf16.mxu0 %v5484
        %7730 = vmatpush1.bf16.msra.mxu0 %v5483
        %7731 = vmatprep.subr.bf16.mxu0 %v5486
        %7732 = vmatpush1.bf16.msra.mxu0 %v5485
        %7733 = vmatprep.mubr.bf16.mxu0 %v1716
        %7734 = vmatmul.mubr.bf16.gmra.mrb[0].mxu0 %v1715
        %v7735 = vpop.f32.mrb[0].mxu0
        %v7736 = vadd.f32 %v7693, %v7735
        %v7737 = vpop.f32.mrb[0].mxu0
        %v7738 = vadd.f32 %v7695, %v7737
        %v7739 = vpop.f32.mrb[0].mxu0
        %v7740 = vadd.f32 %v7697, %v7739
        %v7741 = vpop.f32.mrb[0].mxu0
        %v7742 = vadd.f32 %v7699, %v7741
        %7743 = vdwg.mxu0
        %7744 = vmatprep.subr.bf16.mxu0 %v5488
        %7745 = vmatpush1.bf16.msra.mxu0 %v5487
        %7746 = vmatprep.subr.bf16.mxu0 %v5490
        %7747 = vmatpush1.bf16.msra.mxu0 %v5489
        %7748 = vmatprep.subr.bf16.mxu0 %v5492
        %7749 = vmatpush1.bf16.msra.mxu0 %v5491
        %7750 = vmatprep.subr.bf16.mxu0 %v5494
        %7751 = vmatpush1.bf16.msra.mxu0 %v5493
        %7752 = vmatprep.subr.bf16.mxu0 %v5496
        %7753 = vmatpush1.bf16.msra.mxu0 %v5495
        %7754 = vmatprep.subr.bf16.mxu0 %v5498
        %7755 = vmatpush1.bf16.msra.mxu0 %v5497
        %7756 = vmatprep.subr.bf16.mxu0 %v5500
        %7757 = vmatpush1.bf16.msra.mxu0 %v5499
        %7758 = vmatprep.subr.bf16.mxu0 %v5502
        %7759 = vmatpush1.bf16.msra.mxu0 %v5501
        %7760 = vmatprep.subr.bf16.mxu0 %v5504
        %7761 = vmatpush1.bf16.msra.mxu0 %v5503
        %7762 = vmatprep.subr.bf16.mxu0 %v5506
        %7763 = vmatpush1.bf16.msra.mxu0 %v5505
        %7764 = vmatprep.subr.bf16.mxu0 %v5508
        %7765 = vmatpush1.bf16.msra.mxu0 %v5507
        %7766 = vmatprep.subr.bf16.mxu0 %v5510
        %7767 = vmatpush1.bf16.msra.mxu0 %v5509
        %7768 = vmatprep.subr.bf16.mxu0 %v5512
        %7769 = vmatpush1.bf16.msra.mxu0 %v5511
        %7770 = vmatprep.subr.bf16.mxu0 %v5514
        %7771 = vmatpush1.bf16.msra.mxu0 %v5513
        %7772 = vmatprep.subr.bf16.mxu0 %v5516
        %7773 = vmatpush1.bf16.msra.mxu0 %v5515
        %7774 = vmatprep.subr.bf16.mxu0 %v5518
        %7775 = vmatpush1.bf16.msra.mxu0 %v5517
        %7776 = vmatprep.mubr.bf16.mxu0 %v1718
        %7777 = vmatmul.mubr.bf16.gmra.mrb[0].mxu0 %v1717
        %v7778 = vpop.f32.mrb[0].mxu0
        %v7779 = vadd.f32 %v7736, %v7778
        %v7780 = vpop.f32.mrb[0].mxu0
        %v7781 = vadd.f32 %v7738, %v7780
        %v7782 = vpop.f32.mrb[0].mxu0
        %v7783 = vadd.f32 %v7740, %v7782
        %v7784 = vpop.f32.mrb[0].mxu0
        %v7785 = vadd.f32 %v7742, %v7784
        %7786 = vdwg.mxu0
        %7787 = vmatprep.subr.bf16.mxu0 %v5520
        %7788 = vmatpush1.bf16.msra.mxu0 %v5519
        %7789 = vmatprep.subr.bf16.mxu0 %v5522
        %7790 = vmatpush1.bf16.msra.mxu0 %v5521
        %7791 = vmatprep.subr.bf16.mxu0 %v5524
        %7792 = vmatpush1.bf16.msra.mxu0 %v5523
        %7793 = vmatprep.subr.bf16.mxu0 %v5526
        %7794 = vmatpush1.bf16.msra.mxu0 %v5525
        %7795 = vmatprep.subr.bf16.mxu0 %v5528
        %7796 = vmatpush1.bf16.msra.mxu0 %v5527
        %7797 = vmatprep.subr.bf16.mxu0 %v5530
        %7798 = vmatpush1.bf16.msra.mxu0 %v5529
        %7799 = vmatprep.subr.bf16.mxu0 %v5532
        %7800 = vmatpush1.bf16.msra.mxu0 %v5531
        %7801 = vmatprep.subr.bf16.mxu0 %v5534
        %7802 = vmatpush1.bf16.msra.mxu0 %v5533
        %7803 = vmatprep.subr.bf16.mxu0 %v5536
        %7804 = vmatpush1.bf16.msra.mxu0 %v5535
        %7805 = vmatprep.subr.bf16.mxu0 %v5538
        %7806 = vmatpush1.bf16.msra.mxu0 %v5537
        %7807 = vmatprep.subr.bf16.mxu0 %v5540
        %7808 = vmatpush1.bf16.msra.mxu0 %v5539
        %7809 = vmatprep.subr.bf16.mxu0 %v5542
        %7810 = vmatpush1.bf16.msra.mxu0 %v5541
        %7811 = vmatprep.subr.bf16.mxu0 %v5544
        %7812 = vmatpush1.bf16.msra.mxu0 %v5543
        %7813 = vmatprep.subr.bf16.mxu0 %v5546
        %7814 = vmatpush1.bf16.msra.mxu0 %v5545
        %7815 = vmatprep.subr.bf16.mxu0 %v5548
        %7816 = vmatpush1.bf16.msra.mxu0 %v5547
        %7817 = vmatprep.subr.bf16.mxu0 %v5550
        %7818 = vmatpush1.bf16.msra.mxu0 %v5549
        %7819 = vmatprep.mubr.bf16.mxu0 %v1720
        %7820 = vmatmul.mubr.bf16.gmra.mrb[0].mxu0 %v1719
        %v7821 = vpop.f32.mrb[0].mxu0
        %v7822 = vadd.f32 %v7779, %v7821
        %v7823 = vpop.f32.mrb[0].mxu0
        %v7824 = vadd.f32 %v7781, %v7823
        %v7825 = vpop.f32.mrb[0].mxu0
        %v7826 = vadd.f32 %v7783, %v7825
        %v7827 = vpop.f32.mrb[0].mxu0
        %v7828 = vadd.f32 %v7785, %v7827
        %7829 = vdwg.mxu0
        %7830 = vmatprep.subr.bf16.mxu0 %v5552
        %7831 = vmatpush1.bf16.msra.mxu0 %v5551
        %7832 = vmatprep.subr.bf16.mxu0 %v5554
        %7833 = vmatpush1.bf16.msra.mxu0 %v5553
        %7834 = vmatprep.subr.bf16.mxu0 %v5556
        %7835 = vmatpush1.bf16.msra.mxu0 %v5555
        %7836 = vmatprep.subr.bf16.mxu0 %v5558
        %7837 = vmatpush1.bf16.msra.mxu0 %v5557
        %7838 = vmatprep.subr.bf16.mxu0 %v5560
        %7839 = vmatpush1.bf16.msra.mxu0 %v5559
        %7840 = vmatprep.subr.bf16.mxu0 %v5562
        %7841 = vmatpush1.bf16.msra.mxu0 %v5561
        %7842 = vmatprep.subr.bf16.mxu0 %v5564
        %7843 = vmatpush1.bf16.msra.mxu0 %v5563
        %7844 = vmatprep.subr.bf16.mxu0 %v5566
        %7845 = vmatpush1.bf16.msra.mxu0 %v5565
        %7846 = vmatprep.subr.bf16.mxu0 %v5568
        %7847 = vmatpush1.bf16.msra.mxu0 %v5567
        %7848 = vmatprep.subr.bf16.mxu0 %v5570
        %7849 = vmatpush1.bf16.msra.mxu0 %v5569
        %7850 = vmatprep.subr.bf16.mxu0 %v5572
        %7851 = vmatpush1.bf16.msra.mxu0 %v5571
        %7852 = vmatprep.subr.bf16.mxu0 %v5574
        %7853 = vmatpush1.bf16.msra.mxu0 %v5573
        %7854 = vmatprep.subr.bf16.mxu0 %v5576
        %7855 = vmatpush1.bf16.msra.mxu0 %v5575
        %7856 = vmatprep.subr.bf16.mxu0 %v5578
        %7857 = vmatpush1.bf16.msra.mxu0 %v5577
        %7858 = vmatprep.subr.bf16.mxu0 %v5580
        %7859 = vmatpush1.bf16.msra.mxu0 %v5579
        %7860 = vmatprep.subr.bf16.mxu0 %v5582
        %7861 = vmatpush1.bf16.msra.mxu0 %v5581
        %7862 = vmatprep.mubr.bf16.mxu0 %v1722
        %7863 = vmatmul.mubr.bf16.gmra.mrb[0].mxu0 %v1721
        %v7864 = vpop.f32.mrb[0].mxu0
        %v7865 = vadd.f32 %v7822, %v7864
        %v7866 = vpop.f32.mrb[0].mxu0
        %v7867 = vadd.f32 %v7824, %v7866
        %v7868 = vpop.f32.mrb[0].mxu0
        %v7869 = vadd.f32 %v7826, %v7868
        %v7870 = vpop.f32.mrb[0].mxu0
        %v7871 = vadd.f32 %v7828, %v7870
        %7872 = vdwg.mxu0
        %7873 = vmatprep.subr.bf16.mxu0 %v5584
        %7874 = vmatpush1.bf16.msra.mxu0 %v5583
        %7875 = vmatprep.subr.bf16.mxu0 %v5586
        %7876 = vmatpush1.bf16.msra.mxu0 %v5585
        %7877 = vmatprep.subr.bf16.mxu0 %v5588
        %7878 = vmatpush1.bf16.msra.mxu0 %v5587
        %7879 = vmatprep.subr.bf16.mxu0 %v5590
        %7880 = vmatpush1.bf16.msra.mxu0 %v5589
        %7881 = vmatprep.subr.bf16.mxu0 %v5592
        %7882 = vmatpush1.bf16.msra.mxu0 %v5591
        %7883 = vmatprep.subr.bf16.mxu0 %v5594
        %7884 = vmatpush1.bf16.msra.mxu0 %v5593
        %7885 = vmatprep.subr.bf16.mxu0 %v5596
        %7886 = vmatpush1.bf16.msra.mxu0 %v5595
        %7887 = vmatprep.subr.bf16.mxu0 %v5598
        %7888 = vmatpush1.bf16.msra.mxu0 %v5597
        %7889 = vmatprep.subr.bf16.mxu0 %v5600
        %7890 = vmatpush1.bf16.msra.mxu0 %v5599
        %7891 = vmatprep.subr.bf16.mxu0 %v5602
        %7892 = vmatpush1.bf16.msra.mxu0 %v5601
        %7893 = vmatprep.subr.bf16.mxu0 %v5604
        %7894 = vmatpush1.bf16.msra.mxu0 %v5603
        %7895 = vmatprep.subr.bf16.mxu0 %v5606
        %7896 = vmatpush1.bf16.msra.mxu0 %v5605
        %7897 = vmatprep.subr.bf16.mxu0 %v5608
        %7898 = vmatpush1.bf16.msra.mxu0 %v5607
        %7899 = vmatprep.subr.bf16.mxu0 %v5610
        %7900 = vmatpush1.bf16.msra.mxu0 %v5609
        %7901 = vmatprep.subr.bf16.mxu0 %v5612
        %7902 = vmatpush1.bf16.msra.mxu0 %v5611
        %7903 = vmatprep.subr.bf16.mxu0 %v5614
        %7904 = vmatpush1.bf16.msra.mxu0 %v5613
        %7905 = vmatprep.mubr.bf16.mxu0 %v1724
        %7906 = vmatmul.mubr.bf16.gmra.mrb[0].mxu0 %v1723
        %v7907 = vpop.f32.mrb[0].mxu0
        %v7908 = vadd.f32 %v7865, %v7907
        %v7909 = vpop.f32.mrb[0].mxu0
        %v7910 = vadd.f32 %v7867, %v7909
        %v7911 = vpop.f32.mrb[0].mxu0
        %v7912 = vadd.f32 %v7869, %v7911
        %v7913 = vpop.f32.mrb[0].mxu0
        %v7914 = vadd.f32 %v7871, %v7913
        %7915 = vdwg.mxu0
        %7916 = vmatprep.subr.bf16.mxu0 %v5616
        %7917 = vmatpush1.bf16.msra.mxu0 %v5615
        %7918 = vmatprep.subr.bf16.mxu0 %v5618
        %7919 = vmatpush1.bf16.msra.mxu0 %v5617
        %7920 = vmatprep.subr.bf16.mxu0 %v5620
        %7921 = vmatpush1.bf16.msra.mxu0 %v5619
        %7922 = vmatprep.subr.bf16.mxu0 %v5622
        %7923 = vmatpush1.bf16.msra.mxu0 %v5621
        %7924 = vmatprep.subr.bf16.mxu0 %v5624
        %7925 = vmatpush1.bf16.msra.mxu0 %v5623
        %7926 = vmatprep.subr.bf16.mxu0 %v5626
        %7927 = vmatpush1.bf16.msra.mxu0 %v5625
        %7928 = vmatprep.subr.bf16.mxu0 %v5628
        %7929 = vmatpush1.bf16.msra.mxu0 %v5627
        %7930 = vmatprep.subr.bf16.mxu0 %v5630
        %7931 = vmatpush1.bf16.msra.mxu0 %v5629
        %7932 = vmatprep.subr.bf16.mxu0 %v5632
        %7933 = vmatpush1.bf16.msra.mxu0 %v5631
        %7934 = vmatprep.subr.bf16.mxu0 %v5634
        %7935 = vmatpush1.bf16.msra.mxu0 %v5633
        %7936 = vmatprep.subr.bf16.mxu0 %v5636
        %7937 = vmatpush1.bf16.msra.mxu0 %v5635
        %7938 = vmatprep.subr.bf16.mxu0 %v5638
        %7939 = vmatpush1.bf16.msra.mxu0 %v5637
        %7940 = vmatprep.subr.bf16.mxu0 %v5640
        %7941 = vmatpush1.bf16.msra.mxu0 %v5639
        %7942 = vmatprep.subr.bf16.mxu0 %v5642
        %7943 = vmatpush1.bf16.msra.mxu0 %v5641
        %7944 = vmatprep.subr.bf16.mxu0 %v5644
        %7945 = vmatpush1.bf16.msra.mxu0 %v5643
        %7946 = vmatprep.subr.bf16.mxu0 %v5646
        %7947 = vmatpush1.bf16.msra.mxu0 %v5645
        %7948 = vmatprep.mubr.bf16.mxu0 %v1726
        %7949 = vmatmul.mubr.bf16.gmra.mrb[0].mxu0 %v1725
        %v7950 = vpop.f32.mrb[0].mxu0
        %v7951 = vadd.f32 %v7908, %v7950
        %v7952 = vpop.f32.mrb[0].mxu0
        %v7953 = vadd.f32 %v7910, %v7952
        %v7954 = vpop.f32.mrb[0].mxu0
        %v7955 = vadd.f32 %v7912, %v7954
        %v7956 = vpop.f32.mrb[0].mxu0
        %v7957 = vadd.f32 %v7914, %v7956
        %7958 = vdwg.mxu0
        %7959 = vmatprep.subr.bf16.mxu0 %v5648
        %7960 = vmatpush1.bf16.msra.mxu0 %v5647
        %7961 = vmatprep.subr.bf16.mxu0 %v5650
        %7962 = vmatpush1.bf16.msra.mxu0 %v5649
        %7963 = vmatprep.subr.bf16.mxu0 %v5652
        %7964 = vmatpush1.bf16.msra.mxu0 %v5651
        %7965 = vmatprep.subr.bf16.mxu0 %v5654
        %7966 = vmatpush1.bf16.msra.mxu0 %v5653
        %7967 = vmatprep.subr.bf16.mxu0 %v5656
        %7968 = vmatpush1.bf16.msra.mxu0 %v5655
        %7969 = vmatprep.subr.bf16.mxu0 %v5658
        %7970 = vmatpush1.bf16.msra.mxu0 %v5657
        %7971 = vmatprep.subr.bf16.mxu0 %v5660
        %7972 = vmatpush1.bf16.msra.mxu0 %v5659
        %7973 = vmatprep.subr.bf16.mxu0 %v5662
        %7974 = vmatpush1.bf16.msra.mxu0 %v5661
        %7975 = vmatprep.subr.bf16.mxu0 %v5664
        %7976 = vmatpush1.bf16.msra.mxu0 %v5663
        %7977 = vmatprep.subr.bf16.mxu0 %v5666
        %7978 = vmatpush1.bf16.msra.mxu0 %v5665
        %7979 = vmatprep.subr.bf16.mxu0 %v5668
        %7980 = vmatpush1.bf16.msra.mxu0 %v5667
        %7981 = vmatprep.subr.bf16.mxu0 %v5670
        %7982 = vmatpush1.bf16.msra.mxu0 %v5669
        %7983 = vmatprep.subr.bf16.mxu0 %v5672
        %7984 = vmatpush1.bf16.msra.mxu0 %v5671
        %7985 = vmatprep.subr.bf16.mxu0 %v5674
        %7986 = vmatpush1.bf16.msra.mxu0 %v5673
        %7987 = vmatprep.subr.bf16.mxu0 %v5676
        %7988 = vmatpush1.bf16.msra.mxu0 %v5675
        %7989 = vmatprep.subr.bf16.mxu0 %v5678
        %7990 = vmatpush1.bf16.msra.mxu0 %v5677
        %7991 = vmatprep.mubr.bf16.mxu0 %v1728
        %7992 = vmatmul.mubr.bf16.gmra.mrb[0].mxu0 %v1727
        %v7993 = vpop.f32.mrb[0].mxu0
        %v7994 = vadd.f32 %v7951, %v7993
        %v7995 = vpop.f32.mrb[0].mxu0
        %v7996 = vadd.f32 %v7953, %v7995
        %v7997 = vpop.f32.mrb[0].mxu0
        %v7998 = vadd.f32 %v7955, %v7997
        %v7999 = vpop.f32.mrb[0].mxu0
        %v8000 = vadd.f32 %v7957, %v7999
        %8001 = vdwg.mxu0
        %8002 = vmatprep.subr.bf16.mxu0 %v5680
        %8003 = vmatpush1.bf16.msra.mxu0 %v5679
        %8004 = vmatprep.subr.bf16.mxu0 %v5682
        %8005 = vmatpush1.bf16.msra.mxu0 %v5681
        %8006 = vmatprep.subr.bf16.mxu0 %v5684
        %8007 = vmatpush1.bf16.msra.mxu0 %v5683
        %8008 = vmatprep.subr.bf16.mxu0 %v5686
        %8009 = vmatpush1.bf16.msra.mxu0 %v5685
        %8010 = vmatprep.subr.bf16.mxu0 %v5688
        %8011 = vmatpush1.bf16.msra.mxu0 %v5687
        %8012 = vmatprep.subr.bf16.mxu0 %v5690
        %8013 = vmatpush1.bf16.msra.mxu0 %v5689
        %8014 = vmatprep.subr.bf16.mxu0 %v5692
        %8015 = vmatpush1.bf16.msra.mxu0 %v5691
        %8016 = vmatprep.subr.bf16.mxu0 %v5694
        %8017 = vmatpush1.bf16.msra.mxu0 %v5693
        %8018 = vmatprep.subr.bf16.mxu0 %v5696
        %8019 = vmatpush1.bf16.msra.mxu0 %v5695
        %8020 = vmatprep.subr.bf16.mxu0 %v5698
        %8021 = vmatpush1.bf16.msra.mxu0 %v5697
        %8022 = vmatprep.subr.bf16.mxu0 %v5700
        %8023 = vmatpush1.bf16.msra.mxu0 %v5699
        %8024 = vmatprep.subr.bf16.mxu0 %v5702
        %8025 = vmatpush1.bf16.msra.mxu0 %v5701
        %8026 = vmatprep.subr.bf16.mxu0 %v5704
        %8027 = vmatpush1.bf16.msra.mxu0 %v5703
        %8028 = vmatprep.subr.bf16.mxu0 %v5706
        %8029 = vmatpush1.bf16.msra.mxu0 %v5705
        %8030 = vmatprep.subr.bf16.mxu0 %v5708
        %8031 = vmatpush1.bf16.msra.mxu0 %v5707
        %8032 = vmatprep.subr.bf16.mxu0 %v5710
        %8033 = vmatpush1.bf16.msra.mxu0 %v5709
        %8034 = vmatprep.mubr.bf16.mxu0 %v1730
        %8035 = vmatmul.mubr.bf16.gmra.mrb[0].mxu0 %v1729
        %v8036 = vpop.f32.mrb[0].mxu0
        %v8037 = vadd.f32 %v7994, %v8036
        %v8038 = vpop.f32.mrb[0].mxu0
        %v8039 = vadd.f32 %v7996, %v8038
        %v8040 = vpop.f32.mrb[0].mxu0
        %v8041 = vadd.f32 %v7998, %v8040
        %v8042 = vpop.f32.mrb[0].mxu0
        %v8043 = vadd.f32 %v8000, %v8042
        %8044 = vdwg.mxu0
        %8045 = vmatprep.subr.bf16.mxu0 %v5712
        %8046 = vmatpush1.bf16.msra.mxu0 %v5711
        %8047 = vmatprep.subr.bf16.mxu0 %v5714
        %8048 = vmatpush1.bf16.msra.mxu0 %v5713
        %8049 = vmatprep.subr.bf16.mxu0 %v5716
        %8050 = vmatpush1.bf16.msra.mxu0 %v5715
        %8051 = vmatprep.subr.bf16.mxu0 %v5718
        %8052 = vmatpush1.bf16.msra.mxu0 %v5717
        %8053 = vmatprep.subr.bf16.mxu0 %v5720
        %8054 = vmatpush1.bf16.msra.mxu0 %v5719
        %8055 = vmatprep.subr.bf16.mxu0 %v5722
        %8056 = vmatpush1.bf16.msra.mxu0 %v5721
        %8057 = vmatprep.subr.bf16.mxu0 %v5724
        %8058 = vmatpush1.bf16.msra.mxu0 %v5723
        %8059 = vmatprep.subr.bf16.mxu0 %v5726
        %8060 = vmatpush1.bf16.msra.mxu0 %v5725
        %8061 = vmatprep.subr.bf16.mxu0 %v5728
        %8062 = vmatpush1.bf16.msra.mxu0 %v5727
        %8063 = vmatprep.subr.bf16.mxu0 %v5730
        %8064 = vmatpush1.bf16.msra.mxu0 %v5729
        %8065 = vmatprep.subr.bf16.mxu0 %v5732
        %8066 = vmatpush1.bf16.msra.mxu0 %v5731
        %8067 = vmatprep.subr.bf16.mxu0 %v5734
        %8068 = vmatpush1.bf16.msra.mxu0 %v5733
        %8069 = vmatprep.subr.bf16.mxu0 %v5736
        %8070 = vmatpush1.bf16.msra.mxu0 %v5735
        %8071 = vmatprep.subr.bf16.mxu0 %v5738
        %8072 = vmatpush1.bf16.msra.mxu0 %v5737
        %8073 = vmatprep.subr.bf16.mxu0 %v5740
        %8074 = vmatpush1.bf16.msra.mxu0 %v5739
        %8075 = vmatprep.subr.bf16.mxu0 %v5742
        %8076 = vmatpush1.bf16.msra.mxu0 %v5741
        %8077 = vmatprep.mubr.bf16.mxu0 %v1732
        %8078 = vmatmul.mubr.bf16.gmra.mrb[0].mxu0 %v1731
        %v8079 = vpop.f32.mrb[0].mxu0
        %v8080 = vadd.f32 %v8037, %v8079
        %v8081 = vpop.f32.mrb[0].mxu0
        %v8082 = vadd.f32 %v8039, %v8081
        %v8083 = vpop.f32.mrb[0].mxu0
        %v8084 = vadd.f32 %v8041, %v8083
        %v8085 = vpop.f32.mrb[0].mxu0
        %v8086 = vadd.f32 %v8043, %v8085
        %8087 = vdwg.mxu0
        %8088 = vmatprep.subr.bf16.mxu0 %v5744
        %8089 = vmatpush1.bf16.msra.mxu0 %v5743
        %8090 = vmatprep.subr.bf16.mxu0 %v5746
        %8091 = vmatpush1.bf16.msra.mxu0 %v5745
        %8092 = vmatprep.subr.bf16.mxu0 %v5748
        %8093 = vmatpush1.bf16.msra.mxu0 %v5747
        %8094 = vmatprep.subr.bf16.mxu0 %v5750
        %8095 = vmatpush1.bf16.msra.mxu0 %v5749
        %8096 = vmatprep.subr.bf16.mxu0 %v5752
        %8097 = vmatpush1.bf16.msra.mxu0 %v5751
        %8098 = vmatprep.subr.bf16.mxu0 %v5754
        %8099 = vmatpush1.bf16.msra.mxu0 %v5753
        %8100 = vmatprep.subr.bf16.mxu0 %v5756
        %8101 = vmatpush1.bf16.msra.mxu0 %v5755
        %8102 = vmatprep.subr.bf16.mxu0 %v5758
        %8103 = vmatpush1.bf16.msra.mxu0 %v5757
        %8104 = vmatprep.subr.bf16.mxu0 %v5760
        %8105 = vmatpush1.bf16.msra.mxu0 %v5759
        %8106 = vmatprep.subr.bf16.mxu0 %v5762
        %8107 = vmatpush1.bf16.msra.mxu0 %v5761
        %8108 = vmatprep.subr.bf16.mxu0 %v5764
        %8109 = vmatpush1.bf16.msra.mxu0 %v5763
        %8110 = vmatprep.subr.bf16.mxu0 %v5766
        %8111 = vmatpush1.bf16.msra.mxu0 %v5765
        %8112 = vmatprep.subr.bf16.mxu0 %v5768
        %8113 = vmatpush1.bf16.msra.mxu0 %v5767
        %8114 = vmatprep.subr.bf16.mxu0 %v5770
        %8115 = vmatpush1.bf16.msra.mxu0 %v5769
        %8116 = vmatprep.subr.bf16.mxu0 %v5772
        %8117 = vmatpush1.bf16.msra.mxu0 %v5771
        %8118 = vmatprep.subr.bf16.mxu0 %v5774
        %8119 = vmatpush1.bf16.msra.mxu0 %v5773
        %8120 = vmatprep.mubr.bf16.mxu0 %v1734
        %8121 = vmatmul.mubr.bf16.gmra.mrb[0].mxu0 %v1733
        %v8122 = vpop.f32.mrb[0].mxu0
        %v8123 = vadd.f32 %v8080, %v8122
        %v8124 = vpop.f32.mrb[0].mxu0
        %v8125 = vadd.f32 %v8082, %v8124
        %v8126 = vpop.f32.mrb[0].mxu0
        %v8127 = vadd.f32 %v8084, %v8126
        %v8128 = vpop.f32.mrb[0].mxu0
        %v8129 = vadd.f32 %v8086, %v8128
        %8130 = vdwg.mxu0
        %8131 = vmatprep.subr.bf16.mxu0 %v5776
        %8132 = vmatpush1.bf16.msra.mxu0 %v5775
        %8133 = vmatprep.subr.bf16.mxu0 %v5778
        %8134 = vmatpush1.bf16.msra.mxu0 %v5777
        %8135 = vmatprep.subr.bf16.mxu0 %v5780
        %8136 = vmatpush1.bf16.msra.mxu0 %v5779
        %8137 = vmatprep.subr.bf16.mxu0 %v5782
        %8138 = vmatpush1.bf16.msra.mxu0 %v5781
        %8139 = vmatprep.subr.bf16.mxu0 %v5784
        %8140 = vmatpush1.bf16.msra.mxu0 %v5783
        %8141 = vmatprep.subr.bf16.mxu0 %v5786
        %8142 = vmatpush1.bf16.msra.mxu0 %v5785
        %8143 = vmatprep.subr.bf16.mxu0 %v5788
        %8144 = vmatpush1.bf16.msra.mxu0 %v5787
        %8145 = vmatprep.subr.bf16.mxu0 %v5790
        %8146 = vmatpush1.bf16.msra.mxu0 %v5789
        %8147 = vmatprep.subr.bf16.mxu0 %v5792
        %8148 = vmatpush1.bf16.msra.mxu0 %v5791
        %8149 = vmatprep.subr.bf16.mxu0 %v5794
        %8150 = vmatpush1.bf16.msra.mxu0 %v5793
        %8151 = vmatprep.subr.bf16.mxu0 %v5796
        %8152 = vmatpush1.bf16.msra.mxu0 %v5795
        %8153 = vmatprep.subr.bf16.mxu0 %v5798
        %8154 = vmatpush1.bf16.msra.mxu0 %v5797
        %8155 = vmatprep.subr.bf16.mxu0 %v5800
        %8156 = vmatpush1.bf16.msra.mxu0 %v5799
        %8157 = vmatprep.subr.bf16.mxu0 %v5802
        %8158 = vmatpush1.bf16.msra.mxu0 %v5801
        %8159 = vmatprep.subr.bf16.mxu0 %v5804
        %8160 = vmatpush1.bf16.msra.mxu0 %v5803
        %8161 = vmatprep.subr.bf16.mxu0 %v5806
        %8162 = vmatpush1.bf16.msra.mxu0 %v5805
        %8163 = vmatprep.mubr.bf16.mxu0 %v1736
        %8164 = vmatmul.mubr.bf16.gmra.mrb[0].mxu0 %v1735
        %v8165 = vpop.f32.mrb[0].mxu0
        %v8166 = vadd.f32 %v8123, %v8165
        %v8167 = vpop.f32.mrb[0].mxu0
        %v8168 = vadd.f32 %v8125, %v8167
        %v8169 = vpop.f32.mrb[0].mxu0
        %v8170 = vadd.f32 %v8127, %v8169
        %v8171 = vpop.f32.mrb[0].mxu0
        %v8172 = vadd.f32 %v8129, %v8171
        %8173 = vdwg.mxu0
        %8174 = vmatprep.subr.bf16.mxu0 %v5808
        %8175 = vmatpush1.bf16.msra.mxu0 %v5807
        %8176 = vmatprep.subr.bf16.mxu0 %v5810
        %8177 = vmatpush1.bf16.msra.mxu0 %v5809
        %8178 = vmatprep.subr.bf16.mxu0 %v5812
        %8179 = vmatpush1.bf16.msra.mxu0 %v5811
        %8180 = vmatprep.subr.bf16.mxu0 %v5814
        %8181 = vmatpush1.bf16.msra.mxu0 %v5813
        %8182 = vmatprep.subr.bf16.mxu0 %v5816
        %8183 = vmatpush1.bf16.msra.mxu0 %v5815
        %8184 = vmatprep.subr.bf16.mxu0 %v5818
        %8185 = vmatpush1.bf16.msra.mxu0 %v5817
        %8186 = vmatprep.subr.bf16.mxu0 %v5820
        %8187 = vmatpush1.bf16.msra.mxu0 %v5819
        %8188 = vmatprep.subr.bf16.mxu0 %v5822
        %8189 = vmatpush1.bf16.msra.mxu0 %v5821
        %8190 = vmatprep.subr.bf16.mxu0 %v5824
        %8191 = vmatpush1.bf16.msra.mxu0 %v5823
        %8192 = vmatprep.subr.bf16.mxu0 %v5826
        %8193 = vmatpush1.bf16.msra.mxu0 %v5825
        %8194 = vmatprep.subr.bf16.mxu0 %v5828
        %8195 = vmatpush1.bf16.msra.mxu0 %v5827
        %8196 = vmatprep.subr.bf16.mxu0 %v5830
        %8197 = vmatpush1.bf16.msra.mxu0 %v5829
        %8198 = vmatprep.subr.bf16.mxu0 %v5832
        %8199 = vmatpush1.bf16.msra.mxu0 %v5831
        %8200 = vmatprep.subr.bf16.mxu0 %v5834
        %8201 = vmatpush1.bf16.msra.mxu0 %v5833
        %8202 = vmatprep.subr.bf16.mxu0 %v5836
        %8203 = vmatpush1.bf16.msra.mxu0 %v5835
        %8204 = vmatprep.subr.bf16.mxu0 %v5838
        %8205 = vmatpush1.bf16.msra.mxu0 %v5837
        %8206 = vmatprep.mubr.bf16.mxu0 %v1738
        %8207 = vmatmul.mubr.bf16.gmra.mrb[0].mxu0 %v1737
        %v8208 = vpop.f32.mrb[0].mxu0
        %v8209 = vadd.f32 %v8166, %v8208
        %v8210 = vpop.f32.mrb[0].mxu0
        %v8211 = vadd.f32 %v8168, %v8210
        %v8212 = vpop.f32.mrb[0].mxu0
        %v8213 = vadd.f32 %v8170, %v8212
        %v8214 = vpop.f32.mrb[0].mxu0
        %v8215 = vadd.f32 %v8172, %v8214
        %8216 = vdwg.mxu0
        %8217 = vmatprep.subr.bf16.mxu0 %v5840
        %8218 = vmatpush1.bf16.msra.mxu0 %v5839
        %8219 = vmatprep.subr.bf16.mxu0 %v5842
        %8220 = vmatpush1.bf16.msra.mxu0 %v5841
        %8221 = vmatprep.subr.bf16.mxu0 %v5844
        %8222 = vmatpush1.bf16.msra.mxu0 %v5843
        %8223 = vmatprep.subr.bf16.mxu0 %v5846
        %8224 = vmatpush1.bf16.msra.mxu0 %v5845
        %8225 = vmatprep.subr.bf16.mxu0 %v5848
        %8226 = vmatpush1.bf16.msra.mxu0 %v5847
        %8227 = vmatprep.subr.bf16.mxu0 %v5850
        %8228 = vmatpush1.bf16.msra.mxu0 %v5849
        %8229 = vmatprep.subr.bf16.mxu0 %v5852
        %8230 = vmatpush1.bf16.msra.mxu0 %v5851
        %8231 = vmatprep.subr.bf16.mxu0 %v5854
        %8232 = vmatpush1.bf16.msra.mxu0 %v5853
        %8233 = vmatprep.subr.bf16.mxu0 %v5856
        %8234 = vmatpush1.bf16.msra.mxu0 %v5855
        %8235 = vmatprep.subr.bf16.mxu0 %v5858
        %8236 = vmatpush1.bf16.msra.mxu0 %v5857
        %8237 = vmatprep.subr.bf16.mxu0 %v5860
        %8238 = vmatpush1.bf16.msra.mxu0 %v5859
        %8239 = vmatprep.subr.bf16.mxu0 %v5862
        %8240 = vmatpush1.bf16.msra.mxu0 %v5861
        %8241 = vmatprep.subr.bf16.mxu0 %v5864
        %8242 = vmatpush1.bf16.msra.mxu0 %v5863
        %8243 = vmatprep.subr.bf16.mxu0 %v5866
        %8244 = vmatpush1.bf16.msra.mxu0 %v5865
        %8245 = vmatprep.subr.bf16.mxu0 %v5868
        %8246 = vmatpush1.bf16.msra.mxu0 %v5867
        %8247 = vmatprep.subr.bf16.mxu0 %v5870
        %8248 = vmatpush1.bf16.msra.mxu0 %v5869
        %8249 = vmatprep.mubr.bf16.mxu0 %v1740
        %8250 = vmatmul.mubr.bf16.gmra.mrb[0].mxu0 %v1739
        %v8251 = vpop.f32.mrb[0].mxu0
        %v8252 = vadd.f32 %v8209, %v8251
        %v8253 = vpop.f32.mrb[0].mxu0
        %v8254 = vadd.f32 %v8211, %v8253
        %v8255 = vpop.f32.mrb[0].mxu0
        %v8256 = vadd.f32 %v8213, %v8255
        %v8257 = vpop.f32.mrb[0].mxu0
        %v8258 = vadd.f32 %v8215, %v8257
        %8259 = vdwg.mxu0
        %8260 = vmatprep.subr.bf16.mxu0 %v5872
        %8261 = vmatpush1.bf16.msra.mxu0 %v5871
        %8262 = vmatprep.subr.bf16.mxu0 %v5874
        %8263 = vmatpush1.bf16.msra.mxu0 %v5873
        %8264 = vmatprep.subr.bf16.mxu0 %v5876
        %8265 = vmatpush1.bf16.msra.mxu0 %v5875
        %8266 = vmatprep.subr.bf16.mxu0 %v5878
        %8267 = vmatpush1.bf16.msra.mxu0 %v5877
        %8268 = vmatprep.subr.bf16.mxu0 %v5880
        %8269 = vmatpush1.bf16.msra.mxu0 %v5879
        %8270 = vmatprep.subr.bf16.mxu0 %v5882
        %8271 = vmatpush1.bf16.msra.mxu0 %v5881
        %8272 = vmatprep.subr.bf16.mxu0 %v5884
        %8273 = vmatpush1.bf16.msra.mxu0 %v5883
        %8274 = vmatprep.subr.bf16.mxu0 %v5886
        %8275 = vmatpush1.bf16.msra.mxu0 %v5885
        %8276 = vmatprep.subr.bf16.mxu0 %v5888
        %8277 = vmatpush1.bf16.msra.mxu0 %v5887
        %8278 = vmatprep.subr.bf16.mxu0 %v5890
        %8279 = vmatpush1.bf16.msra.mxu0 %v5889
        %8280 = vmatprep.subr.bf16.mxu0 %v5892
        %8281 = vmatpush1.bf16.msra.mxu0 %v5891
        %8282 = vmatprep.subr.bf16.mxu0 %v5894
        %8283 = vmatpush1.bf16.msra.mxu0 %v5893
        %8284 = vmatprep.subr.bf16.mxu0 %v5896
        %8285 = vmatpush1.bf16.msra.mxu0 %v5895
        %8286 = vmatprep.subr.bf16.mxu0 %v5898
        %8287 = vmatpush1.bf16.msra.mxu0 %v5897
        %8288 = vmatprep.subr.bf16.mxu0 %v5900
        %8289 = vmatpush1.bf16.msra.mxu0 %v5899
        %8290 = vmatprep.subr.bf16.mxu0 %v5902
        %8291 = vmatpush1.bf16.msra.mxu0 %v5901
        %8292 = vmatprep.mubr.bf16.mxu0 %v1742
        %8293 = vmatmul.mubr.bf16.gmra.mrb[0].mxu0 %v1741
        %v8294 = vpop.f32.mrb[0].mxu0
        %v8295 = vadd.f32 %v8252, %v8294
        %v8296 = vpop.f32.mrb[0].mxu0
        %v8297 = vadd.f32 %v8254, %v8296
        %v8298 = vpop.f32.mrb[0].mxu0
        %v8299 = vadd.f32 %v8256, %v8298
        %v8300 = vpop.f32.mrb[0].mxu0
        %v8301 = vadd.f32 %v8258, %v8300
        %8302 = vdwg.mxu0
        %v8303 = vadd.f32 %v395, %v8295
        %v8304 = vadd.f32 %v396, %v8297
        %v8305 = vadd.f32 %v397, %v8299
        %v8306 = vadd.f32 %v398, %v8301
        %8307 = vst [vmem:[#allocation2] sm:$0xff] %v8303
        %8308 = vst [vmem:[#allocation2 + $0x8] sm:$0xff] %v8304
        %8309 = vst [vmem:[#allocation2 + $0x10] sm:$0xff] %v8305
        %8310 = vst [vmem:[#allocation2 + $0x18] sm:$0xff] %v8306
        %p8311 = scmp.eq.s32.totalorder %s23, 3
        // Predicated region
        $region60: #{feature_discriminator.2} parent=46 // pred_check
          %p8312 = pneg %p8311
        $region61: #{feature_discriminator.2} parent=46 // pred_check_branch
          %8314 = sbr.rel (%p8312) target = $region63
        $region62: #{feature_discriminator.2} parent=46 // pred_region
          %v8315 = vld [vmem:[#allocation2] sm:$0xff]
          %v8316 = vld [vmem:[#allocation2 + $0x8] sm:$0xff]
          %v8317 = vld [vmem:[#allocation2 + $0x10] sm:$0xff]
          %v8318 = vld [vmem:[#allocation2 + $0x18] sm:$0xff]
          %8319 = vst [vmem:[%s385] sm:$0xff] %v8315
          %8320 = vst [vmem:[%s385 + $0x8] sm:$0xff] %v8316
          %8321 = vst [vmem:[%s385 + $0x10] sm:$0xff] %v8317
          %8322 = vst [vmem:[%s385 + $0x18] sm:$0xff] %v8318
        $region63: #{feature_discriminator.2} parent=46 // pred_fallthru
          _
        %s8323 = smul.u32 2, %s22
        %p8324 = scmp.lt.s32.totalorder %s21, 1
        %s8325 = scalar_select %p8324, %s21, 1
        %p8326 = scmp.lt.s32.totalorder %s8323, 1
        %s8327 = scalar_select %p8326, %s8323, 1
        %s8328 = smul.addr %s8327, 2
        %s8329 = smul.addr %s8325, 4
        %s8330 = sadd.s32 %s8328, %s8329
        %s8331 = smul.addr %s8330, 8
        %s8332 = scalar_lea.vmem %s2, %s8331
        // Predicated region
        $region64: #{feature_discriminator.2} parent=46 // pred_check
          %p8333 = pneg %p117
        $region65: #{feature_discriminator.2} parent=46 // pred_check_branch
          %8335 = sbr.rel (%p8333) target = $region67
        $region66: #{feature_discriminator.2} parent=46 // pred_region
          %s8336 = smul.u32 2, %s22
        $region67: #{feature_discriminator.2} parent=46 // pred_fallthru
          _
      $region47: #{feature_discriminator.2} parent=5 // pred_fallthru
        _
      %p8337 = scmp.le.s32.totalorder 2, %s11
      // Predicated region
      $region68: #{feature_discriminator.2} parent=5 // pred_check
        %p8338 = pneg %p8337
      $region69: #{feature_discriminator.2} parent=5 // pred_check_branch
        %8340 = sbr.rel (%p8338) target = $region71
      $region70: #{feature_discriminator.2} parent=5 // pred_region
        %s8341 = ssub.s32 %s11, 2
        // Predicated region
        $region72: #{feature_discriminator.2} parent=70 // pred_check
          %p8342 = pneg %p123
        $region73: #{feature_discriminator.2} parent=70 // pred_check_branch
          %8344 = sbr.rel (%p8342) target = $region75
        $region74: #{feature_discriminator.2} parent=70 // pred_region
          %s8345 = smul.u32 2, %s25
          %p8346 = scmp.lt.s32.totalorder %s24, 1
          %s8347 = scalar_select %p8346, %s24, 1
          %p8348 = scmp.lt.s32.totalorder %s8345, 1
          %s8349 = scalar_select %p8348, %s8345, 1
          %s8350 = smul.addr %s8349, 2
          %s8351 = smul.addr %s8347, 4
          %s8352 = sadd.s32 %s8350, %s8351
          %s8353 = smul.addr %s8352, 8
          %s8354 = scalar_lea.vmem %s2, %s8353
        $region75: #{feature_discriminator.2} parent=70 // pred_fallthru
          _
      $region71: #{feature_discriminator.2} parent=5 // pred_fallthru
        _
    $region6: #{feature_discriminator.2} parent=1 // loop_footer
      %s15 = sadd.s32 1, %s11
    $region7: #{feature_discriminator.2} parent=1 // loop_footer_branch
      %10 = sbr.rel target = $region3
    $region8: #{feature_discriminator.2} parent=1 // loop_exit
      _
    %8355 = vsyncpa [#allocation5], 1
    %s8356 = scalar_lea.sflag [#allocation5], 1
    %8357 = vsyncpa %s8356, 1

</llo_original>
